<compile_context>
chip_gen: v6e
topology: v6e:2x2x1
jax: 0.10.0
libtpu: 0.0.40
codegen_flags: <defaults>
</compile_context>

<pallas_src>
import math
from functools import partial

import jax
import jax.numpy as jnp
from jax.experimental import pallas as pl
from jax.experimental.pallas import tpu as pltpu


def _round_up(x, m):
    return ((x + m - 1) // m) * m


# --------------------------------------------------------------------------------------
# Kernel 1: Conv2d(kernel=4, stride=2, pad=1) + bias + ReLU as TWO shift-accumulate
# matmuls (one per dh phase) on a phase-decomposed input resident in VMEM.
#
# Input layout (prepared in plain JAX, see _prep_conv_input):
#   T[b, i*Wo + wo, ((a*2+bb)*2+dw)*C + c] = x_pad[b, 2*i + a, 2*(wo+dw) + bb, c]
# so for a given dh the taps (kh=2*dh+a, kw=2*dw+bb) for ALL (a, bb, dw, c) are the
# contiguous row slice [dh*Wo, dh*Wo + Ho*Wo) with K = 8*Cin lanes:
#   y[ho*Wo+wo, :] = sum_dh  T[b, dh*Wo + ho*Wo + wo, :] @ W2[dh]
# --------------------------------------------------------------------------------------
def _conv_s2k4_kernel(x_ref, w_ref, b_ref, o_ref, *, Wo, HoWo, TB):
    cout = o_ref.shape[-1]
    bias = b_ref[...]                                    # (1, Cout) f32, hoisted
    for tb in range(TB):                                 # small static unroll
        acc = jnp.zeros((HoWo, cout), jnp.float32)
        for dh in range(2):
            # (HoWo, 8*Cin) contiguous, aligned sublane slice; bf16 MXU operand.
            tap = x_ref[tb, pl.ds(dh * Wo, HoWo), :].astype(jnp.bfloat16)
            acc = acc + jnp.dot(tap, w_ref[dh], preferred_element_type=jnp.float32)
        # bias + ReLU in f32 on the VPU
        o_ref[tb] = jnp.maximum(acc + bias, 0.0).astype(o_ref.dtype)


def _pick_batch_tile(B, HoWo):
    """Images per grid step: aim for >=~1024 matmul rows per step, keep unroll small."""
    target = max(1, min(16, 1024 // max(HoWo, 1)))
    tb = 1
    for d in range(1, B + 1):
        if B % d == 0 and d <= target:
            tb = d
    return tb


def conv_s2k4_relu(T, w2, b2, Ho, Wo):
    """T: (B, (Ho+1)*Wo, 8*Cin); w2: (2, 8*Cin, Cout) bf16; b2: (1, Cout) f32."""
    B, F, C8 = T.shape
    Cout = w2.shape[-1]
    HoWo = Ho * Wo
    TB = _pick_batch_tile(B, HoWo)
    return pl.pallas_call(
        partial(_conv_s2k4_kernel, Wo=Wo, HoWo=HoWo, TB=TB),
        out_shape=jax.ShapeDtypeStruct((B, HoWo, Cout), jnp.bfloat16),
        grid=(B // TB,),
        in_specs=[
            pl.BlockSpec((TB, F, C8), lambda b: (b, 0, 0)),     # per-image-group tile
            pl.BlockSpec((2, C8, Cout), lambda b: (0, 0, 0)),   # weights resident
            pl.BlockSpec((1, Cout), lambda b: (0, 0)),          # bias resident
        ],
        out_specs=pl.BlockSpec((TB, HoWo, Cout), lambda b: (b, 0, 0)),
        compiler_params=pltpu.CompilerParams(
            dimension_semantics=("parallel",),       # batch axis -> dual-TC on v7x
            vmem_limit_bytes=32 * 1024 * 1024),      # fits v7x (64 MiB phys) comfortably
    )(T, w2, b2)


# --------------------------------------------------------------------------------------
# Kernel 2: fused head = conv4 (as a GEMM over pre-gathered 4x4 patches) + NCHW flatten
# + lin1 + ReLU + fc, all in one kernel gridded over batch tiles.
# Patch rows are ordered (hw, b) so the NCHW flatten is realised as a sum of 16
# aligned (TB, 32) @ (32, 256) matmuls against a re-ordered lin1 weight -- no in-kernel
# transposes or reshapes.  fc output is padded to 128 lanes (lane-dense stores).
# --------------------------------------------------------------------------------------
def _head_kernel(p_ref, w4_ref, b4_ref, w1_ref, b1_ref, wf_ref, bf_ref, o_ref):
    TB = p_ref.shape[1]
    acc = jnp.zeros((TB, w1_ref.shape[-1]), jnp.float32)
    b4 = b4_ref[...]
    for hw in range(16):
        h4 = jnp.dot(p_ref[hw], w4_ref[...], preferred_element_type=jnp.float32)
        h4 = jnp.maximum(h4 + b4, 0.0).astype(jnp.bfloat16)          # conv4 + ReLU
        acc = acc + jnp.dot(h4, w1_ref[hw], preferred_element_type=jnp.float32)
    y1 = jnp.maximum(acc + b1_ref[...], 0.0).astype(jnp.bfloat16)    # lin1 + ReLU
    o_ref[...] = (jnp.dot(y1, wf_ref[...], preferred_element_type=jnp.float32)
                  + bf_ref[...])                                      # fc


def head_fused(patches, w4, b4, w1r, b1, wfc, bfc):
    """patches: (16, Bp, 512) bf16, Bp a multiple of 8 (or 128 for large batches)."""
    _, Bp, K4 = patches.shape
    Nf = wfc.shape[1]
    TB = min(Bp, 128)
    return pl.pallas_call(
        _head_kernel,
        out_shape=jax.ShapeDtypeStruct((Bp, Nf), jnp.float32),
        grid=(Bp // TB,),
        in_specs=[
            pl.BlockSpec((16, TB, K4), lambda i: (0, i, 0)),
            pl.BlockSpec(w4.shape, lambda i: (0, 0)),
            pl.BlockSpec(b4.shape, lambda i: (0, 0)),
            pl.BlockSpec(w1r.shape, lambda i: (0, 0, 0)),
            pl.BlockSpec(b1.shape, lambda i: (0, 0)),
            pl.BlockSpec(wfc.shape, lambda i: (0, 0)),
            pl.BlockSpec(bfc.shape, lambda i: (0, 0)),
        ],
        out_specs=pl.BlockSpec((TB, Nf), lambda i: (i, 0)),
        compiler_params=pltpu.CompilerParams(
            dimension_semantics=("parallel",),
            vmem_limit_bytes=32 * 1024 * 1024),
    )(patches, w4, b4, w1r, b1, wfc, bfc)


# --------------------------------------------------------------------------------------
# Plain-JAX data preparation (cheap pad/reshape/transpose; no 16x im2col duplication).
# --------------------------------------------------------------------------------------
def _prep_conv_input(x_nhwc, Ho, Wo):
    """(B, 2Ho, 2Wo, C) -> (B, (Ho+1)*Wo, 8*C) phase-decomposed layout (see kernel)."""
    B, _, _, C = x_nhwc.shape
    # bf16 when the in-kernel sublane slice offsets (0, Wo) are 16-aligned; otherwise
    # keep f32 in HBM (sublane tile 8) and cast to bf16 inside the kernel.
    dt = jnp.bfloat16 if Wo % 16 == 0 else jnp.float32
    xp = jnp.pad(x_nhwc, ((0, 0), (1, 1), (1, 1), (0, 0)))      # (B, 2Ho+2, 2Wo+2, C)
    ph = xp.reshape(B, Ho + 1, 2, Wo + 1, 2, C)                 # [b, i, a, j, bb, c]
    taps = [ph[:, :, :, dw:dw + Wo, :, :] for dw in (0, 1)]     # dw-shifted phases
    td = jnp.stack(taps, axis=0)                                # (dw, b, i, a, wo, bb, c)
    T = td.transpose(1, 2, 4, 3, 5, 0, 6)                       # (b, i, wo, a, bb, dw, c)
    return T.reshape(B, (Ho + 1) * Wo, 8 * C).astype(dt)


def _prep_head_patches(x3_flat, B):
    """conv3 output (B, 64, 32) -> conv4 im2col patches (16[hw], Bp, 512), rows (hw, b)."""
    x = x3_flat.reshape(B, 8, 8, 32)
    xp = jnp.pad(x, ((0, 0), (1, 1), (1, 1), (0, 0)))           # (B, 10, 10, 32)
    cols = [xp[:, kh:kh + 8:2, kw:kw + 8:2, :] for kh in range(4) for kw in range(4)]
    pat = jnp.stack(cols, axis=3)                               # (B, 4, 4, 16, 32)
    pat = pat.reshape(B, 16, 16 * 32)                           # rows (b, hw), feat (kh,kw,c)
    pat = jnp.transpose(pat, (1, 0, 2))                         # (16[hw], B, 512)
    Bp = _round_up(B, 8) if B <= 128 else _round_up(B, 128)
    if Bp != B:
        pat = jnp.pad(pat, ((0, 0), (0, Bp - B), (0, 0)))
    return pat.astype(jnp.bfloat16)


# --------------------------------------------------------------------------------------
# Parameters: deterministic synthetic init + one-time packing to kernel layouts (bf16).
# --------------------------------------------------------------------------------------
def init_params(key, mod="shape"):
    hid, k, hidden_dim = 32, 4, 256
    out_map = {"shape": 3, "size": 2, "color": 5, "position": 4, "background": 2}
    out_dim = out_map[mod]
    ks = jax.random.split(key, 12)

    def conv_w(kk, cin, cout):
        return jax.random.normal(kk, (k, k, cin, cout), jnp.float32) / math.sqrt(cin * k * k)

    def lin_w(kk, fin, fout):
        return jax.random.normal(kk, (fin, fout), jnp.float32) / math.sqrt(fin)

    return {
        "conv1_w": conv_w(ks[0], 3, hid),   "conv1_b": 0.01 * jax.random.normal(ks[1], (hid,)),
        "conv2_w": conv_w(ks[2], hid, hid), "conv2_b": 0.01 * jax.random.normal(ks[3], (hid,)),
        "conv3_w": conv_w(ks[4], hid, hid), "conv3_b": 0.01 * jax.random.normal(ks[5], (hid,)),
        "conv4_w": conv_w(ks[6], hid, hid), "conv4_b": 0.01 * jax.random.normal(ks[7], (hid,)),
        "lin1_w":  lin_w(ks[8], hid * k * k, hidden_dim),   # 32*4*4 = 512 -> 256
        "lin1_b":  0.01 * jax.random.normal(ks[9], (hidden_dim,)),
        "fc_w":    lin_w(ks[10], hidden_dim, out_dim),
        "fc_b":    0.01 * jax.random.normal(ks[11], (out_dim,)),
    }


def _prep_conv_weight(w_hwio):
    """(4,4,Cin,Cout) HWIO -> (2, 8*Cin, Cout) bf16, rows ordered (a, bb, dw, cin)."""
    per_dh = []
    for dh in (0, 1):
        rows = []
        for a in (0, 1):
            for bb in (0, 1):
                for dw in (0, 1):
                    rows.append(w_hwio[2 * dh + a, 2 * dw + bb])   # (Cin, Cout)
        per_dh.append(jnp.concatenate(rows, axis=0))               # (8*Cin, Cout)
    return jnp.stack(per_dh, axis=0).astype(jnp.bfloat16)          # (2, 8*Cin, Cout)


def prepare_params(params):
    """One-time packing of all weights/biases into TPU-friendly bf16/f32 layouts."""
    out_dim = int(params["fc_w"].shape[1])
    Nf = _round_up(out_dim, 128)
    prep = {
        "conv1_w": _prep_conv_weight(params["conv1_w"]),
        "conv1_b": params["conv1_b"].astype(jnp.float32).reshape(1, -1),
        "conv2_w": _prep_conv_weight(params["conv2_w"]),
        "conv2_b": params["conv2_b"].astype(jnp.float32).reshape(1, -1),
        "conv3_w": _prep_conv_weight(params["conv3_w"]),
        "conv3_b": params["conv3_b"].astype(jnp.float32).reshape(1, -1),
        # conv4 as GEMM weight: rows ordered (kh, kw, cin) to match the patch gather.
        "conv4_w": params["conv4_w"].reshape(4 * 4 * params["conv4_w"].shape[2], -1
                                             ).astype(jnp.bfloat16),
        "conv4_b": params["conv4_b"].astype(jnp.float32).reshape(1, -1),
        # lin1 weight re-ordered so row index = NCHW flatten index c*16 + hw -> (hw, c, n)
        "lin1_w":  params["lin1_w"].reshape(32, 16, -1).transpose(1, 0, 2
                                                                  ).astype(jnp.bfloat16),
        "lin1_b":  params["lin1_b"].astype(jnp.float32).reshape(1, -1),
        "fc_w":    jnp.pad(params["fc_w"], ((0, 0), (0, Nf - out_dim))).astype(jnp.bfloat16),
        "fc_b":    jnp.pad(params["fc_b"].reshape(1, -1),
                           ((0, 0), (0, Nf - out_dim))).astype(jnp.float32),
    }
    return prep, out_dim


# --------------------------------------------------------------------------------------
# Forward pass (matches CNN.forward: 4x conv+ReLU, NCHW flatten, lin1+ReLU, fc).
# --------------------------------------------------------------------------------------
@partial(jax.jit, static_argnames=("out_dim",))
def cnn_forward(prep, x_nchw, out_dim):
    B = x_nchw.shape[0]
    x = jnp.transpose(x_nchw.astype(jnp.float32), (0, 2, 3, 1))          # NCHW -> NHWC
    h = conv_s2k4_relu(_prep_conv_input(x, 32, 32),
                       prep["conv1_w"], prep["conv1_b"], 32, 32)          # (B, 1024, 32)
    h = conv_s2k4_relu(_prep_conv_input(h.reshape(B, 32, 32, 32), 16, 16),
                       prep["conv2_w"], prep["conv2_b"], 16, 16)          # (B, 256, 32)
    h = conv_s2k4_relu(_prep_conv_input(h.reshape(B, 16, 16, 32), 8, 8),
                       prep["conv3_w"], prep["conv3_b"], 8, 8)            # (B, 64, 32)
    pat = _prep_head_patches(h, B)                                        # (16, Bp, 512)
    out = head_fused(pat, prep["conv4_w"], prep["conv4_b"],
                     prep["lin1_w"], prep["lin1_b"], prep["fc_w"], prep["fc_b"])
    return out[:B, :out_dim]


# --------------------------------------------------------------------------------------
# Pure-JAX f32 reference for verification.
# --------------------------------------------------------------------------------------
def reference_forward(params, x_nchw):
    x = jnp.transpose(x_nchw.astype(jnp.float32), (0, 2, 3, 1))

    def conv(x, w, b):
        y = jax.lax.conv_general_dilated(
            x, w, window_strides=(2, 2), padding=[(1, 1), (1, 1)],
            dimension_numbers=("NHWC", "HWIO", "NHWC"))
        return jnp.maximum(y + b, 0.0)

    x = conv(x, params["conv1_w"], params["conv1_b"])
    x = conv(x, params["conv2_w"], params["conv2_b"])
    x = conv(x, params["conv3_w"], params["conv3_b"])
    x = conv(x, params["conv4_w"], params["conv4_b"])
    B = x.shape[0]
    x = jnp.transpose(x, (0, 3, 1, 2)).reshape(B, -1)   # PyTorch NCHW .view(B, -1)
    x = jnp.maximum(x @ params["lin1_w"] + params["lin1_b"], 0.0)
    h = x @ params["fc_w"] + params["fc_b"]
    return h.reshape(-1, params["fc_w"].shape[1])


if __name__ == "__main__":
    key = jax.random.PRNGKey(0)
    k_param, k_data = jax.random.split(key)
    params = init_params(k_param, mod="shape")            # output_dim = 3
    prep, out_dim = prepare_params(params)                # one-time bf16 packing

    # CNN expects 64x64 RGB images in NCHW (four stride-2 convs -> 4x4 -> 512 features)
    x = jax.random.normal(k_data, (2, 3, 64, 64), jnp.float32)

    out = jax.block_until_ready(cnn_forward(prep, x, out_dim=out_dim))
    assert out.shape == (2, 3), out.shape

    ref = jax.block_until_ready(reference_forward(params, x))
    # bf16 MXU operands with f32 accumulation -> small, bounded deviation from f32 ref.
    assert jnp.allclose(out, ref, rtol=2e-2, atol=2e-2), (out, ref)

    print("KERNEL_OK")
</pallas_src>

<mosaic_0001>
module attributes {stable_mosaic.version = 11 : i64} {
  func.func @_conv_s2k4_kernel(%arg0: i32, %arg1: memref<1x1056x24xbf16, #tpu.memory_space<vmem>>, %arg2: memref<2x24x32xbf16, #tpu.memory_space<vmem>>, %arg3: memref<1x32xf32, #tpu.memory_space<vmem>>, %arg4: memref<1x1024x32xbf16, #tpu.memory_space<vmem>>) attributes {dimension_semantics = [#tpu.dimension_semantics<parallel>], iteration_bounds = array<i64: 2>, scalar_prefetch = 0 : i64, scratch_operands = 0 : i64, tpu.core_type = #tpu.core_type<tc>, window_params = [{transform_indices = @transform_0, window_bounds = array<i64: 1, 1056, 24>}, {pipeline_mode = #tpu.pipeline_mode<synchronous>, transform_indices = @transform_1, window_bounds = array<i64: 2, 24, 32>}, {pipeline_mode = #tpu.pipeline_mode<synchronous>, transform_indices = @transform_2, window_bounds = array<i64: 1, 32>}, {transform_indices = @transform_3, window_bounds = array<i64: 1, 1024, 32>}]} {
    %c0 = arith.constant 0 : index
    %c0_0 = arith.constant 0 : index
    %0 = vector.load %arg3[%c0, %c0_0] : memref<1x32xf32, #tpu.memory_space<vmem>>, vector<1x32xf32>
    %cst = arith.constant 0.000000e+00 : f32
    %1 = vector.broadcast %cst : f32 to vector<1024x32xf32>
    %c0_1 = arith.constant 0 : index
    %c0_2 = arith.constant 0 : index
    %c0_3 = arith.constant 0 : index
    %2 = vector.load %arg1[%c0_1, %c0_2, %c0_3] : memref<1x1056x24xbf16, #tpu.memory_space<vmem>>, vector<1x1024x24xbf16>
    %3 = vector.shape_cast %2 : vector<1x1024x24xbf16> to vector<1024x24xbf16>
    %c0_4 = arith.constant 0 : index
    %c0_5 = arith.constant 0 : index
    %c0_6 = arith.constant 0 : index
    %4 = vector.load %arg2[%c0_4, %c0_5, %c0_6] : memref<2x24x32xbf16, #tpu.memory_space<vmem>>, vector<1x24x32xbf16>
    %5 = vector.shape_cast %4 : vector<1x24x32xbf16> to vector<24x32xbf16>
    %cst_7 = arith.constant dense<0.000000e+00> : vector<1024x32xf32>
    %6 = tpu.matmul %3, %5, %cst_7 {dimension_numbers = #tpu.dot_dimension_numbers<[1], [0], [0], [1], [0, 0, 1, 1], [], []>} : vector<1024x24xbf16>, vector<24x32xbf16>, vector<1024x32xf32> -> vector<1024x32xf32>
    %7 = arith.addf %1, %6 : vector<1024x32xf32>
    %c0_8 = arith.constant 0 : index
    %c32 = arith.constant 32 : index
    %c0_9 = arith.constant 0 : index
    %8 = vector.load %arg1[%c0_8, %c32, %c0_9] : memref<1x1056x24xbf16, #tpu.memory_space<vmem>>, vector<1x1024x24xbf16>
    %9 = vector.shape_cast %8 : vector<1x1024x24xbf16> to vector<1024x24xbf16>
    %c1 = arith.constant 1 : index
    %c0_10 = arith.constant 0 : index
    %c0_11 = arith.constant 0 : index
    %10 = vector.load %arg2[%c1, %c0_10, %c0_11] : memref<2x24x32xbf16, #tpu.memory_space<vmem>>, vector<1x24x32xbf16>
    %11 = vector.shape_cast %10 : vector<1x24x32xbf16> to vector<24x32xbf16>
    %cst_12 = arith.constant dense<0.000000e+00> : vector<1024x32xf32>
    %12 = tpu.matmul %9, %11, %cst_12 {dimension_numbers = #tpu.dot_dimension_numbers<[1], [0], [0], [1], [0, 0, 1, 1], [], []>} : vector<1024x24xbf16>, vector<24x32xbf16>, vector<1024x32xf32> -> vector<1024x32xf32>
    %13 = arith.addf %7, %12 : vector<1024x32xf32>
    %14 = vector.broadcast %0 : vector<1x32xf32> to vector<1024x32xf32>
    %15 = arith.addf %13, %14 : vector<1024x32xf32>
    %cst_13 = arith.constant 0.000000e+00 : f32
    %16 = vector.broadcast %cst_13 : f32 to vector<1024x32xf32>
    %17 = arith.maximumf %15, %16 : vector<1024x32xf32>
    %18 = arith.truncf %17 : vector<1024x32xf32> to vector<1024x32xbf16>
    %c0_14 = arith.constant 0 : index
    %c0_15 = arith.constant 0 : index
    %c0_16 = arith.constant 0 : index
    %19 = vector.load %arg4[%c0_14, %c0_15, %c0_16] : memref<1x1024x32xbf16, #tpu.memory_space<vmem>>, vector<1x1024x32xbf16>
    %20 = vector.shape_cast %19 : vector<1x1024x32xbf16> to vector<1024x32xbf16>
    %21 = vector.shape_cast %18 : vector<1024x32xbf16> to vector<1x1024x32xbf16>
    tpu.vector_store %arg4[%c0_14, %c0_15, %c0_16], %21 {strides = array<i32>} : memref<1x1024x32xbf16, #tpu.memory_space<vmem>>, vector<1x1024x32xbf16>,
    return
  }
  func.func @transform_0(%arg0: i32) -> (i32, i32, i32) {
    %c0_i32 = arith.constant 0 : i32
    %c0_i32_0 = arith.constant 0 : i32
    %c0_i32_1 = arith.constant 0 : i32
    return %arg0, %c0_i32, %c0_i32_0 : i32, i32, i32
  }
  func.func @transform_1(%arg0: i32) -> (i32, i32, i32) {
    %c0_i32 = arith.constant 0 : i32
    %c0_i32_0 = arith.constant 0 : i32
    %c0_i32_1 = arith.constant 0 : i32
    %c0_i32_2 = arith.constant 0 : i32
    return %c0_i32, %c0_i32_0, %c0_i32_1 : i32, i32, i32
  }
  func.func @transform_2(%arg0: i32) -> (i32, i32) {
    %c0_i32 = arith.constant 0 : i32
    %c0_i32_0 = arith.constant 0 : i32
    %c0_i32_1 = arith.constant 0 : i32
    return %c0_i32, %c0_i32_0 : i32, i32
  }
  func.func @transform_3(%arg0: i32) -> (i32, i32, i32) {
    %c0_i32 = arith.constant 0 : i32
    %c0_i32_0 = arith.constant 0 : i32
    %c0_i32_1 = arith.constant 0 : i32
    return %arg0, %c0_i32, %c0_i32_0 : i32, i32, i32
  }
}

module attributes {stable_mosaic.version = 11 : i64} {
  func.func @_conv_s2k4_kernel(%arg0: i32, %arg1: memref<2x272x256xbf16, #tpu.memory_space<vmem>>, %arg2: memref<2x256x32xbf16, #tpu.memory_space<vmem>>, %arg3: memref<1x32xf32, #tpu.memory_space<vmem>>, %arg4: memref<2x256x32xbf16, #tpu.memory_space<vmem>>) attributes {dimension_semantics = [#tpu.dimension_semantics<parallel>], iteration_bounds = array<i64: 1>, scalar_prefetch = 0 : i64, scratch_operands = 0 : i64, tpu.core_type = #tpu.core_type<tc>, window_params = [{transform_indices = @transform_0, window_bounds = array<i64: 2, 272, 256>}, {pipeline_mode = #tpu.pipeline_mode<synchronous>, transform_indices = @transform_1, window_bounds = array<i64: 2, 256, 32>}, {pipeline_mode = #tpu.pipeline_mode<synchronous>, transform_indices = @transform_2, window_bounds = array<i64: 1, 32>}, {transform_indices = @transform_3, window_bounds = array<i64: 2, 256, 32>}]} {
    %c0 = arith.constant 0 : index
    %c0_0 = arith.constant 0 : index
    %0 = vector.load %arg3[%c0, %c0_0] : memref<1x32xf32, #tpu.memory_space<vmem>>, vector<1x32xf32>
    %cst = arith.constant 0.000000e+00 : f32
    %1 = vector.broadcast %cst : f32 to vector<256x32xf32>
    %c0_1 = arith.constant 0 : index
    %c0_2 = arith.constant 0 : index
    %c0_3 = arith.constant 0 : index
    %2 = vector.load %arg1[%c0_1, %c0_2, %c0_3] : memref<2x272x256xbf16, #tpu.memory_space<vmem>>, vector<1x256x256xbf16>
    %3 = vector.shape_cast %2 : vector<1x256x256xbf16> to vector<256x256xbf16>
    %c0_4 = arith.constant 0 : index
    %c0_5 = arith.constant 0 : index
    %c0_6 = arith.constant 0 : index
    %4 = vector.load %arg2[%c0_4, %c0_5, %c0_6] : memref<2x256x32xbf16, #tpu.memory_space<vmem>>, vector<1x256x32xbf16>
    %5 = vector.shape_cast %4 : vector<1x256x32xbf16> to vector<256x32xbf16>
    %cst_7 = arith.constant dense<0.000000e+00> : vector<256x32xf32>
    %6 = tpu.matmul %3, %5, %cst_7 {dimension_numbers = #tpu.dot_dimension_numbers<[1], [0], [0], [1], [0, 0, 1, 1], [], []>} : vector<256x256xbf16>, vector<256x32xbf16>, vector<256x32xf32> -> vector<256x32xf32>
    %7 = arith.addf %1, %6 : vector<256x32xf32>
    %c0_8 = arith.constant 0 : index
    %c16 = arith.constant 16 : index
    %c0_9 = arith.constant 0 : index
    %8 = vector.load %arg1[%c0_8, %c16, %c0_9] : memref<2x272x256xbf16, #tpu.memory_space<vmem>>, vector<1x256x256xbf16>
    %9 = vector.shape_cast %8 : vector<1x256x256xbf16> to vector<256x256xbf16>
    %c1 = arith.constant 1 : index
    %c0_10 = arith.constant 0 : index
    %c0_11 = arith.constant 0 : index
    %10 = vector.load %arg2[%c1, %c0_10, %c0_11] : memref<2x256x32xbf16, #tpu.memory_space<vmem>>, vector<1x256x32xbf16>
    %11 = vector.shape_cast %10 : vector<1x256x32xbf16> to vector<256x32xbf16>
    %cst_12 = arith.constant dense<0.000000e+00> : vector<256x32xf32>
    %12 = tpu.matmul %9, %11, %cst_12 {dimension_numbers = #tpu.dot_dimension_numbers<[1], [0], [0], [1], [0, 0, 1, 1], [], []>} : vector<256x256xbf16>, vector<256x32xbf16>, vector<256x32xf32> -> vector<256x32xf32>
    %13 = arith.addf %7, %12 : vector<256x32xf32>
    %14 = vector.broadcast %0 : vector<1x32xf32> to vector<256x32xf32>
    %15 = arith.addf %13, %14 : vector<256x32xf32>
    %cst_13 = arith.constant 0.000000e+00 : f32
    %16 = vector.broadcast %cst_13 : f32 to vector<256x32xf32>
    %17 = arith.maximumf %15, %16 : vector<256x32xf32>
    %18 = arith.truncf %17 : vector<256x32xf32> to vector<256x32xbf16>
    %c0_14 = arith.constant 0 : index
    %c0_15 = arith.constant 0 : index
    %c0_16 = arith.constant 0 : index
    %19 = vector.load %arg4[%c0_14, %c0_15, %c0_16] : memref<2x256x32xbf16, #tpu.memory_space<vmem>>, vector<1x256x32xbf16>
    %20 = vector.shape_cast %19 : vector<1x256x32xbf16> to vector<256x32xbf16>
    %21 = vector.shape_cast %18 : vector<256x32xbf16> to vector<1x256x32xbf16>
    tpu.vector_store %arg4[%c0_14, %c0_15, %c0_16], %21 {strides = array<i32>} : memref<2x256x32xbf16, #tpu.memory_space<vmem>>, vector<1x256x32xbf16>,
    %cst_17 = arith.constant 0.000000e+00 : f32
    %22 = vector.broadcast %cst_17 : f32 to vector<256x32xf32>
    %c1_18 = arith.constant 1 : index
    %c0_19 = arith.constant 0 : index
    %c0_20 = arith.constant 0 : index
    %23 = vector.load %arg1[%c1_18, %c0_19, %c0_20] : memref<2x272x256xbf16, #tpu.memory_space<vmem>>, vector<1x256x256xbf16>
    %24 = vector.shape_cast %23 : vector<1x256x256xbf16> to vector<256x256xbf16>
    %c0_21 = arith.constant 0 : index
    %c0_22 = arith.constant 0 : index
    %c0_23 = arith.constant 0 : index
    %25 = vector.load %arg2[%c0_21, %c0_22, %c0_23] : memref<2x256x32xbf16, #tpu.memory_space<vmem>>, vector<1x256x32xbf16>
    %26 = vector.shape_cast %25 : vector<1x256x32xbf16> to vector<256x32xbf16>
    %cst_24 = arith.constant dense<0.000000e+00> : vector<256x32xf32>
    %27 = tpu.matmul %24, %26, %cst_24 {dimension_numbers = #tpu.dot_dimension_numbers<[1], [0], [0], [1], [0, 0, 1, 1], [], []>} : vector<256x256xbf16>, vector<256x32xbf16>, vector<256x32xf32> -> vector<256x32xf32>
    %28 = arith.addf %22, %27 : vector<256x32xf32>
    %c1_25 = arith.constant 1 : index
    %c16_26 = arith.constant 16 : index
    %c0_27 = arith.constant 0 : index
    %29 = vector.load %arg1[%c1_25, %c16_26, %c0_27] : memref<2x272x256xbf16, #tpu.memory_space<vmem>>, vector<1x256x256xbf16>
    %30 = vector.shape_cast %29 : vector<1x256x256xbf16> to vector<256x256xbf16>
    %c1_28 = arith.constant 1 : index
    %c0_29 = arith.constant 0 : index
    %c0_30 = arith.constant 0 : index
    %31 = vector.load %arg2[%c1_28, %c0_29, %c0_30] : memref<2x256x32xbf16, #tpu.memory_space<vmem>>, vector<1x256x32xbf16>
    %32 = vector.shape_cast %31 : vector<1x256x32xbf16> to vector<256x32xbf16>
    %cst_31 = arith.constant dense<0.000000e+00> : vector<256x32xf32>
    %33 = tpu.matmul %30, %32, %cst_31 {dimension_numbers = #tpu.dot_dimension_numbers<[1], [0], [0], [1], [0, 0, 1, 1], [], []>} : vector<256x256xbf16>, vector<256x32xbf16>, vector<256x32xf32> -> vector<256x32xf32>
    %34 = arith.addf %28, %33 : vector<256x32xf32>
    %35 = vector.broadcast %0 : vector<1x32xf32> to vector<256x32xf32>
    %36 = arith.addf %34, %35 : vector<256x32xf32>
    %cst_32 = arith.constant 0.000000e+00 : f32
    %37 = vector.broadcast %cst_32 : f32 to vector<256x32xf32>
    %38 = arith.maximumf %36, %37 : vector<256x32xf32>
    %39 = arith.truncf %38 : vector<256x32xf32> to vector<256x32xbf16>
    %c1_33 = arith.constant 1 : index
    %c0_34 = arith.constant 0 : index
    %c0_35 = arith.constant 0 : index
    %40 = vector.load %arg4[%c1_33, %c0_34, %c0_35] : memref<2x256x32xbf16, #tpu.memory_space<vmem>>, vector<1x256x32xbf16>
    %41 = vector.shape_cast %40 : vector<1x256x32xbf16> to vector<256x32xbf16>
    %42 = vector.shape_cast %39 : vector<256x32xbf16> to vector<1x256x32xbf16>
    tpu.vector_store %arg4[%c1_33, %c0_34, %c0_35], %42 {strides = array<i32>} : memref<2x256x32xbf16, #tpu.memory_space<vmem>>, vector<1x256x32xbf16>,
    return
  }
  func.func @transform_0(%arg0: i32) -> (i32, i32, i32) {
    %c0_i32 = arith.constant 0 : i32
    %c0_i32_0 = arith.constant 0 : i32
    %c0_i32_1 = arith.constant 0 : i32
    return %arg0, %c0_i32, %c0_i32_0 : i32, i32, i32
  }
  func.func @transform_1(%arg0: i32) -> (i32, i32, i32) {
    %c0_i32 = arith.constant 0 : i32
    %c0_i32_0 = arith.constant 0 : i32
    %c0_i32_1 = arith.constant 0 : i32
    %c0_i32_2 = arith.constant 0 : i32
    return %c0_i32, %c0_i32_0, %c0_i32_1 : i32, i32, i32
  }
  func.func @transform_2(%arg0: i32) -> (i32, i32) {
    %c0_i32 = arith.constant 0 : i32
    %c0_i32_0 = arith.constant 0 : i32
    %c0_i32_1 = arith.constant 0 : i32
    return %c0_i32, %c0_i32_0 : i32, i32
  }
  func.func @transform_3(%arg0: i32) -> (i32, i32, i32) {
    %c0_i32 = arith.constant 0 : i32
    %c0_i32_0 = arith.constant 0 : i32
    %c0_i32_1 = arith.constant 0 : i32
    return %arg0, %c0_i32, %c0_i32_0 : i32, i32, i32
  }
}

module attributes {stable_mosaic.version = 11 : i64} {
  func.func @_conv_s2k4_kernel(%arg0: i32, %arg1: memref<2x72x256xf32, #tpu.memory_space<vmem>>, %arg2: memref<2x256x32xbf16, #tpu.memory_space<vmem>>, %arg3: memref<1x32xf32, #tpu.memory_space<vmem>>, %arg4: memref<2x64x32xbf16, #tpu.memory_space<vmem>>) attributes {dimension_semantics = [#tpu.dimension_semantics<parallel>], iteration_bounds = array<i64: 1>, scalar_prefetch = 0 : i64, scratch_operands = 0 : i64, tpu.core_type = #tpu.core_type<tc>, window_params = [{transform_indices = @transform_0, window_bounds = array<i64: 2, 72, 256>}, {pipeline_mode = #tpu.pipeline_mode<synchronous>, transform_indices = @transform_1, window_bounds = array<i64: 2, 256, 32>}, {pipeline_mode = #tpu.pipeline_mode<synchronous>, transform_indices = @transform_2, window_bounds = array<i64: 1, 32>}, {transform_indices = @transform_3, window_bounds = array<i64: 2, 64, 32>}]} {
    %c0 = arith.constant 0 : index
    %c0_0 = arith.constant 0 : index
    %0 = vector.load %arg3[%c0, %c0_0] : memref<1x32xf32, #tpu.memory_space<vmem>>, vector<1x32xf32>
    %cst = arith.constant 0.000000e+00 : f32
    %1 = vector.broadcast %cst : f32 to vector<64x32xf32>
    %c0_1 = arith.constant 0 : index
    %c0_2 = arith.constant 0 : index
    %c0_3 = arith.constant 0 : index
    %2 = vector.load %arg1[%c0_1, %c0_2, %c0_3] : memref<2x72x256xf32, #tpu.memory_space<vmem>>, vector<1x64x256xf32>
    %3 = vector.shape_cast %2 : vector<1x64x256xf32> to vector<64x256xf32>
    %4 = arith.truncf %3 : vector<64x256xf32> to vector<64x256xbf16>
    %c0_4 = arith.constant 0 : index
    %c0_5 = arith.constant 0 : index
    %c0_6 = arith.constant 0 : index
    %5 = vector.load %arg2[%c0_4, %c0_5, %c0_6] : memref<2x256x32xbf16, #tpu.memory_space<vmem>>, vector<1x256x32xbf16>
    %6 = vector.shape_cast %5 : vector<1x256x32xbf16> to vector<256x32xbf16>
    %cst_7 = arith.constant dense<0.000000e+00> : vector<64x32xf32>
    %7 = tpu.matmul %4, %6, %cst_7 {dimension_numbers = #tpu.dot_dimension_numbers<[1], [0], [0], [1], [0, 0, 1, 1], [], []>} : vector<64x256xbf16>, vector<256x32xbf16>, vector<64x32xf32> -> vector<64x32xf32>
    %8 = arith.addf %1, %7 : vector<64x32xf32>
    %c0_8 = arith.constant 0 : index
    %c8 = arith.constant 8 : index
    %c0_9 = arith.constant 0 : index
    %9 = vector.load %arg1[%c0_8, %c8, %c0_9] : memref<2x72x256xf32, #tpu.memory_space<vmem>>, vector<1x64x256xf32>
    %10 = vector.shape_cast %9 : vector<1x64x256xf32> to vector<64x256xf32>
    %11 = arith.truncf %10 : vector<64x256xf32> to vector<64x256xbf16>
    %c1 = arith.constant 1 : index
    %c0_10 = arith.constant 0 : index
    %c0_11 = arith.constant 0 : index
    %12 = vector.load %arg2[%c1, %c0_10, %c0_11] : memref<2x256x32xbf16, #tpu.memory_space<vmem>>, vector<1x256x32xbf16>
    %13 = vector.shape_cast %12 : vector<1x256x32xbf16> to vector<256x32xbf16>
    %cst_12 = arith.constant dense<0.000000e+00> : vector<64x32xf32>
    %14 = tpu.matmul %11, %13, %cst_12 {dimension_numbers = #tpu.dot_dimension_numbers<[1], [0], [0], [1], [0, 0, 1, 1], [], []>} : vector<64x256xbf16>, vector<256x32xbf16>, vector<64x32xf32> -> vector<64x32xf32>
    %15 = arith.addf %8, %14 : vector<64x32xf32>
    %16 = vector.broadcast %0 : vector<1x32xf32> to vector<64x32xf32>
    %17 = arith.addf %15, %16 : vector<64x32xf32>
    %cst_13 = arith.constant 0.000000e+00 : f32
    %18 = vector.broadcast %cst_13 : f32 to vector<64x32xf32>
    %19 = arith.maximumf %17, %18 : vector<64x32xf32>
    %20 = arith.truncf %19 : vector<64x32xf32> to vector<64x32xbf16>
    %c0_14 = arith.constant 0 : index
    %c0_15 = arith.constant 0 : index
    %c0_16 = arith.constant 0 : index
    %21 = vector.load %arg4[%c0_14, %c0_15, %c0_16] : memref<2x64x32xbf16, #tpu.memory_space<vmem>>, vector<1x64x32xbf16>
    %22 = vector.shape_cast %21 : vector<1x64x32xbf16> to vector<64x32xbf16>
    %23 = vector.shape_cast %20 : vector<64x32xbf16> to vector<1x64x32xbf16>
    tpu.vector_store %arg4[%c0_14, %c0_15, %c0_16], %23 {strides = array<i32>} : memref<2x64x32xbf16, #tpu.memory_space<vmem>>, vector<1x64x32xbf16>,
    %cst_17 = arith.constant 0.000000e+00 : f32
    %24 = vector.broadcast %cst_17 : f32 to vector<64x32xf32>
    %c1_18 = arith.constant 1 : index
    %c0_19 = arith.constant 0 : index
    %c0_20 = arith.constant 0 : index
    %25 = vector.load %arg1[%c1_18, %c0_19, %c0_20] : memref<2x72x256xf32, #tpu.memory_space<vmem>>, vector<1x64x256xf32>
    %26 = vector.shape_cast %25 : vector<1x64x256xf32> to vector<64x256xf32>
    %27 = arith.truncf %26 : vector<64x256xf32> to vector<64x256xbf16>
    %c0_21 = arith.constant 0 : index
    %c0_22 = arith.constant 0 : index
    %c0_23 = arith.constant 0 : index
    %28 = vector.load %arg2[%c0_21, %c0_22, %c0_23] : memref<2x256x32xbf16, #tpu.memory_space<vmem>>, vector<1x256x32xbf16>
    %29 = vector.shape_cast %28 : vector<1x256x32xbf16> to vector<256x32xbf16>
    %cst_24 = arith.constant dense<0.000000e+00> : vector<64x32xf32>
    %30 = tpu.matmul %27, %29, %cst_24 {dimension_numbers = #tpu.dot_dimension_numbers<[1], [0], [0], [1], [0, 0, 1, 1], [], []>} : vector<64x256xbf16>, vector<256x32xbf16>, vector<64x32xf32> -> vector<64x32xf32>
    %31 = arith.addf %24, %30 : vector<64x32xf32>
    %c1_25 = arith.constant 1 : index
    %c8_26 = arith.constant 8 : index
    %c0_27 = arith.constant 0 : index
    %32 = vector.load %arg1[%c1_25, %c8_26, %c0_27] : memref<2x72x256xf32, #tpu.memory_space<vmem>>, vector<1x64x256xf32>
    %33 = vector.shape_cast %32 : vector<1x64x256xf32> to vector<64x256xf32>
    %34 = arith.truncf %33 : vector<64x256xf32> to vector<64x256xbf16>
    %c1_28 = arith.constant 1 : index
    %c0_29 = arith.constant 0 : index
    %c0_30 = arith.constant 0 : index
    %35 = vector.load %arg2[%c1_28, %c0_29, %c0_30] : memref<2x256x32xbf16, #tpu.memory_space<vmem>>, vector<1x256x32xbf16>
    %36 = vector.shape_cast %35 : vector<1x256x32xbf16> to vector<256x32xbf16>
    %cst_31 = arith.constant dense<0.000000e+00> : vector<64x32xf32>
    %37 = tpu.matmul %34, %36, %cst_31 {dimension_numbers = #tpu.dot_dimension_numbers<[1], [0], [0], [1], [0, 0, 1, 1], [], []>} : vector<64x256xbf16>, vector<256x32xbf16>, vector<64x32xf32> -> vector<64x32xf32>
    %38 = arith.addf %31, %37 : vector<64x32xf32>
    %39 = vector.broadcast %0 : vector<1x32xf32> to vector<64x32xf32>
    %40 = arith.addf %38, %39 : vector<64x32xf32>
    %cst_32 = arith.constant 0.000000e+00 : f32
    %41 = vector.broadcast %cst_32 : f32 to vector<64x32xf32>
    %42 = arith.maximumf %40, %41 : vector<64x32xf32>
    %43 = arith.truncf %42 : vector<64x32xf32> to vector<64x32xbf16>
    %c1_33 = arith.constant 1 : index
    %c0_34 = arith.constant 0 : index
    %c0_35 = arith.constant 0 : index
    %44 = vector.load %arg4[%c1_33, %c0_34, %c0_35] : memref<2x64x32xbf16, #tpu.memory_space<vmem>>, vector<1x64x32xbf16>
    %45 = vector.shape_cast %44 : vector<1x64x32xbf16> to vector<64x32xbf16>
    %46 = vector.shape_cast %43 : vector<64x32xbf16> to vector<1x64x32xbf16>
    tpu.vector_store %arg4[%c1_33, %c0_34, %c0_35], %46 {strides = array<i32>} : memref<2x64x32xbf16, #tpu.memory_space<vmem>>, vector<1x64x32xbf16>,
    return
  }
  func.func @transform_0(%arg0: i32) -> (i32, i32, i32) {
    %c0_i32 = arith.constant 0 : i32
    %c0_i32_0 = arith.constant 0 : i32
    %c0_i32_1 = arith.constant 0 : i32
    return %arg0, %c0_i32, %c0_i32_0 : i32, i32, i32
  }
  func.func @transform_1(%arg0: i32) -> (i32, i32, i32) {
    %c0_i32 = arith.constant 0 : i32
    %c0_i32_0 = arith.constant 0 : i32
    %c0_i32_1 = arith.constant 0 : i32
    %c0_i32_2 = arith.constant 0 : i32
    return %c0_i32, %c0_i32_0, %c0_i32_1 : i32, i32, i32
  }
  func.func @transform_2(%arg0: i32) -> (i32, i32) {
    %c0_i32 = arith.constant 0 : i32
    %c0_i32_0 = arith.constant 0 : i32
    %c0_i32_1 = arith.constant 0 : i32
    return %c0_i32, %c0_i32_0 : i32, i32
  }
  func.func @transform_3(%arg0: i32) -> (i32, i32, i32) {
    %c0_i32 = arith.constant 0 : i32
    %c0_i32_0 = arith.constant 0 : i32
    %c0_i32_1 = arith.constant 0 : i32
    return %arg0, %c0_i32, %c0_i32_0 : i32, i32, i32
  }
}

module attributes {stable_mosaic.version = 11 : i64} {
  func.func @_head_kernel(%arg0: i32, %arg1: memref<16x8x512xbf16, #tpu.memory_space<vmem>>, %arg2: memref<512x32xbf16, #tpu.memory_space<vmem>>, %arg3: memref<1x32xf32, #tpu.memory_space<vmem>>, %arg4: memref<16x32x256xbf16, #tpu.memory_space<vmem>>, %arg5: memref<1x256xf32, #tpu.memory_space<vmem>>, %arg6: memref<256x128xbf16, #tpu.memory_space<vmem>>, %arg7: memref<1x128xf32, #tpu.memory_space<vmem>>, %arg8: memref<8x128xf32, #tpu.memory_space<vmem>>) attributes {dimension_semantics = [#tpu.dimension_semantics<parallel>], iteration_bounds = array<i64: 1>, scalar_prefetch = 0 : i64, scratch_operands = 0 : i64, tpu.core_type = #tpu.core_type<tc>, window_params = [{transform_indices = @transform_0, window_bounds = array<i64: 16, 8, 512>}, {pipeline_mode = #tpu.pipeline_mode<synchronous>, transform_indices = @transform_1, window_bounds = array<i64: 512, 32>}, {pipeline_mode = #tpu.pipeline_mode<synchronous>, transform_indices = @transform_2, window_bounds = array<i64: 1, 32>}, {pipeline_mode = #tpu.pipeline_mode<synchronous>, transform_indices = @transform_3, window_bounds = array<i64: 16, 32, 256>}, {pipeline_mode = #tpu.pipeline_mode<synchronous>, transform_indices = @transform_4, window_bounds = array<i64: 1, 256>}, {pipeline_mode = #tpu.pipeline_mode<synchronous>, transform_indices = @transform_5, window_bounds = array<i64: 256, 128>}, {pipeline_mode = #tpu.pipeline_mode<synchronous>, transform_indices = @transform_6, window_bounds = array<i64: 1, 128>}, {transform_indices = @transform_7, window_bounds = array<i64: 8, 128>}]} {
    %cst = arith.constant 0.000000e+00 : f32
    %0 = vector.broadcast %cst : f32 to vector<8x256xf32>
    %c0 = arith.constant 0 : index
    %c0_0 = arith.constant 0 : index
    %1 = vector.load %arg3[%c0, %c0_0] : memref<1x32xf32, #tpu.memory_space<vmem>>, vector<1x32xf32>
    %c0_1 = arith.constant 0 : index
    %c0_2 = arith.constant 0 : index
    %c0_3 = arith.constant 0 : index
    %2 = vector.load %arg1[%c0_1, %c0_2, %c0_3] : memref<16x8x512xbf16, #tpu.memory_space<vmem>>, vector<1x8x512xbf16>
    %3 = vector.shape_cast %2 : vector<1x8x512xbf16> to vector<8x512xbf16>
    %c0_4 = arith.constant 0 : index
    %c0_5 = arith.constant 0 : index
    %4 = vector.load %arg2[%c0_4, %c0_5] : memref<512x32xbf16, #tpu.memory_space<vmem>>, vector<512x32xbf16>
    %cst_6 = arith.constant dense<0.000000e+00> : vector<8x32xf32>
    %5 = tpu.matmul %3, %4, %cst_6 {dimension_numbers = #tpu.dot_dimension_numbers<[1], [0], [0], [1], [0, 0, 1, 1], [], []>} : vector<8x512xbf16>, vector<512x32xbf16>, vector<8x32xf32> -> vector<8x32xf32>
    %6 = vector.broadcast %1 : vector<1x32xf32> to vector<8x32xf32>
    %7 = arith.addf %5, %6 : vector<8x32xf32>
    %cst_7 = arith.constant 0.000000e+00 : f32
    %8 = vector.broadcast %cst_7 : f32 to vector<8x32xf32>
    %9 = arith.maximumf %7, %8 : vector<8x32xf32>
    %10 = arith.truncf %9 : vector<8x32xf32> to vector<8x32xbf16>
    %c0_8 = arith.constant 0 : index
    %c0_9 = arith.constant 0 : index
    %c0_10 = arith.constant 0 : index
    %11 = vector.load %arg4[%c0_8, %c0_9, %c0_10] : memref<16x32x256xbf16, #tpu.memory_space<vmem>>, vector<1x32x256xbf16>
    %12 = vector.shape_cast %11 : vector<1x32x256xbf16> to vector<32x256xbf16>
    %cst_11 = arith.constant dense<0.000000e+00> : vector<8x256xf32>
    %13 = tpu.matmul %10, %12, %cst_11 {dimension_numbers = #tpu.dot_dimension_numbers<[1], [0], [0], [1], [0, 0, 1, 1], [], []>} : vector<8x32xbf16>, vector<32x256xbf16>, vector<8x256xf32> -> vector<8x256xf32>
    %14 = arith.addf %0, %13 : vector<8x256xf32>
    %c1 = arith.constant 1 : index
    %c0_12 = arith.constant 0 : index
    %c0_13 = arith.constant 0 : index
    %15 = vector.load %arg1[%c1, %c0_12, %c0_13] : memref<16x8x512xbf16, #tpu.memory_space<vmem>>, vector<1x8x512xbf16>
    %16 = vector.shape_cast %15 : vector<1x8x512xbf16> to vector<8x512xbf16>
    %c0_14 = arith.constant 0 : index
    %c0_15 = arith.constant 0 : index
    %17 = vector.load %arg2[%c0_14, %c0_15] : memref<512x32xbf16, #tpu.memory_space<vmem>>, vector<512x32xbf16>
    %cst_16 = arith.constant dense<0.000000e+00> : vector<8x32xf32>
    %18 = tpu.matmul %16, %17, %cst_16 {dimension_numbers = #tpu.dot_dimension_numbers<[1], [0], [0], [1], [0, 0, 1, 1], [], []>} : vector<8x512xbf16>, vector<512x32xbf16>, vector<8x32xf32> -> vector<8x32xf32>
    %19 = vector.broadcast %1 : vector<1x32xf32> to vector<8x32xf32>
    %20 = arith.addf %18, %19 : vector<8x32xf32>
    %cst_17 = arith.constant 0.000000e+00 : f32
    %21 = vector.broadcast %cst_17 : f32 to vector<8x32xf32>
    %22 = arith.maximumf %20, %21 : vector<8x32xf32>
    %23 = arith.truncf %22 : vector<8x32xf32> to vector<8x32xbf16>
    %c1_18 = arith.constant 1 : index
    %c0_19 = arith.constant 0 : index
    %c0_20 = arith.constant 0 : index
    %24 = vector.load %arg4[%c1_18, %c0_19, %c0_20] : memref<16x32x256xbf16, #tpu.memory_space<vmem>>, vector<1x32x256xbf16>
    %25 = vector.shape_cast %24 : vector<1x32x256xbf16> to vector<32x256xbf16>
    %cst_21 = arith.constant dense<0.000000e+00> : vector<8x256xf32>
    %26 = tpu.matmul %23, %25, %cst_21 {dimension_numbers = #tpu.dot_dimension_numbers<[1], [0], [0], [1], [0, 0, 1, 1], [], []>} : vector<8x32xbf16>, vector<32x256xbf16>, vector<8x256xf32> -> vector<8x256xf32>
    %27 = arith.addf %14, %26 : vector<8x256xf32>
    %c2 = arith.constant 2 : index
    %c0_22 = arith.constant 0 : index
    %c0_23 = arith.constant 0 : index
    %28 = vector.load %arg1[%c2, %c0_22, %c0_23] : memref<16x8x512xbf16, #tpu.memory_space<vmem>>, vector<1x8x512xbf16>
    %29 = vector.shape_cast %28 : vector<1x8x512xbf16> to vector<8x512xbf16>
    %c0_24 = arith.constant 0 : index
    %c0_25 = arith.constant 0 : index
    %30 = vector.load %arg2[%c0_24, %c0_25] : memref<512x32xbf16, #tpu.memory_space<vmem>>, vector<512x32xbf16>
    %cst_26 = arith.constant dense<0.000000e+00> : vector<8x32xf32>
    %31 = tpu.matmul %29, %30, %cst_26 {dimension_numbers = #tpu.dot_dimension_numbers<[1], [0], [0], [1], [0, 0, 1, 1], [], []>} : vector<8x512xbf16>, vector<512x32xbf16>, vector<8x32xf32> -> vector<8x32xf32>
    %32 = vector.broadcast %1 : vector<1x32xf32> to vector<8x32xf32>
    %33 = arith.addf %31, %32 : vector<8x32xf32>
    %cst_27 = arith.constant 0.000000e+00 : f32
    %34 = vector.broadcast %cst_27 : f32 to vector<8x32xf32>
    %35 = arith.maximumf %33, %34 : vector<8x32xf32>
    %36 = arith.truncf %35 : vector<8x32xf32> to vector<8x32xbf16>
    %c2_28 = arith.constant 2 : index
    %c0_29 = arith.constant 0 : index
    %c0_30 = arith.constant 0 : index
    %37 = vector.load %arg4[%c2_28, %c0_29, %c0_30] : memref<16x32x256xbf16, #tpu.memory_space<vmem>>, vector<1x32x256xbf16>
    %38 = vector.shape_cast %37 : vector<1x32x256xbf16> to vector<32x256xbf16>
    %cst_31 = arith.constant dense<0.000000e+00> : vector<8x256xf32>
    %39 = tpu.matmul %36, %38, %cst_31 {dimension_numbers = #tpu.dot_dimension_numbers<[1], [0], [0], [1], [0, 0, 1, 1], [], []>} : vector<8x32xbf16>, vector<32x256xbf16>, vector<8x256xf32> -> vector<8x256xf32>
    %40 = arith.addf %27, %39 : vector<8x256xf32>
    %c3 = arith.constant 3 : index
    %c0_32 = arith.constant 0 : index
    %c0_33 = arith.constant 0 : index
    %41 = vector.load %arg1[%c3, %c0_32, %c0_33] : memref<16x8x512xbf16, #tpu.memory_space<vmem>>, vector<1x8x512xbf16>
    %42 = vector.shape_cast %41 : vector<1x8x512xbf16> to vector<8x512xbf16>
    %c0_34 = arith.constant 0 : index
    %c0_35 = arith.constant 0 : index
    %43 = vector.load %arg2[%c0_34, %c0_35] : memref<512x32xbf16, #tpu.memory_space<vmem>>, vector<512x32xbf16>
    %cst_36 = arith.constant dense<0.000000e+00> : vector<8x32xf32>
    %44 = tpu.matmul %42, %43, %cst_36 {dimension_numbers = #tpu.dot_dimension_numbers<[1], [0], [0], [1], [0, 0, 1, 1], [], []>} : vector<8x512xbf16>, vector<512x32xbf16>, vector<8x32xf32> -> vector<8x32xf32>
    %45 = vector.broadcast %1 : vector<1x32xf32> to vector<8x32xf32>
    %46 = arith.addf %44, %45 : vector<8x32xf32>
    %cst_37 = arith.constant 0.000000e+00 : f32
    %47 = vector.broadcast %cst_37 : f32 to vector<8x32xf32>
    %48 = arith.maximumf %46, %47 : vector<8x32xf32>
    %49 = arith.truncf %48 : vector<8x32xf32> to vector<8x32xbf16>
    %c3_38 = arith.constant 3 : index
    %c0_39 = arith.constant 0 : index
    %c0_40 = arith.constant 0 : index
    %50 = vector.load %arg4[%c3_38, %c0_39, %c0_40] : memref<16x32x256xbf16, #tpu.memory_space<vmem>>, vector<1x32x256xbf16>
    %51 = vector.shape_cast %50 : vector<1x32x256xbf16> to vector<32x256xbf16>
    %cst_41 = arith.constant dense<0.000000e+00> : vector<8x256xf32>
    %52 = tpu.matmul %49, %51, %cst_41 {dimension_numbers = #tpu.dot_dimension_numbers<[1], [0], [0], [1], [0, 0, 1, 1], [], []>} : vector<8x32xbf16>, vector<32x256xbf16>, vector<8x256xf32> -> vector<8x256xf32>
    %53 = arith.addf %40, %52 : vector<8x256xf32>
    %c4 = arith.constant 4 : index
    %c0_42 = arith.constant 0 : index
    %c0_43 = arith.constant 0 : index
    %54 = vector.load %arg1[%c4, %c0_42, %c0_43] : memref<16x8x512xbf16, #tpu.memory_space<vmem>>, vector<1x8x512xbf16>
    %55 = vector.shape_cast %54 : vector<1x8x512xbf16> to vector<8x512xbf16>
    %c0_44 = arith.constant 0 : index
    %c0_45 = arith.constant 0 : index
    %56 = vector.load %arg2[%c0_44, %c0_45] : memref<512x32xbf16, #tpu.memory_space<vmem>>, vector<512x32xbf16>
    %cst_46 = arith.constant dense<0.000000e+00> : vector<8x32xf32>
    %57 = tpu.matmul %55, %56, %cst_46 {dimension_numbers = #tpu.dot_dimension_numbers<[1], [0], [0], [1], [0, 0, 1, 1], [], []>} : vector<8x512xbf16>, vector<512x32xbf16>, vector<8x32xf32> -> vector<8x32xf32>
    %58 = vector.broadcast %1 : vector<1x32xf32> to vector<8x32xf32>
    %59 = arith.addf %57, %58 : vector<8x32xf32>
    %cst_47 = arith.constant 0.000000e+00 : f32
    %60 = vector.broadcast %cst_47 : f32 to vector<8x32xf32>
    %61 = arith.maximumf %59, %60 : vector<8x32xf32>
    %62 = arith.truncf %61 : vector<8x32xf32> to vector<8x32xbf16>
    %c4_48 = arith.constant 4 : index
    %c0_49 = arith.constant 0 : index
    %c0_50 = arith.constant 0 : index
    %63 = vector.load %arg4[%c4_48, %c0_49, %c0_50] : memref<16x32x256xbf16, #tpu.memory_space<vmem>>, vector<1x32x256xbf16>
    %64 = vector.shape_cast %63 : vector<1x32x256xbf16> to vector<32x256xbf16>
    %cst_51 = arith.constant dense<0.000000e+00> : vector<8x256xf32>
    %65 = tpu.matmul %62, %64, %cst_51 {dimension_numbers = #tpu.dot_dimension_numbers<[1], [0], [0], [1], [0, 0, 1, 1], [], []>} : vector<8x32xbf16>, vector<32x256xbf16>, vector<8x256xf32> -> vector<8x256xf32>
    %66 = arith.addf %53, %65 : vector<8x256xf32>
    %c5 = arith.constant 5 : index
    %c0_52 = arith.constant 0 : index
    %c0_53 = arith.constant 0 : index
    %67 = vector.load %arg1[%c5, %c0_52, %c0_53] : memref<16x8x512xbf16, #tpu.memory_space<vmem>>, vector<1x8x512xbf16>
    %68 = vector.shape_cast %67 : vector<1x8x512xbf16> to vector<8x512xbf16>
    %c0_54 = arith.constant 0 : index
    %c0_55 = arith.constant 0 : index
    %69 = vector.load %arg2[%c0_54, %c0_55] : memref<512x32xbf16, #tpu.memory_space<vmem>>, vector<512x32xbf16>
    %cst_56 = arith.constant dense<0.000000e+00> : vector<8x32xf32>
    %70 = tpu.matmul %68, %69, %cst_56 {dimension_numbers = #tpu.dot_dimension_numbers<[1], [0], [0], [1], [0, 0, 1, 1], [], []>} : vector<8x512xbf16>, vector<512x32xbf16>, vector<8x32xf32> -> vector<8x32xf32>
    %71 = vector.broadcast %1 : vector<1x32xf32> to vector<8x32xf32>
    %72 = arith.addf %70, %71 : vector<8x32xf32>
    %cst_57 = arith.constant 0.000000e+00 : f32
    %73 = vector.broadcast %cst_57 : f32 to vector<8x32xf32>
    %74 = arith.maximumf %72, %73 : vector<8x32xf32>
    %75 = arith.truncf %74 : vector<8x32xf32> to vector<8x32xbf16>
    %c5_58 = arith.constant 5 : index
    %c0_59 = arith.constant 0 : index
    %c0_60 = arith.constant 0 : index
    %76 = vector.load %arg4[%c5_58, %c0_59, %c0_60] : memref<16x32x256xbf16, #tpu.memory_space<vmem>>, vector<1x32x256xbf16>
    %77 = vector.shape_cast %76 : vector<1x32x256xbf16> to vector<32x256xbf16>
    %cst_61 = arith.constant dense<0.000000e+00> : vector<8x256xf32>
    %78 = tpu.matmul %75, %77, %cst_61 {dimension_numbers = #tpu.dot_dimension_numbers<[1], [0], [0], [1], [0, 0, 1, 1], [], []>} : vector<8x32xbf16>, vector<32x256xbf16>, vector<8x256xf32> -> vector<8x256xf32>
    %79 = arith.addf %66, %78 : vector<8x256xf32>
    %c6 = arith.constant 6 : index
    %c0_62 = arith.constant 0 : index
    %c0_63 = arith.constant 0 : index
    %80 = vector.load %arg1[%c6, %c0_62, %c0_63] : memref<16x8x512xbf16, #tpu.memory_space<vmem>>, vector<1x8x512xbf16>
    %81 = vector.shape_cast %80 : vector<1x8x512xbf16> to vector<8x512xbf16>
    %c0_64 = arith.constant 0 : index
    %c0_65 = arith.constant 0 : index
    %82 = vector.load %arg2[%c0_64, %c0_65] : memref<512x32xbf16, #tpu.memory_space<vmem>>, vector<512x32xbf16>
    %cst_66 = arith.constant dense<0.000000e+00> : vector<8x32xf32>
    %83 = tpu.matmul %81, %82, %cst_66 {dimension_numbers = #tpu.dot_dimension_numbers<[1], [0], [0], [1], [0, 0, 1, 1], [], []>} : vector<8x512xbf16>, vector<512x32xbf16>, vector<8x32xf32> -> vector<8x32xf32>
    %84 = vector.broadcast %1 : vector<1x32xf32> to vector<8x32xf32>
    %85 = arith.addf %83, %84 : vector<8x32xf32>
    %cst_67 = arith.constant 0.000000e+00 : f32
    %86 = vector.broadcast %cst_67 : f32 to vector<8x32xf32>
    %87 = arith.maximumf %85, %86 : vector<8x32xf32>
    %88 = arith.truncf %87 : vector<8x32xf32> to vector<8x32xbf16>
    %c6_68 = arith.constant 6 : index
    %c0_69 = arith.constant 0 : index
    %c0_70 = arith.constant 0 : index
    %89 = vector.load %arg4[%c6_68, %c0_69, %c0_70] : memref<16x32x256xbf16, #tpu.memory_space<vmem>>, vector<1x32x256xbf16>
    %90 = vector.shape_cast %89 : vector<1x32x256xbf16> to vector<32x256xbf16>
    %cst_71 = arith.constant dense<0.000000e+00> : vector<8x256xf32>
    %91 = tpu.matmul %88, %90, %cst_71 {dimension_numbers = #tpu.dot_dimension_numbers<[1], [0], [0], [1], [0, 0, 1, 1], [], []>} : vector<8x32xbf16>, vector<32x256xbf16>, vector<8x256xf32> -> vector<8x256xf32>
    %92 = arith.addf %79, %91 : vector<8x256xf32>
    %c7 = arith.constant 7 : index
    %c0_72 = arith.constant 0 : index
    %c0_73 = arith.constant 0 : index
    %93 = vector.load %arg1[%c7, %c0_72, %c0_73] : memref<16x8x512xbf16, #tpu.memory_space<vmem>>, vector<1x8x512xbf16>
    %94 = vector.shape_cast %93 : vector<1x8x512xbf16> to vector<8x512xbf16>
    %c0_74 = arith.constant 0 : index
    %c0_75 = arith.constant 0 : index
    %95 = vector.load %arg2[%c0_74, %c0_75] : memref<512x32xbf16, #tpu.memory_space<vmem>>, vector<512x32xbf16>
    %cst_76 = arith.constant dense<0.000000e+00> : vector<8x32xf32>
    %96 = tpu.matmul %94, %95, %cst_76 {dimension_numbers = #tpu.dot_dimension_numbers<[1], [0], [0], [1], [0, 0, 1, 1], [], []>} : vector<8x512xbf16>, vector<512x32xbf16>, vector<8x32xf32> -> vector<8x32xf32>
    %97 = vector.broadcast %1 : vector<1x32xf32> to vector<8x32xf32>
    %98 = arith.addf %96, %97 : vector<8x32xf32>
    %cst_77 = arith.constant 0.000000e+00 : f32
    %99 = vector.broadcast %cst_77 : f32 to vector<8x32xf32>
    %100 = arith.maximumf %98, %99 : vector<8x32xf32>
    %101 = arith.truncf %100 : vector<8x32xf32> to vector<8x32xbf16>
    %c7_78 = arith.constant 7 : index
    %c0_79 = arith.constant 0 : index
    %c0_80 = arith.constant 0 : index
    %102 = vector.load %arg4[%c7_78, %c0_79, %c0_80] : memref<16x32x256xbf16, #tpu.memory_space<vmem>>, vector<1x32x256xbf16>
    %103 = vector.shape_cast %102 : vector<1x32x256xbf16> to vector<32x256xbf16>
    %cst_81 = arith.constant dense<0.000000e+00> : vector<8x256xf32>
    %104 = tpu.matmul %101, %103, %cst_81 {dimension_numbers = #tpu.dot_dimension_numbers<[1], [0], [0], [1], [0, 0, 1, 1], [], []>} : vector<8x32xbf16>, vector<32x256xbf16>, vector<8x256xf32> -> vector<8x256xf32>
    %105 = arith.addf %92, %104 : vector<8x256xf32>
    %c8 = arith.constant 8 : index
    %c0_82 = arith.constant 0 : index
    %c0_83 = arith.constant 0 : index
    %106 = vector.load %arg1[%c8, %c0_82, %c0_83] : memref<16x8x512xbf16, #tpu.memory_space<vmem>>, vector<1x8x512xbf16>
    %107 = vector.shape_cast %106 : vector<1x8x512xbf16> to vector<8x512xbf16>
    %c0_84 = arith.constant 0 : index
    %c0_85 = arith.constant 0 : index
    %108 = vector.load %arg2[%c0_84, %c0_85] : memref<512x32xbf16, #tpu.memory_space<vmem>>, vector<512x32xbf16>
    %cst_86 = arith.constant dense<0.000000e+00> : vector<8x32xf32>
    %109 = tpu.matmul %107, %108, %cst_86 {dimension_numbers = #tpu.dot_dimension_numbers<[1], [0], [0], [1], [0, 0, 1, 1], [], []>} : vector<8x512xbf16>, vector<512x32xbf16>, vector<8x32xf32> -> vector<8x32xf32>
    %110 = vector.broadcast %1 : vector<1x32xf32> to vector<8x32xf32>
    %111 = arith.addf %109, %110 : vector<8x32xf32>
    %cst_87 = arith.constant 0.000000e+00 : f32
    %112 = vector.broadcast %cst_87 : f32 to vector<8x32xf32>
    %113 = arith.maximumf %111, %112 : vector<8x32xf32>
    %114 = arith.truncf %113 : vector<8x32xf32> to vector<8x32xbf16>
    %c8_88 = arith.constant 8 : index
    %c0_89 = arith.constant 0 : index
    %c0_90 = arith.constant 0 : index
    %115 = vector.load %arg4[%c8_88, %c0_89, %c0_90] : memref<16x32x256xbf16, #tpu.memory_space<vmem>>, vector<1x32x256xbf16>
    %116 = vector.shape_cast %115 : vector<1x32x256xbf16> to vector<32x256xbf16>
    %cst_91 = arith.constant dense<0.000000e+00> : vector<8x256xf32>
    %117 = tpu.matmul %114, %116, %cst_91 {dimension_numbers = #tpu.dot_dimension_numbers<[1], [0], [0], [1], [0, 0, 1, 1], [], []>} : vector<8x32xbf16>, vector<32x256xbf16>, vector<8x256xf32> -> vector<8x256xf32>
    %118 = arith.addf %105, %117 : vector<8x256xf32>
    %c9 = arith.constant 9 : index
    %c0_92 = arith.constant 0 : index
    %c0_93 = arith.constant 0 : index
    %119 = vector.load %arg1[%c9, %c0_92, %c0_93] : memref<16x8x512xbf16, #tpu.memory_space<vmem>>, vector<1x8x512xbf16>
    %120 = vector.shape_cast %119 : vector<1x8x512xbf16> to vector<8x512xbf16>
    %c0_94 = arith.constant 0 : index
    %c0_95 = arith.constant 0 : index
    %121 = vector.load %arg2[%c0_94, %c0_95] : memref<512x32xbf16, #tpu.memory_space<vmem>>, vector<512x32xbf16>
    %cst_96 = arith.constant dense<0.000000e+00> : vector<8x32xf32>
    %122 = tpu.matmul %120, %121, %cst_96 {dimension_numbers = #tpu.dot_dimension_numbers<[1], [0], [0], [1], [0, 0, 1, 1], [], []>} : vector<8x512xbf16>, vector<512x32xbf16>, vector<8x32xf32> -> vector<8x32xf32>
    %123 = vector.broadcast %1 : vector<1x32xf32> to vector<8x32xf32>
    %124 = arith.addf %122, %123 : vector<8x32xf32>
    %cst_97 = arith.constant 0.000000e+00 : f32
    %125 = vector.broadcast %cst_97 : f32 to vector<8x32xf32>
    %126 = arith.maximumf %124, %125 : vector<8x32xf32>
    %127 = arith.truncf %126 : vector<8x32xf32> to vector<8x32xbf16>
    %c9_98 = arith.constant 9 : index
    %c0_99 = arith.constant 0 : index
    %c0_100 = arith.constant 0 : index
    %128 = vector.load %arg4[%c9_98, %c0_99, %c0_100] : memref<16x32x256xbf16, #tpu.memory_space<vmem>>, vector<1x32x256xbf16>
    %129 = vector.shape_cast %128 : vector<1x32x256xbf16> to vector<32x256xbf16>
    %cst_101 = arith.constant dense<0.000000e+00> : vector<8x256xf32>
    %130 = tpu.matmul %127, %129, %cst_101 {dimension_numbers = #tpu.dot_dimension_numbers<[1], [0], [0], [1], [0, 0, 1, 1], [], []>} : vector<8x32xbf16>, vector<32x256xbf16>, vector<8x256xf32> -> vector<8x256xf32>
    %131 = arith.addf %118, %130 : vector<8x256xf32>
    %c10 = arith.constant 10 : index
    %c0_102 = arith.constant 0 : index
    %c0_103 = arith.constant 0 : index
    %132 = vector.load %arg1[%c10, %c0_102, %c0_103] : memref<16x8x512xbf16, #tpu.memory_space<vmem>>, vector<1x8x512xbf16>
    %133 = vector.shape_cast %132 : vector<1x8x512xbf16> to vector<8x512xbf16>
    %c0_104 = arith.constant 0 : index
    %c0_105 = arith.constant 0 : index
    %134 = vector.load %arg2[%c0_104, %c0_105] : memref<512x32xbf16, #tpu.memory_space<vmem>>, vector<512x32xbf16>
    %cst_106 = arith.constant dense<0.000000e+00> : vector<8x32xf32>
    %135 = tpu.matmul %133, %134, %cst_106 {dimension_numbers = #tpu.dot_dimension_numbers<[1], [0], [0], [1], [0, 0, 1, 1], [], []>} : vector<8x512xbf16>, vector<512x32xbf16>, vector<8x32xf32> -> vector<8x32xf32>
    %136 = vector.broadcast %1 : vector<1x32xf32> to vector<8x32xf32>
    %137 = arith.addf %135, %136 : vector<8x32xf32>
    %cst_107 = arith.constant 0.000000e+00 : f32
    %138 = vector.broadcast %cst_107 : f32 to vector<8x32xf32>
    %139 = arith.maximumf %137, %138 : vector<8x32xf32>
    %140 = arith.truncf %139 : vector<8x32xf32> to vector<8x32xbf16>
    %c10_108 = arith.constant 10 : index
    %c0_109 = arith.constant 0 : index
    %c0_110 = arith.constant 0 : index
    %141 = vector.load %arg4[%c10_108, %c0_109, %c0_110] : memref<16x32x256xbf16, #tpu.memory_space<vmem>>, vector<1x32x256xbf16>
    %142 = vector.shape_cast %141 : vector<1x32x256xbf16> to vector<32x256xbf16>
    %cst_111 = arith.constant dense<0.000000e+00> : vector<8x256xf32>
    %143 = tpu.matmul %140, %142, %cst_111 {dimension_numbers = #tpu.dot_dimension_numbers<[1], [0], [0], [1], [0, 0, 1, 1], [], []>} : vector<8x32xbf16>, vector<32x256xbf16>, vector<8x256xf32> -> vector<8x256xf32>
    %144 = arith.addf %131, %143 : vector<8x256xf32>
    %c11 = arith.constant 11 : index
    %c0_112 = arith.constant 0 : index
    %c0_113 = arith.constant 0 : index
    %145 = vector.load %arg1[%c11, %c0_112, %c0_113] : memref<16x8x512xbf16, #tpu.memory_space<vmem>>, vector<1x8x512xbf16>
    %146 = vector.shape_cast %145 : vector<1x8x512xbf16> to vector<8x512xbf16>
    %c0_114 = arith.constant 0 : index
    %c0_115 = arith.constant 0 : index
    %147 = vector.load %arg2[%c0_114, %c0_115] : memref<512x32xbf16, #tpu.memory_space<vmem>>, vector<512x32xbf16>
    %cst_116 = arith.constant dense<0.000000e+00> : vector<8x32xf32>
    %148 = tpu.matmul %146, %147, %cst_116 {dimension_numbers = #tpu.dot_dimension_numbers<[1], [0], [0], [1], [0, 0, 1, 1], [], []>} : vector<8x512xbf16>, vector<512x32xbf16>, vector<8x32xf32> -> vector<8x32xf32>
    %149 = vector.broadcast %1 : vector<1x32xf32> to vector<8x32xf32>
    %150 = arith.addf %148, %149 : vector<8x32xf32>
    %cst_117 = arith.constant 0.000000e+00 : f32
    %151 = vector.broadcast %cst_117 : f32 to vector<8x32xf32>
    %152 = arith.maximumf %150, %151 : vector<8x32xf32>
    %153 = arith.truncf %152 : vector<8x32xf32> to vector<8x32xbf16>
    %c11_118 = arith.constant 11 : index
    %c0_119 = arith.constant 0 : index
    %c0_120 = arith.constant 0 : index
    %154 = vector.load %arg4[%c11_118, %c0_119, %c0_120] : memref<16x32x256xbf16, #tpu.memory_space<vmem>>, vector<1x32x256xbf16>
    %155 = vector.shape_cast %154 : vector<1x32x256xbf16> to vector<32x256xbf16>
    %cst_121 = arith.constant dense<0.000000e+00> : vector<8x256xf32>
    %156 = tpu.matmul %153, %155, %cst_121 {dimension_numbers = #tpu.dot_dimension_numbers<[1], [0], [0], [1], [0, 0, 1, 1], [], []>} : vector<8x32xbf16>, vector<32x256xbf16>, vector<8x256xf32> -> vector<8x256xf32>
    %157 = arith.addf %144, %156 : vector<8x256xf32>
    %c12 = arith.constant 12 : index
    %c0_122 = arith.constant 0 : index
    %c0_123 = arith.constant 0 : index
    %158 = vector.load %arg1[%c12, %c0_122, %c0_123] : memref<16x8x512xbf16, #tpu.memory_space<vmem>>, vector<1x8x512xbf16>
    %159 = vector.shape_cast %158 : vector<1x8x512xbf16> to vector<8x512xbf16>
    %c0_124 = arith.constant 0 : index
    %c0_125 = arith.constant 0 : index
    %160 = vector.load %arg2[%c0_124, %c0_125] : memref<512x32xbf16, #tpu.memory_space<vmem>>, vector<512x32xbf16>
    %cst_126 = arith.constant dense<0.000000e+00> : vector<8x32xf32>
    %161 = tpu.matmul %159, %160, %cst_126 {dimension_numbers = #tpu.dot_dimension_numbers<[1], [0], [0], [1], [0, 0, 1, 1], [], []>} : vector<8x512xbf16>, vector<512x32xbf16>, vector<8x32xf32> -> vector<8x32xf32>
    %162 = vector.broadcast %1 : vector<1x32xf32> to vector<8x32xf32>
    %163 = arith.addf %161, %162 : vector<8x32xf32>
    %cst_127 = arith.constant 0.000000e+00 : f32
    %164 = vector.broadcast %cst_127 : f32 to vector<8x32xf32>
    %165 = arith.maximumf %163, %164 : vector<8x32xf32>
    %166 = arith.truncf %165 : vector<8x32xf32> to vector<8x32xbf16>
    %c12_128 = arith.constant 12 : index
    %c0_129 = arith.constant 0 : index
    %c0_130 = arith.constant 0 : index
    %167 = vector.load %arg4[%c12_128, %c0_129, %c0_130] : memref<16x32x256xbf16, #tpu.memory_space<vmem>>, vector<1x32x256xbf16>
    %168 = vector.shape_cast %167 : vector<1x32x256xbf16> to vector<32x256xbf16>
    %cst_131 = arith.constant dense<0.000000e+00> : vector<8x256xf32>
    %169 = tpu.matmul %166, %168, %cst_131 {dimension_numbers = #tpu.dot_dimension_numbers<[1], [0], [0], [1], [0, 0, 1, 1], [], []>} : vector<8x32xbf16>, vector<32x256xbf16>, vector<8x256xf32> -> vector<8x256xf32>
    %170 = arith.addf %157, %169 : vector<8x256xf32>
    %c13 = arith.constant 13 : index
    %c0_132 = arith.constant 0 : index
    %c0_133 = arith.constant 0 : index
    %171 = vector.load %arg1[%c13, %c0_132, %c0_133] : memref<16x8x512xbf16, #tpu.memory_space<vmem>>, vector<1x8x512xbf16>
    %172 = vector.shape_cast %171 : vector<1x8x512xbf16> to vector<8x512xbf16>
    %c0_134 = arith.constant 0 : index
    %c0_135 = arith.constant 0 : index
    %173 = vector.load %arg2[%c0_134, %c0_135] : memref<512x32xbf16, #tpu.memory_space<vmem>>, vector<512x32xbf16>
    %cst_136 = arith.constant dense<0.000000e+00> : vector<8x32xf32>
    %174 = tpu.matmul %172, %173, %cst_136 {dimension_numbers = #tpu.dot_dimension_numbers<[1], [0], [0], [1], [0, 0, 1, 1], [], []>} : vector<8x512xbf16>, vector<512x32xbf16>, vector<8x32xf32> -> vector<8x32xf32>
    %175 = vector.broadcast %1 : vector<1x32xf32> to vector<8x32xf32>
    %176 = arith.addf %174, %175 : vector<8x32xf32>
    %cst_137 = arith.constant 0.000000e+00 : f32
    %177 = vector.broadcast %cst_137 : f32 to vector<8x32xf32>
    %178 = arith.maximumf %176, %177 : vector<8x32xf32>
    %179 = arith.truncf %178 : vector<8x32xf32> to vector<8x32xbf16>
    %c13_138 = arith.constant 13 : index
    %c0_139 = arith.constant 0 : index
    %c0_140 = arith.constant 0 : index
    %180 = vector.load %arg4[%c13_138, %c0_139, %c0_140] : memref<16x32x256xbf16, #tpu.memory_space<vmem>>, vector<1x32x256xbf16>
    %181 = vector.shape_cast %180 : vector<1x32x256xbf16> to vector<32x256xbf16>
    %cst_141 = arith.constant dense<0.000000e+00> : vector<8x256xf32>
    %182 = tpu.matmul %179, %181, %cst_141 {dimension_numbers = #tpu.dot_dimension_numbers<[1], [0], [0], [1], [0, 0, 1, 1], [], []>} : vector<8x32xbf16>, vector<32x256xbf16>, vector<8x256xf32> -> vector<8x256xf32>
    %183 = arith.addf %170, %182 : vector<8x256xf32>
    %c14 = arith.constant 14 : index
    %c0_142 = arith.constant 0 : index
    %c0_143 = arith.constant 0 : index
    %184 = vector.load %arg1[%c14, %c0_142, %c0_143] : memref<16x8x512xbf16, #tpu.memory_space<vmem>>, vector<1x8x512xbf16>
    %185 = vector.shape_cast %184 : vector<1x8x512xbf16> to vector<8x512xbf16>
    %c0_144 = arith.constant 0 : index
    %c0_145 = arith.constant 0 : index
    %186 = vector.load %arg2[%c0_144, %c0_145] : memref<512x32xbf16, #tpu.memory_space<vmem>>, vector<512x32xbf16>
    %cst_146 = arith.constant dense<0.000000e+00> : vector<8x32xf32>
    %187 = tpu.matmul %185, %186, %cst_146 {dimension_numbers = #tpu.dot_dimension_numbers<[1], [0], [0], [1], [0, 0, 1, 1], [], []>} : vector<8x512xbf16>, vector<512x32xbf16>, vector<8x32xf32> -> vector<8x32xf32>
    %188 = vector.broadcast %1 : vector<1x32xf32> to vector<8x32xf32>
    %189 = arith.addf %187, %188 : vector<8x32xf32>
    %cst_147 = arith.constant 0.000000e+00 : f32
    %190 = vector.broadcast %cst_147 : f32 to vector<8x32xf32>
    %191 = arith.maximumf %189, %190 : vector<8x32xf32>
    %192 = arith.truncf %191 : vector<8x32xf32> to vector<8x32xbf16>
    %c14_148 = arith.constant 14 : index
    %c0_149 = arith.constant 0 : index
    %c0_150 = arith.constant 0 : index
    %193 = vector.load %arg4[%c14_148, %c0_149, %c0_150] : memref<16x32x256xbf16, #tpu.memory_space<vmem>>, vector<1x32x256xbf16>
    %194 = vector.shape_cast %193 : vector<1x32x256xbf16> to vector<32x256xbf16>
    %cst_151 = arith.constant dense<0.000000e+00> : vector<8x256xf32>
    %195 = tpu.matmul %192, %194, %cst_151 {dimension_numbers = #tpu.dot_dimension_numbers<[1], [0], [0], [1], [0, 0, 1, 1], [], []>} : vector<8x32xbf16>, vector<32x256xbf16>, vector<8x256xf32> -> vector<8x256xf32>
    %196 = arith.addf %183, %195 : vector<8x256xf32>
    %c15 = arith.constant 15 : index
    %c0_152 = arith.constant 0 : index
    %c0_153 = arith.constant 0 : index
    %197 = vector.load %arg1[%c15, %c0_152, %c0_153] : memref<16x8x512xbf16, #tpu.memory_space<vmem>>, vector<1x8x512xbf16>
    %198 = vector.shape_cast %197 : vector<1x8x512xbf16> to vector<8x512xbf16>
    %c0_154 = arith.constant 0 : index
    %c0_155 = arith.constant 0 : index
    %199 = vector.load %arg2[%c0_154, %c0_155] : memref<512x32xbf16, #tpu.memory_space<vmem>>, vector<512x32xbf16>
    %cst_156 = arith.constant dense<0.000000e+00> : vector<8x32xf32>
    %200 = tpu.matmul %198, %199, %cst_156 {dimension_numbers = #tpu.dot_dimension_numbers<[1], [0], [0], [1], [0, 0, 1, 1], [], []>} : vector<8x512xbf16>, vector<512x32xbf16>, vector<8x32xf32> -> vector<8x32xf32>
    %201 = vector.broadcast %1 : vector<1x32xf32> to vector<8x32xf32>
    %202 = arith.addf %200, %201 : vector<8x32xf32>
    %cst_157 = arith.constant 0.000000e+00 : f32
    %203 = vector.broadcast %cst_157 : f32 to vector<8x32xf32>
    %204 = arith.maximumf %202, %203 : vector<8x32xf32>
    %205 = arith.truncf %204 : vector<8x32xf32> to vector<8x32xbf16>
    %c15_158 = arith.constant 15 : index
    %c0_159 = arith.constant 0 : index
    %c0_160 = arith.constant 0 : index
    %206 = vector.load %arg4[%c15_158, %c0_159, %c0_160] : memref<16x32x256xbf16, #tpu.memory_space<vmem>>, vector<1x32x256xbf16>
    %207 = vector.shape_cast %206 : vector<1x32x256xbf16> to vector<32x256xbf16>
    %cst_161 = arith.constant dense<0.000000e+00> : vector<8x256xf32>
    %208 = tpu.matmul %205, %207, %cst_161 {dimension_numbers = #tpu.dot_dimension_numbers<[1], [0], [0], [1], [0, 0, 1, 1], [], []>} : vector<8x32xbf16>, vector<32x256xbf16>, vector<8x256xf32> -> vector<8x256xf32>
    %209 = arith.addf %196, %208 : vector<8x256xf32>
    %c0_162 = arith.constant 0 : index
    %c0_163 = arith.constant 0 : index
    %210 = vector.load %arg5[%c0_162, %c0_163] : memref<1x256xf32, #tpu.memory_space<vmem>>, vector<1x256xf32>
    %211 = vector.broadcast %210 : vector<1x256xf32> to vector<8x256xf32>
    %212 = arith.addf %209, %211 : vector<8x256xf32>
    %cst_164 = arith.constant 0.000000e+00 : f32
    %213 = vector.broadcast %cst_164 : f32 to vector<8x256xf32>
    %214 = arith.maximumf %212, %213 : vector<8x256xf32>
    %215 = arith.truncf %214 : vector<8x256xf32> to vector<8x256xbf16>
    %c0_165 = arith.constant 0 : index
    %c0_166 = arith.constant 0 : index
    %216 = vector.load %arg6[%c0_165, %c0_166] : memref<256x128xbf16, #tpu.memory_space<vmem>>, vector<256x128xbf16>
    %cst_167 = arith.constant dense<0.000000e+00> : vector<8x128xf32>
    %217 = tpu.matmul %215, %216, %cst_167 {dimension_numbers = #tpu.dot_dimension_numbers<[1], [0], [0], [1], [0, 0, 1, 1], [], []>} : vector<8x256xbf16>, vector<256x128xbf16>, vector<8x128xf32> -> vector<8x128xf32>
    %c0_168 = arith.constant 0 : index
    %c0_169 = arith.constant 0 : index
    %218 = vector.load %arg7[%c0_168, %c0_169] : memref<1x128xf32, #tpu.memory_space<vmem>>, vector<1x128xf32>
    %219 = vector.broadcast %218 : vector<1x128xf32> to vector<8x128xf32>
    %220 = arith.addf %217, %219 : vector<8x128xf32>
    %c0_170 = arith.constant 0 : index
    %c0_171 = arith.constant 0 : index
    %221 = vector.load %arg8[%c0_170, %c0_171] : memref<8x128xf32, #tpu.memory_space<vmem>>, vector<8x128xf32>
    tpu.vector_store %arg8[%c0_170, %c0_171], %220 {strides = array<i32>} : memref<8x128xf32, #tpu.memory_space<vmem>>, vector<8x128xf32>,
    return
  }
  func.func @transform_0(%arg0: i32) -> (i32, i32, i32) {
    %c0_i32 = arith.constant 0 : i32
    %c0_i32_0 = arith.constant 0 : i32
    %c0_i32_1 = arith.constant 0 : i32
    return %c0_i32, %arg0, %c0_i32_0 : i32, i32, i32
  }
  func.func @transform_1(%arg0: i32) -> (i32, i32) {
    %c0_i32 = arith.constant 0 : i32
    %c0_i32_0 = arith.constant 0 : i32
    %c0_i32_1 = arith.constant 0 : i32
    return %c0_i32, %c0_i32_0 : i32, i32
  }
  func.func @transform_2(%arg0: i32) -> (i32, i32) {
    %c0_i32 = arith.constant 0 : i32
    %c0_i32_0 = arith.constant 0 : i32
    %c0_i32_1 = arith.constant 0 : i32
    return %c0_i32, %c0_i32_0 : i32, i32
  }
  func.func @transform_3(%arg0: i32) -> (i32, i32, i32) {
    %c0_i32 = arith.constant 0 : i32
    %c0_i32_0 = arith.constant 0 : i32
    %c0_i32_1 = arith.constant 0 : i32
    %c0_i32_2 = arith.constant 0 : i32
    return %c0_i32, %c0_i32_0, %c0_i32_1 : i32, i32, i32
  }
  func.func @transform_4(%arg0: i32) -> (i32, i32) {
    %c0_i32 = arith.constant 0 : i32
    %c0_i32_0 = arith.constant 0 : i32
    %c0_i32_1 = arith.constant 0 : i32
    return %c0_i32, %c0_i32_0 : i32, i32
  }
  func.func @transform_5(%arg0: i32) -> (i32, i32) {
    %c0_i32 = arith.constant 0 : i32
    %c0_i32_0 = arith.constant 0 : i32
    %c0_i32_1 = arith.constant 0 : i32
    return %c0_i32, %c0_i32_0 : i32, i32
  }
  func.func @transform_6(%arg0: i32) -> (i32, i32) {
    %c0_i32 = arith.constant 0 : i32
    %c0_i32_0 = arith.constant 0 : i32
    %c0_i32_1 = arith.constant 0 : i32
    return %c0_i32, %c0_i32_0 : i32, i32
  }
  func.func @transform_7(%arg0: i32) -> (i32, i32) {
    %c0_i32 = arith.constant 0 : i32
    %c0_i32_0 = arith.constant 0 : i32
    return %arg0, %c0_i32 : i32, i32
  }
}

</mosaic_0001>

<llo_original>
// kernel: cnn_forward.4
$region0: #{cnn_forward.4}
  #allocation0 [shape = 'u32[]', space=smem, size = 0x4, offset = 0x4, fixed_abs, tag = 'smem constant byte address 0x4 - core index']
  #allocation1 [shape = 'u32[144,128]{1,0:T(1,128)}', space=vmem, size = 0x12000, scoped, tag = 'internal scratch']
  %s0 = inlined_call_operand.vmem [shape: bf16[2,1056,24], index: 0, kind: input, shape index: {}]
  %s1 = inlined_call_operand.vmem [shape: bf16[2,24,32], index: 1, kind: input, shape index: {}]
  %s2 = inlined_call_operand.vmem [shape: f32[1,32], index: 2, kind: input, shape index: {}]
  %s3 = inlined_call_operand.vmem [shape: bf16[2,1024,32], index: 3, kind: output, shape index: {}]
  %s4 = sld [smem:[#allocation0]]
  $region45: #{cnn_forward.4} parent=0
    _
  %s6 = ssub.s32 1, %s4
  %s7 = scalar_select 0, %s6, %s4
  loop: start=0, step=1, limit=4
  $region2: #{cnn_forward.4} parent=0 // loop_pre_header
    _
  $region3: #{cnn_forward.4} parent=0 // loop_header
    %s9 = sphi 0, %s13
    %p10 = scmp.ge.s32.totalorder %s9, 4
    %s19 = sphi 0, %s21
    %s22 = sphi 0, %s19
    %s23 = sphi 0, %s22
    %s39 = sphi 0, %s23
    %s43 = sphi 0, %s43
    %s45 = sphi 0, %s43
    %s46 = sphi 0, %s45
    %s60 = sphi 0, %s46
    %s64 = sphi 0, %s64
    %s66 = sphi 0, %s64
    %s67 = sphi 0, %s66
    %s81 = sphi 0, %s67
    %s87 = sphi 0, %s89
    %s90 = sphi 0, %s87
    %s91 = sphi 0, %s90
    %s107 = sphi 0, %s91
  $region4: #{cnn_forward.4} parent=0 // loop_header_branch
    %12 = sbr.rel (%p10) target = $region8
  $region5: #{cnn_forward.4} parent=0 // loop_body
    %s14 = ssub.s32 %s9, 1
    %s15 = ssub.s32 %s9, 2
    %s16 = sadd.s32 %s9, 1
    %s17 = ssub.s32 %s9, %s16
    %p18 = scmp.eq.s32.totalorder %s17, 0
    %s20 = sadd.s32 %s19, 1
    %s21 = scalar_select %p18, %s19, %s20
    %p24 = pneg %p18
    %p25 = scmp.eq.s32.totalorder %s9, 1
    %p26 = por %p24, %p25
    %p27 = scmp.ne.s32.totalorder %s19, %s22
    %p28 = scmp.eq.s32.totalorder %s9, 0
    %p29 = por %p27, %p28
    %p30 = scmp.ne.s32.totalorder %s19, %s22
    %p31 = scmp.eq.s32.totalorder %s14, 1
    %p32 = por %p30, %p31
    %p33 = scmp.ne.s32.totalorder %s22, %s23
    %p34 = scmp.eq.s32.totalorder %s14, 0
    %p35 = por %p33, %p34
    %p36 = scmp.ne.s32.totalorder %s22, %s23
    %p37 = scmp.eq.s32.totalorder %s15, 1
    %p38 = por %p36, %p37
    %p40 = scmp.ne.s32.totalorder %s23, %s39
    %p41 = scmp.eq.s32.totalorder %s15, 0
    %p42 = por %p40, %p41
    %s44 = sadd.s32 %s43, 1
    %p47 = scmp.eq.s32.totalorder %s9, 1
    %p48 = scmp.ne.s32.totalorder %s43, %s45
    %p49 = scmp.eq.s32.totalorder %s9, 0
    %p50 = por %p48, %p49
    %p51 = scmp.ne.s32.totalorder %s43, %s45
    %p52 = scmp.eq.s32.totalorder %s14, 1
    %p53 = por %p51, %p52
    %p54 = scmp.ne.s32.totalorder %s45, %s46
    %p55 = scmp.eq.s32.totalorder %s14, 0
    %p56 = por %p54, %p55
    %p57 = scmp.ne.s32.totalorder %s45, %s46
    %p58 = scmp.eq.s32.totalorder %s15, 1
    %p59 = por %p57, %p58
    %p61 = scmp.ne.s32.totalorder %s46, %s60
    %p62 = scmp.eq.s32.totalorder %s15, 0
    %p63 = por %p61, %p62
    %s65 = sadd.s32 %s64, 1
    %p68 = scmp.eq.s32.totalorder %s9, 1
    %p69 = scmp.ne.s32.totalorder %s64, %s66
    %p70 = scmp.eq.s32.totalorder %s9, 0
    %p71 = por %p69, %p70
    %p72 = scmp.ne.s32.totalorder %s64, %s66
    %p73 = scmp.eq.s32.totalorder %s14, 1
    %p74 = por %p72, %p73
    %p75 = scmp.ne.s32.totalorder %s66, %s67
    %p76 = scmp.eq.s32.totalorder %s14, 0
    %p77 = por %p75, %p76
    %p78 = scmp.ne.s32.totalorder %s66, %s67
    %p79 = scmp.eq.s32.totalorder %s15, 1
    %p80 = por %p78, %p79
    %p82 = scmp.ne.s32.totalorder %s67, %s81
    %p83 = scmp.eq.s32.totalorder %s15, 0
    %p84 = por %p82, %p83
    %s85 = ssub.s32 %s9, %s16
    %p86 = scmp.eq.s32.totalorder %s85, 0
    %s88 = sadd.s32 %s87, 1
    %s89 = scalar_select %p86, %s87, %s88
    %p92 = pneg %p86
    %p93 = scmp.eq.s32.totalorder %s9, 1
    %p94 = por %p92, %p93
    %p95 = scmp.ne.s32.totalorder %s87, %s90
    %p96 = scmp.eq.s32.totalorder %s9, 0
    %p97 = por %p95, %p96
    %p98 = scmp.ne.s32.totalorder %s87, %s90
    %p99 = scmp.eq.s32.totalorder %s14, 1
    %p100 = por %p98, %p99
    %p101 = scmp.ne.s32.totalorder %s90, %s91
    %p102 = scmp.eq.s32.totalorder %s14, 0
    %p103 = por %p101, %p102
    %p104 = scmp.ne.s32.totalorder %s90, %s91
    %p105 = scmp.eq.s32.totalorder %s15, 1
    %p106 = por %p104, %p105
    %p108 = scmp.ne.s32.totalorder %s91, %s107
    %p109 = scmp.eq.s32.totalorder %s15, 0
    %p110 = por %p108, %p109
    %p111 = scmp.le.s32.totalorder 1, %s9
    %p112 = scmp.lt.s32.totalorder %s9, 3
    %p113 = pnand %p111, %p112
    %p114 = pneg %p113
    // Predicated region
    $region9: #{cnn_forward.4} parent=5 // pred_check
      _
    $region10: #{cnn_forward.4} parent=5 // pred_check_branch
      %116 = sbr.rel (%p113) target = $region12
    $region11: #{cnn_forward.4} parent=5 // pred_region
      %s117 = ssub.s32 %s9, 1
      // Predicated region
      $region13: #{cnn_forward.4} parent=11 // pred_check
        %p118 = pneg %p56
      $region14: #{cnn_forward.4} parent=11 // pred_check_branch
        %120 = sbr.rel (%p118) target = $region16
      $region15: #{cnn_forward.4} parent=11 // pred_region
        _
      $region16: #{cnn_forward.4} parent=11 // pred_fallthru
        _
      // Predicated region
      $region17: #{cnn_forward.4} parent=11 // pred_check
        %p121 = pneg %p77
      $region18: #{cnn_forward.4} parent=11 // pred_check_branch
        %123 = sbr.rel (%p121) target = $region20
      $region19: #{cnn_forward.4} parent=11 // pred_region
        _
      $region20: #{cnn_forward.4} parent=11 // pred_fallthru
        _
    $region12: #{cnn_forward.4} parent=5 // pred_fallthru
      _
    %p124 = scmp.lt.s32.totalorder %s9, 2
    // Predicated region
    $region21: #{cnn_forward.4} parent=5 // pred_check
      %p125 = pneg %p124
    $region22: #{cnn_forward.4} parent=5 // pred_check_branch
      %127 = sbr.rel (%p125) target = $region24
    $region23: #{cnn_forward.4} parent=5 // pred_region
      // Predicated region
      $region25: #{cnn_forward.4} parent=23 // pred_check
        %p128 = pneg %p29
      $region26: #{cnn_forward.4} parent=23 // pred_check_branch
        %130 = sbr.rel (%p128) target = $region28
      $region27: #{cnn_forward.4} parent=23 // pred_region
        %p131 = scmp.lt.s32.totalorder %s9, 1
        %s132 = scalar_select %p131, %s9, 1
        %s133 = smul.addr %s132, 132
        %s134 = smul.addr %s133, 4
        %s135 = scalar_lea.vmem %s0, %s134
      $region28: #{cnn_forward.4} parent=23 // pred_fallthru
        _
    $region24: #{cnn_forward.4} parent=5 // pred_fallthru
      _
    %p136 = scmp.le.s32.totalorder 1, %s9
    %p137 = scmp.lt.s32.totalorder %s9, 3
    %p138 = pnand %p136, %p137
    %p139 = pneg %p138
    // Predicated region
    $region29: #{cnn_forward.4} parent=5 // pred_check
      _
    $region30: #{cnn_forward.4} parent=5 // pred_check_branch
      %141 = sbr.rel (%p138) target = $region32
    $region31: #{cnn_forward.4} parent=5 // pred_region
      %s142 = ssub.s32 %s9, 1
      %p143 = scmp.lt.s32.totalorder %s14, 1
      %s144 = scalar_select %p143, %s14, 1
      %s145 = smul.addr %s144, 132
      %s146 = smul.addr %s145, 4
      %s147 = scalar_lea.vmem %s0, %s146
      %p148 = pneg %p35
      %p149 = pneg %p32
      %p150 = pneg %p56
      %p151 = pneg %p53
      %p152 = pneg %p77
      %p153 = pneg %p74
      %p154 = pneg %p103
      %p155 = pneg %p100
      %p156 = scmp.lt.s32.totalorder %s14, 1
      %s157 = scalar_select %p156, %s14, 1
      %s158 = smul.addr %s157, 128
      %s159 = smul.addr %s158, 4
      %s160 = scalar_lea.vmem %s3, %s159
      %p161 = scmp.lt.s32.totalorder %s14, 1
      %s162 = scalar_select %p161, %s14, 1
      %s163 = smul.addr %s162, 132
      %s164 = smul.addr %s163, 4
      %s165 = scalar_lea.vmem %s0, %s164
      %p166 = scmp.lt.s32.totalorder %s14, 1
      %s167 = scalar_select %p166, %s14, 1
      %s168 = smul.addr %s167, 128
      %s169 = smul.addr %s168, 4
      %s170 = scalar_lea.vmem %s3, %s169
      %v172 = vld [vmem:[%s2] sm:$0x1]
      %v173 = vld [vmem:[%s165] sm:$0xf]
      %v174 = vld [vmem:[%s165 + $0x4] sm:$0xf]
      %v175 = vld [vmem:[%s165 + $0x8] sm:$0xf]
      %v176 = vld [vmem:[%s165 + $0xc] sm:$0xf]
      %v177 = vld [vmem:[%s165 + $0x10] sm:$0xf]
      %v178 = vld [vmem:[%s165 + $0x14] sm:$0xf]
      %v179 = vld [vmem:[%s165 + $0x18] sm:$0xf]
      %v180 = vld [vmem:[%s165 + $0x1c] sm:$0xf]
      %v181 = vld [vmem:[%s165 + $0x20] sm:$0xf]
      %v182 = vld [vmem:[%s165 + $0x24] sm:$0xf]
      %v183 = vld [vmem:[%s165 + $0x28] sm:$0xf]
      %v184 = vld [vmem:[%s165 + $0x2c] sm:$0xf]
      %v185 = vld [vmem:[%s165 + $0x30] sm:$0xf]
      %v186 = vld [vmem:[%s165 + $0x34] sm:$0xf]
      %v187 = vld [vmem:[%s165 + $0x38] sm:$0xf]
      %v188 = vld [vmem:[%s165 + $0x3c] sm:$0xf]
      %v189 = vld [vmem:[%s165 + $0x40] sm:$0xf]
      %v190 = vld [vmem:[%s165 + $0x44] sm:$0xf]
      %v191 = vld [vmem:[%s165 + $0x48] sm:$0xf]
      %v192 = vld [vmem:[%s165 + $0x4c] sm:$0xf]
      %v193 = vld [vmem:[%s165 + $0x50] sm:$0xf]
      %v194 = vld [vmem:[%s165 + $0x54] sm:$0xf]
      %v195 = vld [vmem:[%s165 + $0x58] sm:$0xf]
      %v196 = vld [vmem:[%s165 + $0x5c] sm:$0xf]
      %v197 = vld [vmem:[%s165 + $0x60] sm:$0xf]
      %v198 = vld [vmem:[%s165 + $0x64] sm:$0xf]
      %v199 = vld [vmem:[%s165 + $0x68] sm:$0xf]
      %v200 = vld [vmem:[%s165 + $0x6c] sm:$0xf]
      %v201 = vld [vmem:[%s165 + $0x70] sm:$0xf]
      %v202 = vld [vmem:[%s165 + $0x74] sm:$0xf]
      %v203 = vld [vmem:[%s165 + $0x78] sm:$0xf]
      %v204 = vld [vmem:[%s165 + $0x7c] sm:$0xf]
      %v205 = vld [vmem:[%s165 + $0x80] sm:$0xf]
      %v206 = vld [vmem:[%s165 + $0x84] sm:$0xf]
      %v207 = vld [vmem:[%s165 + $0x88] sm:$0xf]
      %v208 = vld [vmem:[%s165 + $0x8c] sm:$0xf]
      %v209 = vld [vmem:[%s165 + $0x90] sm:$0xf]
      %v210 = vld [vmem:[%s165 + $0x94] sm:$0xf]
      %v211 = vld [vmem:[%s165 + $0x98] sm:$0xf]
      %v212 = vld [vmem:[%s165 + $0x9c] sm:$0xf]
      %v213 = vld [vmem:[%s165 + $0xa0] sm:$0xf]
      %v214 = vld [vmem:[%s165 + $0xa4] sm:$0xf]
      %v215 = vld [vmem:[%s165 + $0xa8] sm:$0xf]
      %v216 = vld [vmem:[%s165 + $0xac] sm:$0xf]
      %v217 = vld [vmem:[%s165 + $0xb0] sm:$0xf]
      %v218 = vld [vmem:[%s165 + $0xb4] sm:$0xf]
      %v219 = vld [vmem:[%s165 + $0xb8] sm:$0xf]
      %v220 = vld [vmem:[%s165 + $0xbc] sm:$0xf]
      %v221 = vld [vmem:[%s165 + $0xc0] sm:$0xf]
      %v222 = vld [vmem:[%s165 + $0xc4] sm:$0xf]
      %v223 = vld [vmem:[%s165 + $0xc8] sm:$0xf]
      %v224 = vld [vmem:[%s165 + $0xcc] sm:$0xf]
      %v225 = vld [vmem:[%s165 + $0xd0] sm:$0xf]
      %v226 = vld [vmem:[%s165 + $0xd4] sm:$0xf]
      %v227 = vld [vmem:[%s165 + $0xd8] sm:$0xf]
      %v228 = vld [vmem:[%s165 + $0xdc] sm:$0xf]
      %v229 = vld [vmem:[%s165 + $0xe0] sm:$0xf]
      %v230 = vld [vmem:[%s165 + $0xe4] sm:$0xf]
      %v231 = vld [vmem:[%s165 + $0xe8] sm:$0xf]
      %v232 = vld [vmem:[%s165 + $0xec] sm:$0xf]
      %v233 = vld [vmem:[%s165 + $0xf0] sm:$0xf]
      %v234 = vld [vmem:[%s165 + $0xf4] sm:$0xf]
      %v235 = vld [vmem:[%s165 + $0xf8] sm:$0xf]
      %v236 = vld [vmem:[%s165 + $0xfc] sm:$0xf]
      %v237 = vld [vmem:[%s165 + $0x100] sm:$0xf]
      %v238 = vld [vmem:[%s165 + $0x104] sm:$0xf]
      %v239 = vld [vmem:[%s165 + $0x108] sm:$0xf]
      %v240 = vld [vmem:[%s165 + $0x10c] sm:$0xf]
      %v241 = vld [vmem:[%s165 + $0x110] sm:$0xf]
      %v242 = vld [vmem:[%s165 + $0x114] sm:$0xf]
      %v243 = vld [vmem:[%s165 + $0x118] sm:$0xf]
      %v244 = vld [vmem:[%s165 + $0x11c] sm:$0xf]
      %v245 = vld [vmem:[%s165 + $0x120] sm:$0xf]
      %v246 = vld [vmem:[%s165 + $0x124] sm:$0xf]
      %v247 = vld [vmem:[%s165 + $0x128] sm:$0xf]
      %v248 = vld [vmem:[%s165 + $0x12c] sm:$0xf]
      %v249 = vld [vmem:[%s165 + $0x130] sm:$0xf]
      %v250 = vld [vmem:[%s165 + $0x134] sm:$0xf]
      %v251 = vld [vmem:[%s165 + $0x138] sm:$0xf]
      %v252 = vld [vmem:[%s165 + $0x13c] sm:$0xf]
      %v253 = vld [vmem:[%s165 + $0x140] sm:$0xf]
      %v254 = vld [vmem:[%s165 + $0x144] sm:$0xf]
      %v255 = vld [vmem:[%s165 + $0x148] sm:$0xf]
      %v256 = vld [vmem:[%s165 + $0x14c] sm:$0xf]
      %v257 = vld [vmem:[%s165 + $0x150] sm:$0xf]
      %v258 = vld [vmem:[%s165 + $0x154] sm:$0xf]
      %v259 = vld [vmem:[%s165 + $0x158] sm:$0xf]
      %v260 = vld [vmem:[%s165 + $0x15c] sm:$0xf]
      %v261 = vld [vmem:[%s165 + $0x160] sm:$0xf]
      %v262 = vld [vmem:[%s165 + $0x164] sm:$0xf]
      %v263 = vld [vmem:[%s165 + $0x168] sm:$0xf]
      %v264 = vld [vmem:[%s165 + $0x16c] sm:$0xf]
      %v265 = vld [vmem:[%s165 + $0x170] sm:$0xf]
      %v266 = vld [vmem:[%s165 + $0x174] sm:$0xf]
      %v267 = vld [vmem:[%s165 + $0x178] sm:$0xf]
      %v268 = vld [vmem:[%s165 + $0x17c] sm:$0xf]
      %v269 = vld [vmem:[%s165 + $0x180] sm:$0xf]
      %v270 = vld [vmem:[%s165 + $0x184] sm:$0xf]
      %v271 = vld [vmem:[%s165 + $0x188] sm:$0xf]
      %v272 = vld [vmem:[%s165 + $0x18c] sm:$0xf]
      %v273 = vld [vmem:[%s165 + $0x190] sm:$0xf]
      %v274 = vld [vmem:[%s165 + $0x194] sm:$0xf]
      %v275 = vld [vmem:[%s165 + $0x198] sm:$0xf]
      %v276 = vld [vmem:[%s165 + $0x19c] sm:$0xf]
      %v277 = vld [vmem:[%s165 + $0x1a0] sm:$0xf]
      %v278 = vld [vmem:[%s165 + $0x1a4] sm:$0xf]
      %v279 = vld [vmem:[%s165 + $0x1a8] sm:$0xf]
      %v280 = vld [vmem:[%s165 + $0x1ac] sm:$0xf]
      %v281 = vld [vmem:[%s165 + $0x1b0] sm:$0xf]
      %v282 = vld [vmem:[%s165 + $0x1b4] sm:$0xf]
      %v283 = vld [vmem:[%s165 + $0x1b8] sm:$0xf]
      %v284 = vld [vmem:[%s165 + $0x1bc] sm:$0xf]
      %v285 = vld [vmem:[%s165 + $0x1c0] sm:$0xf]
      %v286 = vld [vmem:[%s165 + $0x1c4] sm:$0xf]
      %v287 = vld [vmem:[%s165 + $0x1c8] sm:$0xf]
      %v288 = vld [vmem:[%s165 + $0x1cc] sm:$0xf]
      %v289 = vld [vmem:[%s165 + $0x1d0] sm:$0xf]
      %v290 = vld [vmem:[%s165 + $0x1d4] sm:$0xf]
      %v291 = vld [vmem:[%s165 + $0x1d8] sm:$0xf]
      %v292 = vld [vmem:[%s165 + $0x1dc] sm:$0xf]
      %v293 = vld [vmem:[%s165 + $0x1e0] sm:$0xf]
      %v294 = vld [vmem:[%s165 + $0x1e4] sm:$0xf]
      %v295 = vld [vmem:[%s165 + $0x1e8] sm:$0xf]
      %v296 = vld [vmem:[%s165 + $0x1ec] sm:$0xf]
      %v297 = vld [vmem:[%s165 + $0x1f0] sm:$0xf]
      %v298 = vld [vmem:[%s165 + $0x1f4] sm:$0xf]
      %v299 = vld [vmem:[%s165 + $0x1f8] sm:$0xf]
      %v300 = vld [vmem:[%s165 + $0x1fc] sm:$0xf]
      %v301 = vld [vmem:[%s1] sm:$0xf]
      %v302 = vld [vmem:[%s1 + $0x4] sm:$0xf]
      %v303 = vld [vmem:[%s1 + $0x8] sm:$0xf]
      %v304 = vld [vmem:[%s165 + $0x200] sm:$0xf]
      %v305 = vld [vmem:[%s165 + $0x204] sm:$0xf]
      %v306 = vld [vmem:[%s165 + $0x208] sm:$0xf]
      %v307 = vld [vmem:[%s165 + $0x20c] sm:$0xf]
      %s308 = scalar_lea.vmem %s1, 12
      %v309 = vld [vmem:[%s308] sm:$0xf]
      %v310 = vld [vmem:[%s308 + $0x4] sm:$0xf]
      %v311 = vld [vmem:[%s308 + $0x8] sm:$0xf]
      %v440 = vunpack.c.l.b16 %v177
      %v441 = vunpack.c.l.b16 %v178
      %v442 = vunpack.c.l.b16 %v179
      %v443 = vunpack.c.l.b16 %v180
      %v444 = vunpack.c.l.b16 %v181
      %v445 = vunpack.c.l.b16 %v182
      %v446 = vunpack.c.l.b16 %v183
      %v447 = vunpack.c.l.b16 %v184
      %v448 = vunpack.c.l.b16 %v185
      %v449 = vunpack.c.l.b16 %v186
      %v450 = vunpack.c.l.b16 %v187
      %v451 = vunpack.c.l.b16 %v188
      %v452 = vunpack.c.l.b16 %v189
      %v453 = vunpack.c.l.b16 %v190
      %v454 = vunpack.c.l.b16 %v191
      %v455 = vunpack.c.l.b16 %v192
      %v456 = vunpack.c.l.b16 %v193
      %v457 = vunpack.c.l.b16 %v194
      %v458 = vunpack.c.l.b16 %v195
      %v459 = vunpack.c.l.b16 %v196
      %v460 = vunpack.c.l.b16 %v197
      %v461 = vunpack.c.l.b16 %v198
      %v462 = vunpack.c.l.b16 %v199
      %v463 = vunpack.c.l.b16 %v200
      %v464 = vunpack.c.l.b16 %v201
      %v465 = vunpack.c.l.b16 %v202
      %v466 = vunpack.c.l.b16 %v203
      %v467 = vunpack.c.l.b16 %v204
      %v468 = vunpack.c.l.b16 %v205
      %v469 = vunpack.c.l.b16 %v206
      %v470 = vunpack.c.l.b16 %v207
      %v471 = vunpack.c.l.b16 %v208
      %v472 = vunpack.c.l.b16 %v209
      %v473 = vunpack.c.l.b16 %v210
      %v474 = vunpack.c.l.b16 %v211
      %v475 = vunpack.c.l.b16 %v212
      %v476 = vunpack.c.l.b16 %v213
      %v477 = vunpack.c.l.b16 %v214
      %v478 = vunpack.c.l.b16 %v215
      %v479 = vunpack.c.l.b16 %v216
      %v480 = vunpack.c.l.b16 %v217
      %v481 = vunpack.c.l.b16 %v218
      %v482 = vunpack.c.l.b16 %v219
      %v483 = vunpack.c.l.b16 %v220
      %v484 = vunpack.c.l.b16 %v221
      %v485 = vunpack.c.l.b16 %v222
      %v486 = vunpack.c.l.b16 %v223
      %v487 = vunpack.c.l.b16 %v224
      %v488 = vunpack.c.l.b16 %v225
      %v489 = vunpack.c.l.b16 %v226
      %v490 = vunpack.c.l.b16 %v227
      %v491 = vunpack.c.l.b16 %v228
      %v492 = vunpack.c.l.b16 %v229
      %v493 = vunpack.c.l.b16 %v230
      %v494 = vunpack.c.l.b16 %v231
      %v495 = vunpack.c.l.b16 %v232
      %v496 = vunpack.c.l.b16 %v233
      %v497 = vunpack.c.l.b16 %v234
      %v498 = vunpack.c.l.b16 %v235
      %v499 = vunpack.c.l.b16 %v236
      %v500 = vunpack.c.l.b16 %v237
      %v501 = vunpack.c.l.b16 %v238
      %v502 = vunpack.c.l.b16 %v239
      %v503 = vunpack.c.l.b16 %v240
      %v504 = vunpack.c.l.b16 %v241
      %v505 = vunpack.c.l.b16 %v242
      %v506 = vunpack.c.l.b16 %v243
      %v507 = vunpack.c.l.b16 %v244
      %v508 = vunpack.c.l.b16 %v245
      %v509 = vunpack.c.l.b16 %v246
      %v510 = vunpack.c.l.b16 %v247
      %v511 = vunpack.c.l.b16 %v248
      %v512 = vunpack.c.l.b16 %v249
      %v513 = vunpack.c.l.b16 %v250
      %v514 = vunpack.c.l.b16 %v251
      %v515 = vunpack.c.l.b16 %v252
      %v516 = vunpack.c.l.b16 %v253
      %v517 = vunpack.c.l.b16 %v254
      %v518 = vunpack.c.l.b16 %v255
      %v519 = vunpack.c.l.b16 %v256
      %v520 = vunpack.c.l.b16 %v257
      %v521 = vunpack.c.l.b16 %v258
      %v522 = vunpack.c.l.b16 %v259
      %v523 = vunpack.c.l.b16 %v260
      %v524 = vunpack.c.l.b16 %v261
      %v525 = vunpack.c.l.b16 %v262
      %v526 = vunpack.c.l.b16 %v263
      %v527 = vunpack.c.l.b16 %v264
      %v528 = vunpack.c.l.b16 %v265
      %v529 = vunpack.c.l.b16 %v266
      %v530 = vunpack.c.l.b16 %v267
      %v531 = vunpack.c.l.b16 %v268
      %v532 = vunpack.c.l.b16 %v269
      %v533 = vunpack.c.l.b16 %v270
      %v534 = vunpack.c.l.b16 %v271
      %v535 = vunpack.c.l.b16 %v272
      %v536 = vunpack.c.l.b16 %v273
      %v537 = vunpack.c.l.b16 %v274
      %v538 = vunpack.c.l.b16 %v275
      %v539 = vunpack.c.l.b16 %v276
      %v540 = vunpack.c.l.b16 %v277
      %v541 = vunpack.c.l.b16 %v278
      %v542 = vunpack.c.l.b16 %v279
      %v543 = vunpack.c.l.b16 %v280
      %v544 = vunpack.c.l.b16 %v281
      %v545 = vunpack.c.l.b16 %v282
      %v546 = vunpack.c.l.b16 %v283
      %v547 = vunpack.c.l.b16 %v284
      %v548 = vunpack.c.l.b16 %v285
      %v549 = vunpack.c.l.b16 %v286
      %v550 = vunpack.c.l.b16 %v287
      %v551 = vunpack.c.l.b16 %v288
      %v552 = vunpack.c.l.b16 %v289
      %v553 = vunpack.c.l.b16 %v290
      %v554 = vunpack.c.l.b16 %v291
      %v555 = vunpack.c.l.b16 %v292
      %v556 = vunpack.c.l.b16 %v293
      %v557 = vunpack.c.l.b16 %v294
      %v558 = vunpack.c.l.b16 %v295
      %v559 = vunpack.c.l.b16 %v296
      %v560 = vunpack.c.l.b16 %v297
      %v561 = vunpack.c.l.b16 %v298
      %v562 = vunpack.c.l.b16 %v299
      %v563 = vunpack.c.l.b16 %v300
      %v564 = vunpack.c.l.b16 %v304
      %v565 = vunpack.c.l.b16 %v305
      %v566 = vunpack.c.l.b16 %v306
      %v567 = vunpack.c.l.b16 %v307
      %v568 = vpack.c.b16 %v441, %v440
      %v569 = vpack.c.b16 %v443, %v442
      %v570 = vpack.c.b16 %v445, %v444
      %v571 = vpack.c.b16 %v447, %v446
      %v572 = vpack.c.b16 %v449, %v448
      %v573 = vpack.c.b16 %v451, %v450
      %v574 = vpack.c.b16 %v453, %v452
      %v575 = vpack.c.b16 %v455, %v454
      %v576 = vpack.c.b16 %v457, %v456
      %v577 = vpack.c.b16 %v459, %v458
      %v578 = vpack.c.b16 %v461, %v460
      %v579 = vpack.c.b16 %v463, %v462
      %v580 = vpack.c.b16 %v465, %v464
      %v581 = vpack.c.b16 %v467, %v466
      %v582 = vpack.c.b16 %v469, %v468
      %v583 = vpack.c.b16 %v471, %v470
      %v584 = vpack.c.b16 %v473, %v472
      %v585 = vpack.c.b16 %v475, %v474
      %v586 = vpack.c.b16 %v477, %v476
      %v587 = vpack.c.b16 %v479, %v478
      %v588 = vpack.c.b16 %v481, %v480
      %v589 = vpack.c.b16 %v483, %v482
      %v590 = vpack.c.b16 %v485, %v484
      %v591 = vpack.c.b16 %v487, %v486
      %v592 = vpack.c.b16 %v489, %v488
      %v593 = vpack.c.b16 %v491, %v490
      %v594 = vpack.c.b16 %v493, %v492
      %v595 = vpack.c.b16 %v495, %v494
      %v596 = vpack.c.b16 %v497, %v496
      %v597 = vpack.c.b16 %v499, %v498
      %v598 = vpack.c.b16 %v501, %v500
      %v599 = vpack.c.b16 %v503, %v502
      %v600 = vpack.c.b16 %v505, %v504
      %v601 = vpack.c.b16 %v507, %v506
      %v602 = vpack.c.b16 %v509, %v508
      %v603 = vpack.c.b16 %v511, %v510
      %v604 = vpack.c.b16 %v513, %v512
      %v605 = vpack.c.b16 %v515, %v514
      %v606 = vpack.c.b16 %v517, %v516
      %v607 = vpack.c.b16 %v519, %v518
      %v608 = vpack.c.b16 %v521, %v520
      %v609 = vpack.c.b16 %v523, %v522
      %v610 = vpack.c.b16 %v525, %v524
      %v611 = vpack.c.b16 %v527, %v526
      %v612 = vpack.c.b16 %v529, %v528
      %v613 = vpack.c.b16 %v531, %v530
      %v614 = vpack.c.b16 %v533, %v532
      %v615 = vpack.c.b16 %v535, %v534
      %v616 = vpack.c.b16 %v537, %v536
      %v617 = vpack.c.b16 %v539, %v538
      %v618 = vpack.c.b16 %v541, %v540
      %v619 = vpack.c.b16 %v543, %v542
      %v620 = vpack.c.b16 %v545, %v544
      %v621 = vpack.c.b16 %v547, %v546
      %v622 = vpack.c.b16 %v549, %v548
      %v623 = vpack.c.b16 %v551, %v550
      %v624 = vpack.c.b16 %v553, %v552
      %v625 = vpack.c.b16 %v555, %v554
      %v626 = vpack.c.b16 %v557, %v556
      %v627 = vpack.c.b16 %v559, %v558
      %v628 = vpack.c.b16 %v561, %v560
      %v629 = vpack.c.b16 %v563, %v562
      %v630 = vpack.c.b16 %v565, %v564
      %v631 = vpack.c.b16 %v567, %v566
      %v635 = vunpack.c.l.b16 %v309
      %v636 = vunpack.c.l.b16 %v310
      %v637 = vunpack.c.l.b16 %v311
      %v638 = vpack.c.b16 %v636, %v635
      %v639 = vpack.c.b16 %v637, %v637
      %vm641 = vcmask 195584
      %v643 = vsel %vm641, %v568, 0
      %v646 = vsel %vm641, %v569, 0
      %v649 = vsel %vm641, %v570, 0
      %v652 = vsel %vm641, %v571, 0
      %v655 = vsel %vm641, %v572, 0
      %v658 = vsel %vm641, %v573, 0
      %v661 = vsel %vm641, %v574, 0
      %v664 = vsel %vm641, %v575, 0
      %v667 = vsel %vm641, %v576, 0
      %v670 = vsel %vm641, %v577, 0
      %v673 = vsel %vm641, %v578, 0
      %v676 = vsel %vm641, %v579, 0
      %v679 = vsel %vm641, %v580, 0
      %v682 = vsel %vm641, %v581, 0
      %v685 = vsel %vm641, %v582, 0
      %v688 = vsel %vm641, %v583, 0
      %v691 = vsel %vm641, %v584, 0
      %v694 = vsel %vm641, %v585, 0
      %v697 = vsel %vm641, %v586, 0
      %v700 = vsel %vm641, %v587, 0
      %v703 = vsel %vm641, %v588, 0
      %v706 = vsel %vm641, %v589, 0
      %v709 = vsel %vm641, %v590, 0
      %v712 = vsel %vm641, %v591, 0
      %v715 = vsel %vm641, %v592, 0
      %v718 = vsel %vm641, %v593, 0
      %v721 = vsel %vm641, %v594, 0
      %v724 = vsel %vm641, %v595, 0
      %v727 = vsel %vm641, %v596, 0
      %v730 = vsel %vm641, %v597, 0
      %v733 = vsel %vm641, %v598, 0
      %v736 = vsel %vm641, %v599, 0
      %v739 = vsel %vm641, %v600, 0
      %v742 = vsel %vm641, %v601, 0
      %v745 = vsel %vm641, %v602, 0
      %v748 = vsel %vm641, %v603, 0
      %v751 = vsel %vm641, %v604, 0
      %v754 = vsel %vm641, %v605, 0
      %v757 = vsel %vm641, %v606, 0
      %v760 = vsel %vm641, %v607, 0
      %v763 = vsel %vm641, %v608, 0
      %v766 = vsel %vm641, %v609, 0
      %v769 = vsel %vm641, %v610, 0
      %v772 = vsel %vm641, %v611, 0
      %v775 = vsel %vm641, %v612, 0
      %v778 = vsel %vm641, %v613, 0
      %v781 = vsel %vm641, %v614, 0
      %v784 = vsel %vm641, %v615, 0
      %v787 = vsel %vm641, %v616, 0
      %v790 = vsel %vm641, %v617, 0
      %v793 = vsel %vm641, %v618, 0
      %v796 = vsel %vm641, %v619, 0
      %v799 = vsel %vm641, %v620, 0
      %v802 = vsel %vm641, %v621, 0
      %v805 = vsel %vm641, %v622, 0
      %v808 = vsel %vm641, %v623, 0
      %v811 = vsel %vm641, %v624, 0
      %v814 = vsel %vm641, %v625, 0
      %v817 = vsel %vm641, %v626, 0
      %v820 = vsel %vm641, %v627, 0
      %v823 = vsel %vm641, %v628, 0
      %v826 = vsel %vm641, %v629, 0
      %v829 = vsel %vm641, %v630, 0
      %v832 = vsel %vm641, %v631, 0
      %vm834 = vcmask 1043456
      %v836 = vsel %vm834, %v639, 0
      %838 = vmatprep.subr.bf16.mxu0 0
      %839 = vmatpush1.bf16.msra.mxu0 0
      %840 = vmatprep.subr.bf16.mxu0 0
      %841 = vmatpush1.bf16.msra.mxu0 0
      %842 = vmatprep.subr.bf16.mxu0 0
      %843 = vmatpush1.bf16.msra.mxu0 0
      %844 = vmatprep.subr.bf16.mxu0 0
      %845 = vmatpush1.bf16.msra.mxu0 0
      %846 = vmatprep.subr.bf16.mxu0 0
      %847 = vmatpush1.bf16.msra.mxu0 0
      %848 = vmatprep.subr.bf16.mxu0 0
      %849 = vmatpush1.bf16.msra.mxu0 0
      %850 = vmatprep.subr.bf16.mxu0 0
      %851 = vmatpush1.bf16.msra.mxu0 %v836
      %852 = vmatprep.subr.bf16.mxu0 0
      %853 = vmatpush1.bf16.msra.mxu0 %v638
      %854 = vmatprep.subr.bf16.mxu0 0
      %855 = vmatpush2.bf16.msra.mxu0 0
      %856 = vmatprep.subr.bf16.mxu0 0
      %857 = vmatpush2.bf16.msra.mxu0 0
      %858 = vmatprep.subr.bf16.mxu0 0
      %859 = vmatpush2.bf16.msra.mxu0 0
      %860 = vmatprep.subr.bf16.mxu0 0
      %861 = vmatpush2.bf16.msra.mxu0 0
      %862 = vmatprep.subr.bf16.mxu0 0
      %863 = vmatpush2.bf16.msra.mxu0 0
      %864 = vmatprep.subr.bf16.mxu0 0
      %865 = vmatpush2.bf16.msra.mxu0 0
      %866 = vmatprep.subr.bf16.mxu0 0
      %867 = vmatpush2.bf16.msra.mxu0 0
      %868 = vmatprep.subr.bf16.mxu0 0
      %869 = vmatpush2.bf16.msra.mxu0 0
      %870 = vmatprep.mubr.bf16.mxu0 0
      %871 = vmatmul.mubr.bf16.gmra.mxu0 %v643
      %v872 = vpop.f32.mrf.mxu0
      %v873 = vadd.f32 0.0, %v872
      %v874 = vpop.f32.mrf.mxu0
      %v875 = vpop.f32.mrf.mxu0
      %v876 = vadd.f32 0.0, %v875
      %v877 = vpop.f32.mrf.mxu0
      %878 = vmatprep.mubr.bf16.mxu0 0
      %879 = vmatmul.mubr.bf16.gmra.mxu0 %v646
      %v880 = vpop.f32.mrf.mxu0
      %v881 = vadd.f32 0.0, %v880
      %v882 = vpop.f32.mrf.mxu0
      %v883 = vpop.f32.mrf.mxu0
      %v884 = vadd.f32 0.0, %v883
      %v885 = vpop.f32.mrf.mxu0
      %886 = vmatprep.mubr.bf16.mxu0 0
      %887 = vmatmul.mubr.bf16.gmra.mxu0 %v649
      %v888 = vpop.f32.mrf.mxu0
      %v889 = vadd.f32 0.0, %v888
      %v890 = vpop.f32.mrf.mxu0
      %v891 = vpop.f32.mrf.mxu0
      %v892 = vadd.f32 0.0, %v891
      %v893 = vpop.f32.mrf.mxu0
      %894 = vmatprep.mubr.bf16.mxu0 0
      %895 = vmatmul.mubr.bf16.gmra.mxu0 %v652
      %v896 = vpop.f32.mrf.mxu0
      %v897 = vadd.f32 0.0, %v896
      %v898 = vpop.f32.mrf.mxu0
      %v899 = vpop.f32.mrf.mxu0
      %v900 = vadd.f32 0.0, %v899
      %v901 = vpop.f32.mrf.mxu0
      %902 = vmatprep.mubr.bf16.mxu0 0
      %903 = vmatmul.mubr.bf16.gmra.mxu0 %v655
      %v904 = vpop.f32.mrf.mxu0
      %v905 = vadd.f32 0.0, %v904
      %v906 = vpop.f32.mrf.mxu0
      %v907 = vpop.f32.mrf.mxu0
      %v908 = vadd.f32 0.0, %v907
      %v909 = vpop.f32.mrf.mxu0
      %910 = vmatprep.mubr.bf16.mxu0 0
      %911 = vmatmul.mubr.bf16.gmra.mxu0 %v658
      %v912 = vpop.f32.mrf.mxu0
      %v913 = vadd.f32 0.0, %v912
      %v914 = vpop.f32.mrf.mxu0
      %v915 = vpop.f32.mrf.mxu0
      %v916 = vadd.f32 0.0, %v915
      %v917 = vpop.f32.mrf.mxu0
      %918 = vmatprep.mubr.bf16.mxu0 0
      %919 = vmatmul.mubr.bf16.gmra.mxu0 %v661
      %v920 = vpop.f32.mrf.mxu0
      %v921 = vadd.f32 0.0, %v920
      %v922 = vpop.f32.mrf.mxu0
      %v923 = vpop.f32.mrf.mxu0
      %v924 = vadd.f32 0.0, %v923
      %v925 = vpop.f32.mrf.mxu0
      %926 = vmatprep.mubr.bf16.mxu0 0
      %927 = vmatmul.mubr.bf16.gmra.mxu0 %v664
      %v928 = vpop.f32.mrf.mxu0
      %v929 = vadd.f32 0.0, %v928
      %v930 = vpop.f32.mrf.mxu0
      %v931 = vpop.f32.mrf.mxu0
      %v932 = vadd.f32 0.0, %v931
      %v933 = vpop.f32.mrf.mxu0
      %934 = vmatprep.mubr.bf16.mxu0 0
      %935 = vmatmul.mubr.bf16.gmra.mxu0 %v667
      %v936 = vpop.f32.mrf.mxu0
      %v937 = vadd.f32 0.0, %v936
      %v938 = vpop.f32.mrf.mxu0
      %v939 = vpop.f32.mrf.mxu0
      %v940 = vadd.f32 0.0, %v939
      %v941 = vpop.f32.mrf.mxu0
      %942 = vmatprep.mubr.bf16.mxu0 0
      %943 = vmatmul.mubr.bf16.gmra.mxu0 %v670
      %v944 = vpop.f32.mrf.mxu0
      %v945 = vadd.f32 0.0, %v944
      %v946 = vpop.f32.mrf.mxu0
      %v947 = vpop.f32.mrf.mxu0
      %v948 = vadd.f32 0.0, %v947
      %v949 = vpop.f32.mrf.mxu0
      %950 = vmatprep.mubr.bf16.mxu0 0
      %951 = vmatmul.mubr.bf16.gmra.mxu0 %v673
      %v952 = vpop.f32.mrf.mxu0
      %v953 = vadd.f32 0.0, %v952
      %v954 = vpop.f32.mrf.mxu0
      %v955 = vpop.f32.mrf.mxu0
      %v956 = vadd.f32 0.0, %v955
      %v957 = vpop.f32.mrf.mxu0
      %958 = vmatprep.mubr.bf16.mxu0 0
      %959 = vmatmul.mubr.bf16.gmra.mxu0 %v676
      %v960 = vpop.f32.mrf.mxu0
      %v961 = vadd.f32 0.0, %v960
      %v962 = vpop.f32.mrf.mxu0
      %v963 = vpop.f32.mrf.mxu0
      %v964 = vadd.f32 0.0, %v963
      %v965 = vpop.f32.mrf.mxu0
      %966 = vmatprep.mubr.bf16.mxu0 0
      %967 = vmatmul.mubr.bf16.gmra.mxu0 %v679
      %v968 = vpop.f32.mrf.mxu0
      %v969 = vadd.f32 0.0, %v968
      %v970 = vpop.f32.mrf.mxu0
      %v971 = vpop.f32.mrf.mxu0
      %v972 = vadd.f32 0.0, %v971
      %v973 = vpop.f32.mrf.mxu0
      %974 = vmatprep.mubr.bf16.mxu0 0
      %975 = vmatmul.mubr.bf16.gmra.mxu0 %v682
      %v976 = vpop.f32.mrf.mxu0
      %v977 = vadd.f32 0.0, %v976
      %v978 = vpop.f32.mrf.mxu0
      %v979 = vpop.f32.mrf.mxu0
      %v980 = vadd.f32 0.0, %v979
      %v981 = vpop.f32.mrf.mxu0
      %982 = vmatprep.mubr.bf16.mxu0 0
      %983 = vmatmul.mubr.bf16.gmra.mxu0 %v685
      %v984 = vpop.f32.mrf.mxu0
      %v985 = vadd.f32 0.0, %v984
      %v986 = vpop.f32.mrf.mxu0
      %v987 = vpop.f32.mrf.mxu0
      %v988 = vadd.f32 0.0, %v987
      %v989 = vpop.f32.mrf.mxu0
      %990 = vmatprep.mubr.bf16.mxu0 0
      %991 = vmatmul.mubr.bf16.gmra.mxu0 %v688
      %v992 = vpop.f32.mrf.mxu0
      %v993 = vadd.f32 0.0, %v992
      %v994 = vpop.f32.mrf.mxu0
      %v995 = vpop.f32.mrf.mxu0
      %v996 = vadd.f32 0.0, %v995
      %v997 = vpop.f32.mrf.mxu0
      %998 = vmatprep.mubr.bf16.mxu0 0
      %999 = vmatmul.mubr.bf16.gmra.mxu0 %v691
      %v1000 = vpop.f32.mrf.mxu0
      %v1001 = vadd.f32 0.0, %v1000
      %v1002 = vpop.f32.mrf.mxu0
      %v1003 = vpop.f32.mrf.mxu0
      %v1004 = vadd.f32 0.0, %v1003
      %v1005 = vpop.f32.mrf.mxu0
      %1006 = vmatprep.mubr.bf16.mxu0 0
      %1007 = vmatmul.mubr.bf16.gmra.mxu0 %v694
      %v1008 = vpop.f32.mrf.mxu0
      %v1009 = vadd.f32 0.0, %v1008
      %v1010 = vpop.f32.mrf.mxu0
      %v1011 = vpop.f32.mrf.mxu0
      %v1012 = vadd.f32 0.0, %v1011
      %v1013 = vpop.f32.mrf.mxu0
      %1014 = vmatprep.mubr.bf16.mxu0 0
      %1015 = vmatmul.mubr.bf16.gmra.mxu0 %v697
      %v1016 = vpop.f32.mrf.mxu0
      %v1017 = vadd.f32 0.0, %v1016
      %v1018 = vpop.f32.mrf.mxu0
      %v1019 = vpop.f32.mrf.mxu0
      %v1020 = vadd.f32 0.0, %v1019
      %v1021 = vpop.f32.mrf.mxu0
      %1022 = vmatprep.mubr.bf16.mxu0 0
      %1023 = vmatmul.mubr.bf16.gmra.mxu0 %v700
      %v1024 = vpop.f32.mrf.mxu0
      %v1025 = vadd.f32 0.0, %v1024
      %v1026 = vpop.f32.mrf.mxu0
      %v1027 = vpop.f32.mrf.mxu0
      %v1028 = vadd.f32 0.0, %v1027
      %v1029 = vpop.f32.mrf.mxu0
      %1030 = vmatprep.mubr.bf16.mxu0 0
      %1031 = vmatmul.mubr.bf16.gmra.mxu0 %v703
      %v1032 = vpop.f32.mrf.mxu0
      %v1033 = vadd.f32 0.0, %v1032
      %v1034 = vpop.f32.mrf.mxu0
      %v1035 = vpop.f32.mrf.mxu0
      %v1036 = vadd.f32 0.0, %v1035
      %v1037 = vpop.f32.mrf.mxu0
      %1038 = vmatprep.mubr.bf16.mxu0 0
      %1039 = vmatmul.mubr.bf16.gmra.mxu0 %v706
      %v1040 = vpop.f32.mrf.mxu0
      %v1041 = vadd.f32 0.0, %v1040
      %v1042 = vpop.f32.mrf.mxu0
      %v1043 = vpop.f32.mrf.mxu0
      %v1044 = vadd.f32 0.0, %v1043
      %v1045 = vpop.f32.mrf.mxu0
      %1046 = vmatprep.mubr.bf16.mxu0 0
      %1047 = vmatmul.mubr.bf16.gmra.mxu0 %v709
      %v1048 = vpop.f32.mrf.mxu0
      %v1049 = vadd.f32 0.0, %v1048
      %v1050 = vpop.f32.mrf.mxu0
      %v1051 = vpop.f32.mrf.mxu0
      %v1052 = vadd.f32 0.0, %v1051
      %v1053 = vpop.f32.mrf.mxu0
      %1054 = vmatprep.mubr.bf16.mxu0 0
      %1055 = vmatmul.mubr.bf16.gmra.mxu0 %v712
      %v1056 = vpop.f32.mrf.mxu0
      %v1057 = vadd.f32 0.0, %v1056
      %v1058 = vpop.f32.mrf.mxu0
      %v1059 = vpop.f32.mrf.mxu0
      %v1060 = vadd.f32 0.0, %v1059
      %v1061 = vpop.f32.mrf.mxu0
      %1062 = vmatprep.mubr.bf16.mxu0 0
      %1063 = vmatmul.mubr.bf16.gmra.mxu0 %v715
      %v1064 = vpop.f32.mrf.mxu0
      %v1065 = vadd.f32 0.0, %v1064
      %v1066 = vpop.f32.mrf.mxu0
      %v1067 = vpop.f32.mrf.mxu0
      %v1068 = vadd.f32 0.0, %v1067
      %v1069 = vpop.f32.mrf.mxu0
      %1070 = vmatprep.mubr.bf16.mxu0 0
      %1071 = vmatmul.mubr.bf16.gmra.mxu0 %v718
      %v1072 = vpop.f32.mrf.mxu0
      %v1073 = vadd.f32 0.0, %v1072
      %v1074 = vpop.f32.mrf.mxu0
      %v1075 = vpop.f32.mrf.mxu0
      %v1076 = vadd.f32 0.0, %v1075
      %v1077 = vpop.f32.mrf.mxu0
      %1078 = vmatprep.mubr.bf16.mxu0 0
      %1079 = vmatmul.mubr.bf16.gmra.mxu0 %v721
      %v1080 = vpop.f32.mrf.mxu0
      %v1081 = vadd.f32 0.0, %v1080
      %v1082 = vpop.f32.mrf.mxu0
      %v1083 = vpop.f32.mrf.mxu0
      %v1084 = vadd.f32 0.0, %v1083
      %v1085 = vpop.f32.mrf.mxu0
      %1086 = vmatprep.mubr.bf16.mxu0 0
      %1087 = vmatmul.mubr.bf16.gmra.mxu0 %v724
      %v1088 = vpop.f32.mrf.mxu0
      %v1089 = vadd.f32 0.0, %v1088
      %v1090 = vpop.f32.mrf.mxu0
      %v1091 = vpop.f32.mrf.mxu0
      %v1092 = vadd.f32 0.0, %v1091
      %v1093 = vpop.f32.mrf.mxu0
      %1094 = vmatprep.mubr.bf16.mxu0 0
      %1095 = vmatmul.mubr.bf16.gmra.mxu0 %v727
      %v1096 = vpop.f32.mrf.mxu0
      %v1097 = vadd.f32 0.0, %v1096
      %v1098 = vpop.f32.mrf.mxu0
      %v1099 = vpop.f32.mrf.mxu0
      %v1100 = vadd.f32 0.0, %v1099
      %v1101 = vpop.f32.mrf.mxu0
      %1102 = vmatprep.mubr.bf16.mxu0 0
      %1103 = vmatmul.mubr.bf16.gmra.mxu0 %v730
      %v1104 = vpop.f32.mrf.mxu0
      %v1105 = vadd.f32 0.0, %v1104
      %v1106 = vpop.f32.mrf.mxu0
      %v1107 = vpop.f32.mrf.mxu0
      %v1108 = vadd.f32 0.0, %v1107
      %v1109 = vpop.f32.mrf.mxu0
      %1110 = vmatprep.mubr.bf16.mxu0 0
      %1111 = vmatmul.mubr.bf16.gmra.mxu0 %v733
      %v1112 = vpop.f32.mrf.mxu0
      %v1113 = vadd.f32 0.0, %v1112
      %v1114 = vpop.f32.mrf.mxu0
      %v1115 = vpop.f32.mrf.mxu0
      %v1116 = vadd.f32 0.0, %v1115
      %v1117 = vpop.f32.mrf.mxu0
      %1118 = vmatprep.mubr.bf16.mxu0 0
      %1119 = vmatmul.mubr.bf16.gmra.mxu0 %v736
      %v1120 = vpop.f32.mrf.mxu0
      %v1121 = vadd.f32 0.0, %v1120
      %v1122 = vpop.f32.mrf.mxu0
      %v1123 = vpop.f32.mrf.mxu0
      %v1124 = vadd.f32 0.0, %v1123
      %v1125 = vpop.f32.mrf.mxu0
      %1126 = vmatprep.mubr.bf16.mxu0 0
      %1127 = vmatmul.mubr.bf16.gmra.mxu0 %v739
      %v1128 = vpop.f32.mrf.mxu0
      %v1129 = vadd.f32 0.0, %v1128
      %v1130 = vpop.f32.mrf.mxu0
      %v1131 = vpop.f32.mrf.mxu0
      %v1132 = vadd.f32 0.0, %v1131
      %v1133 = vpop.f32.mrf.mxu0
      %1134 = vmatprep.mubr.bf16.mxu0 0
      %1135 = vmatmul.mubr.bf16.gmra.mxu0 %v742
      %v1136 = vpop.f32.mrf.mxu0
      %v1137 = vadd.f32 0.0, %v1136
      %v1138 = vpop.f32.mrf.mxu0
      %v1139 = vpop.f32.mrf.mxu0
      %v1140 = vadd.f32 0.0, %v1139
      %v1141 = vpop.f32.mrf.mxu0
      %1142 = vmatprep.mubr.bf16.mxu0 0
      %1143 = vmatmul.mubr.bf16.gmra.mxu0 %v745
      %v1144 = vpop.f32.mrf.mxu0
      %v1145 = vadd.f32 0.0, %v1144
      %v1146 = vpop.f32.mrf.mxu0
      %v1147 = vpop.f32.mrf.mxu0
      %v1148 = vadd.f32 0.0, %v1147
      %v1149 = vpop.f32.mrf.mxu0
      %1150 = vmatprep.mubr.bf16.mxu0 0
      %1151 = vmatmul.mubr.bf16.gmra.mxu0 %v748
      %v1152 = vpop.f32.mrf.mxu0
      %v1153 = vadd.f32 0.0, %v1152
      %v1154 = vpop.f32.mrf.mxu0
      %v1155 = vpop.f32.mrf.mxu0
      %v1156 = vadd.f32 0.0, %v1155
      %v1157 = vpop.f32.mrf.mxu0
      %1158 = vmatprep.mubr.bf16.mxu0 0
      %1159 = vmatmul.mubr.bf16.gmra.mxu0 %v751
      %v1160 = vpop.f32.mrf.mxu0
      %v1161 = vadd.f32 0.0, %v1160
      %v1162 = vpop.f32.mrf.mxu0
      %v1163 = vpop.f32.mrf.mxu0
      %v1164 = vadd.f32 0.0, %v1163
      %v1165 = vpop.f32.mrf.mxu0
      %1166 = vmatprep.mubr.bf16.mxu0 0
      %1167 = vmatmul.mubr.bf16.gmra.mxu0 %v754
      %v1168 = vpop.f32.mrf.mxu0
      %v1169 = vadd.f32 0.0, %v1168
      %v1170 = vpop.f32.mrf.mxu0
      %v1171 = vpop.f32.mrf.mxu0
      %v1172 = vadd.f32 0.0, %v1171
      %v1173 = vpop.f32.mrf.mxu0
      %1174 = vmatprep.mubr.bf16.mxu0 0
      %1175 = vmatmul.mubr.bf16.gmra.mxu0 %v757
      %v1176 = vpop.f32.mrf.mxu0
      %v1177 = vadd.f32 0.0, %v1176
      %v1178 = vpop.f32.mrf.mxu0
      %v1179 = vpop.f32.mrf.mxu0
      %v1180 = vadd.f32 0.0, %v1179
      %v1181 = vpop.f32.mrf.mxu0
      %1182 = vmatprep.mubr.bf16.mxu0 0
      %1183 = vmatmul.mubr.bf16.gmra.mxu0 %v760
      %v1184 = vpop.f32.mrf.mxu0
      %v1185 = vadd.f32 0.0, %v1184
      %v1186 = vpop.f32.mrf.mxu0
      %v1187 = vpop.f32.mrf.mxu0
      %v1188 = vadd.f32 0.0, %v1187
      %v1189 = vpop.f32.mrf.mxu0
      %1190 = vmatprep.mubr.bf16.mxu0 0
      %1191 = vmatmul.mubr.bf16.gmra.mxu0 %v763
      %v1192 = vpop.f32.mrf.mxu0
      %v1193 = vadd.f32 0.0, %v1192
      %v1194 = vpop.f32.mrf.mxu0
      %v1195 = vpop.f32.mrf.mxu0
      %v1196 = vadd.f32 0.0, %v1195
      %v1197 = vpop.f32.mrf.mxu0
      %1198 = vmatprep.mubr.bf16.mxu0 0
      %1199 = vmatmul.mubr.bf16.gmra.mxu0 %v766
      %v1200 = vpop.f32.mrf.mxu0
      %v1201 = vadd.f32 0.0, %v1200
      %v1202 = vpop.f32.mrf.mxu0
      %v1203 = vpop.f32.mrf.mxu0
      %v1204 = vadd.f32 0.0, %v1203
      %v1205 = vpop.f32.mrf.mxu0
      %1206 = vmatprep.mubr.bf16.mxu0 0
      %1207 = vmatmul.mubr.bf16.gmra.mxu0 %v769
      %v1208 = vpop.f32.mrf.mxu0
      %v1209 = vadd.f32 0.0, %v1208
      %v1210 = vpop.f32.mrf.mxu0
      %v1211 = vpop.f32.mrf.mxu0
      %v1212 = vadd.f32 0.0, %v1211
      %v1213 = vpop.f32.mrf.mxu0
      %1214 = vmatprep.mubr.bf16.mxu0 0
      %1215 = vmatmul.mubr.bf16.gmra.mxu0 %v772
      %v1216 = vpop.f32.mrf.mxu0
      %v1217 = vadd.f32 0.0, %v1216
      %v1218 = vpop.f32.mrf.mxu0
      %v1219 = vpop.f32.mrf.mxu0
      %v1220 = vadd.f32 0.0, %v1219
      %v1221 = vpop.f32.mrf.mxu0
      %1222 = vmatprep.mubr.bf16.mxu0 0
      %1223 = vmatmul.mubr.bf16.gmra.mxu0 %v775
      %v1224 = vpop.f32.mrf.mxu0
      %v1225 = vadd.f32 0.0, %v1224
      %v1226 = vpop.f32.mrf.mxu0
      %v1227 = vpop.f32.mrf.mxu0
      %v1228 = vadd.f32 0.0, %v1227
      %v1229 = vpop.f32.mrf.mxu0
      %1230 = vmatprep.mubr.bf16.mxu0 0
      %1231 = vmatmul.mubr.bf16.gmra.mxu0 %v778
      %v1232 = vpop.f32.mrf.mxu0
      %v1233 = vadd.f32 0.0, %v1232
      %v1234 = vpop.f32.mrf.mxu0
      %v1235 = vpop.f32.mrf.mxu0
      %v1236 = vadd.f32 0.0, %v1235
      %v1237 = vpop.f32.mrf.mxu0
      %1238 = vmatprep.mubr.bf16.mxu0 0
      %1239 = vmatmul.mubr.bf16.gmra.mxu0 %v781
      %v1240 = vpop.f32.mrf.mxu0
      %v1241 = vadd.f32 0.0, %v1240
      %v1242 = vpop.f32.mrf.mxu0
      %v1243 = vpop.f32.mrf.mxu0
      %v1244 = vadd.f32 0.0, %v1243
      %v1245 = vpop.f32.mrf.mxu0
      %1246 = vmatprep.mubr.bf16.mxu0 0
      %1247 = vmatmul.mubr.bf16.gmra.mxu0 %v784
      %v1248 = vpop.f32.mrf.mxu0
      %v1249 = vadd.f32 0.0, %v1248
      %v1250 = vpop.f32.mrf.mxu0
      %v1251 = vpop.f32.mrf.mxu0
      %v1252 = vadd.f32 0.0, %v1251
      %v1253 = vpop.f32.mrf.mxu0
      %1254 = vmatprep.mubr.bf16.mxu0 0
      %1255 = vmatmul.mubr.bf16.gmra.mxu0 %v787
      %v1256 = vpop.f32.mrf.mxu0
      %v1257 = vadd.f32 0.0, %v1256
      %v1258 = vpop.f32.mrf.mxu0
      %v1259 = vpop.f32.mrf.mxu0
      %v1260 = vadd.f32 0.0, %v1259
      %v1261 = vpop.f32.mrf.mxu0
      %1262 = vmatprep.mubr.bf16.mxu0 0
      %1263 = vmatmul.mubr.bf16.gmra.mxu0 %v790
      %v1264 = vpop.f32.mrf.mxu0
      %v1265 = vadd.f32 0.0, %v1264
      %v1266 = vpop.f32.mrf.mxu0
      %v1267 = vpop.f32.mrf.mxu0
      %v1268 = vadd.f32 0.0, %v1267
      %v1269 = vpop.f32.mrf.mxu0
      %1270 = vmatprep.mubr.bf16.mxu0 0
      %1271 = vmatmul.mubr.bf16.gmra.mxu0 %v793
      %v1272 = vpop.f32.mrf.mxu0
      %v1273 = vadd.f32 0.0, %v1272
      %v1274 = vpop.f32.mrf.mxu0
      %v1275 = vpop.f32.mrf.mxu0
      %v1276 = vadd.f32 0.0, %v1275
      %v1277 = vpop.f32.mrf.mxu0
      %1278 = vmatprep.mubr.bf16.mxu0 0
      %1279 = vmatmul.mubr.bf16.gmra.mxu0 %v796
      %v1280 = vpop.f32.mrf.mxu0
      %v1281 = vadd.f32 0.0, %v1280
      %v1282 = vpop.f32.mrf.mxu0
      %v1283 = vpop.f32.mrf.mxu0
      %v1284 = vadd.f32 0.0, %v1283
      %v1285 = vpop.f32.mrf.mxu0
      %1286 = vmatprep.mubr.bf16.mxu0 0
      %1287 = vmatmul.mubr.bf16.gmra.mxu0 %v799
      %v1288 = vpop.f32.mrf.mxu0
      %v1289 = vadd.f32 0.0, %v1288
      %v1290 = vpop.f32.mrf.mxu0
      %v1291 = vpop.f32.mrf.mxu0
      %v1292 = vadd.f32 0.0, %v1291
      %v1293 = vpop.f32.mrf.mxu0
      %1294 = vmatprep.mubr.bf16.mxu0 0
      %1295 = vmatmul.mubr.bf16.gmra.mxu0 %v802
      %v1296 = vpop.f32.mrf.mxu0
      %v1297 = vadd.f32 0.0, %v1296
      %v1298 = vpop.f32.mrf.mxu0
      %v1299 = vpop.f32.mrf.mxu0
      %v1300 = vadd.f32 0.0, %v1299
      %v1301 = vpop.f32.mrf.mxu0
      %1302 = vmatprep.mubr.bf16.mxu0 0
      %1303 = vmatmul.mubr.bf16.gmra.mxu0 %v805
      %v1304 = vpop.f32.mrf.mxu0
      %v1305 = vadd.f32 0.0, %v1304
      %v1306 = vpop.f32.mrf.mxu0
      %v1307 = vpop.f32.mrf.mxu0
      %v1308 = vadd.f32 0.0, %v1307
      %v1309 = vpop.f32.mrf.mxu0
      %1310 = vmatprep.mubr.bf16.mxu0 0
      %1311 = vmatmul.mubr.bf16.gmra.mxu0 %v808
      %v1312 = vpop.f32.mrf.mxu0
      %v1313 = vadd.f32 0.0, %v1312
      %v1314 = vpop.f32.mrf.mxu0
      %v1315 = vpop.f32.mrf.mxu0
      %v1316 = vadd.f32 0.0, %v1315
      %v1317 = vpop.f32.mrf.mxu0
      %1318 = vmatprep.mubr.bf16.mxu0 0
      %1319 = vmatmul.mubr.bf16.gmra.mxu0 %v811
      %v1320 = vpop.f32.mrf.mxu0
      %v1321 = vadd.f32 0.0, %v1320
      %v1322 = vpop.f32.mrf.mxu0
      %v1323 = vpop.f32.mrf.mxu0
      %v1324 = vadd.f32 0.0, %v1323
      %v1325 = vpop.f32.mrf.mxu0
      %1326 = vmatprep.mubr.bf16.mxu0 0
      %1327 = vmatmul.mubr.bf16.gmra.mxu0 %v814
      %v1328 = vpop.f32.mrf.mxu0
      %v1329 = vadd.f32 0.0, %v1328
      %v1330 = vpop.f32.mrf.mxu0
      %v1331 = vpop.f32.mrf.mxu0
      %v1332 = vadd.f32 0.0, %v1331
      %v1333 = vpop.f32.mrf.mxu0
      %1334 = vmatprep.mubr.bf16.mxu0 0
      %1335 = vmatmul.mubr.bf16.gmra.mxu0 %v817
      %v1336 = vpop.f32.mrf.mxu0
      %v1337 = vadd.f32 0.0, %v1336
      %v1338 = vpop.f32.mrf.mxu0
      %v1339 = vpop.f32.mrf.mxu0
      %v1340 = vadd.f32 0.0, %v1339
      %v1341 = vpop.f32.mrf.mxu0
      %1342 = vmatprep.mubr.bf16.mxu0 0
      %1343 = vmatmul.mubr.bf16.gmra.mxu0 %v820
      %v1344 = vpop.f32.mrf.mxu0
      %v1345 = vadd.f32 0.0, %v1344
      %v1346 = vpop.f32.mrf.mxu0
      %v1347 = vpop.f32.mrf.mxu0
      %v1348 = vadd.f32 0.0, %v1347
      %v1349 = vpop.f32.mrf.mxu0
      %1350 = vmatprep.mubr.bf16.mxu0 0
      %1351 = vmatmul.mubr.bf16.gmra.mxu0 %v823
      %v1352 = vpop.f32.mrf.mxu0
      %v1353 = vadd.f32 0.0, %v1352
      %v1354 = vpop.f32.mrf.mxu0
      %v1355 = vpop.f32.mrf.mxu0
      %v1356 = vadd.f32 0.0, %v1355
      %v1357 = vpop.f32.mrf.mxu0
      %1358 = vmatprep.mubr.bf16.mxu0 0
      %1359 = vmatmul.mubr.bf16.gmra.mxu0 %v826
      %v1360 = vpop.f32.mrf.mxu0
      %v1361 = vadd.f32 0.0, %v1360
      %v1362 = vpop.f32.mrf.mxu0
      %v1363 = vpop.f32.mrf.mxu0
      %v1364 = vadd.f32 0.0, %v1363
      %v1365 = vpop.f32.mrf.mxu0
      %1366 = vmatprep.mubr.bf16.mxu0 0
      %1367 = vmatmul.mubr.bf16.gmra.mxu0 %v829
      %v1368 = vpop.f32.mrf.mxu0
      %v1369 = vadd.f32 0.0, %v1368
      %v1370 = vpop.f32.mrf.mxu0
      %v1371 = vpop.f32.mrf.mxu0
      %v1372 = vadd.f32 0.0, %v1371
      %v1373 = vpop.f32.mrf.mxu0
      %1374 = vmatprep.mubr.bf16.mxu0 0
      %1375 = vmatmul.mubr.bf16.gmra.mxu0 %v832
      %v1376 = vpop.f32.mrf.mxu0
      %v1377 = vadd.f32 0.0, %v1376
      %v1378 = vpop.f32.mrf.mxu0
      %v1379 = vpop.f32.mrf.mxu0
      %v1380 = vadd.f32 0.0, %v1379
      %v1381 = vpop.f32.mrf.mxu0
      %1382 = vdwg.mxu0
      %v1387 = vunpack.c.l.b16 %v173
      %v1388 = vunpack.c.l.b16 %v174
      %v1389 = vunpack.c.l.b16 %v175
      %v1390 = vunpack.c.l.b16 %v176
      %v1391 = vpack.c.b16 %v1388, %v1387
      %v1392 = vpack.c.b16 %v1390, %v1389
      %v1396 = vunpack.c.l.b16 %v301
      %v1397 = vunpack.c.l.b16 %v302
      %v1398 = vunpack.c.l.b16 %v303
      %v1399 = vpack.c.b16 %v1397, %v1396
      %v1400 = vpack.c.b16 %v1398, %v1398
      %v1403 = vsel %vm641, %v1391, 0
      %v1406 = vsel %vm641, %v1392, 0
      %v1409 = vsel %vm834, %v1400, 0
      %1411 = vmatprep.subr.bf16.mxu0 0
      %1412 = vmatpush1.bf16.msra.mxu0 0
      %1413 = vmatprep.subr.bf16.mxu0 0
      %1414 = vmatpush1.bf16.msra.mxu0 0
      %1415 = vmatprep.subr.bf16.mxu0 0
      %1416 = vmatpush1.bf16.msra.mxu0 0
      %1417 = vmatprep.subr.bf16.mxu0 0
      %1418 = vmatpush1.bf16.msra.mxu0 0
      %1419 = vmatprep.subr.bf16.mxu0 0
      %1420 = vmatpush1.bf16.msra.mxu0 0
      %1421 = vmatprep.subr.bf16.mxu0 0
      %1422 = vmatpush1.bf16.msra.mxu0 0
      %1423 = vmatprep.subr.bf16.mxu0 0
      %1424 = vmatpush1.bf16.msra.mxu0 %v1409
      %1425 = vmatprep.subr.bf16.mxu0 0
      %1426 = vmatpush1.bf16.msra.mxu0 %v1399
      %1427 = vmatprep.subr.bf16.mxu0 0
      %1428 = vmatpush2.bf16.msra.mxu0 0
      %1429 = vmatprep.subr.bf16.mxu0 0
      %1430 = vmatpush2.bf16.msra.mxu0 0
      %1431 = vmatprep.subr.bf16.mxu0 0
      %1432 = vmatpush2.bf16.msra.mxu0 0
      %1433 = vmatprep.subr.bf16.mxu0 0
      %1434 = vmatpush2.bf16.msra.mxu0 0
      %1435 = vmatprep.subr.bf16.mxu0 0
      %1436 = vmatpush2.bf16.msra.mxu0 0
      %1437 = vmatprep.subr.bf16.mxu0 0
      %1438 = vmatpush2.bf16.msra.mxu0 0
      %1439 = vmatprep.subr.bf16.mxu0 0
      %1440 = vmatpush2.bf16.msra.mxu0 0
      %1441 = vmatprep.subr.bf16.mxu0 0
      %1442 = vmatpush2.bf16.msra.mxu0 0
      %1443 = vmatprep.mubr.bf16.mxu0 0
      %1444 = vmatmul.mubr.bf16.gmra.mxu0 %v1403
      %v1445 = vpop.f32.mrf.mxu0
      %v1446 = vadd.f32 %v873, %v1445
      %v1447 = vpop.f32.mrf.mxu0
      %v1448 = vpop.f32.mrf.mxu0
      %v1449 = vadd.f32 %v876, %v1448
      %v1450 = vpop.f32.mrf.mxu0
      %1451 = vmatprep.mubr.bf16.mxu0 0
      %1452 = vmatmul.mubr.bf16.gmra.mxu0 %v1406
      %v1453 = vpop.f32.mrf.mxu0
      %v1454 = vadd.f32 %v881, %v1453
      %v1455 = vpop.f32.mrf.mxu0
      %v1456 = vpop.f32.mrf.mxu0
      %v1457 = vadd.f32 %v884, %v1456
      %v1458 = vpop.f32.mrf.mxu0
      %1459 = vmatprep.mubr.bf16.mxu0 0
      %1460 = vmatmul.mubr.bf16.gmra.mxu0 %v643
      %v1461 = vpop.f32.mrf.mxu0
      %v1462 = vadd.f32 %v889, %v1461
      %v1463 = vpop.f32.mrf.mxu0
      %v1464 = vpop.f32.mrf.mxu0
      %v1465 = vadd.f32 %v892, %v1464
      %v1466 = vpop.f32.mrf.mxu0
      %1467 = vmatprep.mubr.bf16.mxu0 0
      %1468 = vmatmul.mubr.bf16.gmra.mxu0 %v646
      %v1469 = vpop.f32.mrf.mxu0
      %v1470 = vadd.f32 %v897, %v1469
      %v1471 = vpop.f32.mrf.mxu0
      %v1472 = vpop.f32.mrf.mxu0
      %v1473 = vadd.f32 %v900, %v1472
      %v1474 = vpop.f32.mrf.mxu0
      %1475 = vmatprep.mubr.bf16.mxu0 0
      %1476 = vmatmul.mubr.bf16.gmra.mxu0 %v649
      %v1477 = vpop.f32.mrf.mxu0
      %v1478 = vadd.f32 %v905, %v1477
      %v1479 = vpop.f32.mrf.mxu0
      %v1480 = vpop.f32.mrf.mxu0
      %v1481 = vadd.f32 %v908, %v1480
      %v1482 = vpop.f32.mrf.mxu0
      %1483 = vmatprep.mubr.bf16.mxu0 0
      %1484 = vmatmul.mubr.bf16.gmra.mxu0 %v652
      %v1485 = vpop.f32.mrf.mxu0
      %v1486 = vadd.f32 %v913, %v1485
      %v1487 = vpop.f32.mrf.mxu0
      %v1488 = vpop.f32.mrf.mxu0
      %v1489 = vadd.f32 %v916, %v1488
      %v1490 = vpop.f32.mrf.mxu0
      %1491 = vmatprep.mubr.bf16.mxu0 0
      %1492 = vmatmul.mubr.bf16.gmra.mxu0 %v655
      %v1493 = vpop.f32.mrf.mxu0
      %v1494 = vadd.f32 %v921, %v1493
      %v1495 = vpop.f32.mrf.mxu0
      %v1496 = vpop.f32.mrf.mxu0
      %v1497 = vadd.f32 %v924, %v1496
      %v1498 = vpop.f32.mrf.mxu0
      %1499 = vmatprep.mubr.bf16.mxu0 0
      %1500 = vmatmul.mubr.bf16.gmra.mxu0 %v658
      %v1501 = vpop.f32.mrf.mxu0
      %v1502 = vadd.f32 %v929, %v1501
      %v1503 = vpop.f32.mrf.mxu0
      %v1504 = vpop.f32.mrf.mxu0
      %v1505 = vadd.f32 %v932, %v1504
      %v1506 = vpop.f32.mrf.mxu0
      %1507 = vmatprep.mubr.bf16.mxu0 0
      %1508 = vmatmul.mubr.bf16.gmra.mxu0 %v661
      %v1509 = vpop.f32.mrf.mxu0
      %v1510 = vadd.f32 %v937, %v1509
      %v1511 = vpop.f32.mrf.mxu0
      %v1512 = vpop.f32.mrf.mxu0
      %v1513 = vadd.f32 %v940, %v1512
      %v1514 = vpop.f32.mrf.mxu0
      %1515 = vmatprep.mubr.bf16.mxu0 0
      %1516 = vmatmul.mubr.bf16.gmra.mxu0 %v664
      %v1517 = vpop.f32.mrf.mxu0
      %v1518 = vadd.f32 %v945, %v1517
      %v1519 = vpop.f32.mrf.mxu0
      %v1520 = vpop.f32.mrf.mxu0
      %v1521 = vadd.f32 %v948, %v1520
      %v1522 = vpop.f32.mrf.mxu0
      %1523 = vmatprep.mubr.bf16.mxu0 0
      %1524 = vmatmul.mubr.bf16.gmra.mxu0 %v667
      %v1525 = vpop.f32.mrf.mxu0
      %v1526 = vadd.f32 %v953, %v1525
      %v1527 = vpop.f32.mrf.mxu0
      %v1528 = vpop.f32.mrf.mxu0
      %v1529 = vadd.f32 %v956, %v1528
      %v1530 = vpop.f32.mrf.mxu0
      %1531 = vmatprep.mubr.bf16.mxu0 0
      %1532 = vmatmul.mubr.bf16.gmra.mxu0 %v670
      %v1533 = vpop.f32.mrf.mxu0
      %v1534 = vadd.f32 %v961, %v1533
      %v1535 = vpop.f32.mrf.mxu0
      %v1536 = vpop.f32.mrf.mxu0
      %v1537 = vadd.f32 %v964, %v1536
      %v1538 = vpop.f32.mrf.mxu0
      %1539 = vmatprep.mubr.bf16.mxu0 0
      %1540 = vmatmul.mubr.bf16.gmra.mxu0 %v673
      %v1541 = vpop.f32.mrf.mxu0
      %v1542 = vadd.f32 %v969, %v1541
      %v1543 = vpop.f32.mrf.mxu0
      %v1544 = vpop.f32.mrf.mxu0
      %v1545 = vadd.f32 %v972, %v1544
      %v1546 = vpop.f32.mrf.mxu0
      %1547 = vmatprep.mubr.bf16.mxu0 0
      %1548 = vmatmul.mubr.bf16.gmra.mxu0 %v676
      %v1549 = vpop.f32.mrf.mxu0
      %v1550 = vadd.f32 %v977, %v1549
      %v1551 = vpop.f32.mrf.mxu0
      %v1552 = vpop.f32.mrf.mxu0
      %v1553 = vadd.f32 %v980, %v1552
      %v1554 = vpop.f32.mrf.mxu0
      %1555 = vmatprep.mubr.bf16.mxu0 0
      %1556 = vmatmul.mubr.bf16.gmra.mxu0 %v679
      %v1557 = vpop.f32.mrf.mxu0
      %v1558 = vadd.f32 %v985, %v1557
      %v1559 = vpop.f32.mrf.mxu0
      %v1560 = vpop.f32.mrf.mxu0
      %v1561 = vadd.f32 %v988, %v1560
      %v1562 = vpop.f32.mrf.mxu0
      %1563 = vmatprep.mubr.bf16.mxu0 0
      %1564 = vmatmul.mubr.bf16.gmra.mxu0 %v682
      %v1565 = vpop.f32.mrf.mxu0
      %v1566 = vadd.f32 %v993, %v1565
      %v1567 = vpop.f32.mrf.mxu0
      %v1568 = vpop.f32.mrf.mxu0
      %v1569 = vadd.f32 %v996, %v1568
      %v1570 = vpop.f32.mrf.mxu0
      %1571 = vmatprep.mubr.bf16.mxu0 0
      %1572 = vmatmul.mubr.bf16.gmra.mxu0 %v685
      %v1573 = vpop.f32.mrf.mxu0
      %v1574 = vadd.f32 %v1001, %v1573
      %v1575 = vpop.f32.mrf.mxu0
      %v1576 = vpop.f32.mrf.mxu0
      %v1577 = vadd.f32 %v1004, %v1576
      %v1578 = vpop.f32.mrf.mxu0
      %1579 = vmatprep.mubr.bf16.mxu0 0
      %1580 = vmatmul.mubr.bf16.gmra.mxu0 %v688
      %v1581 = vpop.f32.mrf.mxu0
      %v1582 = vadd.f32 %v1009, %v1581
      %v1583 = vpop.f32.mrf.mxu0
      %v1584 = vpop.f32.mrf.mxu0
      %v1585 = vadd.f32 %v1012, %v1584
      %v1586 = vpop.f32.mrf.mxu0
      %1587 = vmatprep.mubr.bf16.mxu0 0
      %1588 = vmatmul.mubr.bf16.gmra.mxu0 %v691
      %v1589 = vpop.f32.mrf.mxu0
      %v1590 = vadd.f32 %v1017, %v1589
      %v1591 = vpop.f32.mrf.mxu0
      %v1592 = vpop.f32.mrf.mxu0
      %v1593 = vadd.f32 %v1020, %v1592
      %v1594 = vpop.f32.mrf.mxu0
      %1595 = vmatprep.mubr.bf16.mxu0 0
      %1596 = vmatmul.mubr.bf16.gmra.mxu0 %v694
      %v1597 = vpop.f32.mrf.mxu0
      %v1598 = vadd.f32 %v1025, %v1597
      %v1599 = vpop.f32.mrf.mxu0
      %v1600 = vpop.f32.mrf.mxu0
      %v1601 = vadd.f32 %v1028, %v1600
      %v1602 = vpop.f32.mrf.mxu0
      %1603 = vmatprep.mubr.bf16.mxu0 0
      %1604 = vmatmul.mubr.bf16.gmra.mxu0 %v697
      %v1605 = vpop.f32.mrf.mxu0
      %v1606 = vadd.f32 %v1033, %v1605
      %v1607 = vpop.f32.mrf.mxu0
      %v1608 = vpop.f32.mrf.mxu0
      %v1609 = vadd.f32 %v1036, %v1608
      %v1610 = vpop.f32.mrf.mxu0
      %1611 = vmatprep.mubr.bf16.mxu0 0
      %1612 = vmatmul.mubr.bf16.gmra.mxu0 %v700
      %v1613 = vpop.f32.mrf.mxu0
      %v1614 = vadd.f32 %v1041, %v1613
      %v1615 = vpop.f32.mrf.mxu0
      %v1616 = vpop.f32.mrf.mxu0
      %v1617 = vadd.f32 %v1044, %v1616
      %v1618 = vpop.f32.mrf.mxu0
      %1619 = vmatprep.mubr.bf16.mxu0 0
      %1620 = vmatmul.mubr.bf16.gmra.mxu0 %v703
      %v1621 = vpop.f32.mrf.mxu0
      %v1622 = vadd.f32 %v1049, %v1621
      %v1623 = vpop.f32.mrf.mxu0
      %v1624 = vpop.f32.mrf.mxu0
      %v1625 = vadd.f32 %v1052, %v1624
      %v1626 = vpop.f32.mrf.mxu0
      %1627 = vmatprep.mubr.bf16.mxu0 0
      %1628 = vmatmul.mubr.bf16.gmra.mxu0 %v706
      %v1629 = vpop.f32.mrf.mxu0
      %v1630 = vadd.f32 %v1057, %v1629
      %v1631 = vpop.f32.mrf.mxu0
      %v1632 = vpop.f32.mrf.mxu0
      %v1633 = vadd.f32 %v1060, %v1632
      %v1634 = vpop.f32.mrf.mxu0
      %1635 = vmatprep.mubr.bf16.mxu0 0
      %1636 = vmatmul.mubr.bf16.gmra.mxu0 %v709
      %v1637 = vpop.f32.mrf.mxu0
      %v1638 = vadd.f32 %v1065, %v1637
      %v1639 = vpop.f32.mrf.mxu0
      %v1640 = vpop.f32.mrf.mxu0
      %v1641 = vadd.f32 %v1068, %v1640
      %v1642 = vpop.f32.mrf.mxu0
      %1643 = vmatprep.mubr.bf16.mxu0 0
      %1644 = vmatmul.mubr.bf16.gmra.mxu0 %v712
      %v1645 = vpop.f32.mrf.mxu0
      %v1646 = vadd.f32 %v1073, %v1645
      %v1647 = vpop.f32.mrf.mxu0
      %v1648 = vpop.f32.mrf.mxu0
      %v1649 = vadd.f32 %v1076, %v1648
      %v1650 = vpop.f32.mrf.mxu0
      %1651 = vmatprep.mubr.bf16.mxu0 0
      %1652 = vmatmul.mubr.bf16.gmra.mxu0 %v715
      %v1653 = vpop.f32.mrf.mxu0
      %v1654 = vadd.f32 %v1081, %v1653
      %v1655 = vpop.f32.mrf.mxu0
      %v1656 = vpop.f32.mrf.mxu0
      %v1657 = vadd.f32 %v1084, %v1656
      %v1658 = vpop.f32.mrf.mxu0
      %1659 = vmatprep.mubr.bf16.mxu0 0
      %1660 = vmatmul.mubr.bf16.gmra.mxu0 %v718
      %v1661 = vpop.f32.mrf.mxu0
      %v1662 = vadd.f32 %v1089, %v1661
      %v1663 = vpop.f32.mrf.mxu0
      %v1664 = vpop.f32.mrf.mxu0
      %v1665 = vadd.f32 %v1092, %v1664
      %v1666 = vpop.f32.mrf.mxu0
      %1667 = vmatprep.mubr.bf16.mxu0 0
      %1668 = vmatmul.mubr.bf16.gmra.mxu0 %v721
      %v1669 = vpop.f32.mrf.mxu0
      %v1670 = vadd.f32 %v1097, %v1669
      %v1671 = vpop.f32.mrf.mxu0
      %v1672 = vpop.f32.mrf.mxu0
      %v1673 = vadd.f32 %v1100, %v1672
      %v1674 = vpop.f32.mrf.mxu0
      %1675 = vmatprep.mubr.bf16.mxu0 0
      %1676 = vmatmul.mubr.bf16.gmra.mxu0 %v724
      %v1677 = vpop.f32.mrf.mxu0
      %v1678 = vadd.f32 %v1105, %v1677
      %v1679 = vpop.f32.mrf.mxu0
      %v1680 = vpop.f32.mrf.mxu0
      %v1681 = vadd.f32 %v1108, %v1680
      %v1682 = vpop.f32.mrf.mxu0
      %1683 = vmatprep.mubr.bf16.mxu0 0
      %1684 = vmatmul.mubr.bf16.gmra.mxu0 %v727
      %v1685 = vpop.f32.mrf.mxu0
      %v1686 = vadd.f32 %v1113, %v1685
      %v1687 = vpop.f32.mrf.mxu0
      %v1688 = vpop.f32.mrf.mxu0
      %v1689 = vadd.f32 %v1116, %v1688
      %v1690 = vpop.f32.mrf.mxu0
      %1691 = vmatprep.mubr.bf16.mxu0 0
      %1692 = vmatmul.mubr.bf16.gmra.mxu0 %v730
      %v1693 = vpop.f32.mrf.mxu0
      %v1694 = vadd.f32 %v1121, %v1693
      %v1695 = vpop.f32.mrf.mxu0
      %v1696 = vpop.f32.mrf.mxu0
      %v1697 = vadd.f32 %v1124, %v1696
      %v1698 = vpop.f32.mrf.mxu0
      %1699 = vmatprep.mubr.bf16.mxu0 0
      %1700 = vmatmul.mubr.bf16.gmra.mxu0 %v733
      %v1701 = vpop.f32.mrf.mxu0
      %v1702 = vadd.f32 %v1129, %v1701
      %v1703 = vpop.f32.mrf.mxu0
      %v1704 = vpop.f32.mrf.mxu0
      %v1705 = vadd.f32 %v1132, %v1704
      %v1706 = vpop.f32.mrf.mxu0
      %1707 = vmatprep.mubr.bf16.mxu0 0
      %1708 = vmatmul.mubr.bf16.gmra.mxu0 %v736
      %v1709 = vpop.f32.mrf.mxu0
      %v1710 = vadd.f32 %v1137, %v1709
      %v1711 = vpop.f32.mrf.mxu0
      %v1712 = vpop.f32.mrf.mxu0
      %v1713 = vadd.f32 %v1140, %v1712
      %v1714 = vpop.f32.mrf.mxu0
      %1715 = vmatprep.mubr.bf16.mxu0 0
      %1716 = vmatmul.mubr.bf16.gmra.mxu0 %v739
      %v1717 = vpop.f32.mrf.mxu0
      %v1718 = vadd.f32 %v1145, %v1717
      %v1719 = vpop.f32.mrf.mxu0
      %v1720 = vpop.f32.mrf.mxu0
      %v1721 = vadd.f32 %v1148, %v1720
      %v1722 = vpop.f32.mrf.mxu0
      %1723 = vmatprep.mubr.bf16.mxu0 0
      %1724 = vmatmul.mubr.bf16.gmra.mxu0 %v742
      %v1725 = vpop.f32.mrf.mxu0
      %v1726 = vadd.f32 %v1153, %v1725
      %v1727 = vpop.f32.mrf.mxu0
      %v1728 = vpop.f32.mrf.mxu0
      %v1729 = vadd.f32 %v1156, %v1728
      %v1730 = vpop.f32.mrf.mxu0
      %1731 = vmatprep.mubr.bf16.mxu0 0
      %1732 = vmatmul.mubr.bf16.gmra.mxu0 %v745
      %v1733 = vpop.f32.mrf.mxu0
      %v1734 = vadd.f32 %v1161, %v1733
      %v1735 = vpop.f32.mrf.mxu0
      %v1736 = vpop.f32.mrf.mxu0
      %v1737 = vadd.f32 %v1164, %v1736
      %v1738 = vpop.f32.mrf.mxu0
      %1739 = vmatprep.mubr.bf16.mxu0 0
      %1740 = vmatmul.mubr.bf16.gmra.mxu0 %v748
      %v1741 = vpop.f32.mrf.mxu0
      %v1742 = vadd.f32 %v1169, %v1741
      %v1743 = vpop.f32.mrf.mxu0
      %v1744 = vpop.f32.mrf.mxu0
      %v1745 = vadd.f32 %v1172, %v1744
      %v1746 = vpop.f32.mrf.mxu0
      %1747 = vmatprep.mubr.bf16.mxu0 0
      %1748 = vmatmul.mubr.bf16.gmra.mxu0 %v751
      %v1749 = vpop.f32.mrf.mxu0
      %v1750 = vadd.f32 %v1177, %v1749
      %v1751 = vpop.f32.mrf.mxu0
      %v1752 = vpop.f32.mrf.mxu0
      %v1753 = vadd.f32 %v1180, %v1752
      %v1754 = vpop.f32.mrf.mxu0
      %1755 = vmatprep.mubr.bf16.mxu0 0
      %1756 = vmatmul.mubr.bf16.gmra.mxu0 %v754
      %v1757 = vpop.f32.mrf.mxu0
      %v1758 = vadd.f32 %v1185, %v1757
      %v1759 = vpop.f32.mrf.mxu0
      %v1760 = vpop.f32.mrf.mxu0
      %v1761 = vadd.f32 %v1188, %v1760
      %v1762 = vpop.f32.mrf.mxu0
      %1763 = vmatprep.mubr.bf16.mxu0 0
      %1764 = vmatmul.mubr.bf16.gmra.mxu0 %v757
      %v1765 = vpop.f32.mrf.mxu0
      %v1766 = vadd.f32 %v1193, %v1765
      %v1767 = vpop.f32.mrf.mxu0
      %v1768 = vpop.f32.mrf.mxu0
      %v1769 = vadd.f32 %v1196, %v1768
      %v1770 = vpop.f32.mrf.mxu0
      %1771 = vmatprep.mubr.bf16.mxu0 0
      %1772 = vmatmul.mubr.bf16.gmra.mxu0 %v760
      %v1773 = vpop.f32.mrf.mxu0
      %v1774 = vadd.f32 %v1201, %v1773
      %v1775 = vpop.f32.mrf.mxu0
      %v1776 = vpop.f32.mrf.mxu0
      %v1777 = vadd.f32 %v1204, %v1776
      %v1778 = vpop.f32.mrf.mxu0
      %1779 = vmatprep.mubr.bf16.mxu0 0
      %1780 = vmatmul.mubr.bf16.gmra.mxu0 %v763
      %v1781 = vpop.f32.mrf.mxu0
      %v1782 = vadd.f32 %v1209, %v1781
      %v1783 = vpop.f32.mrf.mxu0
      %v1784 = vpop.f32.mrf.mxu0
      %v1785 = vadd.f32 %v1212, %v1784
      %v1786 = vpop.f32.mrf.mxu0
      %1787 = vmatprep.mubr.bf16.mxu0 0
      %1788 = vmatmul.mubr.bf16.gmra.mxu0 %v766
      %v1789 = vpop.f32.mrf.mxu0
      %v1790 = vadd.f32 %v1217, %v1789
      %v1791 = vpop.f32.mrf.mxu0
      %v1792 = vpop.f32.mrf.mxu0
      %v1793 = vadd.f32 %v1220, %v1792
      %v1794 = vpop.f32.mrf.mxu0
      %1795 = vmatprep.mubr.bf16.mxu0 0
      %1796 = vmatmul.mubr.bf16.gmra.mxu0 %v769
      %v1797 = vpop.f32.mrf.mxu0
      %v1798 = vadd.f32 %v1225, %v1797
      %v1799 = vpop.f32.mrf.mxu0
      %v1800 = vpop.f32.mrf.mxu0
      %v1801 = vadd.f32 %v1228, %v1800
      %v1802 = vpop.f32.mrf.mxu0
      %1803 = vmatprep.mubr.bf16.mxu0 0
      %1804 = vmatmul.mubr.bf16.gmra.mxu0 %v772
      %v1805 = vpop.f32.mrf.mxu0
      %v1806 = vadd.f32 %v1233, %v1805
      %v1807 = vpop.f32.mrf.mxu0
      %v1808 = vpop.f32.mrf.mxu0
      %v1809 = vadd.f32 %v1236, %v1808
      %v1810 = vpop.f32.mrf.mxu0
      %1811 = vmatprep.mubr.bf16.mxu0 0
      %1812 = vmatmul.mubr.bf16.gmra.mxu0 %v775
      %v1813 = vpop.f32.mrf.mxu0
      %v1814 = vadd.f32 %v1241, %v1813
      %v1815 = vpop.f32.mrf.mxu0
      %v1816 = vpop.f32.mrf.mxu0
      %v1817 = vadd.f32 %v1244, %v1816
      %v1818 = vpop.f32.mrf.mxu0
      %1819 = vmatprep.mubr.bf16.mxu0 0
      %1820 = vmatmul.mubr.bf16.gmra.mxu0 %v778
      %v1821 = vpop.f32.mrf.mxu0
      %v1822 = vadd.f32 %v1249, %v1821
      %v1823 = vpop.f32.mrf.mxu0
      %v1824 = vpop.f32.mrf.mxu0
      %v1825 = vadd.f32 %v1252, %v1824
      %v1826 = vpop.f32.mrf.mxu0
      %1827 = vmatprep.mubr.bf16.mxu0 0
      %1828 = vmatmul.mubr.bf16.gmra.mxu0 %v781
      %v1829 = vpop.f32.mrf.mxu0
      %v1830 = vadd.f32 %v1257, %v1829
      %v1831 = vpop.f32.mrf.mxu0
      %v1832 = vpop.f32.mrf.mxu0
      %v1833 = vadd.f32 %v1260, %v1832
      %v1834 = vpop.f32.mrf.mxu0
      %1835 = vmatprep.mubr.bf16.mxu0 0
      %1836 = vmatmul.mubr.bf16.gmra.mxu0 %v784
      %v1837 = vpop.f32.mrf.mxu0
      %v1838 = vadd.f32 %v1265, %v1837
      %v1839 = vpop.f32.mrf.mxu0
      %v1840 = vpop.f32.mrf.mxu0
      %v1841 = vadd.f32 %v1268, %v1840
      %v1842 = vpop.f32.mrf.mxu0
      %1843 = vmatprep.mubr.bf16.mxu0 0
      %1844 = vmatmul.mubr.bf16.gmra.mxu0 %v787
      %v1845 = vpop.f32.mrf.mxu0
      %v1846 = vadd.f32 %v1273, %v1845
      %v1847 = vpop.f32.mrf.mxu0
      %v1848 = vpop.f32.mrf.mxu0
      %v1849 = vadd.f32 %v1276, %v1848
      %v1850 = vpop.f32.mrf.mxu0
      %1851 = vmatprep.mubr.bf16.mxu0 0
      %1852 = vmatmul.mubr.bf16.gmra.mxu0 %v790
      %v1853 = vpop.f32.mrf.mxu0
      %v1854 = vadd.f32 %v1281, %v1853
      %v1855 = vpop.f32.mrf.mxu0
      %v1856 = vpop.f32.mrf.mxu0
      %v1857 = vadd.f32 %v1284, %v1856
      %v1858 = vpop.f32.mrf.mxu0
      %1859 = vmatprep.mubr.bf16.mxu0 0
      %1860 = vmatmul.mubr.bf16.gmra.mxu0 %v793
      %v1861 = vpop.f32.mrf.mxu0
      %v1862 = vadd.f32 %v1289, %v1861
      %v1863 = vpop.f32.mrf.mxu0
      %v1864 = vpop.f32.mrf.mxu0
      %v1865 = vadd.f32 %v1292, %v1864
      %v1866 = vpop.f32.mrf.mxu0
      %1867 = vmatprep.mubr.bf16.mxu0 0
      %1868 = vmatmul.mubr.bf16.gmra.mxu0 %v796
      %v1869 = vpop.f32.mrf.mxu0
      %v1870 = vadd.f32 %v1297, %v1869
      %v1871 = vpop.f32.mrf.mxu0
      %v1872 = vpop.f32.mrf.mxu0
      %v1873 = vadd.f32 %v1300, %v1872
      %v1874 = vpop.f32.mrf.mxu0
      %1875 = vmatprep.mubr.bf16.mxu0 0
      %1876 = vmatmul.mubr.bf16.gmra.mxu0 %v799
      %v1877 = vpop.f32.mrf.mxu0
      %v1878 = vadd.f32 %v1305, %v1877
      %v1879 = vpop.f32.mrf.mxu0
      %v1880 = vpop.f32.mrf.mxu0
      %v1881 = vadd.f32 %v1308, %v1880
      %v1882 = vpop.f32.mrf.mxu0
      %1883 = vmatprep.mubr.bf16.mxu0 0
      %1884 = vmatmul.mubr.bf16.gmra.mxu0 %v802
      %v1885 = vpop.f32.mrf.mxu0
      %v1886 = vadd.f32 %v1313, %v1885
      %v1887 = vpop.f32.mrf.mxu0
      %v1888 = vpop.f32.mrf.mxu0
      %v1889 = vadd.f32 %v1316, %v1888
      %v1890 = vpop.f32.mrf.mxu0
      %1891 = vmatprep.mubr.bf16.mxu0 0
      %1892 = vmatmul.mubr.bf16.gmra.mxu0 %v805
      %v1893 = vpop.f32.mrf.mxu0
      %v1894 = vadd.f32 %v1321, %v1893
      %v1895 = vpop.f32.mrf.mxu0
      %v1896 = vpop.f32.mrf.mxu0
      %v1897 = vadd.f32 %v1324, %v1896
      %v1898 = vpop.f32.mrf.mxu0
      %1899 = vmatprep.mubr.bf16.mxu0 0
      %1900 = vmatmul.mubr.bf16.gmra.mxu0 %v808
      %v1901 = vpop.f32.mrf.mxu0
      %v1902 = vadd.f32 %v1329, %v1901
      %v1903 = vpop.f32.mrf.mxu0
      %v1904 = vpop.f32.mrf.mxu0
      %v1905 = vadd.f32 %v1332, %v1904
      %v1906 = vpop.f32.mrf.mxu0
      %1907 = vmatprep.mubr.bf16.mxu0 0
      %1908 = vmatmul.mubr.bf16.gmra.mxu0 %v811
      %v1909 = vpop.f32.mrf.mxu0
      %v1910 = vadd.f32 %v1337, %v1909
      %v1911 = vpop.f32.mrf.mxu0
      %v1912 = vpop.f32.mrf.mxu0
      %v1913 = vadd.f32 %v1340, %v1912
      %v1914 = vpop.f32.mrf.mxu0
      %1915 = vmatprep.mubr.bf16.mxu0 0
      %1916 = vmatmul.mubr.bf16.gmra.mxu0 %v814
      %v1917 = vpop.f32.mrf.mxu0
      %v1918 = vadd.f32 %v1345, %v1917
      %v1919 = vpop.f32.mrf.mxu0
      %v1920 = vpop.f32.mrf.mxu0
      %v1921 = vadd.f32 %v1348, %v1920
      %v1922 = vpop.f32.mrf.mxu0
      %1923 = vmatprep.mubr.bf16.mxu0 0
      %1924 = vmatmul.mubr.bf16.gmra.mxu0 %v817
      %v1925 = vpop.f32.mrf.mxu0
      %v1926 = vadd.f32 %v1353, %v1925
      %v1927 = vpop.f32.mrf.mxu0
      %v1928 = vpop.f32.mrf.mxu0
      %v1929 = vadd.f32 %v1356, %v1928
      %v1930 = vpop.f32.mrf.mxu0
      %1931 = vmatprep.mubr.bf16.mxu0 0
      %1932 = vmatmul.mubr.bf16.gmra.mxu0 %v820
      %v1933 = vpop.f32.mrf.mxu0
      %v1934 = vadd.f32 %v1361, %v1933
      %v1935 = vpop.f32.mrf.mxu0
      %v1936 = vpop.f32.mrf.mxu0
      %v1937 = vadd.f32 %v1364, %v1936
      %v1938 = vpop.f32.mrf.mxu0
      %1939 = vmatprep.mubr.bf16.mxu0 0
      %1940 = vmatmul.mubr.bf16.gmra.mxu0 %v823
      %v1941 = vpop.f32.mrf.mxu0
      %v1942 = vadd.f32 %v1369, %v1941
      %v1943 = vpop.f32.mrf.mxu0
      %v1944 = vpop.f32.mrf.mxu0
      %v1945 = vadd.f32 %v1372, %v1944
      %v1946 = vpop.f32.mrf.mxu0
      %1947 = vmatprep.mubr.bf16.mxu0 0
      %1948 = vmatmul.mubr.bf16.gmra.mxu0 %v826
      %v1949 = vpop.f32.mrf.mxu0
      %v1950 = vadd.f32 %v1377, %v1949
      %v1951 = vpop.f32.mrf.mxu0
      %v1952 = vpop.f32.mrf.mxu0
      %v1953 = vadd.f32 %v1380, %v1952
      %v1954 = vpop.f32.mrf.mxu0
      %1955 = vdwg.mxu0
      %v1957 = vlaneseq
      %v1958 = vshrl.u32 %v1957, 7
      %v1959 = vsub.s32 0, %v1958
      %v1960 = vrot.slane %v172, %v1959
      %v1962 = vadd.f32 %v1446, %v1960
      %v1963 = vadd.f32 %v1449, %v1960
      %v1964 = vadd.f32 %v1454, %v1960
      %v1965 = vadd.f32 %v1457, %v1960
      %v1966 = vadd.f32 %v1462, %v1960
      %v1967 = vadd.f32 %v1465, %v1960
      %v1968 = vadd.f32 %v1470, %v1960
      %v1969 = vadd.f32 %v1473, %v1960
      %v1970 = vadd.f32 %v1478, %v1960
      %v1971 = vadd.f32 %v1481, %v1960
      %v1972 = vadd.f32 %v1486, %v1960
      %v1973 = vadd.f32 %v1489, %v1960
      %v1974 = vadd.f32 %v1494, %v1960
      %v1975 = vadd.f32 %v1497, %v1960
      %v1976 = vadd.f32 %v1502, %v1960
      %v1977 = vadd.f32 %v1505, %v1960
      %v1978 = vadd.f32 %v1510, %v1960
      %v1979 = vadd.f32 %v1513, %v1960
      %v1980 = vadd.f32 %v1518, %v1960
      %v1981 = vadd.f32 %v1521, %v1960
      %v1982 = vadd.f32 %v1526, %v1960
      %v1983 = vadd.f32 %v1529, %v1960
      %v1984 = vadd.f32 %v1534, %v1960
      %v1985 = vadd.f32 %v1537, %v1960
      %v1986 = vadd.f32 %v1542, %v1960
      %v1987 = vadd.f32 %v1545, %v1960
      %v1988 = vadd.f32 %v1550, %v1960
      %v1989 = vadd.f32 %v1553, %v1960
      %v1990 = vadd.f32 %v1558, %v1960
      %v1991 = vadd.f32 %v1561, %v1960
      %v1992 = vadd.f32 %v1566, %v1960
      %v1993 = vadd.f32 %v1569, %v1960
      %v1994 = vadd.f32 %v1574, %v1960
      %v1995 = vadd.f32 %v1577, %v1960
      %v1996 = vadd.f32 %v1582, %v1960
      %v1997 = vadd.f32 %v1585, %v1960
      %v1998 = vadd.f32 %v1590, %v1960
      %v1999 = vadd.f32 %v1593, %v1960
      %v2000 = vadd.f32 %v1598, %v1960
      %v2001 = vadd.f32 %v1601, %v1960
      %v2002 = vadd.f32 %v1606, %v1960
      %v2003 = vadd.f32 %v1609, %v1960
      %v2004 = vadd.f32 %v1614, %v1960
      %v2005 = vadd.f32 %v1617, %v1960
      %v2006 = vadd.f32 %v1622, %v1960
      %v2007 = vadd.f32 %v1625, %v1960
      %v2008 = vadd.f32 %v1630, %v1960
      %v2009 = vadd.f32 %v1633, %v1960
      %v2010 = vadd.f32 %v1638, %v1960
      %v2011 = vadd.f32 %v1641, %v1960
      %v2012 = vadd.f32 %v1646, %v1960
      %v2013 = vadd.f32 %v1649, %v1960
      %v2014 = vadd.f32 %v1654, %v1960
      %v2015 = vadd.f32 %v1657, %v1960
      %v2016 = vadd.f32 %v1662, %v1960
      %v2017 = vadd.f32 %v1665, %v1960
      %v2018 = vadd.f32 %v1670, %v1960
      %v2019 = vadd.f32 %v1673, %v1960
      %v2020 = vadd.f32 %v1678, %v1960
      %v2021 = vadd.f32 %v1681, %v1960
      %v2022 = vadd.f32 %v1686, %v1960
      %v2023 = vadd.f32 %v1689, %v1960
      %v2024 = vadd.f32 %v1694, %v1960
      %v2025 = vadd.f32 %v1697, %v1960
      %v2026 = vadd.f32 %v1702, %v1960
      %v2027 = vadd.f32 %v1705, %v1960
      %v2028 = vadd.f32 %v1710, %v1960
      %v2029 = vadd.f32 %v1713, %v1960
      %v2030 = vadd.f32 %v1718, %v1960
      %v2031 = vadd.f32 %v1721, %v1960
      %v2032 = vadd.f32 %v1726, %v1960
      %v2033 = vadd.f32 %v1729, %v1960
      %v2034 = vadd.f32 %v1734, %v1960
      %v2035 = vadd.f32 %v1737, %v1960
      %v2036 = vadd.f32 %v1742, %v1960
      %v2037 = vadd.f32 %v1745, %v1960
      %v2038 = vadd.f32 %v1750, %v1960
      %v2039 = vadd.f32 %v1753, %v1960
      %v2040 = vadd.f32 %v1758, %v1960
      %v2041 = vadd.f32 %v1761, %v1960
      %v2042 = vadd.f32 %v1766, %v1960
      %v2043 = vadd.f32 %v1769, %v1960
      %v2044 = vadd.f32 %v1774, %v1960
      %v2045 = vadd.f32 %v1777, %v1960
      %v2046 = vadd.f32 %v1782, %v1960
      %v2047 = vadd.f32 %v1785, %v1960
      %v2048 = vadd.f32 %v1790, %v1960
      %v2049 = vadd.f32 %v1793, %v1960
      %v2050 = vadd.f32 %v1798, %v1960
      %v2051 = vadd.f32 %v1801, %v1960
      %v2052 = vadd.f32 %v1806, %v1960
      %v2053 = vadd.f32 %v1809, %v1960
      %v2054 = vadd.f32 %v1814, %v1960
      %v2055 = vadd.f32 %v1817, %v1960
      %v2056 = vadd.f32 %v1822, %v1960
      %v2057 = vadd.f32 %v1825, %v1960
      %v2058 = vadd.f32 %v1830, %v1960
      %v2059 = vadd.f32 %v1833, %v1960
      %v2060 = vadd.f32 %v1838, %v1960
      %v2061 = vadd.f32 %v1841, %v1960
      %v2062 = vadd.f32 %v1846, %v1960
      %v2063 = vadd.f32 %v1849, %v1960
      %v2064 = vadd.f32 %v1854, %v1960
      %v2065 = vadd.f32 %v1857, %v1960
      %v2066 = vadd.f32 %v1862, %v1960
      %v2067 = vadd.f32 %v1865, %v1960
      %v2068 = vadd.f32 %v1870, %v1960
      %v2069 = vadd.f32 %v1873, %v1960
      %v2070 = vadd.f32 %v1878, %v1960
      %v2071 = vadd.f32 %v1881, %v1960
      %v2072 = vadd.f32 %v1886, %v1960
      %v2073 = vadd.f32 %v1889, %v1960
      %v2074 = vadd.f32 %v1894, %v1960
      %v2075 = vadd.f32 %v1897, %v1960
      %v2076 = vadd.f32 %v1902, %v1960
      %v2077 = vadd.f32 %v1905, %v1960
      %v2078 = vadd.f32 %v1910, %v1960
      %v2079 = vadd.f32 %v1913, %v1960
      %v2080 = vadd.f32 %v1918, %v1960
      %v2081 = vadd.f32 %v1921, %v1960
      %v2082 = vadd.f32 %v1926, %v1960
      %v2083 = vadd.f32 %v1929, %v1960
      %v2084 = vadd.f32 %v1934, %v1960
      %v2085 = vadd.f32 %v1937, %v1960
      %v2086 = vadd.f32 %v1942, %v1960
      %v2087 = vadd.f32 %v1945, %v1960
      %v2088 = vadd.f32 %v1950, %v1960
      %v2089 = vadd.f32 %v1953, %v1960
      %v2090 = vmax.f32 %v1962, 0.0
      %v2091 = vmax.f32 %v1963, 0.0
      %v2092 = vmax.f32 %v1964, 0.0
      %v2093 = vmax.f32 %v1965, 0.0
      %v2094 = vmax.f32 %v1966, 0.0
      %v2095 = vmax.f32 %v1967, 0.0
      %v2096 = vmax.f32 %v1968, 0.0
      %v2097 = vmax.f32 %v1969, 0.0
      %v2098 = vmax.f32 %v1970, 0.0
      %v2099 = vmax.f32 %v1971, 0.0
      %v2100 = vmax.f32 %v1972, 0.0
      %v2101 = vmax.f32 %v1973, 0.0
      %v2102 = vmax.f32 %v1974, 0.0
      %v2103 = vmax.f32 %v1975, 0.0
      %v2104 = vmax.f32 %v1976, 0.0
      %v2105 = vmax.f32 %v1977, 0.0
      %v2106 = vmax.f32 %v1978, 0.0
      %v2107 = vmax.f32 %v1979, 0.0
      %v2108 = vmax.f32 %v1980, 0.0
      %v2109 = vmax.f32 %v1981, 0.0
      %v2110 = vmax.f32 %v1982, 0.0
      %v2111 = vmax.f32 %v1983, 0.0
      %v2112 = vmax.f32 %v1984, 0.0
      %v2113 = vmax.f32 %v1985, 0.0
      %v2114 = vmax.f32 %v1986, 0.0
      %v2115 = vmax.f32 %v1987, 0.0
      %v2116 = vmax.f32 %v1988, 0.0
      %v2117 = vmax.f32 %v1989, 0.0
      %v2118 = vmax.f32 %v1990, 0.0
      %v2119 = vmax.f32 %v1991, 0.0
      %v2120 = vmax.f32 %v1992, 0.0
      %v2121 = vmax.f32 %v1993, 0.0
      %v2122 = vmax.f32 %v1994, 0.0
      %v2123 = vmax.f32 %v1995, 0.0
      %v2124 = vmax.f32 %v1996, 0.0
      %v2125 = vmax.f32 %v1997, 0.0
      %v2126 = vmax.f32 %v1998, 0.0
      %v2127 = vmax.f32 %v1999, 0.0
      %v2128 = vmax.f32 %v2000, 0.0
      %v2129 = vmax.f32 %v2001, 0.0
      %v2130 = vmax.f32 %v2002, 0.0
      %v2131 = vmax.f32 %v2003, 0.0
      %v2132 = vmax.f32 %v2004, 0.0
      %v2133 = vmax.f32 %v2005, 0.0
      %v2134 = vmax.f32 %v2006, 0.0
      %v2135 = vmax.f32 %v2007, 0.0
      %v2136 = vmax.f32 %v2008, 0.0
      %v2137 = vmax.f32 %v2009, 0.0
      %v2138 = vmax.f32 %v2010, 0.0
      %v2139 = vmax.f32 %v2011, 0.0
      %v2140 = vmax.f32 %v2012, 0.0
      %v2141 = vmax.f32 %v2013, 0.0
      %v2142 = vmax.f32 %v2014, 0.0
      %v2143 = vmax.f32 %v2015, 0.0
      %v2144 = vmax.f32 %v2016, 0.0
      %v2145 = vmax.f32 %v2017, 0.0
      %v2146 = vmax.f32 %v2018, 0.0
      %v2147 = vmax.f32 %v2019, 0.0
      %v2148 = vmax.f32 %v2020, 0.0
      %v2149 = vmax.f32 %v2021, 0.0
      %v2150 = vmax.f32 %v2022, 0.0
      %v2151 = vmax.f32 %v2023, 0.0
      %v2152 = vmax.f32 %v2024, 0.0
      %v2153 = vmax.f32 %v2025, 0.0
      %v2154 = vmax.f32 %v2026, 0.0
      %v2155 = vmax.f32 %v2027, 0.0
      %v2156 = vmax.f32 %v2028, 0.0
      %v2157 = vmax.f32 %v2029, 0.0
      %v2158 = vmax.f32 %v2030, 0.0
      %v2159 = vmax.f32 %v2031, 0.0
      %v2160 = vmax.f32 %v2032, 0.0
      %v2161 = vmax.f32 %v2033, 0.0
      %v2162 = vmax.f32 %v2034, 0.0
      %v2163 = vmax.f32 %v2035, 0.0
      %v2164 = vmax.f32 %v2036, 0.0
      %v2165 = vmax.f32 %v2037, 0.0
      %v2166 = vmax.f32 %v2038, 0.0
      %v2167 = vmax.f32 %v2039, 0.0
      %v2168 = vmax.f32 %v2040, 0.0
      %v2169 = vmax.f32 %v2041, 0.0
      %v2170 = vmax.f32 %v2042, 0.0
      %v2171 = vmax.f32 %v2043, 0.0
      %v2172 = vmax.f32 %v2044, 0.0
      %v2173 = vmax.f32 %v2045, 0.0
      %v2174 = vmax.f32 %v2046, 0.0
      %v2175 = vmax.f32 %v2047, 0.0
      %v2176 = vmax.f32 %v2048, 0.0
      %v2177 = vmax.f32 %v2049, 0.0
      %v2178 = vmax.f32 %v2050, 0.0
      %v2179 = vmax.f32 %v2051, 0.0
      %v2180 = vmax.f32 %v2052, 0.0
      %v2181 = vmax.f32 %v2053, 0.0
      %v2182 = vmax.f32 %v2054, 0.0
      %v2183 = vmax.f32 %v2055, 0.0
      %v2184 = vmax.f32 %v2056, 0.0
      %v2185 = vmax.f32 %v2057, 0.0
      %v2186 = vmax.f32 %v2058, 0.0
      %v2187 = vmax.f32 %v2059, 0.0
      %v2188 = vmax.f32 %v2060, 0.0
      %v2189 = vmax.f32 %v2061, 0.0
      %v2190 = vmax.f32 %v2062, 0.0
      %v2191 = vmax.f32 %v2063, 0.0
      %v2192 = vmax.f32 %v2064, 0.0
      %v2193 = vmax.f32 %v2065, 0.0
      %v2194 = vmax.f32 %v2066, 0.0
      %v2195 = vmax.f32 %v2067, 0.0
      %v2196 = vmax.f32 %v2068, 0.0
      %v2197 = vmax.f32 %v2069, 0.0
      %v2198 = vmax.f32 %v2070, 0.0
      %v2199 = vmax.f32 %v2071, 0.0
      %v2200 = vmax.f32 %v2072, 0.0
      %v2201 = vmax.f32 %v2073, 0.0
      %v2202 = vmax.f32 %v2074, 0.0
      %v2203 = vmax.f32 %v2075, 0.0
      %v2204 = vmax.f32 %v2076, 0.0
      %v2205 = vmax.f32 %v2077, 0.0
      %v2206 = vmax.f32 %v2078, 0.0
      %v2207 = vmax.f32 %v2079, 0.0
      %v2208 = vmax.f32 %v2080, 0.0
      %v2209 = vmax.f32 %v2081, 0.0
      %v2210 = vmax.f32 %v2082, 0.0
      %v2211 = vmax.f32 %v2083, 0.0
      %v2212 = vmax.f32 %v2084, 0.0
      %v2213 = vmax.f32 %v2085, 0.0
      %v2214 = vmax.f32 %v2086, 0.0
      %v2215 = vmax.f32 %v2087, 0.0
      %v2216 = vmax.f32 %v2088, 0.0
      %v2217 = vmax.f32 %v2089, 0.0
      %v2218 = vpack.c.bf16 %v2091, %v2090
      %v2219 = vpack.c.bf16 %v2093, %v2092
      %v2220 = vpack.c.bf16 %v2095, %v2094
      %v2221 = vpack.c.bf16 %v2097, %v2096
      %v2222 = vpack.c.bf16 %v2099, %v2098
      %v2223 = vpack.c.bf16 %v2101, %v2100
      %v2224 = vpack.c.bf16 %v2103, %v2102
      %v2225 = vpack.c.bf16 %v2105, %v2104
      %v2226 = vpack.c.bf16 %v2107, %v2106
      %v2227 = vpack.c.bf16 %v2109, %v2108
      %v2228 = vpack.c.bf16 %v2111, %v2110
      %v2229 = vpack.c.bf16 %v2113, %v2112
      %v2230 = vpack.c.bf16 %v2115, %v2114
      %v2231 = vpack.c.bf16 %v2117, %v2116
      %v2232 = vpack.c.bf16 %v2119, %v2118
      %v2233 = vpack.c.bf16 %v2121, %v2120
      %v2234 = vpack.c.bf16 %v2123, %v2122
      %v2235 = vpack.c.bf16 %v2125, %v2124
      %v2236 = vpack.c.bf16 %v2127, %v2126
      %v2237 = vpack.c.bf16 %v2129, %v2128
      %v2238 = vpack.c.bf16 %v2131, %v2130
      %v2239 = vpack.c.bf16 %v2133, %v2132
      %v2240 = vpack.c.bf16 %v2135, %v2134
      %v2241 = vpack.c.bf16 %v2137, %v2136
      %v2242 = vpack.c.bf16 %v2139, %v2138
      %v2243 = vpack.c.bf16 %v2141, %v2140
      %v2244 = vpack.c.bf16 %v2143, %v2142
      %v2245 = vpack.c.bf16 %v2145, %v2144
      %v2246 = vpack.c.bf16 %v2147, %v2146
      %v2247 = vpack.c.bf16 %v2149, %v2148
      %v2248 = vpack.c.bf16 %v2151, %v2150
      %v2249 = vpack.c.bf16 %v2153, %v2152
      %v2250 = vpack.c.bf16 %v2155, %v2154
      %v2251 = vpack.c.bf16 %v2157, %v2156
      %v2252 = vpack.c.bf16 %v2159, %v2158
      %v2253 = vpack.c.bf16 %v2161, %v2160
      %v2254 = vpack.c.bf16 %v2163, %v2162
      %v2255 = vpack.c.bf16 %v2165, %v2164
      %v2256 = vpack.c.bf16 %v2167, %v2166
      %v2257 = vpack.c.bf16 %v2169, %v2168
      %v2258 = vpack.c.bf16 %v2171, %v2170
      %v2259 = vpack.c.bf16 %v2173, %v2172
      %v2260 = vpack.c.bf16 %v2175, %v2174
      %v2261 = vpack.c.bf16 %v2177, %v2176
      %v2262 = vpack.c.bf16 %v2179, %v2178
      %v2263 = vpack.c.bf16 %v2181, %v2180
      %v2264 = vpack.c.bf16 %v2183, %v2182
      %v2265 = vpack.c.bf16 %v2185, %v2184
      %v2266 = vpack.c.bf16 %v2187, %v2186
      %v2267 = vpack.c.bf16 %v2189, %v2188
      %v2268 = vpack.c.bf16 %v2191, %v2190
      %v2269 = vpack.c.bf16 %v2193, %v2192
      %v2270 = vpack.c.bf16 %v2195, %v2194
      %v2271 = vpack.c.bf16 %v2197, %v2196
      %v2272 = vpack.c.bf16 %v2199, %v2198
      %v2273 = vpack.c.bf16 %v2201, %v2200
      %v2274 = vpack.c.bf16 %v2203, %v2202
      %v2275 = vpack.c.bf16 %v2205, %v2204
      %v2276 = vpack.c.bf16 %v2207, %v2206
      %v2277 = vpack.c.bf16 %v2209, %v2208
      %v2278 = vpack.c.bf16 %v2211, %v2210
      %v2279 = vpack.c.bf16 %v2213, %v2212
      %v2280 = vpack.c.bf16 %v2215, %v2214
      %v2281 = vpack.c.bf16 %v2217, %v2216
      %v2346 = vunpack.c.l.b16 %v2218
      %v2347 = vunpack.c.h.b16 %v2218
      %v2348 = vunpack.c.l.b16 %v2219
      %v2349 = vunpack.c.h.b16 %v2219
      %v2350 = vunpack.c.l.b16 %v2220
      %v2351 = vunpack.c.h.b16 %v2220
      %v2352 = vunpack.c.l.b16 %v2221
      %v2353 = vunpack.c.h.b16 %v2221
      %v2354 = vunpack.c.l.b16 %v2222
      %v2355 = vunpack.c.h.b16 %v2222
      %v2356 = vunpack.c.l.b16 %v2223
      %v2357 = vunpack.c.h.b16 %v2223
      %v2358 = vunpack.c.l.b16 %v2224
      %v2359 = vunpack.c.h.b16 %v2224
      %v2360 = vunpack.c.l.b16 %v2225
      %v2361 = vunpack.c.h.b16 %v2225
      %v2362 = vunpack.c.l.b16 %v2226
      %v2363 = vunpack.c.h.b16 %v2226
      %v2364 = vunpack.c.l.b16 %v2227
      %v2365 = vunpack.c.h.b16 %v2227
      %v2366 = vunpack.c.l.b16 %v2228
      %v2367 = vunpack.c.h.b16 %v2228
      %v2368 = vunpack.c.l.b16 %v2229
      %v2369 = vunpack.c.h.b16 %v2229
      %v2370 = vunpack.c.l.b16 %v2230
      %v2371 = vunpack.c.h.b16 %v2230
      %v2372 = vunpack.c.l.b16 %v2231
      %v2373 = vunpack.c.h.b16 %v2231
      %v2374 = vunpack.c.l.b16 %v2232
      %v2375 = vunpack.c.h.b16 %v2232
      %v2376 = vunpack.c.l.b16 %v2233
      %v2377 = vunpack.c.h.b16 %v2233
      %v2378 = vunpack.c.l.b16 %v2234
      %v2379 = vunpack.c.h.b16 %v2234
      %v2380 = vunpack.c.l.b16 %v2235
      %v2381 = vunpack.c.h.b16 %v2235
      %v2382 = vunpack.c.l.b16 %v2236
      %v2383 = vunpack.c.h.b16 %v2236
      %v2384 = vunpack.c.l.b16 %v2237
      %v2385 = vunpack.c.h.b16 %v2237
      %v2386 = vunpack.c.l.b16 %v2238
      %v2387 = vunpack.c.h.b16 %v2238
      %v2388 = vunpack.c.l.b16 %v2239
      %v2389 = vunpack.c.h.b16 %v2239
      %v2390 = vunpack.c.l.b16 %v2240
      %v2391 = vunpack.c.h.b16 %v2240
      %v2392 = vunpack.c.l.b16 %v2241
      %v2393 = vunpack.c.h.b16 %v2241
      %v2394 = vunpack.c.l.b16 %v2242
      %v2395 = vunpack.c.h.b16 %v2242
      %v2396 = vunpack.c.l.b16 %v2243
      %v2397 = vunpack.c.h.b16 %v2243
      %v2398 = vunpack.c.l.b16 %v2244
      %v2399 = vunpack.c.h.b16 %v2244
      %v2400 = vunpack.c.l.b16 %v2245
      %v2401 = vunpack.c.h.b16 %v2245
      %v2402 = vunpack.c.l.b16 %v2246
      %v2403 = vunpack.c.h.b16 %v2246
      %v2404 = vunpack.c.l.b16 %v2247
      %v2405 = vunpack.c.h.b16 %v2247
      %v2406 = vunpack.c.l.b16 %v2248
      %v2407 = vunpack.c.h.b16 %v2248
      %v2408 = vunpack.c.l.b16 %v2249
      %v2409 = vunpack.c.h.b16 %v2249
      %v2410 = vunpack.c.l.b16 %v2250
      %v2411 = vunpack.c.h.b16 %v2250
      %v2412 = vunpack.c.l.b16 %v2251
      %v2413 = vunpack.c.h.b16 %v2251
      %v2414 = vunpack.c.l.b16 %v2252
      %v2415 = vunpack.c.h.b16 %v2252
      %v2416 = vunpack.c.l.b16 %v2253
      %v2417 = vunpack.c.h.b16 %v2253
      %v2418 = vunpack.c.l.b16 %v2254
      %v2419 = vunpack.c.h.b16 %v2254
      %v2420 = vunpack.c.l.b16 %v2255
      %v2421 = vunpack.c.h.b16 %v2255
      %v2422 = vunpack.c.l.b16 %v2256
      %v2423 = vunpack.c.h.b16 %v2256
      %v2424 = vunpack.c.l.b16 %v2257
      %v2425 = vunpack.c.h.b16 %v2257
      %v2426 = vunpack.c.l.b16 %v2258
      %v2427 = vunpack.c.h.b16 %v2258
      %v2428 = vunpack.c.l.b16 %v2259
      %v2429 = vunpack.c.h.b16 %v2259
      %v2430 = vunpack.c.l.b16 %v2260
      %v2431 = vunpack.c.h.b16 %v2260
      %v2432 = vunpack.c.l.b16 %v2261
      %v2433 = vunpack.c.h.b16 %v2261
      %v2434 = vunpack.c.l.b16 %v2262
      %v2435 = vunpack.c.h.b16 %v2262
      %v2436 = vunpack.c.l.b16 %v2263
      %v2437 = vunpack.c.h.b16 %v2263
      %v2438 = vunpack.c.l.b16 %v2264
      %v2439 = vunpack.c.h.b16 %v2264
      %v2440 = vunpack.c.l.b16 %v2265
      %v2441 = vunpack.c.h.b16 %v2265
      %v2442 = vunpack.c.l.b16 %v2266
      %v2443 = vunpack.c.h.b16 %v2266
      %v2444 = vunpack.c.l.b16 %v2267
      %v2445 = vunpack.c.h.b16 %v2267
      %v2446 = vunpack.c.l.b16 %v2268
      %v2447 = vunpack.c.h.b16 %v2268
      %v2448 = vunpack.c.l.b16 %v2269
      %v2449 = vunpack.c.h.b16 %v2269
      %v2450 = vunpack.c.l.b16 %v2270
      %v2451 = vunpack.c.h.b16 %v2270
      %v2452 = vunpack.c.l.b16 %v2271
      %v2453 = vunpack.c.h.b16 %v2271
      %v2454 = vunpack.c.l.b16 %v2272
      %v2455 = vunpack.c.h.b16 %v2272
      %v2456 = vunpack.c.l.b16 %v2273
      %v2457 = vunpack.c.h.b16 %v2273
      %v2458 = vunpack.c.l.b16 %v2274
      %v2459 = vunpack.c.h.b16 %v2274
      %v2460 = vunpack.c.l.b16 %v2275
      %v2461 = vunpack.c.h.b16 %v2275
      %v2462 = vunpack.c.l.b16 %v2276
      %v2463 = vunpack.c.h.b16 %v2276
      %v2464 = vunpack.c.l.b16 %v2277
      %v2465 = vunpack.c.h.b16 %v2277
      %v2466 = vunpack.c.l.b16 %v2278
      %v2467 = vunpack.c.h.b16 %v2278
      %v2468 = vunpack.c.l.b16 %v2279
      %v2469 = vunpack.c.h.b16 %v2279
      %v2470 = vunpack.c.l.b16 %v2280
      %v2471 = vunpack.c.h.b16 %v2280
      %v2472 = vunpack.c.l.b16 %v2281
      %v2473 = vunpack.c.h.b16 %v2281
      %v2474 = vpack.c.b16 %v2346, %v2346
      %v2475 = vpack.c.b16 %v2347, %v2347
      %v2476 = vpack.c.b16 %v2348, %v2348
      %v2477 = vpack.c.b16 %v2349, %v2349
      %v2478 = vpack.c.b16 %v2350, %v2350
      %v2479 = vpack.c.b16 %v2351, %v2351
      %v2480 = vpack.c.b16 %v2352, %v2352
      %v2481 = vpack.c.b16 %v2353, %v2353
      %v2482 = vpack.c.b16 %v2354, %v2354
      %v2483 = vpack.c.b16 %v2355, %v2355
      %v2484 = vpack.c.b16 %v2356, %v2356
      %v2485 = vpack.c.b16 %v2357, %v2357
      %v2486 = vpack.c.b16 %v2358, %v2358
      %v2487 = vpack.c.b16 %v2359, %v2359
      %v2488 = vpack.c.b16 %v2360, %v2360
      %v2489 = vpack.c.b16 %v2361, %v2361
      %v2490 = vpack.c.b16 %v2362, %v2362
      %v2491 = vpack.c.b16 %v2363, %v2363
      %v2492 = vpack.c.b16 %v2364, %v2364
      %v2493 = vpack.c.b16 %v2365, %v2365
      %v2494 = vpack.c.b16 %v2366, %v2366
      %v2495 = vpack.c.b16 %v2367, %v2367
      %v2496 = vpack.c.b16 %v2368, %v2368
      %v2497 = vpack.c.b16 %v2369, %v2369
      %v2498 = vpack.c.b16 %v2370, %v2370
      %v2499 = vpack.c.b16 %v2371, %v2371
      %v2500 = vpack.c.b16 %v2372, %v2372
      %v2501 = vpack.c.b16 %v2373, %v2373
      %v2502 = vpack.c.b16 %v2374, %v2374
      %v2503 = vpack.c.b16 %v2375, %v2375
      %v2504 = vpack.c.b16 %v2376, %v2376
      %v2505 = vpack.c.b16 %v2377, %v2377
      %v2506 = vpack.c.b16 %v2378, %v2378
      %v2507 = vpack.c.b16 %v2379, %v2379
      %v2508 = vpack.c.b16 %v2380, %v2380
      %v2509 = vpack.c.b16 %v2381, %v2381
      %v2510 = vpack.c.b16 %v2382, %v2382
      %v2511 = vpack.c.b16 %v2383, %v2383
      %v2512 = vpack.c.b16 %v2384, %v2384
      %v2513 = vpack.c.b16 %v2385, %v2385
      %v2514 = vpack.c.b16 %v2386, %v2386
      %v2515 = vpack.c.b16 %v2387, %v2387
      %v2516 = vpack.c.b16 %v2388, %v2388
      %v2517 = vpack.c.b16 %v2389, %v2389
      %v2518 = vpack.c.b16 %v2390, %v2390
      %v2519 = vpack.c.b16 %v2391, %v2391
      %v2520 = vpack.c.b16 %v2392, %v2392
      %v2521 = vpack.c.b16 %v2393, %v2393
      %v2522 = vpack.c.b16 %v2394, %v2394
      %v2523 = vpack.c.b16 %v2395, %v2395
      %v2524 = vpack.c.b16 %v2396, %v2396
      %v2525 = vpack.c.b16 %v2397, %v2397
      %v2526 = vpack.c.b16 %v2398, %v2398
      %v2527 = vpack.c.b16 %v2399, %v2399
      %v2528 = vpack.c.b16 %v2400, %v2400
      %v2529 = vpack.c.b16 %v2401, %v2401
      %v2530 = vpack.c.b16 %v2402, %v2402
      %v2531 = vpack.c.b16 %v2403, %v2403
      %v2532 = vpack.c.b16 %v2404, %v2404
      %v2533 = vpack.c.b16 %v2405, %v2405
      %v2534 = vpack.c.b16 %v2406, %v2406
      %v2535 = vpack.c.b16 %v2407, %v2407
      %v2536 = vpack.c.b16 %v2408, %v2408
      %v2537 = vpack.c.b16 %v2409, %v2409
      %v2538 = vpack.c.b16 %v2410, %v2410
      %v2539 = vpack.c.b16 %v2411, %v2411
      %v2540 = vpack.c.b16 %v2412, %v2412
      %v2541 = vpack.c.b16 %v2413, %v2413
      %v2542 = vpack.c.b16 %v2414, %v2414
      %v2543 = vpack.c.b16 %v2415, %v2415
      %v2544 = vpack.c.b16 %v2416, %v2416
      %v2545 = vpack.c.b16 %v2417, %v2417
      %v2546 = vpack.c.b16 %v2418, %v2418
      %v2547 = vpack.c.b16 %v2419, %v2419
      %v2548 = vpack.c.b16 %v2420, %v2420
      %v2549 = vpack.c.b16 %v2421, %v2421
      %v2550 = vpack.c.b16 %v2422, %v2422
      %v2551 = vpack.c.b16 %v2423, %v2423
      %v2552 = vpack.c.b16 %v2424, %v2424
      %v2553 = vpack.c.b16 %v2425, %v2425
      %v2554 = vpack.c.b16 %v2426, %v2426
      %v2555 = vpack.c.b16 %v2427, %v2427
      %v2556 = vpack.c.b16 %v2428, %v2428
      %v2557 = vpack.c.b16 %v2429, %v2429
      %v2558 = vpack.c.b16 %v2430, %v2430
      %v2559 = vpack.c.b16 %v2431, %v2431
      %v2560 = vpack.c.b16 %v2432, %v2432
      %v2561 = vpack.c.b16 %v2433, %v2433
      %v2562 = vpack.c.b16 %v2434, %v2434
      %v2563 = vpack.c.b16 %v2435, %v2435
      %v2564 = vpack.c.b16 %v2436, %v2436
      %v2565 = vpack.c.b16 %v2437, %v2437
      %v2566 = vpack.c.b16 %v2438, %v2438
      %v2567 = vpack.c.b16 %v2439, %v2439
      %v2568 = vpack.c.b16 %v2440, %v2440
      %v2569 = vpack.c.b16 %v2441, %v2441
      %v2570 = vpack.c.b16 %v2442, %v2442
      %v2571 = vpack.c.b16 %v2443, %v2443
      %v2572 = vpack.c.b16 %v2444, %v2444
      %v2573 = vpack.c.b16 %v2445, %v2445
      %v2574 = vpack.c.b16 %v2446, %v2446
      %v2575 = vpack.c.b16 %v2447, %v2447
      %v2576 = vpack.c.b16 %v2448, %v2448
      %v2577 = vpack.c.b16 %v2449, %v2449
      %v2578 = vpack.c.b16 %v2450, %v2450
      %v2579 = vpack.c.b16 %v2451, %v2451
      %v2580 = vpack.c.b16 %v2452, %v2452
      %v2581 = vpack.c.b16 %v2453, %v2453
      %v2582 = vpack.c.b16 %v2454, %v2454
      %v2583 = vpack.c.b16 %v2455, %v2455
      %v2584 = vpack.c.b16 %v2456, %v2456
      %v2585 = vpack.c.b16 %v2457, %v2457
      %v2586 = vpack.c.b16 %v2458, %v2458
      %v2587 = vpack.c.b16 %v2459, %v2459
      %v2588 = vpack.c.b16 %v2460, %v2460
      %v2589 = vpack.c.b16 %v2461, %v2461
      %v2590 = vpack.c.b16 %v2462, %v2462
      %v2591 = vpack.c.b16 %v2463, %v2463
      %v2592 = vpack.c.b16 %v2464, %v2464
      %v2593 = vpack.c.b16 %v2465, %v2465
      %v2594 = vpack.c.b16 %v2466, %v2466
      %v2595 = vpack.c.b16 %v2467, %v2467
      %v2596 = vpack.c.b16 %v2468, %v2468
      %v2597 = vpack.c.b16 %v2469, %v2469
      %v2598 = vpack.c.b16 %v2470, %v2470
      %v2599 = vpack.c.b16 %v2471, %v2471
      %v2600 = vpack.c.b16 %v2472, %v2472
      %v2601 = vpack.c.b16 %v2473, %v2473
      %vm2730 = vcmask 257024
      %2731 = vst.msk [vmem:[%s170] sm:$0xf] %vm2730, %v2474
      %2732 = vst.msk [vmem:[%s170 + $0x4] sm:$0xf] %vm2730, %v2475
      %2733 = vst.msk [vmem:[%s170 + $0x8] sm:$0xf] %vm2730, %v2476
      %2734 = vst.msk [vmem:[%s170 + $0xc] sm:$0xf] %vm2730, %v2477
      %2735 = vst.msk [vmem:[%s170 + $0x10] sm:$0xf] %vm2730, %v2478
      %2736 = vst.msk [vmem:[%s170 + $0x14] sm:$0xf] %vm2730, %v2479
      %2737 = vst.msk [vmem:[%s170 + $0x18] sm:$0xf] %vm2730, %v2480
      %2738 = vst.msk [vmem:[%s170 + $0x1c] sm:$0xf] %vm2730, %v2481
      %2739 = vst.msk [vmem:[%s170 + $0x20] sm:$0xf] %vm2730, %v2482
      %2740 = vst.msk [vmem:[%s170 + $0x24] sm:$0xf] %vm2730, %v2483
      %2741 = vst.msk [vmem:[%s170 + $0x28] sm:$0xf] %vm2730, %v2484
      %2742 = vst.msk [vmem:[%s170 + $0x2c] sm:$0xf] %vm2730, %v2485
      %2743 = vst.msk [vmem:[%s170 + $0x30] sm:$0xf] %vm2730, %v2486
      %2744 = vst.msk [vmem:[%s170 + $0x34] sm:$0xf] %vm2730, %v2487
      %2745 = vst.msk [vmem:[%s170 + $0x38] sm:$0xf] %vm2730, %v2488
      %2746 = vst.msk [vmem:[%s170 + $0x3c] sm:$0xf] %vm2730, %v2489
      %2747 = vst.msk [vmem:[%s170 + $0x40] sm:$0xf] %vm2730, %v2490
      %2748 = vst.msk [vmem:[%s170 + $0x44] sm:$0xf] %vm2730, %v2491
      %2749 = vst.msk [vmem:[%s170 + $0x48] sm:$0xf] %vm2730, %v2492
      %2750 = vst.msk [vmem:[%s170 + $0x4c] sm:$0xf] %vm2730, %v2493
      %2751 = vst.msk [vmem:[%s170 + $0x50] sm:$0xf] %vm2730, %v2494
      %2752 = vst.msk [vmem:[%s170 + $0x54] sm:$0xf] %vm2730, %v2495
      %2753 = vst.msk [vmem:[%s170 + $0x58] sm:$0xf] %vm2730, %v2496
      %2754 = vst.msk [vmem:[%s170 + $0x5c] sm:$0xf] %vm2730, %v2497
      %2755 = vst.msk [vmem:[%s170 + $0x60] sm:$0xf] %vm2730, %v2498
      %2756 = vst.msk [vmem:[%s170 + $0x64] sm:$0xf] %vm2730, %v2499
      %2757 = vst.msk [vmem:[%s170 + $0x68] sm:$0xf] %vm2730, %v2500
      %2758 = vst.msk [vmem:[%s170 + $0x6c] sm:$0xf] %vm2730, %v2501
      %2759 = vst.msk [vmem:[%s170 + $0x70] sm:$0xf] %vm2730, %v2502
      %2760 = vst.msk [vmem:[%s170 + $0x74] sm:$0xf] %vm2730, %v2503
      %2761 = vst.msk [vmem:[%s170 + $0x78] sm:$0xf] %vm2730, %v2504
      %2762 = vst.msk [vmem:[%s170 + $0x7c] sm:$0xf] %vm2730, %v2505
      %2763 = vst.msk [vmem:[%s170 + $0x80] sm:$0xf] %vm2730, %v2506
      %2764 = vst.msk [vmem:[%s170 + $0x84] sm:$0xf] %vm2730, %v2507
      %2765 = vst.msk [vmem:[%s170 + $0x88] sm:$0xf] %vm2730, %v2508
      %2766 = vst.msk [vmem:[%s170 + $0x8c] sm:$0xf] %vm2730, %v2509
      %2767 = vst.msk [vmem:[%s170 + $0x90] sm:$0xf] %vm2730, %v2510
      %2768 = vst.msk [vmem:[%s170 + $0x94] sm:$0xf] %vm2730, %v2511
      %2769 = vst.msk [vmem:[%s170 + $0x98] sm:$0xf] %vm2730, %v2512
      %2770 = vst.msk [vmem:[%s170 + $0x9c] sm:$0xf] %vm2730, %v2513
      %2771 = vst.msk [vmem:[%s170 + $0xa0] sm:$0xf] %vm2730, %v2514
      %2772 = vst.msk [vmem:[%s170 + $0xa4] sm:$0xf] %vm2730, %v2515
      %2773 = vst.msk [vmem:[%s170 + $0xa8] sm:$0xf] %vm2730, %v2516
      %2774 = vst.msk [vmem:[%s170 + $0xac] sm:$0xf] %vm2730, %v2517
      %2775 = vst.msk [vmem:[%s170 + $0xb0] sm:$0xf] %vm2730, %v2518
      %2776 = vst.msk [vmem:[%s170 + $0xb4] sm:$0xf] %vm2730, %v2519
      %2777 = vst.msk [vmem:[%s170 + $0xb8] sm:$0xf] %vm2730, %v2520
      %2778 = vst.msk [vmem:[%s170 + $0xbc] sm:$0xf] %vm2730, %v2521
      %2779 = vst.msk [vmem:[%s170 + $0xc0] sm:$0xf] %vm2730, %v2522
      %2780 = vst.msk [vmem:[%s170 + $0xc4] sm:$0xf] %vm2730, %v2523
      %2781 = vst.msk [vmem:[%s170 + $0xc8] sm:$0xf] %vm2730, %v2524
      %2782 = vst.msk [vmem:[%s170 + $0xcc] sm:$0xf] %vm2730, %v2525
      %2783 = vst.msk [vmem:[%s170 + $0xd0] sm:$0xf] %vm2730, %v2526
      %2784 = vst.msk [vmem:[%s170 + $0xd4] sm:$0xf] %vm2730, %v2527
      %2785 = vst.msk [vmem:[%s170 + $0xd8] sm:$0xf] %vm2730, %v2528
      %2786 = vst.msk [vmem:[%s170 + $0xdc] sm:$0xf] %vm2730, %v2529
      %2787 = vst.msk [vmem:[%s170 + $0xe0] sm:$0xf] %vm2730, %v2530
      %2788 = vst.msk [vmem:[%s170 + $0xe4] sm:$0xf] %vm2730, %v2531
      %2789 = vst.msk [vmem:[%s170 + $0xe8] sm:$0xf] %vm2730, %v2532
      %2790 = vst.msk [vmem:[%s170 + $0xec] sm:$0xf] %vm2730, %v2533
      %2791 = vst.msk [vmem:[%s170 + $0xf0] sm:$0xf] %vm2730, %v2534
      %2792 = vst.msk [vmem:[%s170 + $0xf4] sm:$0xf] %vm2730, %v2535
      %2793 = vst.msk [vmem:[%s170 + $0xf8] sm:$0xf] %vm2730, %v2536
      %2794 = vst.msk [vmem:[%s170 + $0xfc] sm:$0xf] %vm2730, %v2537
      %2795 = vst.msk [vmem:[%s170 + $0x100] sm:$0xf] %vm2730, %v2538
      %2796 = vst.msk [vmem:[%s170 + $0x104] sm:$0xf] %vm2730, %v2539
      %2797 = vst.msk [vmem:[%s170 + $0x108] sm:$0xf] %vm2730, %v2540
      %2798 = vst.msk [vmem:[%s170 + $0x10c] sm:$0xf] %vm2730, %v2541
      %2799 = vst.msk [vmem:[%s170 + $0x110] sm:$0xf] %vm2730, %v2542
      %2800 = vst.msk [vmem:[%s170 + $0x114] sm:$0xf] %vm2730, %v2543
      %2801 = vst.msk [vmem:[%s170 + $0x118] sm:$0xf] %vm2730, %v2544
      %2802 = vst.msk [vmem:[%s170 + $0x11c] sm:$0xf] %vm2730, %v2545
      %2803 = vst.msk [vmem:[%s170 + $0x120] sm:$0xf] %vm2730, %v2546
      %2804 = vst.msk [vmem:[%s170 + $0x124] sm:$0xf] %vm2730, %v2547
      %2805 = vst.msk [vmem:[%s170 + $0x128] sm:$0xf] %vm2730, %v2548
      %2806 = vst.msk [vmem:[%s170 + $0x12c] sm:$0xf] %vm2730, %v2549
      %2807 = vst.msk [vmem:[%s170 + $0x130] sm:$0xf] %vm2730, %v2550
      %2808 = vst.msk [vmem:[%s170 + $0x134] sm:$0xf] %vm2730, %v2551
      %2809 = vst.msk [vmem:[%s170 + $0x138] sm:$0xf] %vm2730, %v2552
      %2810 = vst.msk [vmem:[%s170 + $0x13c] sm:$0xf] %vm2730, %v2553
      %2811 = vst.msk [vmem:[%s170 + $0x140] sm:$0xf] %vm2730, %v2554
      %2812 = vst.msk [vmem:[%s170 + $0x144] sm:$0xf] %vm2730, %v2555
      %2813 = vst.msk [vmem:[%s170 + $0x148] sm:$0xf] %vm2730, %v2556
      %2814 = vst.msk [vmem:[%s170 + $0x14c] sm:$0xf] %vm2730, %v2557
      %2815 = vst.msk [vmem:[%s170 + $0x150] sm:$0xf] %vm2730, %v2558
      %2816 = vst.msk [vmem:[%s170 + $0x154] sm:$0xf] %vm2730, %v2559
      %2817 = vst.msk [vmem:[%s170 + $0x158] sm:$0xf] %vm2730, %v2560
      %2818 = vst.msk [vmem:[%s170 + $0x15c] sm:$0xf] %vm2730, %v2561
      %2819 = vst.msk [vmem:[%s170 + $0x160] sm:$0xf] %vm2730, %v2562
      %2820 = vst.msk [vmem:[%s170 + $0x164] sm:$0xf] %vm2730, %v2563
      %2821 = vst.msk [vmem:[%s170 + $0x168] sm:$0xf] %vm2730, %v2564
      %2822 = vst.msk [vmem:[%s170 + $0x16c] sm:$0xf] %vm2730, %v2565
      %2823 = vst.msk [vmem:[%s170 + $0x170] sm:$0xf] %vm2730, %v2566
      %2824 = vst.msk [vmem:[%s170 + $0x174] sm:$0xf] %vm2730, %v2567
      %2825 = vst.msk [vmem:[%s170 + $0x178] sm:$0xf] %vm2730, %v2568
      %2826 = vst.msk [vmem:[%s170 + $0x17c] sm:$0xf] %vm2730, %v2569
      %2827 = vst.msk [vmem:[%s170 + $0x180] sm:$0xf] %vm2730, %v2570
      %2828 = vst.msk [vmem:[%s170 + $0x184] sm:$0xf] %vm2730, %v2571
      %2829 = vst.msk [vmem:[%s170 + $0x188] sm:$0xf] %vm2730, %v2572
      %2830 = vst.msk [vmem:[%s170 + $0x18c] sm:$0xf] %vm2730, %v2573
      %2831 = vst.msk [vmem:[%s170 + $0x190] sm:$0xf] %vm2730, %v2574
      %2832 = vst.msk [vmem:[%s170 + $0x194] sm:$0xf] %vm2730, %v2575
      %2833 = vst.msk [vmem:[%s170 + $0x198] sm:$0xf] %vm2730, %v2576
      %2834 = vst.msk [vmem:[%s170 + $0x19c] sm:$0xf] %vm2730, %v2577
      %2835 = vst.msk [vmem:[%s170 + $0x1a0] sm:$0xf] %vm2730, %v2578
      %2836 = vst.msk [vmem:[%s170 + $0x1a4] sm:$0xf] %vm2730, %v2579
      %2837 = vst.msk [vmem:[%s170 + $0x1a8] sm:$0xf] %vm2730, %v2580
      %2838 = vst.msk [vmem:[%s170 + $0x1ac] sm:$0xf] %vm2730, %v2581
      %2839 = vst.msk [vmem:[%s170 + $0x1b0] sm:$0xf] %vm2730, %v2582
      %2840 = vst.msk [vmem:[%s170 + $0x1b4] sm:$0xf] %vm2730, %v2583
      %2841 = vst.msk [vmem:[%s170 + $0x1b8] sm:$0xf] %vm2730, %v2584
      %2842 = vst.msk [vmem:[%s170 + $0x1bc] sm:$0xf] %vm2730, %v2585
      %2843 = vst.msk [vmem:[%s170 + $0x1c0] sm:$0xf] %vm2730, %v2586
      %2844 = vst.msk [vmem:[%s170 + $0x1c4] sm:$0xf] %vm2730, %v2587
      %2845 = vst.msk [vmem:[%s170 + $0x1c8] sm:$0xf] %vm2730, %v2588
      %2846 = vst.msk [vmem:[%s170 + $0x1cc] sm:$0xf] %vm2730, %v2589
      %2847 = vst.msk [vmem:[%s170 + $0x1d0] sm:$0xf] %vm2730, %v2590
      %2848 = vst.msk [vmem:[%s170 + $0x1d4] sm:$0xf] %vm2730, %v2591
      %2849 = vst.msk [vmem:[%s170 + $0x1d8] sm:$0xf] %vm2730, %v2592
      %2850 = vst.msk [vmem:[%s170 + $0x1dc] sm:$0xf] %vm2730, %v2593
      %2851 = vst.msk [vmem:[%s170 + $0x1e0] sm:$0xf] %vm2730, %v2594
      %2852 = vst.msk [vmem:[%s170 + $0x1e4] sm:$0xf] %vm2730, %v2595
      %2853 = vst.msk [vmem:[%s170 + $0x1e8] sm:$0xf] %vm2730, %v2596
      %2854 = vst.msk [vmem:[%s170 + $0x1ec] sm:$0xf] %vm2730, %v2597
      %2855 = vst.msk [vmem:[%s170 + $0x1f0] sm:$0xf] %vm2730, %v2598
      %2856 = vst.msk [vmem:[%s170 + $0x1f4] sm:$0xf] %vm2730, %v2599
      %2857 = vst.msk [vmem:[%s170 + $0x1f8] sm:$0xf] %vm2730, %v2600
      %2858 = vst.msk [vmem:[%s170 + $0x1fc] sm:$0xf] %vm2730, %v2601
      %p2859 = scmp.lt.s32.totalorder %s14, 1
      %s2860 = scalar_select %p2859, %s14, 1
      %s2861 = smul.addr %s2860, 128
      %s2862 = smul.addr %s2861, 4
      %s2863 = scalar_lea.vmem %s3, %s2862
      // Predicated region
      $region33: #{cnn_forward.4} parent=31 // pred_check
        %p2864 = pneg %p100
      $region34: #{cnn_forward.4} parent=31 // pred_check_branch
        %2866 = sbr.rel (%p2864) target = $region36
      $region35: #{cnn_forward.4} parent=31 // pred_region
        _
      $region36: #{cnn_forward.4} parent=31 // pred_fallthru
        _
    $region32: #{cnn_forward.4} parent=5 // pred_fallthru
      _
    %p2867 = scmp.le.s32.totalorder 2, %s9
    // Predicated region
    $region37: #{cnn_forward.4} parent=5 // pred_check
      %p2868 = pneg %p2867
    $region38: #{cnn_forward.4} parent=5 // pred_check_branch
      %2870 = sbr.rel (%p2868) target = $region40
    $region39: #{cnn_forward.4} parent=5 // pred_region
      %s2871 = ssub.s32 %s9, 2
      // Predicated region
      $region41: #{cnn_forward.4} parent=39 // pred_check
        %p2872 = pneg %p106
      $region42: #{cnn_forward.4} parent=39 // pred_check_branch
        %2874 = sbr.rel (%p2872) target = $region44
      $region43: #{cnn_forward.4} parent=39 // pred_region
        %p2875 = scmp.lt.s32.totalorder %s15, 1
        %s2876 = scalar_select %p2875, %s15, 1
        %s2877 = smul.addr %s2876, 128
        %s2878 = smul.addr %s2877, 4
        %s2879 = scalar_lea.vmem %s3, %s2878
      $region44: #{cnn_forward.4} parent=39 // pred_fallthru
        _
    $region40: #{cnn_forward.4} parent=5 // pred_fallthru
      _
  $region6: #{cnn_forward.4} parent=0 // loop_footer
    %s13 = sadd.s32 1, %s9
  $region7: #{cnn_forward.4} parent=0 // loop_footer_branch
    %8 = sbr.rel target = $region3
  $region8: #{cnn_forward.4} parent=0 // loop_exit
    _

// kernel: cnn_forward.5
$region0: #{cnn_forward.5}
  #allocation0 [shape = 'u32[]', space=smem, size = 0x4, offset = 0x4, fixed_abs, tag = 'smem constant byte address 0x4 - core index']
  #allocation1 [shape = 'u32[144,128]{1,0:T(1,128)}', space=vmem, size = 0x12000, scoped, tag = 'internal scratch']
  %s0 = inlined_call_operand.vmem [shape: bf16[2,272,256], index: 0, kind: input, shape index: {}]
  %s1 = inlined_call_operand.vmem [shape: bf16[2,256,32], index: 1, kind: input, shape index: {}]
  %s2 = inlined_call_operand.vmem [shape: f32[1,32], index: 2, kind: input, shape index: {}]
  %s3 = inlined_call_operand.vmem [shape: bf16[2,256,32], index: 3, kind: output, shape index: {}]
  %s4 = sld [smem:[#allocation0]]
  $region22: #{cnn_forward.5} parent=0
    _
  %s6 = ssub.s32 1, %s4
  %s7 = scalar_select 0, %s6, %s4
  // Predicated region
  $region2: #{cnn_forward.5} parent=0 // pred_check
    _
  $region3: #{cnn_forward.5} parent=0 // pred_check_branch
    %9 = sbr.rel (0) target = $region5
  $region4: #{cnn_forward.5} parent=0 // pred_region
    _
  $region5: #{cnn_forward.5} parent=0 // pred_fallthru
    _
  // Predicated region
  $region6: #{cnn_forward.5} parent=0 // pred_check
    _
  $region7: #{cnn_forward.5} parent=0 // pred_check_branch
    %11 = sbr.rel (0) target = $region9
  $region8: #{cnn_forward.5} parent=0 // pred_region
    _
  $region9: #{cnn_forward.5} parent=0 // pred_fallthru
    _
  // Predicated region
  $region10: #{cnn_forward.5} parent=0 // pred_check
    _
  $region11: #{cnn_forward.5} parent=0 // pred_check_branch
    %13 = sbr.rel (0) target = $region13
  $region12: #{cnn_forward.5} parent=0 // pred_region
    _
  $region13: #{cnn_forward.5} parent=0 // pred_fallthru
    _
  %v15 = vld [vmem:[%s2] sm:$0x1]
  %v16 = vld [vmem:[%s0] sm:$0xff]
  %v17 = vld [vmem:[%s0 + $0x8] sm:$0xff]
  %v18 = vld [vmem:[%s0 + $0x10] sm:$0xff]
  %v19 = vld [vmem:[%s0 + $0x18] sm:$0xff]
  %v20 = vld [vmem:[%s0 + $0x20] sm:$0xff]
  %v21 = vld [vmem:[%s0 + $0x28] sm:$0xff]
  %v22 = vld [vmem:[%s0 + $0x30] sm:$0xff]
  %v23 = vld [vmem:[%s0 + $0x38] sm:$0xff]
  %v24 = vld [vmem:[%s0 + $0x40] sm:$0xff]
  %v25 = vld [vmem:[%s0 + $0x48] sm:$0xff]
  %v26 = vld [vmem:[%s0 + $0x50] sm:$0xff]
  %v27 = vld [vmem:[%s0 + $0x58] sm:$0xff]
  %v28 = vld [vmem:[%s0 + $0x60] sm:$0xff]
  %v29 = vld [vmem:[%s0 + $0x68] sm:$0xff]
  %v30 = vld [vmem:[%s0 + $0x70] sm:$0xff]
  %v31 = vld [vmem:[%s0 + $0x78] sm:$0xff]
  %v32 = vld [vmem:[%s0 + $0x80] sm:$0xff]
  %v33 = vld [vmem:[%s0 + $0x88] sm:$0xff]
  %v34 = vld [vmem:[%s0 + $0x90] sm:$0xff]
  %v35 = vld [vmem:[%s0 + $0x98] sm:$0xff]
  %v36 = vld [vmem:[%s0 + $0xa0] sm:$0xff]
  %v37 = vld [vmem:[%s0 + $0xa8] sm:$0xff]
  %v38 = vld [vmem:[%s0 + $0xb0] sm:$0xff]
  %v39 = vld [vmem:[%s0 + $0xb8] sm:$0xff]
  %v40 = vld [vmem:[%s0 + $0xc0] sm:$0xff]
  %v41 = vld [vmem:[%s0 + $0xc8] sm:$0xff]
  %v42 = vld [vmem:[%s0 + $0xd0] sm:$0xff]
  %v43 = vld [vmem:[%s0 + $0xd8] sm:$0xff]
  %v44 = vld [vmem:[%s0 + $0xe0] sm:$0xff]
  %v45 = vld [vmem:[%s0 + $0xe8] sm:$0xff]
  %v46 = vld [vmem:[%s0 + $0xf0] sm:$0xff]
  %v47 = vld [vmem:[%s0 + $0xf8] sm:$0xff]
  %v48 = vld [vmem:[%s1] sm:$0xf]
  %v49 = vld [vmem:[%s1 + $0x4] sm:$0xf]
  %v50 = vld [vmem:[%s1 + $0x8] sm:$0xf]
  %v51 = vld [vmem:[%s1 + $0xc] sm:$0xf]
  %v52 = vld [vmem:[%s1 + $0x10] sm:$0xf]
  %v53 = vld [vmem:[%s1 + $0x14] sm:$0xf]
  %v54 = vld [vmem:[%s1 + $0x18] sm:$0xf]
  %v55 = vld [vmem:[%s1 + $0x1c] sm:$0xf]
  %v56 = vld [vmem:[%s1 + $0x20] sm:$0xf]
  %v57 = vld [vmem:[%s1 + $0x24] sm:$0xf]
  %v58 = vld [vmem:[%s1 + $0x28] sm:$0xf]
  %v59 = vld [vmem:[%s1 + $0x2c] sm:$0xf]
  %v60 = vld [vmem:[%s1 + $0x30] sm:$0xf]
  %v61 = vld [vmem:[%s1 + $0x34] sm:$0xf]
  %v62 = vld [vmem:[%s1 + $0x38] sm:$0xf]
  %v63 = vld [vmem:[%s1 + $0x3c] sm:$0xf]
  %v64 = vld [vmem:[%s1 + $0x40] sm:$0xf]
  %v65 = vld [vmem:[%s1 + $0x44] sm:$0xf]
  %v66 = vld [vmem:[%s1 + $0x48] sm:$0xf]
  %v67 = vld [vmem:[%s1 + $0x4c] sm:$0xf]
  %v68 = vld [vmem:[%s1 + $0x50] sm:$0xf]
  %v69 = vld [vmem:[%s1 + $0x54] sm:$0xf]
  %v70 = vld [vmem:[%s1 + $0x58] sm:$0xf]
  %v71 = vld [vmem:[%s1 + $0x5c] sm:$0xf]
  %v72 = vld [vmem:[%s1 + $0x60] sm:$0xf]
  %v73 = vld [vmem:[%s1 + $0x64] sm:$0xf]
  %v74 = vld [vmem:[%s1 + $0x68] sm:$0xf]
  %v75 = vld [vmem:[%s1 + $0x6c] sm:$0xf]
  %v76 = vld [vmem:[%s1 + $0x70] sm:$0xf]
  %v77 = vld [vmem:[%s1 + $0x74] sm:$0xf]
  %v78 = vld [vmem:[%s1 + $0x78] sm:$0xf]
  %v79 = vld [vmem:[%s1 + $0x7c] sm:$0xf]
  %v80 = vld [vmem:[%s0 + $0x100] sm:$0xff]
  %v81 = vld [vmem:[%s0 + $0x108] sm:$0xff]
  %s82 = scalar_lea.vmem %s1, 128
  %v83 = vld [vmem:[%s82] sm:$0xf]
  %v84 = vld [vmem:[%s82 + $0x4] sm:$0xf]
  %v85 = vld [vmem:[%s82 + $0x8] sm:$0xf]
  %v86 = vld [vmem:[%s82 + $0xc] sm:$0xf]
  %v87 = vld [vmem:[%s82 + $0x10] sm:$0xf]
  %v88 = vld [vmem:[%s82 + $0x14] sm:$0xf]
  %v89 = vld [vmem:[%s82 + $0x18] sm:$0xf]
  %v90 = vld [vmem:[%s82 + $0x1c] sm:$0xf]
  %v91 = vld [vmem:[%s82 + $0x20] sm:$0xf]
  %v92 = vld [vmem:[%s82 + $0x24] sm:$0xf]
  %v93 = vld [vmem:[%s82 + $0x28] sm:$0xf]
  %v94 = vld [vmem:[%s82 + $0x2c] sm:$0xf]
  %v95 = vld [vmem:[%s82 + $0x30] sm:$0xf]
  %v96 = vld [vmem:[%s82 + $0x34] sm:$0xf]
  %v97 = vld [vmem:[%s82 + $0x38] sm:$0xf]
  %v98 = vld [vmem:[%s82 + $0x3c] sm:$0xf]
  %v99 = vld [vmem:[%s82 + $0x40] sm:$0xf]
  %v100 = vld [vmem:[%s82 + $0x44] sm:$0xf]
  %v101 = vld [vmem:[%s82 + $0x48] sm:$0xf]
  %v102 = vld [vmem:[%s82 + $0x4c] sm:$0xf]
  %v103 = vld [vmem:[%s82 + $0x50] sm:$0xf]
  %v104 = vld [vmem:[%s82 + $0x54] sm:$0xf]
  %v105 = vld [vmem:[%s82 + $0x58] sm:$0xf]
  %v106 = vld [vmem:[%s82 + $0x5c] sm:$0xf]
  %v107 = vld [vmem:[%s82 + $0x60] sm:$0xf]
  %v108 = vld [vmem:[%s82 + $0x64] sm:$0xf]
  %v109 = vld [vmem:[%s82 + $0x68] sm:$0xf]
  %v110 = vld [vmem:[%s82 + $0x6c] sm:$0xf]
  %v111 = vld [vmem:[%s82 + $0x70] sm:$0xf]
  %v112 = vld [vmem:[%s82 + $0x74] sm:$0xf]
  %v113 = vld [vmem:[%s82 + $0x78] sm:$0xf]
  %v114 = vld [vmem:[%s82 + $0x7c] sm:$0xf]
  %v147 = vunpack.c.l.b16 %v18
  %v148 = vunpack.c.h.b16 %v18
  %v149 = vunpack.c.l.b16 %v19
  %v150 = vunpack.c.h.b16 %v19
  %v151 = vunpack.c.l.b16 %v20
  %v152 = vunpack.c.h.b16 %v20
  %v153 = vunpack.c.l.b16 %v21
  %v154 = vunpack.c.h.b16 %v21
  %v155 = vunpack.c.l.b16 %v22
  %v156 = vunpack.c.h.b16 %v22
  %v157 = vunpack.c.l.b16 %v23
  %v158 = vunpack.c.h.b16 %v23
  %v159 = vunpack.c.l.b16 %v24
  %v160 = vunpack.c.h.b16 %v24
  %v161 = vunpack.c.l.b16 %v25
  %v162 = vunpack.c.h.b16 %v25
  %v163 = vunpack.c.l.b16 %v26
  %v164 = vunpack.c.h.b16 %v26
  %v165 = vunpack.c.l.b16 %v27
  %v166 = vunpack.c.h.b16 %v27
  %v167 = vunpack.c.l.b16 %v28
  %v168 = vunpack.c.h.b16 %v28
  %v169 = vunpack.c.l.b16 %v29
  %v170 = vunpack.c.h.b16 %v29
  %v171 = vunpack.c.l.b16 %v30
  %v172 = vunpack.c.h.b16 %v30
  %v173 = vunpack.c.l.b16 %v31
  %v174 = vunpack.c.h.b16 %v31
  %v175 = vunpack.c.l.b16 %v32
  %v176 = vunpack.c.h.b16 %v32
  %v177 = vunpack.c.l.b16 %v33
  %v178 = vunpack.c.h.b16 %v33
  %v179 = vunpack.c.l.b16 %v34
  %v180 = vunpack.c.h.b16 %v34
  %v181 = vunpack.c.l.b16 %v35
  %v182 = vunpack.c.h.b16 %v35
  %v183 = vunpack.c.l.b16 %v36
  %v184 = vunpack.c.h.b16 %v36
  %v185 = vunpack.c.l.b16 %v37
  %v186 = vunpack.c.h.b16 %v37
  %v187 = vunpack.c.l.b16 %v38
  %v188 = vunpack.c.h.b16 %v38
  %v189 = vunpack.c.l.b16 %v39
  %v190 = vunpack.c.h.b16 %v39
  %v191 = vunpack.c.l.b16 %v40
  %v192 = vunpack.c.h.b16 %v40
  %v193 = vunpack.c.l.b16 %v41
  %v194 = vunpack.c.h.b16 %v41
  %v195 = vunpack.c.l.b16 %v42
  %v196 = vunpack.c.h.b16 %v42
  %v197 = vunpack.c.l.b16 %v43
  %v198 = vunpack.c.h.b16 %v43
  %v199 = vunpack.c.l.b16 %v44
  %v200 = vunpack.c.h.b16 %v44
  %v201 = vunpack.c.l.b16 %v45
  %v202 = vunpack.c.h.b16 %v45
  %v203 = vunpack.c.l.b16 %v46
  %v204 = vunpack.c.h.b16 %v46
  %v205 = vunpack.c.l.b16 %v47
  %v206 = vunpack.c.h.b16 %v47
  %v207 = vunpack.c.l.b16 %v80
  %v208 = vunpack.c.h.b16 %v80
  %v209 = vunpack.c.l.b16 %v81
  %v210 = vunpack.c.h.b16 %v81
  %v211 = vpack.c.b16 %v149, %v147
  %v212 = vpack.c.b16 %v150, %v148
  %v213 = vpack.c.b16 %v153, %v151
  %v214 = vpack.c.b16 %v154, %v152
  %v215 = vpack.c.b16 %v157, %v155
  %v216 = vpack.c.b16 %v158, %v156
  %v217 = vpack.c.b16 %v161, %v159
  %v218 = vpack.c.b16 %v162, %v160
  %v219 = vpack.c.b16 %v165, %v163
  %v220 = vpack.c.b16 %v166, %v164
  %v221 = vpack.c.b16 %v169, %v167
  %v222 = vpack.c.b16 %v170, %v168
  %v223 = vpack.c.b16 %v173, %v171
  %v224 = vpack.c.b16 %v174, %v172
  %v225 = vpack.c.b16 %v177, %v175
  %v226 = vpack.c.b16 %v178, %v176
  %v227 = vpack.c.b16 %v181, %v179
  %v228 = vpack.c.b16 %v182, %v180
  %v229 = vpack.c.b16 %v185, %v183
  %v230 = vpack.c.b16 %v186, %v184
  %v231 = vpack.c.b16 %v189, %v187
  %v232 = vpack.c.b16 %v190, %v188
  %v233 = vpack.c.b16 %v193, %v191
  %v234 = vpack.c.b16 %v194, %v192
  %v235 = vpack.c.b16 %v197, %v195
  %v236 = vpack.c.b16 %v198, %v196
  %v237 = vpack.c.b16 %v201, %v199
  %v238 = vpack.c.b16 %v202, %v200
  %v239 = vpack.c.b16 %v205, %v203
  %v240 = vpack.c.b16 %v206, %v204
  %v241 = vpack.c.b16 %v209, %v207
  %v242 = vpack.c.b16 %v210, %v208
  %v307 = vunpack.c.l.b16 %v83
  %v308 = vunpack.c.l.b16 %v84
  %v309 = vunpack.c.l.b16 %v85
  %v310 = vunpack.c.l.b16 %v86
  %v311 = vunpack.c.l.b16 %v87
  %v312 = vunpack.c.l.b16 %v88
  %v313 = vunpack.c.l.b16 %v89
  %v314 = vunpack.c.l.b16 %v90
  %v315 = vunpack.c.l.b16 %v91
  %v316 = vunpack.c.l.b16 %v92
  %v317 = vunpack.c.l.b16 %v93
  %v318 = vunpack.c.l.b16 %v94
  %v319 = vunpack.c.l.b16 %v95
  %v320 = vunpack.c.l.b16 %v96
  %v321 = vunpack.c.l.b16 %v97
  %v322 = vunpack.c.l.b16 %v98
  %v323 = vunpack.c.l.b16 %v99
  %v324 = vunpack.c.l.b16 %v100
  %v325 = vunpack.c.l.b16 %v101
  %v326 = vunpack.c.l.b16 %v102
  %v327 = vunpack.c.l.b16 %v103
  %v328 = vunpack.c.l.b16 %v104
  %v329 = vunpack.c.l.b16 %v105
  %v330 = vunpack.c.l.b16 %v106
  %v331 = vunpack.c.l.b16 %v107
  %v332 = vunpack.c.l.b16 %v108
  %v333 = vunpack.c.l.b16 %v109
  %v334 = vunpack.c.l.b16 %v110
  %v335 = vunpack.c.l.b16 %v111
  %v336 = vunpack.c.l.b16 %v112
  %v337 = vunpack.c.l.b16 %v113
  %v338 = vunpack.c.l.b16 %v114
  %v339 = vpack.c.b16 %v308, %v307
  %v340 = vpack.c.b16 %v310, %v309
  %v341 = vpack.c.b16 %v312, %v311
  %v342 = vpack.c.b16 %v314, %v313
  %v343 = vpack.c.b16 %v316, %v315
  %v344 = vpack.c.b16 %v318, %v317
  %v345 = vpack.c.b16 %v320, %v319
  %v346 = vpack.c.b16 %v322, %v321
  %v347 = vpack.c.b16 %v324, %v323
  %v348 = vpack.c.b16 %v326, %v325
  %v349 = vpack.c.b16 %v328, %v327
  %v350 = vpack.c.b16 %v330, %v329
  %v351 = vpack.c.b16 %v332, %v331
  %v352 = vpack.c.b16 %v334, %v333
  %v353 = vpack.c.b16 %v336, %v335
  %v354 = vpack.c.b16 %v338, %v337
  %371 = vmatprep.subr.bf16.mxu0 0
  %372 = vmatpush1.bf16.msra.mxu0 %v346
  %373 = vmatprep.subr.bf16.mxu0 0
  %374 = vmatpush1.bf16.msra.mxu0 %v345
  %375 = vmatprep.subr.bf16.mxu0 0
  %376 = vmatpush1.bf16.msra.mxu0 %v344
  %377 = vmatprep.subr.bf16.mxu0 0
  %378 = vmatpush1.bf16.msra.mxu0 %v343
  %379 = vmatprep.subr.bf16.mxu0 0
  %380 = vmatpush1.bf16.msra.mxu0 %v342
  %381 = vmatprep.subr.bf16.mxu0 0
  %382 = vmatpush1.bf16.msra.mxu0 %v341
  %383 = vmatprep.subr.bf16.mxu0 0
  %384 = vmatpush1.bf16.msra.mxu0 %v340
  %385 = vmatprep.subr.bf16.mxu0 0
  %386 = vmatpush1.bf16.msra.mxu0 %v339
  %387 = vmatprep.subr.bf16.mxu0 0
  %388 = vmatpush2.bf16.msra.mxu0 %v354
  %389 = vmatprep.subr.bf16.mxu0 0
  %390 = vmatpush2.bf16.msra.mxu0 %v353
  %391 = vmatprep.subr.bf16.mxu0 0
  %392 = vmatpush2.bf16.msra.mxu0 %v352
  %393 = vmatprep.subr.bf16.mxu0 0
  %394 = vmatpush2.bf16.msra.mxu0 %v351
  %395 = vmatprep.subr.bf16.mxu0 0
  %396 = vmatpush2.bf16.msra.mxu0 %v350
  %397 = vmatprep.subr.bf16.mxu0 0
  %398 = vmatpush2.bf16.msra.mxu0 %v349
  %399 = vmatprep.subr.bf16.mxu0 0
  %400 = vmatpush2.bf16.msra.mxu0 %v348
  %401 = vmatprep.subr.bf16.mxu0 0
  %402 = vmatpush2.bf16.msra.mxu0 %v347
  %403 = vmatprep.mubr.bf16.mxu0 %v212
  %404 = vmatmul.mubr.bf16.gmra.mxu0 %v211
  %v405 = vpop.f32.mrf.mxu0
  %v406 = vadd.f32 0.0, %v405
  %v407 = vpop.f32.mrf.mxu0
  %v408 = vpop.f32.mrf.mxu0
  %v409 = vadd.f32 0.0, %v408
  %v410 = vpop.f32.mrf.mxu0
  %411 = vmatprep.mubr.bf16.mxu0 %v214
  %412 = vmatmul.mubr.bf16.gmra.mxu0 %v213
  %v413 = vpop.f32.mrf.mxu0
  %v414 = vadd.f32 0.0, %v413
  %v415 = vpop.f32.mrf.mxu0
  %v416 = vpop.f32.mrf.mxu0
  %v417 = vadd.f32 0.0, %v416
  %v418 = vpop.f32.mrf.mxu0
  %419 = vmatprep.mubr.bf16.mxu0 %v216
  %420 = vmatmul.mubr.bf16.gmra.mxu0 %v215
  %v421 = vpop.f32.mrf.mxu0
  %v422 = vadd.f32 0.0, %v421
  %v423 = vpop.f32.mrf.mxu0
  %v424 = vpop.f32.mrf.mxu0
  %v425 = vadd.f32 0.0, %v424
  %v426 = vpop.f32.mrf.mxu0
  %427 = vmatprep.mubr.bf16.mxu0 %v218
  %428 = vmatmul.mubr.bf16.gmra.mxu0 %v217
  %v429 = vpop.f32.mrf.mxu0
  %v430 = vadd.f32 0.0, %v429
  %v431 = vpop.f32.mrf.mxu0
  %v432 = vpop.f32.mrf.mxu0
  %v433 = vadd.f32 0.0, %v432
  %v434 = vpop.f32.mrf.mxu0
  %435 = vmatprep.mubr.bf16.mxu0 %v220
  %436 = vmatmul.mubr.bf16.gmra.mxu0 %v219
  %v437 = vpop.f32.mrf.mxu0
  %v438 = vadd.f32 0.0, %v437
  %v439 = vpop.f32.mrf.mxu0
  %v440 = vpop.f32.mrf.mxu0
  %v441 = vadd.f32 0.0, %v440
  %v442 = vpop.f32.mrf.mxu0
  %443 = vmatprep.mubr.bf16.mxu0 %v222
  %444 = vmatmul.mubr.bf16.gmra.mxu0 %v221
  %v445 = vpop.f32.mrf.mxu0
  %v446 = vadd.f32 0.0, %v445
  %v447 = vpop.f32.mrf.mxu0
  %v448 = vpop.f32.mrf.mxu0
  %v449 = vadd.f32 0.0, %v448
  %v450 = vpop.f32.mrf.mxu0
  %451 = vmatprep.mubr.bf16.mxu0 %v224
  %452 = vmatmul.mubr.bf16.gmra.mxu0 %v223
  %v453 = vpop.f32.mrf.mxu0
  %v454 = vadd.f32 0.0, %v453
  %v455 = vpop.f32.mrf.mxu0
  %v456 = vpop.f32.mrf.mxu0
  %v457 = vadd.f32 0.0, %v456
  %v458 = vpop.f32.mrf.mxu0
  %459 = vmatprep.mubr.bf16.mxu0 %v226
  %460 = vmatmul.mubr.bf16.gmra.mxu0 %v225
  %v461 = vpop.f32.mrf.mxu0
  %v462 = vadd.f32 0.0, %v461
  %v463 = vpop.f32.mrf.mxu0
  %v464 = vpop.f32.mrf.mxu0
  %v465 = vadd.f32 0.0, %v464
  %v466 = vpop.f32.mrf.mxu0
  %467 = vmatprep.mubr.bf16.mxu0 %v228
  %468 = vmatmul.mubr.bf16.gmra.mxu0 %v227
  %v469 = vpop.f32.mrf.mxu0
  %v470 = vadd.f32 0.0, %v469
  %v471 = vpop.f32.mrf.mxu0
  %v472 = vpop.f32.mrf.mxu0
  %v473 = vadd.f32 0.0, %v472
  %v474 = vpop.f32.mrf.mxu0
  %475 = vmatprep.mubr.bf16.mxu0 %v230
  %476 = vmatmul.mubr.bf16.gmra.mxu0 %v229
  %v477 = vpop.f32.mrf.mxu0
  %v478 = vadd.f32 0.0, %v477
  %v479 = vpop.f32.mrf.mxu0
  %v480 = vpop.f32.mrf.mxu0
  %v481 = vadd.f32 0.0, %v480
  %v482 = vpop.f32.mrf.mxu0
  %483 = vmatprep.mubr.bf16.mxu0 %v232
  %484 = vmatmul.mubr.bf16.gmra.mxu0 %v231
  %v485 = vpop.f32.mrf.mxu0
  %v486 = vadd.f32 0.0, %v485
  %v487 = vpop.f32.mrf.mxu0
  %v488 = vpop.f32.mrf.mxu0
  %v489 = vadd.f32 0.0, %v488
  %v490 = vpop.f32.mrf.mxu0
  %491 = vmatprep.mubr.bf16.mxu0 %v234
  %492 = vmatmul.mubr.bf16.gmra.mxu0 %v233
  %v493 = vpop.f32.mrf.mxu0
  %v494 = vadd.f32 0.0, %v493
  %v495 = vpop.f32.mrf.mxu0
  %v496 = vpop.f32.mrf.mxu0
  %v497 = vadd.f32 0.0, %v496
  %v498 = vpop.f32.mrf.mxu0
  %499 = vmatprep.mubr.bf16.mxu0 %v236
  %500 = vmatmul.mubr.bf16.gmra.mxu0 %v235
  %v501 = vpop.f32.mrf.mxu0
  %v502 = vadd.f32 0.0, %v501
  %v503 = vpop.f32.mrf.mxu0
  %v504 = vpop.f32.mrf.mxu0
  %v505 = vadd.f32 0.0, %v504
  %v506 = vpop.f32.mrf.mxu0
  %507 = vmatprep.mubr.bf16.mxu0 %v238
  %508 = vmatmul.mubr.bf16.gmra.mxu0 %v237
  %v509 = vpop.f32.mrf.mxu0
  %v510 = vadd.f32 0.0, %v509
  %v511 = vpop.f32.mrf.mxu0
  %v512 = vpop.f32.mrf.mxu0
  %v513 = vadd.f32 0.0, %v512
  %v514 = vpop.f32.mrf.mxu0
  %515 = vmatprep.mubr.bf16.mxu0 %v240
  %516 = vmatmul.mubr.bf16.gmra.mxu0 %v239
  %v517 = vpop.f32.mrf.mxu0
  %v518 = vadd.f32 0.0, %v517
  %v519 = vpop.f32.mrf.mxu0
  %v520 = vpop.f32.mrf.mxu0
  %v521 = vadd.f32 0.0, %v520
  %v522 = vpop.f32.mrf.mxu0
  %523 = vmatprep.mubr.bf16.mxu0 %v242
  %524 = vmatmul.mubr.bf16.gmra.mxu0 %v241
  %v525 = vpop.f32.mrf.mxu0
  %v526 = vadd.f32 0.0, %v525
  %v527 = vpop.f32.mrf.mxu0
  %v528 = vpop.f32.mrf.mxu0
  %v529 = vadd.f32 0.0, %v528
  %v530 = vpop.f32.mrf.mxu0
  %531 = vdwg.mxu0
  %v534 = vunpack.c.l.b16 %v16
  %v535 = vunpack.c.h.b16 %v16
  %v536 = vunpack.c.l.b16 %v17
  %v537 = vunpack.c.h.b16 %v17
  %v538 = vpack.c.b16 %v536, %v534
  %v539 = vpack.c.b16 %v537, %v535
  %v574 = vunpack.c.l.b16 %v48
  %v575 = vunpack.c.l.b16 %v49
  %v576 = vunpack.c.l.b16 %v50
  %v577 = vunpack.c.l.b16 %v51
  %v578 = vunpack.c.l.b16 %v52
  %v579 = vunpack.c.l.b16 %v53
  %v580 = vunpack.c.l.b16 %v54
  %v581 = vunpack.c.l.b16 %v55
  %v582 = vunpack.c.l.b16 %v56
  %v583 = vunpack.c.l.b16 %v57
  %v584 = vunpack.c.l.b16 %v58
  %v585 = vunpack.c.l.b16 %v59
  %v586 = vunpack.c.l.b16 %v60
  %v587 = vunpack.c.l.b16 %v61
  %v588 = vunpack.c.l.b16 %v62
  %v589 = vunpack.c.l.b16 %v63
  %v590 = vunpack.c.l.b16 %v64
  %v591 = vunpack.c.l.b16 %v65
  %v592 = vunpack.c.l.b16 %v66
  %v593 = vunpack.c.l.b16 %v67
  %v594 = vunpack.c.l.b16 %v68
  %v595 = vunpack.c.l.b16 %v69
  %v596 = vunpack.c.l.b16 %v70
  %v597 = vunpack.c.l.b16 %v71
  %v598 = vunpack.c.l.b16 %v72
  %v599 = vunpack.c.l.b16 %v73
  %v600 = vunpack.c.l.b16 %v74
  %v601 = vunpack.c.l.b16 %v75
  %v602 = vunpack.c.l.b16 %v76
  %v603 = vunpack.c.l.b16 %v77
  %v604 = vunpack.c.l.b16 %v78
  %v605 = vunpack.c.l.b16 %v79
  %v606 = vpack.c.b16 %v575, %v574
  %v607 = vpack.c.b16 %v577, %v576
  %v608 = vpack.c.b16 %v579, %v578
  %v609 = vpack.c.b16 %v581, %v580
  %v610 = vpack.c.b16 %v583, %v582
  %v611 = vpack.c.b16 %v585, %v584
  %v612 = vpack.c.b16 %v587, %v586
  %v613 = vpack.c.b16 %v589, %v588
  %v614 = vpack.c.b16 %v591, %v590
  %v615 = vpack.c.b16 %v593, %v592
  %v616 = vpack.c.b16 %v595, %v594
  %v617 = vpack.c.b16 %v597, %v596
  %v618 = vpack.c.b16 %v599, %v598
  %v619 = vpack.c.b16 %v601, %v600
  %v620 = vpack.c.b16 %v603, %v602
  %v621 = vpack.c.b16 %v605, %v604
  %638 = vmatprep.subr.bf16.mxu0 0
  %639 = vmatpush1.bf16.msra.mxu0 %v613
  %640 = vmatprep.subr.bf16.mxu0 0
  %641 = vmatpush1.bf16.msra.mxu0 %v612
  %642 = vmatprep.subr.bf16.mxu0 0
  %643 = vmatpush1.bf16.msra.mxu0 %v611
  %644 = vmatprep.subr.bf16.mxu0 0
  %645 = vmatpush1.bf16.msra.mxu0 %v610
  %646 = vmatprep.subr.bf16.mxu0 0
  %647 = vmatpush1.bf16.msra.mxu0 %v609
  %648 = vmatprep.subr.bf16.mxu0 0
  %649 = vmatpush1.bf16.msra.mxu0 %v608
  %650 = vmatprep.subr.bf16.mxu0 0
  %651 = vmatpush1.bf16.msra.mxu0 %v607
  %652 = vmatprep.subr.bf16.mxu0 0
  %653 = vmatpush1.bf16.msra.mxu0 %v606
  %654 = vmatprep.subr.bf16.mxu0 0
  %655 = vmatpush2.bf16.msra.mxu0 %v621
  %656 = vmatprep.subr.bf16.mxu0 0
  %657 = vmatpush2.bf16.msra.mxu0 %v620
  %658 = vmatprep.subr.bf16.mxu0 0
  %659 = vmatpush2.bf16.msra.mxu0 %v619
  %660 = vmatprep.subr.bf16.mxu0 0
  %661 = vmatpush2.bf16.msra.mxu0 %v618
  %662 = vmatprep.subr.bf16.mxu0 0
  %663 = vmatpush2.bf16.msra.mxu0 %v617
  %664 = vmatprep.subr.bf16.mxu0 0
  %665 = vmatpush2.bf16.msra.mxu0 %v616
  %666 = vmatprep.subr.bf16.mxu0 0
  %667 = vmatpush2.bf16.msra.mxu0 %v615
  %668 = vmatprep.subr.bf16.mxu0 0
  %669 = vmatpush2.bf16.msra.mxu0 %v614
  %670 = vmatprep.mubr.bf16.mxu0 %v539
  %671 = vmatmul.mubr.bf16.gmra.mxu0 %v538
  %v672 = vpop.f32.mrf.mxu0
  %v673 = vadd.f32 %v406, %v672
  %v674 = vpop.f32.mrf.mxu0
  %v675 = vpop.f32.mrf.mxu0
  %v676 = vadd.f32 %v409, %v675
  %v677 = vpop.f32.mrf.mxu0
  %678 = vmatprep.mubr.bf16.mxu0 %v212
  %679 = vmatmul.mubr.bf16.gmra.mxu0 %v211
  %v680 = vpop.f32.mrf.mxu0
  %v681 = vadd.f32 %v414, %v680
  %v682 = vpop.f32.mrf.mxu0
  %v683 = vpop.f32.mrf.mxu0
  %v684 = vadd.f32 %v417, %v683
  %v685 = vpop.f32.mrf.mxu0
  %686 = vmatprep.mubr.bf16.mxu0 %v214
  %687 = vmatmul.mubr.bf16.gmra.mxu0 %v213
  %v688 = vpop.f32.mrf.mxu0
  %v689 = vadd.f32 %v422, %v688
  %v690 = vpop.f32.mrf.mxu0
  %v691 = vpop.f32.mrf.mxu0
  %v692 = vadd.f32 %v425, %v691
  %v693 = vpop.f32.mrf.mxu0
  %694 = vmatprep.mubr.bf16.mxu0 %v216
  %695 = vmatmul.mubr.bf16.gmra.mxu0 %v215
  %v696 = vpop.f32.mrf.mxu0
  %v697 = vadd.f32 %v430, %v696
  %v698 = vpop.f32.mrf.mxu0
  %v699 = vpop.f32.mrf.mxu0
  %v700 = vadd.f32 %v433, %v699
  %v701 = vpop.f32.mrf.mxu0
  %702 = vmatprep.mubr.bf16.mxu0 %v218
  %703 = vmatmul.mubr.bf16.gmra.mxu0 %v217
  %v704 = vpop.f32.mrf.mxu0
  %v705 = vadd.f32 %v438, %v704
  %v706 = vpop.f32.mrf.mxu0
  %v707 = vpop.f32.mrf.mxu0
  %v708 = vadd.f32 %v441, %v707
  %v709 = vpop.f32.mrf.mxu0
  %710 = vmatprep.mubr.bf16.mxu0 %v220
  %711 = vmatmul.mubr.bf16.gmra.mxu0 %v219
  %v712 = vpop.f32.mrf.mxu0
  %v713 = vadd.f32 %v446, %v712
  %v714 = vpop.f32.mrf.mxu0
  %v715 = vpop.f32.mrf.mxu0
  %v716 = vadd.f32 %v449, %v715
  %v717 = vpop.f32.mrf.mxu0
  %718 = vmatprep.mubr.bf16.mxu0 %v222
  %719 = vmatmul.mubr.bf16.gmra.mxu0 %v221
  %v720 = vpop.f32.mrf.mxu0
  %v721 = vadd.f32 %v454, %v720
  %v722 = vpop.f32.mrf.mxu0
  %v723 = vpop.f32.mrf.mxu0
  %v724 = vadd.f32 %v457, %v723
  %v725 = vpop.f32.mrf.mxu0
  %726 = vmatprep.mubr.bf16.mxu0 %v224
  %727 = vmatmul.mubr.bf16.gmra.mxu0 %v223
  %v728 = vpop.f32.mrf.mxu0
  %v729 = vadd.f32 %v462, %v728
  %v730 = vpop.f32.mrf.mxu0
  %v731 = vpop.f32.mrf.mxu0
  %v732 = vadd.f32 %v465, %v731
  %v733 = vpop.f32.mrf.mxu0
  %734 = vmatprep.mubr.bf16.mxu0 %v226
  %735 = vmatmul.mubr.bf16.gmra.mxu0 %v225
  %v736 = vpop.f32.mrf.mxu0
  %v737 = vadd.f32 %v470, %v736
  %v738 = vpop.f32.mrf.mxu0
  %v739 = vpop.f32.mrf.mxu0
  %v740 = vadd.f32 %v473, %v739
  %v741 = vpop.f32.mrf.mxu0
  %742 = vmatprep.mubr.bf16.mxu0 %v228
  %743 = vmatmul.mubr.bf16.gmra.mxu0 %v227
  %v744 = vpop.f32.mrf.mxu0
  %v745 = vadd.f32 %v478, %v744
  %v746 = vpop.f32.mrf.mxu0
  %v747 = vpop.f32.mrf.mxu0
  %v748 = vadd.f32 %v481, %v747
  %v749 = vpop.f32.mrf.mxu0
  %750 = vmatprep.mubr.bf16.mxu0 %v230
  %751 = vmatmul.mubr.bf16.gmra.mxu0 %v229
  %v752 = vpop.f32.mrf.mxu0
  %v753 = vadd.f32 %v486, %v752
  %v754 = vpop.f32.mrf.mxu0
  %v755 = vpop.f32.mrf.mxu0
  %v756 = vadd.f32 %v489, %v755
  %v757 = vpop.f32.mrf.mxu0
  %758 = vmatprep.mubr.bf16.mxu0 %v232
  %759 = vmatmul.mubr.bf16.gmra.mxu0 %v231
  %v760 = vpop.f32.mrf.mxu0
  %v761 = vadd.f32 %v494, %v760
  %v762 = vpop.f32.mrf.mxu0
  %v763 = vpop.f32.mrf.mxu0
  %v764 = vadd.f32 %v497, %v763
  %v765 = vpop.f32.mrf.mxu0
  %766 = vmatprep.mubr.bf16.mxu0 %v234
  %767 = vmatmul.mubr.bf16.gmra.mxu0 %v233
  %v768 = vpop.f32.mrf.mxu0
  %v769 = vadd.f32 %v502, %v768
  %v770 = vpop.f32.mrf.mxu0
  %v771 = vpop.f32.mrf.mxu0
  %v772 = vadd.f32 %v505, %v771
  %v773 = vpop.f32.mrf.mxu0
  %774 = vmatprep.mubr.bf16.mxu0 %v236
  %775 = vmatmul.mubr.bf16.gmra.mxu0 %v235
  %v776 = vpop.f32.mrf.mxu0
  %v777 = vadd.f32 %v510, %v776
  %v778 = vpop.f32.mrf.mxu0
  %v779 = vpop.f32.mrf.mxu0
  %v780 = vadd.f32 %v513, %v779
  %v781 = vpop.f32.mrf.mxu0
  %782 = vmatprep.mubr.bf16.mxu0 %v238
  %783 = vmatmul.mubr.bf16.gmra.mxu0 %v237
  %v784 = vpop.f32.mrf.mxu0
  %v785 = vadd.f32 %v518, %v784
  %v786 = vpop.f32.mrf.mxu0
  %v787 = vpop.f32.mrf.mxu0
  %v788 = vadd.f32 %v521, %v787
  %v789 = vpop.f32.mrf.mxu0
  %790 = vmatprep.mubr.bf16.mxu0 %v240
  %791 = vmatmul.mubr.bf16.gmra.mxu0 %v239
  %v792 = vpop.f32.mrf.mxu0
  %v793 = vadd.f32 %v526, %v792
  %v794 = vpop.f32.mrf.mxu0
  %v795 = vpop.f32.mrf.mxu0
  %v796 = vadd.f32 %v529, %v795
  %v797 = vpop.f32.mrf.mxu0
  %798 = vdwg.mxu0
  %v800 = vlaneseq
  %v801 = vshrl.u32 %v800, 7
  %v802 = vsub.s32 0, %v801
  %v803 = vrot.slane %v15, %v802
  %v805 = vadd.f32 %v673, %v803
  %v806 = vadd.f32 %v676, %v803
  %v807 = vadd.f32 %v681, %v803
  %v808 = vadd.f32 %v684, %v803
  %v809 = vadd.f32 %v689, %v803
  %v810 = vadd.f32 %v692, %v803
  %v811 = vadd.f32 %v697, %v803
  %v812 = vadd.f32 %v700, %v803
  %v813 = vadd.f32 %v705, %v803
  %v814 = vadd.f32 %v708, %v803
  %v815 = vadd.f32 %v713, %v803
  %v816 = vadd.f32 %v716, %v803
  %v817 = vadd.f32 %v721, %v803
  %v818 = vadd.f32 %v724, %v803
  %v819 = vadd.f32 %v729, %v803
  %v820 = vadd.f32 %v732, %v803
  %v821 = vadd.f32 %v737, %v803
  %v822 = vadd.f32 %v740, %v803
  %v823 = vadd.f32 %v745, %v803
  %v824 = vadd.f32 %v748, %v803
  %v825 = vadd.f32 %v753, %v803
  %v826 = vadd.f32 %v756, %v803
  %v827 = vadd.f32 %v761, %v803
  %v828 = vadd.f32 %v764, %v803
  %v829 = vadd.f32 %v769, %v803
  %v830 = vadd.f32 %v772, %v803
  %v831 = vadd.f32 %v777, %v803
  %v832 = vadd.f32 %v780, %v803
  %v833 = vadd.f32 %v785, %v803
  %v834 = vadd.f32 %v788, %v803
  %v835 = vadd.f32 %v793, %v803
  %v836 = vadd.f32 %v796, %v803
  %v837 = vmax.f32 %v805, 0.0
  %v838 = vmax.f32 %v806, 0.0
  %v839 = vmax.f32 %v807, 0.0
  %v840 = vmax.f32 %v808, 0.0
  %v841 = vmax.f32 %v809, 0.0
  %v842 = vmax.f32 %v810, 0.0
  %v843 = vmax.f32 %v811, 0.0
  %v844 = vmax.f32 %v812, 0.0
  %v845 = vmax.f32 %v813, 0.0
  %v846 = vmax.f32 %v814, 0.0
  %v847 = vmax.f32 %v815, 0.0
  %v848 = vmax.f32 %v816, 0.0
  %v849 = vmax.f32 %v817, 0.0
  %v850 = vmax.f32 %v818, 0.0
  %v851 = vmax.f32 %v819, 0.0
  %v852 = vmax.f32 %v820, 0.0
  %v853 = vmax.f32 %v821, 0.0
  %v854 = vmax.f32 %v822, 0.0
  %v855 = vmax.f32 %v823, 0.0
  %v856 = vmax.f32 %v824, 0.0
  %v857 = vmax.f32 %v825, 0.0
  %v858 = vmax.f32 %v826, 0.0
  %v859 = vmax.f32 %v827, 0.0
  %v860 = vmax.f32 %v828, 0.0
  %v861 = vmax.f32 %v829, 0.0
  %v862 = vmax.f32 %v830, 0.0
  %v863 = vmax.f32 %v831, 0.0
  %v864 = vmax.f32 %v832, 0.0
  %v865 = vmax.f32 %v833, 0.0
  %v866 = vmax.f32 %v834, 0.0
  %v867 = vmax.f32 %v835, 0.0
  %v868 = vmax.f32 %v836, 0.0
  %v869 = vpack.c.bf16 %v838, %v837
  %v870 = vpack.c.bf16 %v840, %v839
  %v871 = vpack.c.bf16 %v842, %v841
  %v872 = vpack.c.bf16 %v844, %v843
  %v873 = vpack.c.bf16 %v846, %v845
  %v874 = vpack.c.bf16 %v848, %v847
  %v875 = vpack.c.bf16 %v850, %v849
  %v876 = vpack.c.bf16 %v852, %v851
  %v877 = vpack.c.bf16 %v854, %v853
  %v878 = vpack.c.bf16 %v856, %v855
  %v879 = vpack.c.bf16 %v858, %v857
  %v880 = vpack.c.bf16 %v860, %v859
  %v881 = vpack.c.bf16 %v862, %v861
  %v882 = vpack.c.bf16 %v864, %v863
  %v883 = vpack.c.bf16 %v866, %v865
  %v884 = vpack.c.bf16 %v868, %v867
  %v901 = vunpack.c.l.b16 %v869
  %v902 = vunpack.c.h.b16 %v869
  %v903 = vunpack.c.l.b16 %v870
  %v904 = vunpack.c.h.b16 %v870
  %v905 = vunpack.c.l.b16 %v871
  %v906 = vunpack.c.h.b16 %v871
  %v907 = vunpack.c.l.b16 %v872
  %v908 = vunpack.c.h.b16 %v872
  %v909 = vunpack.c.l.b16 %v873
  %v910 = vunpack.c.h.b16 %v873
  %v911 = vunpack.c.l.b16 %v874
  %v912 = vunpack.c.h.b16 %v874
  %v913 = vunpack.c.l.b16 %v875
  %v914 = vunpack.c.h.b16 %v875
  %v915 = vunpack.c.l.b16 %v876
  %v916 = vunpack.c.h.b16 %v876
  %v917 = vunpack.c.l.b16 %v877
  %v918 = vunpack.c.h.b16 %v877
  %v919 = vunpack.c.l.b16 %v878
  %v920 = vunpack.c.h.b16 %v878
  %v921 = vunpack.c.l.b16 %v879
  %v922 = vunpack.c.h.b16 %v879
  %v923 = vunpack.c.l.b16 %v880
  %v924 = vunpack.c.h.b16 %v880
  %v925 = vunpack.c.l.b16 %v881
  %v926 = vunpack.c.h.b16 %v881
  %v927 = vunpack.c.l.b16 %v882
  %v928 = vunpack.c.h.b16 %v882
  %v929 = vunpack.c.l.b16 %v883
  %v930 = vunpack.c.h.b16 %v883
  %v931 = vunpack.c.l.b16 %v884
  %v932 = vunpack.c.h.b16 %v884
  %v933 = vpack.c.b16 %v901, %v901
  %v934 = vpack.c.b16 %v902, %v902
  %v935 = vpack.c.b16 %v903, %v903
  %v936 = vpack.c.b16 %v904, %v904
  %v937 = vpack.c.b16 %v905, %v905
  %v938 = vpack.c.b16 %v906, %v906
  %v939 = vpack.c.b16 %v907, %v907
  %v940 = vpack.c.b16 %v908, %v908
  %v941 = vpack.c.b16 %v909, %v909
  %v942 = vpack.c.b16 %v910, %v910
  %v943 = vpack.c.b16 %v911, %v911
  %v944 = vpack.c.b16 %v912, %v912
  %v945 = vpack.c.b16 %v913, %v913
  %v946 = vpack.c.b16 %v914, %v914
  %v947 = vpack.c.b16 %v915, %v915
  %v948 = vpack.c.b16 %v916, %v916
  %v949 = vpack.c.b16 %v917, %v917
  %v950 = vpack.c.b16 %v918, %v918
  %v951 = vpack.c.b16 %v919, %v919
  %v952 = vpack.c.b16 %v920, %v920
  %v953 = vpack.c.b16 %v921, %v921
  %v954 = vpack.c.b16 %v922, %v922
  %v955 = vpack.c.b16 %v923, %v923
  %v956 = vpack.c.b16 %v924, %v924
  %v957 = vpack.c.b16 %v925, %v925
  %v958 = vpack.c.b16 %v926, %v926
  %v959 = vpack.c.b16 %v927, %v927
  %v960 = vpack.c.b16 %v928, %v928
  %v961 = vpack.c.b16 %v929, %v929
  %v962 = vpack.c.b16 %v930, %v930
  %v963 = vpack.c.b16 %v931, %v931
  %v964 = vpack.c.b16 %v932, %v932
  %vm997 = vcmask 257024
  %998 = vst.msk [vmem:[%s3] sm:$0xf] %vm997, %v933
  %999 = vst.msk [vmem:[%s3 + $0x4] sm:$0xf] %vm997, %v934
  %1000 = vst.msk [vmem:[%s3 + $0x8] sm:$0xf] %vm997, %v935
  %1001 = vst.msk [vmem:[%s3 + $0xc] sm:$0xf] %vm997, %v936
  %1002 = vst.msk [vmem:[%s3 + $0x10] sm:$0xf] %vm997, %v937
  %1003 = vst.msk [vmem:[%s3 + $0x14] sm:$0xf] %vm997, %v938
  %1004 = vst.msk [vmem:[%s3 + $0x18] sm:$0xf] %vm997, %v939
  %1005 = vst.msk [vmem:[%s3 + $0x1c] sm:$0xf] %vm997, %v940
  %1006 = vst.msk [vmem:[%s3 + $0x20] sm:$0xf] %vm997, %v941
  %1007 = vst.msk [vmem:[%s3 + $0x24] sm:$0xf] %vm997, %v942
  %1008 = vst.msk [vmem:[%s3 + $0x28] sm:$0xf] %vm997, %v943
  %1009 = vst.msk [vmem:[%s3 + $0x2c] sm:$0xf] %vm997, %v944
  %1010 = vst.msk [vmem:[%s3 + $0x30] sm:$0xf] %vm997, %v945
  %1011 = vst.msk [vmem:[%s3 + $0x34] sm:$0xf] %vm997, %v946
  %1012 = vst.msk [vmem:[%s3 + $0x38] sm:$0xf] %vm997, %v947
  %1013 = vst.msk [vmem:[%s3 + $0x3c] sm:$0xf] %vm997, %v948
  %1014 = vst.msk [vmem:[%s3 + $0x40] sm:$0xf] %vm997, %v949
  %1015 = vst.msk [vmem:[%s3 + $0x44] sm:$0xf] %vm997, %v950
  %1016 = vst.msk [vmem:[%s3 + $0x48] sm:$0xf] %vm997, %v951
  %1017 = vst.msk [vmem:[%s3 + $0x4c] sm:$0xf] %vm997, %v952
  %1018 = vst.msk [vmem:[%s3 + $0x50] sm:$0xf] %vm997, %v953
  %1019 = vst.msk [vmem:[%s3 + $0x54] sm:$0xf] %vm997, %v954
  %1020 = vst.msk [vmem:[%s3 + $0x58] sm:$0xf] %vm997, %v955
  %1021 = vst.msk [vmem:[%s3 + $0x5c] sm:$0xf] %vm997, %v956
  %1022 = vst.msk [vmem:[%s3 + $0x60] sm:$0xf] %vm997, %v957
  %1023 = vst.msk [vmem:[%s3 + $0x64] sm:$0xf] %vm997, %v958
  %1024 = vst.msk [vmem:[%s3 + $0x68] sm:$0xf] %vm997, %v959
  %1025 = vst.msk [vmem:[%s3 + $0x6c] sm:$0xf] %vm997, %v960
  %1026 = vst.msk [vmem:[%s3 + $0x70] sm:$0xf] %vm997, %v961
  %1027 = vst.msk [vmem:[%s3 + $0x74] sm:$0xf] %vm997, %v962
  %1028 = vst.msk [vmem:[%s3 + $0x78] sm:$0xf] %vm997, %v963
  %1029 = vst.msk [vmem:[%s3 + $0x7c] sm:$0xf] %vm997, %v964
  %s1030 = scalar_lea.vmem %s0, 272
  %v1031 = vld [vmem:[%s1030] sm:$0xff]
  %v1032 = vld [vmem:[%s1030 + $0x8] sm:$0xff]
  %v1033 = vld [vmem:[%s1030 + $0x10] sm:$0xff]
  %v1034 = vld [vmem:[%s1030 + $0x18] sm:$0xff]
  %v1035 = vld [vmem:[%s1030 + $0x20] sm:$0xff]
  %v1036 = vld [vmem:[%s1030 + $0x28] sm:$0xff]
  %v1037 = vld [vmem:[%s1030 + $0x30] sm:$0xff]
  %v1038 = vld [vmem:[%s1030 + $0x38] sm:$0xff]
  %v1039 = vld [vmem:[%s1030 + $0x40] sm:$0xff]
  %v1040 = vld [vmem:[%s1030 + $0x48] sm:$0xff]
  %v1041 = vld [vmem:[%s1030 + $0x50] sm:$0xff]
  %v1042 = vld [vmem:[%s1030 + $0x58] sm:$0xff]
  %v1043 = vld [vmem:[%s1030 + $0x60] sm:$0xff]
  %v1044 = vld [vmem:[%s1030 + $0x68] sm:$0xff]
  %v1045 = vld [vmem:[%s1030 + $0x70] sm:$0xff]
  %v1046 = vld [vmem:[%s1030 + $0x78] sm:$0xff]
  %v1047 = vld [vmem:[%s1030 + $0x80] sm:$0xff]
  %v1048 = vld [vmem:[%s1030 + $0x88] sm:$0xff]
  %v1049 = vld [vmem:[%s1030 + $0x90] sm:$0xff]
  %v1050 = vld [vmem:[%s1030 + $0x98] sm:$0xff]
  %v1051 = vld [vmem:[%s1030 + $0xa0] sm:$0xff]
  %v1052 = vld [vmem:[%s1030 + $0xa8] sm:$0xff]
  %v1053 = vld [vmem:[%s1030 + $0xb0] sm:$0xff]
  %v1054 = vld [vmem:[%s1030 + $0xb8] sm:$0xff]
  %v1055 = vld [vmem:[%s1030 + $0xc0] sm:$0xff]
  %v1056 = vld [vmem:[%s1030 + $0xc8] sm:$0xff]
  %v1057 = vld [vmem:[%s1030 + $0xd0] sm:$0xff]
  %v1058 = vld [vmem:[%s1030 + $0xd8] sm:$0xff]
  %v1059 = vld [vmem:[%s1030 + $0xe0] sm:$0xff]
  %v1060 = vld [vmem:[%s1030 + $0xe8] sm:$0xff]
  %v1061 = vld [vmem:[%s1030 + $0xf0] sm:$0xff]
  %v1062 = vld [vmem:[%s1030 + $0xf8] sm:$0xff]
  %v1063 = vld [vmem:[%s1] sm:$0xf]
  %v1064 = vld [vmem:[%s1 + $0x4] sm:$0xf]
  %v1065 = vld [vmem:[%s1 + $0x8] sm:$0xf]
  %v1066 = vld [vmem:[%s1 + $0xc] sm:$0xf]
  %v1067 = vld [vmem:[%s1 + $0x10] sm:$0xf]
  %v1068 = vld [vmem:[%s1 + $0x14] sm:$0xf]
  %v1069 = vld [vmem:[%s1 + $0x18] sm:$0xf]
  %v1070 = vld [vmem:[%s1 + $0x1c] sm:$0xf]
  %v1071 = vld [vmem:[%s1 + $0x20] sm:$0xf]
  %v1072 = vld [vmem:[%s1 + $0x24] sm:$0xf]
  %v1073 = vld [vmem:[%s1 + $0x28] sm:$0xf]
  %v1074 = vld [vmem:[%s1 + $0x2c] sm:$0xf]
  %v1075 = vld [vmem:[%s1 + $0x30] sm:$0xf]
  %v1076 = vld [vmem:[%s1 + $0x34] sm:$0xf]
  %v1077 = vld [vmem:[%s1 + $0x38] sm:$0xf]
  %v1078 = vld [vmem:[%s1 + $0x3c] sm:$0xf]
  %v1079 = vld [vmem:[%s1 + $0x40] sm:$0xf]
  %v1080 = vld [vmem:[%s1 + $0x44] sm:$0xf]
  %v1081 = vld [vmem:[%s1 + $0x48] sm:$0xf]
  %v1082 = vld [vmem:[%s1 + $0x4c] sm:$0xf]
  %v1083 = vld [vmem:[%s1 + $0x50] sm:$0xf]
  %v1084 = vld [vmem:[%s1 + $0x54] sm:$0xf]
  %v1085 = vld [vmem:[%s1 + $0x58] sm:$0xf]
  %v1086 = vld [vmem:[%s1 + $0x5c] sm:$0xf]
  %v1087 = vld [vmem:[%s1 + $0x60] sm:$0xf]
  %v1088 = vld [vmem:[%s1 + $0x64] sm:$0xf]
  %v1089 = vld [vmem:[%s1 + $0x68] sm:$0xf]
  %v1090 = vld [vmem:[%s1 + $0x6c] sm:$0xf]
  %v1091 = vld [vmem:[%s1 + $0x70] sm:$0xf]
  %v1092 = vld [vmem:[%s1 + $0x74] sm:$0xf]
  %v1093 = vld [vmem:[%s1 + $0x78] sm:$0xf]
  %v1094 = vld [vmem:[%s1 + $0x7c] sm:$0xf]
  %v1095 = vld [vmem:[%s1030 + $0x100] sm:$0xff]
  %v1096 = vld [vmem:[%s1030 + $0x108] sm:$0xff]
  %v1097 = vld [vmem:[%s82] sm:$0xf]
  %v1098 = vld [vmem:[%s82 + $0x4] sm:$0xf]
  %v1099 = vld [vmem:[%s82 + $0x8] sm:$0xf]
  %v1100 = vld [vmem:[%s82 + $0xc] sm:$0xf]
  %v1101 = vld [vmem:[%s82 + $0x10] sm:$0xf]
  %v1102 = vld [vmem:[%s82 + $0x14] sm:$0xf]
  %v1103 = vld [vmem:[%s82 + $0x18] sm:$0xf]
  %v1104 = vld [vmem:[%s82 + $0x1c] sm:$0xf]
  %v1105 = vld [vmem:[%s82 + $0x20] sm:$0xf]
  %v1106 = vld [vmem:[%s82 + $0x24] sm:$0xf]
  %v1107 = vld [vmem:[%s82 + $0x28] sm:$0xf]
  %v1108 = vld [vmem:[%s82 + $0x2c] sm:$0xf]
  %v1109 = vld [vmem:[%s82 + $0x30] sm:$0xf]
  %v1110 = vld [vmem:[%s82 + $0x34] sm:$0xf]
  %v1111 = vld [vmem:[%s82 + $0x38] sm:$0xf]
  %v1112 = vld [vmem:[%s82 + $0x3c] sm:$0xf]
  %v1113 = vld [vmem:[%s82 + $0x40] sm:$0xf]
  %v1114 = vld [vmem:[%s82 + $0x44] sm:$0xf]
  %v1115 = vld [vmem:[%s82 + $0x48] sm:$0xf]
  %v1116 = vld [vmem:[%s82 + $0x4c] sm:$0xf]
  %v1117 = vld [vmem:[%s82 + $0x50] sm:$0xf]
  %v1118 = vld [vmem:[%s82 + $0x54] sm:$0xf]
  %v1119 = vld [vmem:[%s82 + $0x58] sm:$0xf]
  %v1120 = vld [vmem:[%s82 + $0x5c] sm:$0xf]
  %v1121 = vld [vmem:[%s82 + $0x60] sm:$0xf]
  %v1122 = vld [vmem:[%s82 + $0x64] sm:$0xf]
  %v1123 = vld [vmem:[%s82 + $0x68] sm:$0xf]
  %v1124 = vld [vmem:[%s82 + $0x6c] sm:$0xf]
  %v1125 = vld [vmem:[%s82 + $0x70] sm:$0xf]
  %v1126 = vld [vmem:[%s82 + $0x74] sm:$0xf]
  %v1127 = vld [vmem:[%s82 + $0x78] sm:$0xf]
  %v1128 = vld [vmem:[%s82 + $0x7c] sm:$0xf]
  %v1161 = vunpack.c.l.b16 %v1033
  %v1162 = vunpack.c.h.b16 %v1033
  %v1163 = vunpack.c.l.b16 %v1034
  %v1164 = vunpack.c.h.b16 %v1034
  %v1165 = vunpack.c.l.b16 %v1035
  %v1166 = vunpack.c.h.b16 %v1035
  %v1167 = vunpack.c.l.b16 %v1036
  %v1168 = vunpack.c.h.b16 %v1036
  %v1169 = vunpack.c.l.b16 %v1037
  %v1170 = vunpack.c.h.b16 %v1037
  %v1171 = vunpack.c.l.b16 %v1038
  %v1172 = vunpack.c.h.b16 %v1038
  %v1173 = vunpack.c.l.b16 %v1039
  %v1174 = vunpack.c.h.b16 %v1039
  %v1175 = vunpack.c.l.b16 %v1040
  %v1176 = vunpack.c.h.b16 %v1040
  %v1177 = vunpack.c.l.b16 %v1041
  %v1178 = vunpack.c.h.b16 %v1041
  %v1179 = vunpack.c.l.b16 %v1042
  %v1180 = vunpack.c.h.b16 %v1042
  %v1181 = vunpack.c.l.b16 %v1043
  %v1182 = vunpack.c.h.b16 %v1043
  %v1183 = vunpack.c.l.b16 %v1044
  %v1184 = vunpack.c.h.b16 %v1044
  %v1185 = vunpack.c.l.b16 %v1045
  %v1186 = vunpack.c.h.b16 %v1045
  %v1187 = vunpack.c.l.b16 %v1046
  %v1188 = vunpack.c.h.b16 %v1046
  %v1189 = vunpack.c.l.b16 %v1047
  %v1190 = vunpack.c.h.b16 %v1047
  %v1191 = vunpack.c.l.b16 %v1048
  %v1192 = vunpack.c.h.b16 %v1048
  %v1193 = vunpack.c.l.b16 %v1049
  %v1194 = vunpack.c.h.b16 %v1049
  %v1195 = vunpack.c.l.b16 %v1050
  %v1196 = vunpack.c.h.b16 %v1050
  %v1197 = vunpack.c.l.b16 %v1051
  %v1198 = vunpack.c.h.b16 %v1051
  %v1199 = vunpack.c.l.b16 %v1052
  %v1200 = vunpack.c.h.b16 %v1052
  %v1201 = vunpack.c.l.b16 %v1053
  %v1202 = vunpack.c.h.b16 %v1053
  %v1203 = vunpack.c.l.b16 %v1054
  %v1204 = vunpack.c.h.b16 %v1054
  %v1205 = vunpack.c.l.b16 %v1055
  %v1206 = vunpack.c.h.b16 %v1055
  %v1207 = vunpack.c.l.b16 %v1056
  %v1208 = vunpack.c.h.b16 %v1056
  %v1209 = vunpack.c.l.b16 %v1057
  %v1210 = vunpack.c.h.b16 %v1057
  %v1211 = vunpack.c.l.b16 %v1058
  %v1212 = vunpack.c.h.b16 %v1058
  %v1213 = vunpack.c.l.b16 %v1059
  %v1214 = vunpack.c.h.b16 %v1059
  %v1215 = vunpack.c.l.b16 %v1060
  %v1216 = vunpack.c.h.b16 %v1060
  %v1217 = vunpack.c.l.b16 %v1061
  %v1218 = vunpack.c.h.b16 %v1061
  %v1219 = vunpack.c.l.b16 %v1062
  %v1220 = vunpack.c.h.b16 %v1062
  %v1221 = vunpack.c.l.b16 %v1095
  %v1222 = vunpack.c.h.b16 %v1095
  %v1223 = vunpack.c.l.b16 %v1096
  %v1224 = vunpack.c.h.b16 %v1096
  %v1225 = vpack.c.b16 %v1163, %v1161
  %v1226 = vpack.c.b16 %v1164, %v1162
  %v1227 = vpack.c.b16 %v1167, %v1165
  %v1228 = vpack.c.b16 %v1168, %v1166
  %v1229 = vpack.c.b16 %v1171, %v1169
  %v1230 = vpack.c.b16 %v1172, %v1170
  %v1231 = vpack.c.b16 %v1175, %v1173
  %v1232 = vpack.c.b16 %v1176, %v1174
  %v1233 = vpack.c.b16 %v1179, %v1177
  %v1234 = vpack.c.b16 %v1180, %v1178
  %v1235 = vpack.c.b16 %v1183, %v1181
  %v1236 = vpack.c.b16 %v1184, %v1182
  %v1237 = vpack.c.b16 %v1187, %v1185
  %v1238 = vpack.c.b16 %v1188, %v1186
  %v1239 = vpack.c.b16 %v1191, %v1189
  %v1240 = vpack.c.b16 %v1192, %v1190
  %v1241 = vpack.c.b16 %v1195, %v1193
  %v1242 = vpack.c.b16 %v1196, %v1194
  %v1243 = vpack.c.b16 %v1199, %v1197
  %v1244 = vpack.c.b16 %v1200, %v1198
  %v1245 = vpack.c.b16 %v1203, %v1201
  %v1246 = vpack.c.b16 %v1204, %v1202
  %v1247 = vpack.c.b16 %v1207, %v1205
  %v1248 = vpack.c.b16 %v1208, %v1206
  %v1249 = vpack.c.b16 %v1211, %v1209
  %v1250 = vpack.c.b16 %v1212, %v1210
  %v1251 = vpack.c.b16 %v1215, %v1213
  %v1252 = vpack.c.b16 %v1216, %v1214
  %v1253 = vpack.c.b16 %v1219, %v1217
  %v1254 = vpack.c.b16 %v1220, %v1218
  %v1255 = vpack.c.b16 %v1223, %v1221
  %v1256 = vpack.c.b16 %v1224, %v1222
  %v1321 = vunpack.c.l.b16 %v1097
  %v1322 = vunpack.c.l.b16 %v1098
  %v1323 = vunpack.c.l.b16 %v1099
  %v1324 = vunpack.c.l.b16 %v1100
  %v1325 = vunpack.c.l.b16 %v1101
  %v1326 = vunpack.c.l.b16 %v1102
  %v1327 = vunpack.c.l.b16 %v1103
  %v1328 = vunpack.c.l.b16 %v1104
  %v1329 = vunpack.c.l.b16 %v1105
  %v1330 = vunpack.c.l.b16 %v1106
  %v1331 = vunpack.c.l.b16 %v1107
  %v1332 = vunpack.c.l.b16 %v1108
  %v1333 = vunpack.c.l.b16 %v1109
  %v1334 = vunpack.c.l.b16 %v1110
  %v1335 = vunpack.c.l.b16 %v1111
  %v1336 = vunpack.c.l.b16 %v1112
  %v1337 = vunpack.c.l.b16 %v1113
  %v1338 = vunpack.c.l.b16 %v1114
  %v1339 = vunpack.c.l.b16 %v1115
  %v1340 = vunpack.c.l.b16 %v1116
  %v1341 = vunpack.c.l.b16 %v1117
  %v1342 = vunpack.c.l.b16 %v1118
  %v1343 = vunpack.c.l.b16 %v1119
  %v1344 = vunpack.c.l.b16 %v1120
  %v1345 = vunpack.c.l.b16 %v1121
  %v1346 = vunpack.c.l.b16 %v1122
  %v1347 = vunpack.c.l.b16 %v1123
  %v1348 = vunpack.c.l.b16 %v1124
  %v1349 = vunpack.c.l.b16 %v1125
  %v1350 = vunpack.c.l.b16 %v1126
  %v1351 = vunpack.c.l.b16 %v1127
  %v1352 = vunpack.c.l.b16 %v1128
  %v1353 = vpack.c.b16 %v1322, %v1321
  %v1354 = vpack.c.b16 %v1324, %v1323
  %v1355 = vpack.c.b16 %v1326, %v1325
  %v1356 = vpack.c.b16 %v1328, %v1327
  %v1357 = vpack.c.b16 %v1330, %v1329
  %v1358 = vpack.c.b16 %v1332, %v1331
  %v1359 = vpack.c.b16 %v1334, %v1333
  %v1360 = vpack.c.b16 %v1336, %v1335
  %v1361 = vpack.c.b16 %v1338, %v1337
  %v1362 = vpack.c.b16 %v1340, %v1339
  %v1363 = vpack.c.b16 %v1342, %v1341
  %v1364 = vpack.c.b16 %v1344, %v1343
  %v1365 = vpack.c.b16 %v1346, %v1345
  %v1366 = vpack.c.b16 %v1348, %v1347
  %v1367 = vpack.c.b16 %v1350, %v1349
  %v1368 = vpack.c.b16 %v1352, %v1351
  %1385 = vmatprep.subr.bf16.mxu0 0
  %1386 = vmatpush1.bf16.msra.mxu0 %v1360
  %1387 = vmatprep.subr.bf16.mxu0 0
  %1388 = vmatpush1.bf16.msra.mxu0 %v1359
  %1389 = vmatprep.subr.bf16.mxu0 0
  %1390 = vmatpush1.bf16.msra.mxu0 %v1358
  %1391 = vmatprep.subr.bf16.mxu0 0
  %1392 = vmatpush1.bf16.msra.mxu0 %v1357
  %1393 = vmatprep.subr.bf16.mxu0 0
  %1394 = vmatpush1.bf16.msra.mxu0 %v1356
  %1395 = vmatprep.subr.bf16.mxu0 0
  %1396 = vmatpush1.bf16.msra.mxu0 %v1355
  %1397 = vmatprep.subr.bf16.mxu0 0
  %1398 = vmatpush1.bf16.msra.mxu0 %v1354
  %1399 = vmatprep.subr.bf16.mxu0 0
  %1400 = vmatpush1.bf16.msra.mxu0 %v1353
  %1401 = vmatprep.subr.bf16.mxu0 0
  %1402 = vmatpush2.bf16.msra.mxu0 %v1368
  %1403 = vmatprep.subr.bf16.mxu0 0
  %1404 = vmatpush2.bf16.msra.mxu0 %v1367
  %1405 = vmatprep.subr.bf16.mxu0 0
  %1406 = vmatpush2.bf16.msra.mxu0 %v1366
  %1407 = vmatprep.subr.bf16.mxu0 0
  %1408 = vmatpush2.bf16.msra.mxu0 %v1365
  %1409 = vmatprep.subr.bf16.mxu0 0
  %1410 = vmatpush2.bf16.msra.mxu0 %v1364
  %1411 = vmatprep.subr.bf16.mxu0 0
  %1412 = vmatpush2.bf16.msra.mxu0 %v1363
  %1413 = vmatprep.subr.bf16.mxu0 0
  %1414 = vmatpush2.bf16.msra.mxu0 %v1362
  %1415 = vmatprep.subr.bf16.mxu0 0
  %1416 = vmatpush2.bf16.msra.mxu0 %v1361
  %1417 = vmatprep.mubr.bf16.mxu0 %v1226
  %1418 = vmatmul.mubr.bf16.gmra.mxu0 %v1225
  %v1419 = vpop.f32.mrf.mxu0
  %v1420 = vadd.f32 0.0, %v1419
  %v1421 = vpop.f32.mrf.mxu0
  %v1422 = vpop.f32.mrf.mxu0
  %v1423 = vadd.f32 0.0, %v1422
  %v1424 = vpop.f32.mrf.mxu0
  %1425 = vmatprep.mubr.bf16.mxu0 %v1228
  %1426 = vmatmul.mubr.bf16.gmra.mxu0 %v1227
  %v1427 = vpop.f32.mrf.mxu0
  %v1428 = vadd.f32 0.0, %v1427
  %v1429 = vpop.f32.mrf.mxu0
  %v1430 = vpop.f32.mrf.mxu0
  %v1431 = vadd.f32 0.0, %v1430
  %v1432 = vpop.f32.mrf.mxu0
  %1433 = vmatprep.mubr.bf16.mxu0 %v1230
  %1434 = vmatmul.mubr.bf16.gmra.mxu0 %v1229
  %v1435 = vpop.f32.mrf.mxu0
  %v1436 = vadd.f32 0.0, %v1435
  %v1437 = vpop.f32.mrf.mxu0
  %v1438 = vpop.f32.mrf.mxu0
  %v1439 = vadd.f32 0.0, %v1438
  %v1440 = vpop.f32.mrf.mxu0
  %1441 = vmatprep.mubr.bf16.mxu0 %v1232
  %1442 = vmatmul.mubr.bf16.gmra.mxu0 %v1231
  %v1443 = vpop.f32.mrf.mxu0
  %v1444 = vadd.f32 0.0, %v1443
  %v1445 = vpop.f32.mrf.mxu0
  %v1446 = vpop.f32.mrf.mxu0
  %v1447 = vadd.f32 0.0, %v1446
  %v1448 = vpop.f32.mrf.mxu0
  %1449 = vmatprep.mubr.bf16.mxu0 %v1234
  %1450 = vmatmul.mubr.bf16.gmra.mxu0 %v1233
  %v1451 = vpop.f32.mrf.mxu0
  %v1452 = vadd.f32 0.0, %v1451
  %v1453 = vpop.f32.mrf.mxu0
  %v1454 = vpop.f32.mrf.mxu0
  %v1455 = vadd.f32 0.0, %v1454
  %v1456 = vpop.f32.mrf.mxu0
  %1457 = vmatprep.mubr.bf16.mxu0 %v1236
  %1458 = vmatmul.mubr.bf16.gmra.mxu0 %v1235
  %v1459 = vpop.f32.mrf.mxu0
  %v1460 = vadd.f32 0.0, %v1459
  %v1461 = vpop.f32.mrf.mxu0
  %v1462 = vpop.f32.mrf.mxu0
  %v1463 = vadd.f32 0.0, %v1462
  %v1464 = vpop.f32.mrf.mxu0
  %1465 = vmatprep.mubr.bf16.mxu0 %v1238
  %1466 = vmatmul.mubr.bf16.gmra.mxu0 %v1237
  %v1467 = vpop.f32.mrf.mxu0
  %v1468 = vadd.f32 0.0, %v1467
  %v1469 = vpop.f32.mrf.mxu0
  %v1470 = vpop.f32.mrf.mxu0
  %v1471 = vadd.f32 0.0, %v1470
  %v1472 = vpop.f32.mrf.mxu0
  %1473 = vmatprep.mubr.bf16.mxu0 %v1240
  %1474 = vmatmul.mubr.bf16.gmra.mxu0 %v1239
  %v1475 = vpop.f32.mrf.mxu0
  %v1476 = vadd.f32 0.0, %v1475
  %v1477 = vpop.f32.mrf.mxu0
  %v1478 = vpop.f32.mrf.mxu0
  %v1479 = vadd.f32 0.0, %v1478
  %v1480 = vpop.f32.mrf.mxu0
  %1481 = vmatprep.mubr.bf16.mxu0 %v1242
  %1482 = vmatmul.mubr.bf16.gmra.mxu0 %v1241
  %v1483 = vpop.f32.mrf.mxu0
  %v1484 = vadd.f32 0.0, %v1483
  %v1485 = vpop.f32.mrf.mxu0
  %v1486 = vpop.f32.mrf.mxu0
  %v1487 = vadd.f32 0.0, %v1486
  %v1488 = vpop.f32.mrf.mxu0
  %1489 = vmatprep.mubr.bf16.mxu0 %v1244
  %1490 = vmatmul.mubr.bf16.gmra.mxu0 %v1243
  %v1491 = vpop.f32.mrf.mxu0
  %v1492 = vadd.f32 0.0, %v1491
  %v1493 = vpop.f32.mrf.mxu0
  %v1494 = vpop.f32.mrf.mxu0
  %v1495 = vadd.f32 0.0, %v1494
  %v1496 = vpop.f32.mrf.mxu0
  %1497 = vmatprep.mubr.bf16.mxu0 %v1246
  %1498 = vmatmul.mubr.bf16.gmra.mxu0 %v1245
  %v1499 = vpop.f32.mrf.mxu0
  %v1500 = vadd.f32 0.0, %v1499
  %v1501 = vpop.f32.mrf.mxu0
  %v1502 = vpop.f32.mrf.mxu0
  %v1503 = vadd.f32 0.0, %v1502
  %v1504 = vpop.f32.mrf.mxu0
  %1505 = vmatprep.mubr.bf16.mxu0 %v1248
  %1506 = vmatmul.mubr.bf16.gmra.mxu0 %v1247
  %v1507 = vpop.f32.mrf.mxu0
  %v1508 = vadd.f32 0.0, %v1507
  %v1509 = vpop.f32.mrf.mxu0
  %v1510 = vpop.f32.mrf.mxu0
  %v1511 = vadd.f32 0.0, %v1510
  %v1512 = vpop.f32.mrf.mxu0
  %1513 = vmatprep.mubr.bf16.mxu0 %v1250
  %1514 = vmatmul.mubr.bf16.gmra.mxu0 %v1249
  %v1515 = vpop.f32.mrf.mxu0
  %v1516 = vadd.f32 0.0, %v1515
  %v1517 = vpop.f32.mrf.mxu0
  %v1518 = vpop.f32.mrf.mxu0
  %v1519 = vadd.f32 0.0, %v1518
  %v1520 = vpop.f32.mrf.mxu0
  %1521 = vmatprep.mubr.bf16.mxu0 %v1252
  %1522 = vmatmul.mubr.bf16.gmra.mxu0 %v1251
  %v1523 = vpop.f32.mrf.mxu0
  %v1524 = vadd.f32 0.0, %v1523
  %v1525 = vpop.f32.mrf.mxu0
  %v1526 = vpop.f32.mrf.mxu0
  %v1527 = vadd.f32 0.0, %v1526
  %v1528 = vpop.f32.mrf.mxu0
  %1529 = vmatprep.mubr.bf16.mxu0 %v1254
  %1530 = vmatmul.mubr.bf16.gmra.mxu0 %v1253
  %v1531 = vpop.f32.mrf.mxu0
  %v1532 = vadd.f32 0.0, %v1531
  %v1533 = vpop.f32.mrf.mxu0
  %v1534 = vpop.f32.mrf.mxu0
  %v1535 = vadd.f32 0.0, %v1534
  %v1536 = vpop.f32.mrf.mxu0
  %1537 = vmatprep.mubr.bf16.mxu0 %v1256
  %1538 = vmatmul.mubr.bf16.gmra.mxu0 %v1255
  %v1539 = vpop.f32.mrf.mxu0
  %v1540 = vadd.f32 0.0, %v1539
  %v1541 = vpop.f32.mrf.mxu0
  %v1542 = vpop.f32.mrf.mxu0
  %v1543 = vadd.f32 0.0, %v1542
  %v1544 = vpop.f32.mrf.mxu0
  %1545 = vdwg.mxu0
  %v1548 = vunpack.c.l.b16 %v1031
  %v1549 = vunpack.c.h.b16 %v1031
  %v1550 = vunpack.c.l.b16 %v1032
  %v1551 = vunpack.c.h.b16 %v1032
  %v1552 = vpack.c.b16 %v1550, %v1548
  %v1553 = vpack.c.b16 %v1551, %v1549
  %v1588 = vunpack.c.l.b16 %v1063
  %v1589 = vunpack.c.l.b16 %v1064
  %v1590 = vunpack.c.l.b16 %v1065
  %v1591 = vunpack.c.l.b16 %v1066
  %v1592 = vunpack.c.l.b16 %v1067
  %v1593 = vunpack.c.l.b16 %v1068
  %v1594 = vunpack.c.l.b16 %v1069
  %v1595 = vunpack.c.l.b16 %v1070
  %v1596 = vunpack.c.l.b16 %v1071
  %v1597 = vunpack.c.l.b16 %v1072
  %v1598 = vunpack.c.l.b16 %v1073
  %v1599 = vunpack.c.l.b16 %v1074
  %v1600 = vunpack.c.l.b16 %v1075
  %v1601 = vunpack.c.l.b16 %v1076
  %v1602 = vunpack.c.l.b16 %v1077
  %v1603 = vunpack.c.l.b16 %v1078
  %v1604 = vunpack.c.l.b16 %v1079
  %v1605 = vunpack.c.l.b16 %v1080
  %v1606 = vunpack.c.l.b16 %v1081
  %v1607 = vunpack.c.l.b16 %v1082
  %v1608 = vunpack.c.l.b16 %v1083
  %v1609 = vunpack.c.l.b16 %v1084
  %v1610 = vunpack.c.l.b16 %v1085
  %v1611 = vunpack.c.l.b16 %v1086
  %v1612 = vunpack.c.l.b16 %v1087
  %v1613 = vunpack.c.l.b16 %v1088
  %v1614 = vunpack.c.l.b16 %v1089
  %v1615 = vunpack.c.l.b16 %v1090
  %v1616 = vunpack.c.l.b16 %v1091
  %v1617 = vunpack.c.l.b16 %v1092
  %v1618 = vunpack.c.l.b16 %v1093
  %v1619 = vunpack.c.l.b16 %v1094
  %v1620 = vpack.c.b16 %v1589, %v1588
  %v1621 = vpack.c.b16 %v1591, %v1590
  %v1622 = vpack.c.b16 %v1593, %v1592
  %v1623 = vpack.c.b16 %v1595, %v1594
  %v1624 = vpack.c.b16 %v1597, %v1596
  %v1625 = vpack.c.b16 %v1599, %v1598
  %v1626 = vpack.c.b16 %v1601, %v1600
  %v1627 = vpack.c.b16 %v1603, %v1602
  %v1628 = vpack.c.b16 %v1605, %v1604
  %v1629 = vpack.c.b16 %v1607, %v1606
  %v1630 = vpack.c.b16 %v1609, %v1608
  %v1631 = vpack.c.b16 %v1611, %v1610
  %v1632 = vpack.c.b16 %v1613, %v1612
  %v1633 = vpack.c.b16 %v1615, %v1614
  %v1634 = vpack.c.b16 %v1617, %v1616
  %v1635 = vpack.c.b16 %v1619, %v1618
  %1652 = vmatprep.subr.bf16.mxu0 0
  %1653 = vmatpush1.bf16.msra.mxu0 %v1627
  %1654 = vmatprep.subr.bf16.mxu0 0
  %1655 = vmatpush1.bf16.msra.mxu0 %v1626
  %1656 = vmatprep.subr.bf16.mxu0 0
  %1657 = vmatpush1.bf16.msra.mxu0 %v1625
  %1658 = vmatprep.subr.bf16.mxu0 0
  %1659 = vmatpush1.bf16.msra.mxu0 %v1624
  %1660 = vmatprep.subr.bf16.mxu0 0
  %1661 = vmatpush1.bf16.msra.mxu0 %v1623
  %1662 = vmatprep.subr.bf16.mxu0 0
  %1663 = vmatpush1.bf16.msra.mxu0 %v1622
  %1664 = vmatprep.subr.bf16.mxu0 0
  %1665 = vmatpush1.bf16.msra.mxu0 %v1621
  %1666 = vmatprep.subr.bf16.mxu0 0
  %1667 = vmatpush1.bf16.msra.mxu0 %v1620
  %1668 = vmatprep.subr.bf16.mxu0 0
  %1669 = vmatpush2.bf16.msra.mxu0 %v1635
  %1670 = vmatprep.subr.bf16.mxu0 0
  %1671 = vmatpush2.bf16.msra.mxu0 %v1634
  %1672 = vmatprep.subr.bf16.mxu0 0
  %1673 = vmatpush2.bf16.msra.mxu0 %v1633
  %1674 = vmatprep.subr.bf16.mxu0 0
  %1675 = vmatpush2.bf16.msra.mxu0 %v1632
  %1676 = vmatprep.subr.bf16.mxu0 0
  %1677 = vmatpush2.bf16.msra.mxu0 %v1631
  %1678 = vmatprep.subr.bf16.mxu0 0
  %1679 = vmatpush2.bf16.msra.mxu0 %v1630
  %1680 = vmatprep.subr.bf16.mxu0 0
  %1681 = vmatpush2.bf16.msra.mxu0 %v1629
  %1682 = vmatprep.subr.bf16.mxu0 0
  %1683 = vmatpush2.bf16.msra.mxu0 %v1628
  %1684 = vmatprep.mubr.bf16.mxu0 %v1553
  %1685 = vmatmul.mubr.bf16.gmra.mxu0 %v1552
  %v1686 = vpop.f32.mrf.mxu0
  %v1687 = vadd.f32 %v1420, %v1686
  %v1688 = vpop.f32.mrf.mxu0
  %v1689 = vpop.f32.mrf.mxu0
  %v1690 = vadd.f32 %v1423, %v1689
  %v1691 = vpop.f32.mrf.mxu0
  %1692 = vmatprep.mubr.bf16.mxu0 %v1226
  %1693 = vmatmul.mubr.bf16.gmra.mxu0 %v1225
  %v1694 = vpop.f32.mrf.mxu0
  %v1695 = vadd.f32 %v1428, %v1694
  %v1696 = vpop.f32.mrf.mxu0
  %v1697 = vpop.f32.mrf.mxu0
  %v1698 = vadd.f32 %v1431, %v1697
  %v1699 = vpop.f32.mrf.mxu0
  %1700 = vmatprep.mubr.bf16.mxu0 %v1228
  %1701 = vmatmul.mubr.bf16.gmra.mxu0 %v1227
  %v1702 = vpop.f32.mrf.mxu0
  %v1703 = vadd.f32 %v1436, %v1702
  %v1704 = vpop.f32.mrf.mxu0
  %v1705 = vpop.f32.mrf.mxu0
  %v1706 = vadd.f32 %v1439, %v1705
  %v1707 = vpop.f32.mrf.mxu0
  %1708 = vmatprep.mubr.bf16.mxu0 %v1230
  %1709 = vmatmul.mubr.bf16.gmra.mxu0 %v1229
  %v1710 = vpop.f32.mrf.mxu0
  %v1711 = vadd.f32 %v1444, %v1710
  %v1712 = vpop.f32.mrf.mxu0
  %v1713 = vpop.f32.mrf.mxu0
  %v1714 = vadd.f32 %v1447, %v1713
  %v1715 = vpop.f32.mrf.mxu0
  %1716 = vmatprep.mubr.bf16.mxu0 %v1232
  %1717 = vmatmul.mubr.bf16.gmra.mxu0 %v1231
  %v1718 = vpop.f32.mrf.mxu0
  %v1719 = vadd.f32 %v1452, %v1718
  %v1720 = vpop.f32.mrf.mxu0
  %v1721 = vpop.f32.mrf.mxu0
  %v1722 = vadd.f32 %v1455, %v1721
  %v1723 = vpop.f32.mrf.mxu0
  %1724 = vmatprep.mubr.bf16.mxu0 %v1234
  %1725 = vmatmul.mubr.bf16.gmra.mxu0 %v1233
  %v1726 = vpop.f32.mrf.mxu0
  %v1727 = vadd.f32 %v1460, %v1726
  %v1728 = vpop.f32.mrf.mxu0
  %v1729 = vpop.f32.mrf.mxu0
  %v1730 = vadd.f32 %v1463, %v1729
  %v1731 = vpop.f32.mrf.mxu0
  %1732 = vmatprep.mubr.bf16.mxu0 %v1236
  %1733 = vmatmul.mubr.bf16.gmra.mxu0 %v1235
  %v1734 = vpop.f32.mrf.mxu0
  %v1735 = vadd.f32 %v1468, %v1734
  %v1736 = vpop.f32.mrf.mxu0
  %v1737 = vpop.f32.mrf.mxu0
  %v1738 = vadd.f32 %v1471, %v1737
  %v1739 = vpop.f32.mrf.mxu0
  %1740 = vmatprep.mubr.bf16.mxu0 %v1238
  %1741 = vmatmul.mubr.bf16.gmra.mxu0 %v1237
  %v1742 = vpop.f32.mrf.mxu0
  %v1743 = vadd.f32 %v1476, %v1742
  %v1744 = vpop.f32.mrf.mxu0
  %v1745 = vpop.f32.mrf.mxu0
  %v1746 = vadd.f32 %v1479, %v1745
  %v1747 = vpop.f32.mrf.mxu0
  %1748 = vmatprep.mubr.bf16.mxu0 %v1240
  %1749 = vmatmul.mubr.bf16.gmra.mxu0 %v1239
  %v1750 = vpop.f32.mrf.mxu0
  %v1751 = vadd.f32 %v1484, %v1750
  %v1752 = vpop.f32.mrf.mxu0
  %v1753 = vpop.f32.mrf.mxu0
  %v1754 = vadd.f32 %v1487, %v1753
  %v1755 = vpop.f32.mrf.mxu0
  %1756 = vmatprep.mubr.bf16.mxu0 %v1242
  %1757 = vmatmul.mubr.bf16.gmra.mxu0 %v1241
  %v1758 = vpop.f32.mrf.mxu0
  %v1759 = vadd.f32 %v1492, %v1758
  %v1760 = vpop.f32.mrf.mxu0
  %v1761 = vpop.f32.mrf.mxu0
  %v1762 = vadd.f32 %v1495, %v1761
  %v1763 = vpop.f32.mrf.mxu0
  %1764 = vmatprep.mubr.bf16.mxu0 %v1244
  %1765 = vmatmul.mubr.bf16.gmra.mxu0 %v1243
  %v1766 = vpop.f32.mrf.mxu0
  %v1767 = vadd.f32 %v1500, %v1766
  %v1768 = vpop.f32.mrf.mxu0
  %v1769 = vpop.f32.mrf.mxu0
  %v1770 = vadd.f32 %v1503, %v1769
  %v1771 = vpop.f32.mrf.mxu0
  %1772 = vmatprep.mubr.bf16.mxu0 %v1246
  %1773 = vmatmul.mubr.bf16.gmra.mxu0 %v1245
  %v1774 = vpop.f32.mrf.mxu0
  %v1775 = vadd.f32 %v1508, %v1774
  %v1776 = vpop.f32.mrf.mxu0
  %v1777 = vpop.f32.mrf.mxu0
  %v1778 = vadd.f32 %v1511, %v1777
  %v1779 = vpop.f32.mrf.mxu0
  %1780 = vmatprep.mubr.bf16.mxu0 %v1248
  %1781 = vmatmul.mubr.bf16.gmra.mxu0 %v1247
  %v1782 = vpop.f32.mrf.mxu0
  %v1783 = vadd.f32 %v1516, %v1782
  %v1784 = vpop.f32.mrf.mxu0
  %v1785 = vpop.f32.mrf.mxu0
  %v1786 = vadd.f32 %v1519, %v1785
  %v1787 = vpop.f32.mrf.mxu0
  %1788 = vmatprep.mubr.bf16.mxu0 %v1250
  %1789 = vmatmul.mubr.bf16.gmra.mxu0 %v1249
  %v1790 = vpop.f32.mrf.mxu0
  %v1791 = vadd.f32 %v1524, %v1790
  %v1792 = vpop.f32.mrf.mxu0
  %v1793 = vpop.f32.mrf.mxu0
  %v1794 = vadd.f32 %v1527, %v1793
  %v1795 = vpop.f32.mrf.mxu0
  %1796 = vmatprep.mubr.bf16.mxu0 %v1252
  %1797 = vmatmul.mubr.bf16.gmra.mxu0 %v1251
  %v1798 = vpop.f32.mrf.mxu0
  %v1799 = vadd.f32 %v1532, %v1798
  %v1800 = vpop.f32.mrf.mxu0
  %v1801 = vpop.f32.mrf.mxu0
  %v1802 = vadd.f32 %v1535, %v1801
  %v1803 = vpop.f32.mrf.mxu0
  %1804 = vmatprep.mubr.bf16.mxu0 %v1254
  %1805 = vmatmul.mubr.bf16.gmra.mxu0 %v1253
  %v1806 = vpop.f32.mrf.mxu0
  %v1807 = vadd.f32 %v1540, %v1806
  %v1808 = vpop.f32.mrf.mxu0
  %v1809 = vpop.f32.mrf.mxu0
  %v1810 = vadd.f32 %v1543, %v1809
  %v1811 = vpop.f32.mrf.mxu0
  %1812 = vdwg.mxu0
  %v1813 = vadd.f32 %v1687, %v803
  %v1814 = vadd.f32 %v1690, %v803
  %v1815 = vadd.f32 %v1695, %v803
  %v1816 = vadd.f32 %v1698, %v803
  %v1817 = vadd.f32 %v1703, %v803
  %v1818 = vadd.f32 %v1706, %v803
  %v1819 = vadd.f32 %v1711, %v803
  %v1820 = vadd.f32 %v1714, %v803
  %v1821 = vadd.f32 %v1719, %v803
  %v1822 = vadd.f32 %v1722, %v803
  %v1823 = vadd.f32 %v1727, %v803
  %v1824 = vadd.f32 %v1730, %v803
  %v1825 = vadd.f32 %v1735, %v803
  %v1826 = vadd.f32 %v1738, %v803
  %v1827 = vadd.f32 %v1743, %v803
  %v1828 = vadd.f32 %v1746, %v803
  %v1829 = vadd.f32 %v1751, %v803
  %v1830 = vadd.f32 %v1754, %v803
  %v1831 = vadd.f32 %v1759, %v803
  %v1832 = vadd.f32 %v1762, %v803
  %v1833 = vadd.f32 %v1767, %v803
  %v1834 = vadd.f32 %v1770, %v803
  %v1835 = vadd.f32 %v1775, %v803
  %v1836 = vadd.f32 %v1778, %v803
  %v1837 = vadd.f32 %v1783, %v803
  %v1838 = vadd.f32 %v1786, %v803
  %v1839 = vadd.f32 %v1791, %v803
  %v1840 = vadd.f32 %v1794, %v803
  %v1841 = vadd.f32 %v1799, %v803
  %v1842 = vadd.f32 %v1802, %v803
  %v1843 = vadd.f32 %v1807, %v803
  %v1844 = vadd.f32 %v1810, %v803
  %v1845 = vmax.f32 %v1813, 0.0
  %v1846 = vmax.f32 %v1814, 0.0
  %v1847 = vmax.f32 %v1815, 0.0
  %v1848 = vmax.f32 %v1816, 0.0
  %v1849 = vmax.f32 %v1817, 0.0
  %v1850 = vmax.f32 %v1818, 0.0
  %v1851 = vmax.f32 %v1819, 0.0
  %v1852 = vmax.f32 %v1820, 0.0
  %v1853 = vmax.f32 %v1821, 0.0
  %v1854 = vmax.f32 %v1822, 0.0
  %v1855 = vmax.f32 %v1823, 0.0
  %v1856 = vmax.f32 %v1824, 0.0
  %v1857 = vmax.f32 %v1825, 0.0
  %v1858 = vmax.f32 %v1826, 0.0
  %v1859 = vmax.f32 %v1827, 0.0
  %v1860 = vmax.f32 %v1828, 0.0
  %v1861 = vmax.f32 %v1829, 0.0
  %v1862 = vmax.f32 %v1830, 0.0
  %v1863 = vmax.f32 %v1831, 0.0
  %v1864 = vmax.f32 %v1832, 0.0
  %v1865 = vmax.f32 %v1833, 0.0
  %v1866 = vmax.f32 %v1834, 0.0
  %v1867 = vmax.f32 %v1835, 0.0
  %v1868 = vmax.f32 %v1836, 0.0
  %v1869 = vmax.f32 %v1837, 0.0
  %v1870 = vmax.f32 %v1838, 0.0
  %v1871 = vmax.f32 %v1839, 0.0
  %v1872 = vmax.f32 %v1840, 0.0
  %v1873 = vmax.f32 %v1841, 0.0
  %v1874 = vmax.f32 %v1842, 0.0
  %v1875 = vmax.f32 %v1843, 0.0
  %v1876 = vmax.f32 %v1844, 0.0
  %v1877 = vpack.c.bf16 %v1846, %v1845
  %v1878 = vpack.c.bf16 %v1848, %v1847
  %v1879 = vpack.c.bf16 %v1850, %v1849
  %v1880 = vpack.c.bf16 %v1852, %v1851
  %v1881 = vpack.c.bf16 %v1854, %v1853
  %v1882 = vpack.c.bf16 %v1856, %v1855
  %v1883 = vpack.c.bf16 %v1858, %v1857
  %v1884 = vpack.c.bf16 %v1860, %v1859
  %v1885 = vpack.c.bf16 %v1862, %v1861
  %v1886 = vpack.c.bf16 %v1864, %v1863
  %v1887 = vpack.c.bf16 %v1866, %v1865
  %v1888 = vpack.c.bf16 %v1868, %v1867
  %v1889 = vpack.c.bf16 %v1870, %v1869
  %v1890 = vpack.c.bf16 %v1872, %v1871
  %v1891 = vpack.c.bf16 %v1874, %v1873
  %v1892 = vpack.c.bf16 %v1876, %v1875
  %v1909 = vunpack.c.l.b16 %v1877
  %v1910 = vunpack.c.h.b16 %v1877
  %v1911 = vunpack.c.l.b16 %v1878
  %v1912 = vunpack.c.h.b16 %v1878
  %v1913 = vunpack.c.l.b16 %v1879
  %v1914 = vunpack.c.h.b16 %v1879
  %v1915 = vunpack.c.l.b16 %v1880
  %v1916 = vunpack.c.h.b16 %v1880
  %v1917 = vunpack.c.l.b16 %v1881
  %v1918 = vunpack.c.h.b16 %v1881
  %v1919 = vunpack.c.l.b16 %v1882
  %v1920 = vunpack.c.h.b16 %v1882
  %v1921 = vunpack.c.l.b16 %v1883
  %v1922 = vunpack.c.h.b16 %v1883
  %v1923 = vunpack.c.l.b16 %v1884
  %v1924 = vunpack.c.h.b16 %v1884
  %v1925 = vunpack.c.l.b16 %v1885
  %v1926 = vunpack.c.h.b16 %v1885
  %v1927 = vunpack.c.l.b16 %v1886
  %v1928 = vunpack.c.h.b16 %v1886
  %v1929 = vunpack.c.l.b16 %v1887
  %v1930 = vunpack.c.h.b16 %v1887
  %v1931 = vunpack.c.l.b16 %v1888
  %v1932 = vunpack.c.h.b16 %v1888
  %v1933 = vunpack.c.l.b16 %v1889
  %v1934 = vunpack.c.h.b16 %v1889
  %v1935 = vunpack.c.l.b16 %v1890
  %v1936 = vunpack.c.h.b16 %v1890
  %v1937 = vunpack.c.l.b16 %v1891
  %v1938 = vunpack.c.h.b16 %v1891
  %v1939 = vunpack.c.l.b16 %v1892
  %v1940 = vunpack.c.h.b16 %v1892
  %v1941 = vpack.c.b16 %v1909, %v1909
  %v1942 = vpack.c.b16 %v1910, %v1910
  %v1943 = vpack.c.b16 %v1911, %v1911
  %v1944 = vpack.c.b16 %v1912, %v1912
  %v1945 = vpack.c.b16 %v1913, %v1913
  %v1946 = vpack.c.b16 %v1914, %v1914
  %v1947 = vpack.c.b16 %v1915, %v1915
  %v1948 = vpack.c.b16 %v1916, %v1916
  %v1949 = vpack.c.b16 %v1917, %v1917
  %v1950 = vpack.c.b16 %v1918, %v1918
  %v1951 = vpack.c.b16 %v1919, %v1919
  %v1952 = vpack.c.b16 %v1920, %v1920
  %v1953 = vpack.c.b16 %v1921, %v1921
  %v1954 = vpack.c.b16 %v1922, %v1922
  %v1955 = vpack.c.b16 %v1923, %v1923
  %v1956 = vpack.c.b16 %v1924, %v1924
  %v1957 = vpack.c.b16 %v1925, %v1925
  %v1958 = vpack.c.b16 %v1926, %v1926
  %v1959 = vpack.c.b16 %v1927, %v1927
  %v1960 = vpack.c.b16 %v1928, %v1928
  %v1961 = vpack.c.b16 %v1929, %v1929
  %v1962 = vpack.c.b16 %v1930, %v1930
  %v1963 = vpack.c.b16 %v1931, %v1931
  %v1964 = vpack.c.b16 %v1932, %v1932
  %v1965 = vpack.c.b16 %v1933, %v1933
  %v1966 = vpack.c.b16 %v1934, %v1934
  %v1967 = vpack.c.b16 %v1935, %v1935
  %v1968 = vpack.c.b16 %v1936, %v1936
  %v1969 = vpack.c.b16 %v1937, %v1937
  %v1970 = vpack.c.b16 %v1938, %v1938
  %v1971 = vpack.c.b16 %v1939, %v1939
  %v1972 = vpack.c.b16 %v1940, %v1940
  %s2005 = scalar_lea.vmem %s3, 128
  %2006 = vst.msk [vmem:[%s2005] sm:$0xf] %vm997, %v1941
  %2007 = vst.msk [vmem:[%s2005 + $0x4] sm:$0xf] %vm997, %v1942
  %2008 = vst.msk [vmem:[%s2005 + $0x8] sm:$0xf] %vm997, %v1943
  %2009 = vst.msk [vmem:[%s2005 + $0xc] sm:$0xf] %vm997, %v1944
  %2010 = vst.msk [vmem:[%s2005 + $0x10] sm:$0xf] %vm997, %v1945
  %2011 = vst.msk [vmem:[%s2005 + $0x14] sm:$0xf] %vm997, %v1946
  %2012 = vst.msk [vmem:[%s2005 + $0x18] sm:$0xf] %vm997, %v1947
  %2013 = vst.msk [vmem:[%s2005 + $0x1c] sm:$0xf] %vm997, %v1948
  %2014 = vst.msk [vmem:[%s2005 + $0x20] sm:$0xf] %vm997, %v1949
  %2015 = vst.msk [vmem:[%s2005 + $0x24] sm:$0xf] %vm997, %v1950
  %2016 = vst.msk [vmem:[%s2005 + $0x28] sm:$0xf] %vm997, %v1951
  %2017 = vst.msk [vmem:[%s2005 + $0x2c] sm:$0xf] %vm997, %v1952
  %2018 = vst.msk [vmem:[%s2005 + $0x30] sm:$0xf] %vm997, %v1953
  %2019 = vst.msk [vmem:[%s2005 + $0x34] sm:$0xf] %vm997, %v1954
  %2020 = vst.msk [vmem:[%s2005 + $0x38] sm:$0xf] %vm997, %v1955
  %2021 = vst.msk [vmem:[%s2005 + $0x3c] sm:$0xf] %vm997, %v1956
  %2022 = vst.msk [vmem:[%s2005 + $0x40] sm:$0xf] %vm997, %v1957
  %2023 = vst.msk [vmem:[%s2005 + $0x44] sm:$0xf] %vm997, %v1958
  %2024 = vst.msk [vmem:[%s2005 + $0x48] sm:$0xf] %vm997, %v1959
  %2025 = vst.msk [vmem:[%s2005 + $0x4c] sm:$0xf] %vm997, %v1960
  %2026 = vst.msk [vmem:[%s2005 + $0x50] sm:$0xf] %vm997, %v1961
  %2027 = vst.msk [vmem:[%s2005 + $0x54] sm:$0xf] %vm997, %v1962
  %2028 = vst.msk [vmem:[%s2005 + $0x58] sm:$0xf] %vm997, %v1963
  %2029 = vst.msk [vmem:[%s2005 + $0x5c] sm:$0xf] %vm997, %v1964
  %2030 = vst.msk [vmem:[%s2005 + $0x60] sm:$0xf] %vm997, %v1965
  %2031 = vst.msk [vmem:[%s2005 + $0x64] sm:$0xf] %vm997, %v1966
  %2032 = vst.msk [vmem:[%s2005 + $0x68] sm:$0xf] %vm997, %v1967
  %2033 = vst.msk [vmem:[%s2005 + $0x6c] sm:$0xf] %vm997, %v1968
  %2034 = vst.msk [vmem:[%s2005 + $0x70] sm:$0xf] %vm997, %v1969
  %2035 = vst.msk [vmem:[%s2005 + $0x74] sm:$0xf] %vm997, %v1970
  %2036 = vst.msk [vmem:[%s2005 + $0x78] sm:$0xf] %vm997, %v1971
  %2037 = vst.msk [vmem:[%s2005 + $0x7c] sm:$0xf] %vm997, %v1972
  // Predicated region
  $region14: #{cnn_forward.5} parent=0 // pred_check
    _
  $region15: #{cnn_forward.5} parent=0 // pred_check_branch
    %2039 = sbr.rel (0) target = $region17
  $region16: #{cnn_forward.5} parent=0 // pred_region
    _
  $region17: #{cnn_forward.5} parent=0 // pred_fallthru
    _
  // Predicated region
  $region18: #{cnn_forward.5} parent=0 // pred_check
    _
  $region19: #{cnn_forward.5} parent=0 // pred_check_branch
    %2041 = sbr.rel (0) target = $region21
  $region20: #{cnn_forward.5} parent=0 // pred_region
    _
  $region21: #{cnn_forward.5} parent=0 // pred_fallthru
    _

// kernel: cnn_forward.6
$region0: #{cnn_forward.6}
  #allocation0 [shape = 'u32[]', space=smem, size = 0x4, offset = 0x4, fixed_abs, tag = 'smem constant byte address 0x4 - core index']
  #allocation1 [shape = 'u32[144,128]{1,0:T(1,128)}', space=vmem, size = 0x12000, scoped, tag = 'internal scratch']
  %s0 = inlined_call_operand.vmem [shape: f32[2,72,256], index: 0, kind: input, shape index: {}]
  %s1 = inlined_call_operand.vmem [shape: bf16[2,256,32], index: 1, kind: input, shape index: {}]
  %s2 = inlined_call_operand.vmem [shape: f32[1,32], index: 2, kind: input, shape index: {}]
  %s3 = inlined_call_operand.vmem [shape: bf16[2,64,32], index: 3, kind: output, shape index: {}]
  %s4 = sld [smem:[#allocation0]]
  $region22: #{cnn_forward.6} parent=0
    _
  %s6 = ssub.s32 1, %s4
  %s7 = scalar_select 0, %s6, %s4
  // Predicated region
  $region2: #{cnn_forward.6} parent=0 // pred_check
    _
  $region3: #{cnn_forward.6} parent=0 // pred_check_branch
    %9 = sbr.rel (0) target = $region5
  $region4: #{cnn_forward.6} parent=0 // pred_region
    _
  $region5: #{cnn_forward.6} parent=0 // pred_fallthru
    _
  // Predicated region
  $region6: #{cnn_forward.6} parent=0 // pred_check
    _
  $region7: #{cnn_forward.6} parent=0 // pred_check_branch
    %11 = sbr.rel (0) target = $region9
  $region8: #{cnn_forward.6} parent=0 // pred_region
    _
  $region9: #{cnn_forward.6} parent=0 // pred_fallthru
    _
  // Predicated region
  $region10: #{cnn_forward.6} parent=0 // pred_check
    _
  $region11: #{cnn_forward.6} parent=0 // pred_check_branch
    %13 = sbr.rel (0) target = $region13
  $region12: #{cnn_forward.6} parent=0 // pred_region
    _
  $region13: #{cnn_forward.6} parent=0 // pred_fallthru
    _
  %v15 = vld [vmem:[%s2] sm:$0x1]
  %v16 = vld [vmem:[%s0] sm:$0xff]
  %v17 = vld [vmem:[%s0 + $0x8] sm:$0xff]
  %v18 = vld [vmem:[%s0 + $0x10] sm:$0xff]
  %v19 = vld [vmem:[%s0 + $0x18] sm:$0xff]
  %v20 = vld [vmem:[%s0 + $0x20] sm:$0xff]
  %v21 = vld [vmem:[%s0 + $0x28] sm:$0xff]
  %v22 = vld [vmem:[%s0 + $0x30] sm:$0xff]
  %v23 = vld [vmem:[%s0 + $0x38] sm:$0xff]
  %v24 = vld [vmem:[%s0 + $0x40] sm:$0xff]
  %v25 = vld [vmem:[%s0 + $0x48] sm:$0xff]
  %v26 = vld [vmem:[%s0 + $0x50] sm:$0xff]
  %v27 = vld [vmem:[%s0 + $0x58] sm:$0xff]
  %v28 = vld [vmem:[%s0 + $0x60] sm:$0xff]
  %v29 = vld [vmem:[%s0 + $0x68] sm:$0xff]
  %v30 = vld [vmem:[%s0 + $0x70] sm:$0xff]
  %v31 = vld [vmem:[%s0 + $0x78] sm:$0xff]
  %v32 = vpack.c.bf16 %v18, %v16
  %v33 = vpack.c.bf16 %v19, %v17
  %v34 = vpack.c.bf16 %v22, %v20
  %v35 = vpack.c.bf16 %v23, %v21
  %v36 = vpack.c.bf16 %v26, %v24
  %v37 = vpack.c.bf16 %v27, %v25
  %v38 = vpack.c.bf16 %v30, %v28
  %v39 = vpack.c.bf16 %v31, %v29
  %v40 = vld [vmem:[%s1] sm:$0xf]
  %v41 = vld [vmem:[%s1 + $0x4] sm:$0xf]
  %v42 = vld [vmem:[%s1 + $0x8] sm:$0xf]
  %v43 = vld [vmem:[%s1 + $0xc] sm:$0xf]
  %v44 = vld [vmem:[%s1 + $0x10] sm:$0xf]
  %v45 = vld [vmem:[%s1 + $0x14] sm:$0xf]
  %v46 = vld [vmem:[%s1 + $0x18] sm:$0xf]
  %v47 = vld [vmem:[%s1 + $0x1c] sm:$0xf]
  %v48 = vld [vmem:[%s1 + $0x20] sm:$0xf]
  %v49 = vld [vmem:[%s1 + $0x24] sm:$0xf]
  %v50 = vld [vmem:[%s1 + $0x28] sm:$0xf]
  %v51 = vld [vmem:[%s1 + $0x2c] sm:$0xf]
  %v52 = vld [vmem:[%s1 + $0x30] sm:$0xf]
  %v53 = vld [vmem:[%s1 + $0x34] sm:$0xf]
  %v54 = vld [vmem:[%s1 + $0x38] sm:$0xf]
  %v55 = vld [vmem:[%s1 + $0x3c] sm:$0xf]
  %v56 = vld [vmem:[%s1 + $0x40] sm:$0xf]
  %v57 = vld [vmem:[%s1 + $0x44] sm:$0xf]
  %v58 = vld [vmem:[%s1 + $0x48] sm:$0xf]
  %v59 = vld [vmem:[%s1 + $0x4c] sm:$0xf]
  %v60 = vld [vmem:[%s1 + $0x50] sm:$0xf]
  %v61 = vld [vmem:[%s1 + $0x54] sm:$0xf]
  %v62 = vld [vmem:[%s1 + $0x58] sm:$0xf]
  %v63 = vld [vmem:[%s1 + $0x5c] sm:$0xf]
  %v64 = vld [vmem:[%s1 + $0x60] sm:$0xf]
  %v65 = vld [vmem:[%s1 + $0x64] sm:$0xf]
  %v66 = vld [vmem:[%s1 + $0x68] sm:$0xf]
  %v67 = vld [vmem:[%s1 + $0x6c] sm:$0xf]
  %v68 = vld [vmem:[%s1 + $0x70] sm:$0xf]
  %v69 = vld [vmem:[%s1 + $0x74] sm:$0xf]
  %v70 = vld [vmem:[%s1 + $0x78] sm:$0xf]
  %v71 = vld [vmem:[%s1 + $0x7c] sm:$0xf]
  %v72 = vld [vmem:[%s0 + $0x80] sm:$0xff]
  %v73 = vld [vmem:[%s0 + $0x88] sm:$0xff]
  %v74 = vpack.c.bf16 %v20, %v18
  %v75 = vpack.c.bf16 %v21, %v19
  %v76 = vpack.c.bf16 %v24, %v22
  %v77 = vpack.c.bf16 %v25, %v23
  %v78 = vpack.c.bf16 %v28, %v26
  %v79 = vpack.c.bf16 %v29, %v27
  %v80 = vpack.c.bf16 %v72, %v30
  %v81 = vpack.c.bf16 %v73, %v31
  %s82 = scalar_lea.vmem %s1, 128
  %v83 = vld [vmem:[%s82] sm:$0xf]
  %v84 = vld [vmem:[%s82 + $0x4] sm:$0xf]
  %v85 = vld [vmem:[%s82 + $0x8] sm:$0xf]
  %v86 = vld [vmem:[%s82 + $0xc] sm:$0xf]
  %v87 = vld [vmem:[%s82 + $0x10] sm:$0xf]
  %v88 = vld [vmem:[%s82 + $0x14] sm:$0xf]
  %v89 = vld [vmem:[%s82 + $0x18] sm:$0xf]
  %v90 = vld [vmem:[%s82 + $0x1c] sm:$0xf]
  %v91 = vld [vmem:[%s82 + $0x20] sm:$0xf]
  %v92 = vld [vmem:[%s82 + $0x24] sm:$0xf]
  %v93 = vld [vmem:[%s82 + $0x28] sm:$0xf]
  %v94 = vld [vmem:[%s82 + $0x2c] sm:$0xf]
  %v95 = vld [vmem:[%s82 + $0x30] sm:$0xf]
  %v96 = vld [vmem:[%s82 + $0x34] sm:$0xf]
  %v97 = vld [vmem:[%s82 + $0x38] sm:$0xf]
  %v98 = vld [vmem:[%s82 + $0x3c] sm:$0xf]
  %v99 = vld [vmem:[%s82 + $0x40] sm:$0xf]
  %v100 = vld [vmem:[%s82 + $0x44] sm:$0xf]
  %v101 = vld [vmem:[%s82 + $0x48] sm:$0xf]
  %v102 = vld [vmem:[%s82 + $0x4c] sm:$0xf]
  %v103 = vld [vmem:[%s82 + $0x50] sm:$0xf]
  %v104 = vld [vmem:[%s82 + $0x54] sm:$0xf]
  %v105 = vld [vmem:[%s82 + $0x58] sm:$0xf]
  %v106 = vld [vmem:[%s82 + $0x5c] sm:$0xf]
  %v107 = vld [vmem:[%s82 + $0x60] sm:$0xf]
  %v108 = vld [vmem:[%s82 + $0x64] sm:$0xf]
  %v109 = vld [vmem:[%s82 + $0x68] sm:$0xf]
  %v110 = vld [vmem:[%s82 + $0x6c] sm:$0xf]
  %v111 = vld [vmem:[%s82 + $0x70] sm:$0xf]
  %v112 = vld [vmem:[%s82 + $0x74] sm:$0xf]
  %v113 = vld [vmem:[%s82 + $0x78] sm:$0xf]
  %v114 = vld [vmem:[%s82 + $0x7c] sm:$0xf]
  %v147 = vunpack.c.l.b16 %v83
  %v148 = vunpack.c.l.b16 %v84
  %v149 = vunpack.c.l.b16 %v85
  %v150 = vunpack.c.l.b16 %v86
  %v151 = vunpack.c.l.b16 %v87
  %v152 = vunpack.c.l.b16 %v88
  %v153 = vunpack.c.l.b16 %v89
  %v154 = vunpack.c.l.b16 %v90
  %v155 = vunpack.c.l.b16 %v91
  %v156 = vunpack.c.l.b16 %v92
  %v157 = vunpack.c.l.b16 %v93
  %v158 = vunpack.c.l.b16 %v94
  %v159 = vunpack.c.l.b16 %v95
  %v160 = vunpack.c.l.b16 %v96
  %v161 = vunpack.c.l.b16 %v97
  %v162 = vunpack.c.l.b16 %v98
  %v163 = vunpack.c.l.b16 %v99
  %v164 = vunpack.c.l.b16 %v100
  %v165 = vunpack.c.l.b16 %v101
  %v166 = vunpack.c.l.b16 %v102
  %v167 = vunpack.c.l.b16 %v103
  %v168 = vunpack.c.l.b16 %v104
  %v169 = vunpack.c.l.b16 %v105
  %v170 = vunpack.c.l.b16 %v106
  %v171 = vunpack.c.l.b16 %v107
  %v172 = vunpack.c.l.b16 %v108
  %v173 = vunpack.c.l.b16 %v109
  %v174 = vunpack.c.l.b16 %v110
  %v175 = vunpack.c.l.b16 %v111
  %v176 = vunpack.c.l.b16 %v112
  %v177 = vunpack.c.l.b16 %v113
  %v178 = vunpack.c.l.b16 %v114
  %v179 = vpack.c.b16 %v148, %v147
  %v180 = vpack.c.b16 %v150, %v149
  %v181 = vpack.c.b16 %v152, %v151
  %v182 = vpack.c.b16 %v154, %v153
  %v183 = vpack.c.b16 %v156, %v155
  %v184 = vpack.c.b16 %v158, %v157
  %v185 = vpack.c.b16 %v160, %v159
  %v186 = vpack.c.b16 %v162, %v161
  %v187 = vpack.c.b16 %v164, %v163
  %v188 = vpack.c.b16 %v166, %v165
  %v189 = vpack.c.b16 %v168, %v167
  %v190 = vpack.c.b16 %v170, %v169
  %v191 = vpack.c.b16 %v172, %v171
  %v192 = vpack.c.b16 %v174, %v173
  %v193 = vpack.c.b16 %v176, %v175
  %v194 = vpack.c.b16 %v178, %v177
  %211 = vmatprep.subr.bf16.mxu0 0
  %212 = vmatpush1.bf16.msra.mxu0 %v186
  %213 = vmatprep.subr.bf16.mxu0 0
  %214 = vmatpush1.bf16.msra.mxu0 %v185
  %215 = vmatprep.subr.bf16.mxu0 0
  %216 = vmatpush1.bf16.msra.mxu0 %v184
  %217 = vmatprep.subr.bf16.mxu0 0
  %218 = vmatpush1.bf16.msra.mxu0 %v183
  %219 = vmatprep.subr.bf16.mxu0 0
  %220 = vmatpush1.bf16.msra.mxu0 %v182
  %221 = vmatprep.subr.bf16.mxu0 0
  %222 = vmatpush1.bf16.msra.mxu0 %v181
  %223 = vmatprep.subr.bf16.mxu0 0
  %224 = vmatpush1.bf16.msra.mxu0 %v180
  %225 = vmatprep.subr.bf16.mxu0 0
  %226 = vmatpush1.bf16.msra.mxu0 %v179
  %227 = vmatprep.subr.bf16.mxu0 0
  %228 = vmatpush2.bf16.msra.mxu0 %v194
  %229 = vmatprep.subr.bf16.mxu0 0
  %230 = vmatpush2.bf16.msra.mxu0 %v193
  %231 = vmatprep.subr.bf16.mxu0 0
  %232 = vmatpush2.bf16.msra.mxu0 %v192
  %233 = vmatprep.subr.bf16.mxu0 0
  %234 = vmatpush2.bf16.msra.mxu0 %v191
  %235 = vmatprep.subr.bf16.mxu0 0
  %236 = vmatpush2.bf16.msra.mxu0 %v190
  %237 = vmatprep.subr.bf16.mxu0 0
  %238 = vmatpush2.bf16.msra.mxu0 %v189
  %239 = vmatprep.subr.bf16.mxu0 0
  %240 = vmatpush2.bf16.msra.mxu0 %v188
  %241 = vmatprep.subr.bf16.mxu0 0
  %242 = vmatpush2.bf16.msra.mxu0 %v187
  %243 = vmatprep.mubr.bf16.mxu0 %v75
  %244 = vmatmul.mubr.bf16.gmra.mxu0 %v74
  %v245 = vpop.f32.mrf.mxu0
  %v246 = vadd.f32 0.0, %v245
  %v247 = vpop.f32.mrf.mxu0
  %v248 = vpop.f32.mrf.mxu0
  %v249 = vadd.f32 0.0, %v248
  %v250 = vpop.f32.mrf.mxu0
  %251 = vmatprep.mubr.bf16.mxu0 %v77
  %252 = vmatmul.mubr.bf16.gmra.mxu0 %v76
  %v253 = vpop.f32.mrf.mxu0
  %v254 = vadd.f32 0.0, %v253
  %v255 = vpop.f32.mrf.mxu0
  %v256 = vpop.f32.mrf.mxu0
  %v257 = vadd.f32 0.0, %v256
  %v258 = vpop.f32.mrf.mxu0
  %259 = vmatprep.mubr.bf16.mxu0 %v79
  %260 = vmatmul.mubr.bf16.gmra.mxu0 %v78
  %v261 = vpop.f32.mrf.mxu0
  %v262 = vadd.f32 0.0, %v261
  %v263 = vpop.f32.mrf.mxu0
  %v264 = vpop.f32.mrf.mxu0
  %v265 = vadd.f32 0.0, %v264
  %v266 = vpop.f32.mrf.mxu0
  %267 = vmatprep.mubr.bf16.mxu0 %v81
  %268 = vmatmul.mubr.bf16.gmra.mxu0 %v80
  %v269 = vpop.f32.mrf.mxu0
  %v270 = vadd.f32 0.0, %v269
  %v271 = vpop.f32.mrf.mxu0
  %v272 = vpop.f32.mrf.mxu0
  %v273 = vadd.f32 0.0, %v272
  %v274 = vpop.f32.mrf.mxu0
  %275 = vdwg.mxu0
  %v308 = vunpack.c.l.b16 %v40
  %v309 = vunpack.c.l.b16 %v41
  %v310 = vunpack.c.l.b16 %v42
  %v311 = vunpack.c.l.b16 %v43
  %v312 = vunpack.c.l.b16 %v44
  %v313 = vunpack.c.l.b16 %v45
  %v314 = vunpack.c.l.b16 %v46
  %v315 = vunpack.c.l.b16 %v47
  %v316 = vunpack.c.l.b16 %v48
  %v317 = vunpack.c.l.b16 %v49
  %v318 = vunpack.c.l.b16 %v50
  %v319 = vunpack.c.l.b16 %v51
  %v320 = vunpack.c.l.b16 %v52
  %v321 = vunpack.c.l.b16 %v53
  %v322 = vunpack.c.l.b16 %v54
  %v323 = vunpack.c.l.b16 %v55
  %v324 = vunpack.c.l.b16 %v56
  %v325 = vunpack.c.l.b16 %v57
  %v326 = vunpack.c.l.b16 %v58
  %v327 = vunpack.c.l.b16 %v59
  %v328 = vunpack.c.l.b16 %v60
  %v329 = vunpack.c.l.b16 %v61
  %v330 = vunpack.c.l.b16 %v62
  %v331 = vunpack.c.l.b16 %v63
  %v332 = vunpack.c.l.b16 %v64
  %v333 = vunpack.c.l.b16 %v65
  %v334 = vunpack.c.l.b16 %v66
  %v335 = vunpack.c.l.b16 %v67
  %v336 = vunpack.c.l.b16 %v68
  %v337 = vunpack.c.l.b16 %v69
  %v338 = vunpack.c.l.b16 %v70
  %v339 = vunpack.c.l.b16 %v71
  %v340 = vpack.c.b16 %v309, %v308
  %v341 = vpack.c.b16 %v311, %v310
  %v342 = vpack.c.b16 %v313, %v312
  %v343 = vpack.c.b16 %v315, %v314
  %v344 = vpack.c.b16 %v317, %v316
  %v345 = vpack.c.b16 %v319, %v318
  %v346 = vpack.c.b16 %v321, %v320
  %v347 = vpack.c.b16 %v323, %v322
  %v348 = vpack.c.b16 %v325, %v324
  %v349 = vpack.c.b16 %v327, %v326
  %v350 = vpack.c.b16 %v329, %v328
  %v351 = vpack.c.b16 %v331, %v330
  %v352 = vpack.c.b16 %v333, %v332
  %v353 = vpack.c.b16 %v335, %v334
  %v354 = vpack.c.b16 %v337, %v336
  %v355 = vpack.c.b16 %v339, %v338
  %372 = vmatprep.subr.bf16.mxu0 0
  %373 = vmatpush1.bf16.msra.mxu0 %v347
  %374 = vmatprep.subr.bf16.mxu0 0
  %375 = vmatpush1.bf16.msra.mxu0 %v346
  %376 = vmatprep.subr.bf16.mxu0 0
  %377 = vmatpush1.bf16.msra.mxu0 %v345
  %378 = vmatprep.subr.bf16.mxu0 0
  %379 = vmatpush1.bf16.msra.mxu0 %v344
  %380 = vmatprep.subr.bf16.mxu0 0
  %381 = vmatpush1.bf16.msra.mxu0 %v343
  %382 = vmatprep.subr.bf16.mxu0 0
  %383 = vmatpush1.bf16.msra.mxu0 %v342
  %384 = vmatprep.subr.bf16.mxu0 0
  %385 = vmatpush1.bf16.msra.mxu0 %v341
  %386 = vmatprep.subr.bf16.mxu0 0
  %387 = vmatpush1.bf16.msra.mxu0 %v340
  %388 = vmatprep.subr.bf16.mxu0 0
  %389 = vmatpush2.bf16.msra.mxu0 %v355
  %390 = vmatprep.subr.bf16.mxu0 0
  %391 = vmatpush2.bf16.msra.mxu0 %v354
  %392 = vmatprep.subr.bf16.mxu0 0
  %393 = vmatpush2.bf16.msra.mxu0 %v353
  %394 = vmatprep.subr.bf16.mxu0 0
  %395 = vmatpush2.bf16.msra.mxu0 %v352
  %396 = vmatprep.subr.bf16.mxu0 0
  %397 = vmatpush2.bf16.msra.mxu0 %v351
  %398 = vmatprep.subr.bf16.mxu0 0
  %399 = vmatpush2.bf16.msra.mxu0 %v350
  %400 = vmatprep.subr.bf16.mxu0 0
  %401 = vmatpush2.bf16.msra.mxu0 %v349
  %402 = vmatprep.subr.bf16.mxu0 0
  %403 = vmatpush2.bf16.msra.mxu0 %v348
  %404 = vmatprep.mubr.bf16.mxu0 %v33
  %405 = vmatmul.mubr.bf16.gmra.mxu0 %v32
  %v406 = vpop.f32.mrf.mxu0
  %v407 = vadd.f32 %v246, %v406
  %v408 = vpop.f32.mrf.mxu0
  %v409 = vpop.f32.mrf.mxu0
  %v410 = vadd.f32 %v249, %v409
  %v411 = vpop.f32.mrf.mxu0
  %412 = vmatprep.mubr.bf16.mxu0 %v35
  %413 = vmatmul.mubr.bf16.gmra.mxu0 %v34
  %v414 = vpop.f32.mrf.mxu0
  %v415 = vadd.f32 %v254, %v414
  %v416 = vpop.f32.mrf.mxu0
  %v417 = vpop.f32.mrf.mxu0
  %v418 = vadd.f32 %v257, %v417
  %v419 = vpop.f32.mrf.mxu0
  %420 = vmatprep.mubr.bf16.mxu0 %v37
  %421 = vmatmul.mubr.bf16.gmra.mxu0 %v36
  %v422 = vpop.f32.mrf.mxu0
  %v423 = vadd.f32 %v262, %v422
  %v424 = vpop.f32.mrf.mxu0
  %v425 = vpop.f32.mrf.mxu0
  %v426 = vadd.f32 %v265, %v425
  %v427 = vpop.f32.mrf.mxu0
  %428 = vmatprep.mubr.bf16.mxu0 %v39
  %429 = vmatmul.mubr.bf16.gmra.mxu0 %v38
  %v430 = vpop.f32.mrf.mxu0
  %v431 = vadd.f32 %v270, %v430
  %v432 = vpop.f32.mrf.mxu0
  %v433 = vpop.f32.mrf.mxu0
  %v434 = vadd.f32 %v273, %v433
  %v435 = vpop.f32.mrf.mxu0
  %436 = vdwg.mxu0
  %v438 = vlaneseq
  %v439 = vshrl.u32 %v438, 7
  %v440 = vsub.s32 0, %v439
  %v441 = vrot.slane %v15, %v440
  %v443 = vadd.f32 %v407, %v441
  %v444 = vadd.f32 %v410, %v441
  %v445 = vadd.f32 %v415, %v441
  %v446 = vadd.f32 %v418, %v441
  %v447 = vadd.f32 %v423, %v441
  %v448 = vadd.f32 %v426, %v441
  %v449 = vadd.f32 %v431, %v441
  %v450 = vadd.f32 %v434, %v441
  %v451 = vmax.f32 %v443, 0.0
  %v452 = vmax.f32 %v444, 0.0
  %v453 = vmax.f32 %v445, 0.0
  %v454 = vmax.f32 %v446, 0.0
  %v455 = vmax.f32 %v447, 0.0
  %v456 = vmax.f32 %v448, 0.0
  %v457 = vmax.f32 %v449, 0.0
  %v458 = vmax.f32 %v450, 0.0
  %v459 = vpack.c.bf16 %v452, %v451
  %v460 = vpack.c.bf16 %v454, %v453
  %v461 = vpack.c.bf16 %v456, %v455
  %v462 = vpack.c.bf16 %v458, %v457
  %v467 = vunpack.c.l.b16 %v459
  %v468 = vunpack.c.h.b16 %v459
  %v469 = vunpack.c.l.b16 %v460
  %v470 = vunpack.c.h.b16 %v460
  %v471 = vunpack.c.l.b16 %v461
  %v472 = vunpack.c.h.b16 %v461
  %v473 = vunpack.c.l.b16 %v462
  %v474 = vunpack.c.h.b16 %v462
  %v475 = vpack.c.b16 %v467, %v467
  %v476 = vpack.c.b16 %v468, %v468
  %v477 = vpack.c.b16 %v469, %v469
  %v478 = vpack.c.b16 %v470, %v470
  %v479 = vpack.c.b16 %v471, %v471
  %v480 = vpack.c.b16 %v472, %v472
  %v481 = vpack.c.b16 %v473, %v473
  %v482 = vpack.c.b16 %v474, %v474
  %vm491 = vcmask 257024
  %492 = vst.msk [vmem:[%s3] sm:$0xf] %vm491, %v475
  %493 = vst.msk [vmem:[%s3 + $0x4] sm:$0xf] %vm491, %v476
  %494 = vst.msk [vmem:[%s3 + $0x8] sm:$0xf] %vm491, %v477
  %495 = vst.msk [vmem:[%s3 + $0xc] sm:$0xf] %vm491, %v478
  %496 = vst.msk [vmem:[%s3 + $0x10] sm:$0xf] %vm491, %v479
  %497 = vst.msk [vmem:[%s3 + $0x14] sm:$0xf] %vm491, %v480
  %498 = vst.msk [vmem:[%s3 + $0x18] sm:$0xf] %vm491, %v481
  %499 = vst.msk [vmem:[%s3 + $0x1c] sm:$0xf] %vm491, %v482
  %s500 = scalar_lea.vmem %s0, 144
  %v501 = vld [vmem:[%s500] sm:$0xff]
  %v502 = vld [vmem:[%s500 + $0x8] sm:$0xff]
  %v503 = vld [vmem:[%s500 + $0x10] sm:$0xff]
  %v504 = vld [vmem:[%s500 + $0x18] sm:$0xff]
  %v505 = vld [vmem:[%s500 + $0x20] sm:$0xff]
  %v506 = vld [vmem:[%s500 + $0x28] sm:$0xff]
  %v507 = vld [vmem:[%s500 + $0x30] sm:$0xff]
  %v508 = vld [vmem:[%s500 + $0x38] sm:$0xff]
  %v509 = vld [vmem:[%s500 + $0x40] sm:$0xff]
  %v510 = vld [vmem:[%s500 + $0x48] sm:$0xff]
  %v511 = vld [vmem:[%s500 + $0x50] sm:$0xff]
  %v512 = vld [vmem:[%s500 + $0x58] sm:$0xff]
  %v513 = vld [vmem:[%s500 + $0x60] sm:$0xff]
  %v514 = vld [vmem:[%s500 + $0x68] sm:$0xff]
  %v515 = vld [vmem:[%s500 + $0x70] sm:$0xff]
  %v516 = vld [vmem:[%s500 + $0x78] sm:$0xff]
  %v517 = vpack.c.bf16 %v503, %v501
  %v518 = vpack.c.bf16 %v504, %v502
  %v519 = vpack.c.bf16 %v507, %v505
  %v520 = vpack.c.bf16 %v508, %v506
  %v521 = vpack.c.bf16 %v511, %v509
  %v522 = vpack.c.bf16 %v512, %v510
  %v523 = vpack.c.bf16 %v515, %v513
  %v524 = vpack.c.bf16 %v516, %v514
  %v525 = vld [vmem:[%s1] sm:$0xf]
  %v526 = vld [vmem:[%s1 + $0x4] sm:$0xf]
  %v527 = vld [vmem:[%s1 + $0x8] sm:$0xf]
  %v528 = vld [vmem:[%s1 + $0xc] sm:$0xf]
  %v529 = vld [vmem:[%s1 + $0x10] sm:$0xf]
  %v530 = vld [vmem:[%s1 + $0x14] sm:$0xf]
  %v531 = vld [vmem:[%s1 + $0x18] sm:$0xf]
  %v532 = vld [vmem:[%s1 + $0x1c] sm:$0xf]
  %v533 = vld [vmem:[%s1 + $0x20] sm:$0xf]
  %v534 = vld [vmem:[%s1 + $0x24] sm:$0xf]
  %v535 = vld [vmem:[%s1 + $0x28] sm:$0xf]
  %v536 = vld [vmem:[%s1 + $0x2c] sm:$0xf]
  %v537 = vld [vmem:[%s1 + $0x30] sm:$0xf]
  %v538 = vld [vmem:[%s1 + $0x34] sm:$0xf]
  %v539 = vld [vmem:[%s1 + $0x38] sm:$0xf]
  %v540 = vld [vmem:[%s1 + $0x3c] sm:$0xf]
  %v541 = vld [vmem:[%s1 + $0x40] sm:$0xf]
  %v542 = vld [vmem:[%s1 + $0x44] sm:$0xf]
  %v543 = vld [vmem:[%s1 + $0x48] sm:$0xf]
  %v544 = vld [vmem:[%s1 + $0x4c] sm:$0xf]
  %v545 = vld [vmem:[%s1 + $0x50] sm:$0xf]
  %v546 = vld [vmem:[%s1 + $0x54] sm:$0xf]
  %v547 = vld [vmem:[%s1 + $0x58] sm:$0xf]
  %v548 = vld [vmem:[%s1 + $0x5c] sm:$0xf]
  %v549 = vld [vmem:[%s1 + $0x60] sm:$0xf]
  %v550 = vld [vmem:[%s1 + $0x64] sm:$0xf]
  %v551 = vld [vmem:[%s1 + $0x68] sm:$0xf]
  %v552 = vld [vmem:[%s1 + $0x6c] sm:$0xf]
  %v553 = vld [vmem:[%s1 + $0x70] sm:$0xf]
  %v554 = vld [vmem:[%s1 + $0x74] sm:$0xf]
  %v555 = vld [vmem:[%s1 + $0x78] sm:$0xf]
  %v556 = vld [vmem:[%s1 + $0x7c] sm:$0xf]
  %v557 = vld [vmem:[%s500 + $0x80] sm:$0xff]
  %v558 = vld [vmem:[%s500 + $0x88] sm:$0xff]
  %v559 = vpack.c.bf16 %v505, %v503
  %v560 = vpack.c.bf16 %v506, %v504
  %v561 = vpack.c.bf16 %v509, %v507
  %v562 = vpack.c.bf16 %v510, %v508
  %v563 = vpack.c.bf16 %v513, %v511
  %v564 = vpack.c.bf16 %v514, %v512
  %v565 = vpack.c.bf16 %v557, %v515
  %v566 = vpack.c.bf16 %v558, %v516
  %v567 = vld [vmem:[%s82] sm:$0xf]
  %v568 = vld [vmem:[%s82 + $0x4] sm:$0xf]
  %v569 = vld [vmem:[%s82 + $0x8] sm:$0xf]
  %v570 = vld [vmem:[%s82 + $0xc] sm:$0xf]
  %v571 = vld [vmem:[%s82 + $0x10] sm:$0xf]
  %v572 = vld [vmem:[%s82 + $0x14] sm:$0xf]
  %v573 = vld [vmem:[%s82 + $0x18] sm:$0xf]
  %v574 = vld [vmem:[%s82 + $0x1c] sm:$0xf]
  %v575 = vld [vmem:[%s82 + $0x20] sm:$0xf]
  %v576 = vld [vmem:[%s82 + $0x24] sm:$0xf]
  %v577 = vld [vmem:[%s82 + $0x28] sm:$0xf]
  %v578 = vld [vmem:[%s82 + $0x2c] sm:$0xf]
  %v579 = vld [vmem:[%s82 + $0x30] sm:$0xf]
  %v580 = vld [vmem:[%s82 + $0x34] sm:$0xf]
  %v581 = vld [vmem:[%s82 + $0x38] sm:$0xf]
  %v582 = vld [vmem:[%s82 + $0x3c] sm:$0xf]
  %v583 = vld [vmem:[%s82 + $0x40] sm:$0xf]
  %v584 = vld [vmem:[%s82 + $0x44] sm:$0xf]
  %v585 = vld [vmem:[%s82 + $0x48] sm:$0xf]
  %v586 = vld [vmem:[%s82 + $0x4c] sm:$0xf]
  %v587 = vld [vmem:[%s82 + $0x50] sm:$0xf]
  %v588 = vld [vmem:[%s82 + $0x54] sm:$0xf]
  %v589 = vld [vmem:[%s82 + $0x58] sm:$0xf]
  %v590 = vld [vmem:[%s82 + $0x5c] sm:$0xf]
  %v591 = vld [vmem:[%s82 + $0x60] sm:$0xf]
  %v592 = vld [vmem:[%s82 + $0x64] sm:$0xf]
  %v593 = vld [vmem:[%s82 + $0x68] sm:$0xf]
  %v594 = vld [vmem:[%s82 + $0x6c] sm:$0xf]
  %v595 = vld [vmem:[%s82 + $0x70] sm:$0xf]
  %v596 = vld [vmem:[%s82 + $0x74] sm:$0xf]
  %v597 = vld [vmem:[%s82 + $0x78] sm:$0xf]
  %v598 = vld [vmem:[%s82 + $0x7c] sm:$0xf]
  %v631 = vunpack.c.l.b16 %v567
  %v632 = vunpack.c.l.b16 %v568
  %v633 = vunpack.c.l.b16 %v569
  %v634 = vunpack.c.l.b16 %v570
  %v635 = vunpack.c.l.b16 %v571
  %v636 = vunpack.c.l.b16 %v572
  %v637 = vunpack.c.l.b16 %v573
  %v638 = vunpack.c.l.b16 %v574
  %v639 = vunpack.c.l.b16 %v575
  %v640 = vunpack.c.l.b16 %v576
  %v641 = vunpack.c.l.b16 %v577
  %v642 = vunpack.c.l.b16 %v578
  %v643 = vunpack.c.l.b16 %v579
  %v644 = vunpack.c.l.b16 %v580
  %v645 = vunpack.c.l.b16 %v581
  %v646 = vunpack.c.l.b16 %v582
  %v647 = vunpack.c.l.b16 %v583
  %v648 = vunpack.c.l.b16 %v584
  %v649 = vunpack.c.l.b16 %v585
  %v650 = vunpack.c.l.b16 %v586
  %v651 = vunpack.c.l.b16 %v587
  %v652 = vunpack.c.l.b16 %v588
  %v653 = vunpack.c.l.b16 %v589
  %v654 = vunpack.c.l.b16 %v590
  %v655 = vunpack.c.l.b16 %v591
  %v656 = vunpack.c.l.b16 %v592
  %v657 = vunpack.c.l.b16 %v593
  %v658 = vunpack.c.l.b16 %v594
  %v659 = vunpack.c.l.b16 %v595
  %v660 = vunpack.c.l.b16 %v596
  %v661 = vunpack.c.l.b16 %v597
  %v662 = vunpack.c.l.b16 %v598
  %v663 = vpack.c.b16 %v632, %v631
  %v664 = vpack.c.b16 %v634, %v633
  %v665 = vpack.c.b16 %v636, %v635
  %v666 = vpack.c.b16 %v638, %v637
  %v667 = vpack.c.b16 %v640, %v639
  %v668 = vpack.c.b16 %v642, %v641
  %v669 = vpack.c.b16 %v644, %v643
  %v670 = vpack.c.b16 %v646, %v645
  %v671 = vpack.c.b16 %v648, %v647
  %v672 = vpack.c.b16 %v650, %v649
  %v673 = vpack.c.b16 %v652, %v651
  %v674 = vpack.c.b16 %v654, %v653
  %v675 = vpack.c.b16 %v656, %v655
  %v676 = vpack.c.b16 %v658, %v657
  %v677 = vpack.c.b16 %v660, %v659
  %v678 = vpack.c.b16 %v662, %v661
  %695 = vmatprep.subr.bf16.mxu0 0
  %696 = vmatpush1.bf16.msra.mxu0 %v670
  %697 = vmatprep.subr.bf16.mxu0 0
  %698 = vmatpush1.bf16.msra.mxu0 %v669
  %699 = vmatprep.subr.bf16.mxu0 0
  %700 = vmatpush1.bf16.msra.mxu0 %v668
  %701 = vmatprep.subr.bf16.mxu0 0
  %702 = vmatpush1.bf16.msra.mxu0 %v667
  %703 = vmatprep.subr.bf16.mxu0 0
  %704 = vmatpush1.bf16.msra.mxu0 %v666
  %705 = vmatprep.subr.bf16.mxu0 0
  %706 = vmatpush1.bf16.msra.mxu0 %v665
  %707 = vmatprep.subr.bf16.mxu0 0
  %708 = vmatpush1.bf16.msra.mxu0 %v664
  %709 = vmatprep.subr.bf16.mxu0 0
  %710 = vmatpush1.bf16.msra.mxu0 %v663
  %711 = vmatprep.subr.bf16.mxu0 0
  %712 = vmatpush2.bf16.msra.mxu0 %v678
  %713 = vmatprep.subr.bf16.mxu0 0
  %714 = vmatpush2.bf16.msra.mxu0 %v677
  %715 = vmatprep.subr.bf16.mxu0 0
  %716 = vmatpush2.bf16.msra.mxu0 %v676
  %717 = vmatprep.subr.bf16.mxu0 0
  %718 = vmatpush2.bf16.msra.mxu0 %v675
  %719 = vmatprep.subr.bf16.mxu0 0
  %720 = vmatpush2.bf16.msra.mxu0 %v674
  %721 = vmatprep.subr.bf16.mxu0 0
  %722 = vmatpush2.bf16.msra.mxu0 %v673
  %723 = vmatprep.subr.bf16.mxu0 0
  %724 = vmatpush2.bf16.msra.mxu0 %v672
  %725 = vmatprep.subr.bf16.mxu0 0
  %726 = vmatpush2.bf16.msra.mxu0 %v671
  %727 = vmatprep.mubr.bf16.mxu0 %v560
  %728 = vmatmul.mubr.bf16.gmra.mxu0 %v559
  %v729 = vpop.f32.mrf.mxu0
  %v730 = vadd.f32 0.0, %v729
  %v731 = vpop.f32.mrf.mxu0
  %v732 = vpop.f32.mrf.mxu0
  %v733 = vadd.f32 0.0, %v732
  %v734 = vpop.f32.mrf.mxu0
  %735 = vmatprep.mubr.bf16.mxu0 %v562
  %736 = vmatmul.mubr.bf16.gmra.mxu0 %v561
  %v737 = vpop.f32.mrf.mxu0
  %v738 = vadd.f32 0.0, %v737
  %v739 = vpop.f32.mrf.mxu0
  %v740 = vpop.f32.mrf.mxu0
  %v741 = vadd.f32 0.0, %v740
  %v742 = vpop.f32.mrf.mxu0
  %743 = vmatprep.mubr.bf16.mxu0 %v564
  %744 = vmatmul.mubr.bf16.gmra.mxu0 %v563
  %v745 = vpop.f32.mrf.mxu0
  %v746 = vadd.f32 0.0, %v745
  %v747 = vpop.f32.mrf.mxu0
  %v748 = vpop.f32.mrf.mxu0
  %v749 = vadd.f32 0.0, %v748
  %v750 = vpop.f32.mrf.mxu0
  %751 = vmatprep.mubr.bf16.mxu0 %v566
  %752 = vmatmul.mubr.bf16.gmra.mxu0 %v565
  %v753 = vpop.f32.mrf.mxu0
  %v754 = vadd.f32 0.0, %v753
  %v755 = vpop.f32.mrf.mxu0
  %v756 = vpop.f32.mrf.mxu0
  %v757 = vadd.f32 0.0, %v756
  %v758 = vpop.f32.mrf.mxu0
  %759 = vdwg.mxu0
  %v792 = vunpack.c.l.b16 %v525
  %v793 = vunpack.c.l.b16 %v526
  %v794 = vunpack.c.l.b16 %v527
  %v795 = vunpack.c.l.b16 %v528
  %v796 = vunpack.c.l.b16 %v529
  %v797 = vunpack.c.l.b16 %v530
  %v798 = vunpack.c.l.b16 %v531
  %v799 = vunpack.c.l.b16 %v532
  %v800 = vunpack.c.l.b16 %v533
  %v801 = vunpack.c.l.b16 %v534
  %v802 = vunpack.c.l.b16 %v535
  %v803 = vunpack.c.l.b16 %v536
  %v804 = vunpack.c.l.b16 %v537
  %v805 = vunpack.c.l.b16 %v538
  %v806 = vunpack.c.l.b16 %v539
  %v807 = vunpack.c.l.b16 %v540
  %v808 = vunpack.c.l.b16 %v541
  %v809 = vunpack.c.l.b16 %v542
  %v810 = vunpack.c.l.b16 %v543
  %v811 = vunpack.c.l.b16 %v544
  %v812 = vunpack.c.l.b16 %v545
  %v813 = vunpack.c.l.b16 %v546
  %v814 = vunpack.c.l.b16 %v547
  %v815 = vunpack.c.l.b16 %v548
  %v816 = vunpack.c.l.b16 %v549
  %v817 = vunpack.c.l.b16 %v550
  %v818 = vunpack.c.l.b16 %v551
  %v819 = vunpack.c.l.b16 %v552
  %v820 = vunpack.c.l.b16 %v553
  %v821 = vunpack.c.l.b16 %v554
  %v822 = vunpack.c.l.b16 %v555
  %v823 = vunpack.c.l.b16 %v556
  %v824 = vpack.c.b16 %v793, %v792
  %v825 = vpack.c.b16 %v795, %v794
  %v826 = vpack.c.b16 %v797, %v796
  %v827 = vpack.c.b16 %v799, %v798
  %v828 = vpack.c.b16 %v801, %v800
  %v829 = vpack.c.b16 %v803, %v802
  %v830 = vpack.c.b16 %v805, %v804
  %v831 = vpack.c.b16 %v807, %v806
  %v832 = vpack.c.b16 %v809, %v808
  %v833 = vpack.c.b16 %v811, %v810
  %v834 = vpack.c.b16 %v813, %v812
  %v835 = vpack.c.b16 %v815, %v814
  %v836 = vpack.c.b16 %v817, %v816
  %v837 = vpack.c.b16 %v819, %v818
  %v838 = vpack.c.b16 %v821, %v820
  %v839 = vpack.c.b16 %v823, %v822
  %856 = vmatprep.subr.bf16.mxu0 0
  %857 = vmatpush1.bf16.msra.mxu0 %v831
  %858 = vmatprep.subr.bf16.mxu0 0
  %859 = vmatpush1.bf16.msra.mxu0 %v830
  %860 = vmatprep.subr.bf16.mxu0 0
  %861 = vmatpush1.bf16.msra.mxu0 %v829
  %862 = vmatprep.subr.bf16.mxu0 0
  %863 = vmatpush1.bf16.msra.mxu0 %v828
  %864 = vmatprep.subr.bf16.mxu0 0
  %865 = vmatpush1.bf16.msra.mxu0 %v827
  %866 = vmatprep.subr.bf16.mxu0 0
  %867 = vmatpush1.bf16.msra.mxu0 %v826
  %868 = vmatprep.subr.bf16.mxu0 0
  %869 = vmatpush1.bf16.msra.mxu0 %v825
  %870 = vmatprep.subr.bf16.mxu0 0
  %871 = vmatpush1.bf16.msra.mxu0 %v824
  %872 = vmatprep.subr.bf16.mxu0 0
  %873 = vmatpush2.bf16.msra.mxu0 %v839
  %874 = vmatprep.subr.bf16.mxu0 0
  %875 = vmatpush2.bf16.msra.mxu0 %v838
  %876 = vmatprep.subr.bf16.mxu0 0
  %877 = vmatpush2.bf16.msra.mxu0 %v837
  %878 = vmatprep.subr.bf16.mxu0 0
  %879 = vmatpush2.bf16.msra.mxu0 %v836
  %880 = vmatprep.subr.bf16.mxu0 0
  %881 = vmatpush2.bf16.msra.mxu0 %v835
  %882 = vmatprep.subr.bf16.mxu0 0
  %883 = vmatpush2.bf16.msra.mxu0 %v834
  %884 = vmatprep.subr.bf16.mxu0 0
  %885 = vmatpush2.bf16.msra.mxu0 %v833
  %886 = vmatprep.subr.bf16.mxu0 0
  %887 = vmatpush2.bf16.msra.mxu0 %v832
  %888 = vmatprep.mubr.bf16.mxu0 %v518
  %889 = vmatmul.mubr.bf16.gmra.mxu0 %v517
  %v890 = vpop.f32.mrf.mxu0
  %v891 = vadd.f32 %v730, %v890
  %v892 = vpop.f32.mrf.mxu0
  %v893 = vpop.f32.mrf.mxu0
  %v894 = vadd.f32 %v733, %v893
  %v895 = vpop.f32.mrf.mxu0
  %896 = vmatprep.mubr.bf16.mxu0 %v520
  %897 = vmatmul.mubr.bf16.gmra.mxu0 %v519
  %v898 = vpop.f32.mrf.mxu0
  %v899 = vadd.f32 %v738, %v898
  %v900 = vpop.f32.mrf.mxu0
  %v901 = vpop.f32.mrf.mxu0
  %v902 = vadd.f32 %v741, %v901
  %v903 = vpop.f32.mrf.mxu0
  %904 = vmatprep.mubr.bf16.mxu0 %v522
  %905 = vmatmul.mubr.bf16.gmra.mxu0 %v521
  %v906 = vpop.f32.mrf.mxu0
  %v907 = vadd.f32 %v746, %v906
  %v908 = vpop.f32.mrf.mxu0
  %v909 = vpop.f32.mrf.mxu0
  %v910 = vadd.f32 %v749, %v909
  %v911 = vpop.f32.mrf.mxu0
  %912 = vmatprep.mubr.bf16.mxu0 %v524
  %913 = vmatmul.mubr.bf16.gmra.mxu0 %v523
  %v914 = vpop.f32.mrf.mxu0
  %v915 = vadd.f32 %v754, %v914
  %v916 = vpop.f32.mrf.mxu0
  %v917 = vpop.f32.mrf.mxu0
  %v918 = vadd.f32 %v757, %v917
  %v919 = vpop.f32.mrf.mxu0
  %920 = vdwg.mxu0
  %v921 = vadd.f32 %v891, %v441
  %v922 = vadd.f32 %v894, %v441
  %v923 = vadd.f32 %v899, %v441
  %v924 = vadd.f32 %v902, %v441
  %v925 = vadd.f32 %v907, %v441
  %v926 = vadd.f32 %v910, %v441
  %v927 = vadd.f32 %v915, %v441
  %v928 = vadd.f32 %v918, %v441
  %v929 = vmax.f32 %v921, 0.0
  %v930 = vmax.f32 %v922, 0.0
  %v931 = vmax.f32 %v923, 0.0
  %v932 = vmax.f32 %v924, 0.0
  %v933 = vmax.f32 %v925, 0.0
  %v934 = vmax.f32 %v926, 0.0
  %v935 = vmax.f32 %v927, 0.0
  %v936 = vmax.f32 %v928, 0.0
  %v937 = vpack.c.bf16 %v930, %v929
  %v938 = vpack.c.bf16 %v932, %v931
  %v939 = vpack.c.bf16 %v934, %v933
  %v940 = vpack.c.bf16 %v936, %v935
  %v945 = vunpack.c.l.b16 %v937
  %v946 = vunpack.c.h.b16 %v937
  %v947 = vunpack.c.l.b16 %v938
  %v948 = vunpack.c.h.b16 %v938
  %v949 = vunpack.c.l.b16 %v939
  %v950 = vunpack.c.h.b16 %v939
  %v951 = vunpack.c.l.b16 %v940
  %v952 = vunpack.c.h.b16 %v940
  %v953 = vpack.c.b16 %v945, %v945
  %v954 = vpack.c.b16 %v946, %v946
  %v955 = vpack.c.b16 %v947, %v947
  %v956 = vpack.c.b16 %v948, %v948
  %v957 = vpack.c.b16 %v949, %v949
  %v958 = vpack.c.b16 %v950, %v950
  %v959 = vpack.c.b16 %v951, %v951
  %v960 = vpack.c.b16 %v952, %v952
  %s969 = scalar_lea.vmem %s3, 32
  %970 = vst.msk [vmem:[%s969] sm:$0xf] %vm491, %v953
  %971 = vst.msk [vmem:[%s969 + $0x4] sm:$0xf] %vm491, %v954
  %972 = vst.msk [vmem:[%s969 + $0x8] sm:$0xf] %vm491, %v955
  %973 = vst.msk [vmem:[%s969 + $0xc] sm:$0xf] %vm491, %v956
  %974 = vst.msk [vmem:[%s969 + $0x10] sm:$0xf] %vm491, %v957
  %975 = vst.msk [vmem:[%s969 + $0x14] sm:$0xf] %vm491, %v958
  %976 = vst.msk [vmem:[%s969 + $0x18] sm:$0xf] %vm491, %v959
  %977 = vst.msk [vmem:[%s969 + $0x1c] sm:$0xf] %vm491, %v960
  // Predicated region
  $region14: #{cnn_forward.6} parent=0 // pred_check
    _
  $region15: #{cnn_forward.6} parent=0 // pred_check_branch
    %979 = sbr.rel (0) target = $region17
  $region16: #{cnn_forward.6} parent=0 // pred_region
    _
  $region17: #{cnn_forward.6} parent=0 // pred_fallthru
    _
  // Predicated region
  $region18: #{cnn_forward.6} parent=0 // pred_check
    _
  $region19: #{cnn_forward.6} parent=0 // pred_check_branch
    %981 = sbr.rel (0) target = $region21
  $region20: #{cnn_forward.6} parent=0 // pred_region
    _
  $region21: #{cnn_forward.6} parent=0 // pred_fallthru
    _

// kernel: cnn_forward.7
$region0: #{cnn_forward.7}
  #allocation0 [shape = 'u32[]', space=smem, size = 0x4, offset = 0x4, fixed_abs, tag = 'smem constant byte address 0x4 - core index']
  #allocation1 [shape = 'u32[144,128]{1,0:T(1,128)}', space=vmem, size = 0x12000, scoped, tag = 'internal scratch']
  %s0 = inlined_call_operand.vmem [shape: bf16[16,8,512], index: 0, kind: input, shape index: {}]
  %s1 = inlined_call_operand.vmem [shape: bf16[512,32], index: 1, kind: input, shape index: {}]
  %s2 = inlined_call_operand.vmem [shape: f32[1,32], index: 2, kind: input, shape index: {}]
  %s3 = inlined_call_operand.vmem [shape: bf16[16,32,256], index: 3, kind: input, shape index: {}]
  %s4 = inlined_call_operand.vmem [shape: f32[1,256], index: 4, kind: input, shape index: {}]
  %s5 = inlined_call_operand.vmem [shape: bf16[256,128], index: 5, kind: input, shape index: {}]
  %s6 = inlined_call_operand.vmem [shape: f32[1,128], index: 6, kind: input, shape index: {}]
  %s7 = inlined_call_operand.vmem [shape: f32[8,128], index: 7, kind: output, shape index: {}]
  %s8 = sld [smem:[#allocation0]]
  $region38: #{cnn_forward.7} parent=0
    _
  %s10 = ssub.s32 1, %s8
  %s11 = scalar_select 0, %s10, %s8
  // Predicated region
  $region2: #{cnn_forward.7} parent=0 // pred_check
    _
  $region3: #{cnn_forward.7} parent=0 // pred_check_branch
    %13 = sbr.rel (0) target = $region5
  $region4: #{cnn_forward.7} parent=0 // pred_region
    _
  $region5: #{cnn_forward.7} parent=0 // pred_fallthru
    _
  // Predicated region
  $region6: #{cnn_forward.7} parent=0 // pred_check
    _
  $region7: #{cnn_forward.7} parent=0 // pred_check_branch
    %15 = sbr.rel (0) target = $region9
  $region8: #{cnn_forward.7} parent=0 // pred_region
    _
  $region9: #{cnn_forward.7} parent=0 // pred_fallthru
    _
  // Predicated region
  $region10: #{cnn_forward.7} parent=0 // pred_check
    _
  $region11: #{cnn_forward.7} parent=0 // pred_check_branch
    %17 = sbr.rel (0) target = $region13
  $region12: #{cnn_forward.7} parent=0 // pred_region
    _
  $region13: #{cnn_forward.7} parent=0 // pred_fallthru
    _
  // Predicated region
  $region14: #{cnn_forward.7} parent=0 // pred_check
    _
  $region15: #{cnn_forward.7} parent=0 // pred_check_branch
    %19 = sbr.rel (0) target = $region17
  $region16: #{cnn_forward.7} parent=0 // pred_region
    _
  $region17: #{cnn_forward.7} parent=0 // pred_fallthru
    _
  // Predicated region
  $region18: #{cnn_forward.7} parent=0 // pred_check
    _
  $region19: #{cnn_forward.7} parent=0 // pred_check_branch
    %21 = sbr.rel (0) target = $region21
  $region20: #{cnn_forward.7} parent=0 // pred_region
    _
  $region21: #{cnn_forward.7} parent=0 // pred_fallthru
    _
  // Predicated region
  $region22: #{cnn_forward.7} parent=0 // pred_check
    _
  $region23: #{cnn_forward.7} parent=0 // pred_check_branch
    %23 = sbr.rel (0) target = $region25
  $region24: #{cnn_forward.7} parent=0 // pred_region
    _
  $region25: #{cnn_forward.7} parent=0 // pred_fallthru
    _
  // Predicated region
  $region26: #{cnn_forward.7} parent=0 // pred_check
    _
  $region27: #{cnn_forward.7} parent=0 // pred_check_branch
    %25 = sbr.rel (0) target = $region29
  $region28: #{cnn_forward.7} parent=0 // pred_region
    _
  $region29: #{cnn_forward.7} parent=0 // pred_fallthru
    _
  %v27 = vld [vmem:[%s2] sm:$0x1]
  %v28 = vld [vmem:[%s0] sm:$0xff]
  %v29 = vld [vmem:[%s0 + $0x8] sm:$0xff]
  %v30 = vld [vmem:[%s1] sm:$0xf]
  %v31 = vld [vmem:[%s1 + $0x4] sm:$0xf]
  %v32 = vld [vmem:[%s1 + $0x8] sm:$0xf]
  %v33 = vld [vmem:[%s1 + $0xc] sm:$0xf]
  %v34 = vld [vmem:[%s1 + $0x10] sm:$0xf]
  %v35 = vld [vmem:[%s1 + $0x14] sm:$0xf]
  %v36 = vld [vmem:[%s1 + $0x18] sm:$0xf]
  %v37 = vld [vmem:[%s1 + $0x1c] sm:$0xf]
  %v38 = vld [vmem:[%s1 + $0x20] sm:$0xf]
  %v39 = vld [vmem:[%s1 + $0x24] sm:$0xf]
  %v40 = vld [vmem:[%s1 + $0x28] sm:$0xf]
  %v41 = vld [vmem:[%s1 + $0x2c] sm:$0xf]
  %v42 = vld [vmem:[%s1 + $0x30] sm:$0xf]
  %v43 = vld [vmem:[%s1 + $0x34] sm:$0xf]
  %v44 = vld [vmem:[%s1 + $0x38] sm:$0xf]
  %v45 = vld [vmem:[%s1 + $0x3c] sm:$0xf]
  %v46 = vld [vmem:[%s1 + $0x40] sm:$0xf]
  %v47 = vld [vmem:[%s1 + $0x44] sm:$0xf]
  %v48 = vld [vmem:[%s1 + $0x48] sm:$0xf]
  %v49 = vld [vmem:[%s1 + $0x4c] sm:$0xf]
  %v50 = vld [vmem:[%s1 + $0x50] sm:$0xf]
  %v51 = vld [vmem:[%s1 + $0x54] sm:$0xf]
  %v52 = vld [vmem:[%s1 + $0x58] sm:$0xf]
  %v53 = vld [vmem:[%s1 + $0x5c] sm:$0xf]
  %v54 = vld [vmem:[%s1 + $0x60] sm:$0xf]
  %v55 = vld [vmem:[%s1 + $0x64] sm:$0xf]
  %v56 = vld [vmem:[%s1 + $0x68] sm:$0xf]
  %v57 = vld [vmem:[%s1 + $0x6c] sm:$0xf]
  %v58 = vld [vmem:[%s1 + $0x70] sm:$0xf]
  %v59 = vld [vmem:[%s1 + $0x74] sm:$0xf]
  %v60 = vld [vmem:[%s1 + $0x78] sm:$0xf]
  %v61 = vld [vmem:[%s1 + $0x7c] sm:$0xf]
  %v62 = vld [vmem:[%s1 + $0x80] sm:$0xf]
  %v63 = vld [vmem:[%s1 + $0x84] sm:$0xf]
  %v64 = vld [vmem:[%s1 + $0x88] sm:$0xf]
  %v65 = vld [vmem:[%s1 + $0x8c] sm:$0xf]
  %v66 = vld [vmem:[%s1 + $0x90] sm:$0xf]
  %v67 = vld [vmem:[%s1 + $0x94] sm:$0xf]
  %v68 = vld [vmem:[%s1 + $0x98] sm:$0xf]
  %v69 = vld [vmem:[%s1 + $0x9c] sm:$0xf]
  %v70 = vld [vmem:[%s1 + $0xa0] sm:$0xf]
  %v71 = vld [vmem:[%s1 + $0xa4] sm:$0xf]
  %v72 = vld [vmem:[%s1 + $0xa8] sm:$0xf]
  %v73 = vld [vmem:[%s1 + $0xac] sm:$0xf]
  %v74 = vld [vmem:[%s1 + $0xb0] sm:$0xf]
  %v75 = vld [vmem:[%s1 + $0xb4] sm:$0xf]
  %v76 = vld [vmem:[%s1 + $0xb8] sm:$0xf]
  %v77 = vld [vmem:[%s1 + $0xbc] sm:$0xf]
  %v78 = vld [vmem:[%s1 + $0xc0] sm:$0xf]
  %v79 = vld [vmem:[%s1 + $0xc4] sm:$0xf]
  %v80 = vld [vmem:[%s1 + $0xc8] sm:$0xf]
  %v81 = vld [vmem:[%s1 + $0xcc] sm:$0xf]
  %v82 = vld [vmem:[%s1 + $0xd0] sm:$0xf]
  %v83 = vld [vmem:[%s1 + $0xd4] sm:$0xf]
  %v84 = vld [vmem:[%s1 + $0xd8] sm:$0xf]
  %v85 = vld [vmem:[%s1 + $0xdc] sm:$0xf]
  %v86 = vld [vmem:[%s1 + $0xe0] sm:$0xf]
  %v87 = vld [vmem:[%s1 + $0xe4] sm:$0xf]
  %v88 = vld [vmem:[%s1 + $0xe8] sm:$0xf]
  %v89 = vld [vmem:[%s1 + $0xec] sm:$0xf]
  %v90 = vld [vmem:[%s1 + $0xf0] sm:$0xf]
  %v91 = vld [vmem:[%s1 + $0xf4] sm:$0xf]
  %v92 = vld [vmem:[%s1 + $0xf8] sm:$0xf]
  %v93 = vld [vmem:[%s1 + $0xfc] sm:$0xf]
  %v95 = vlaneseq
  %v96 = vshrl.u32 %v95, 7
  %v97 = vsub.s32 0, %v96
  %v98 = vrot.slane %v27, %v97
  %v102 = vunpack.c.l.b16 %v28
  %v103 = vunpack.c.h.b16 %v28
  %v104 = vunpack.c.l.b16 %v29
  %v105 = vunpack.c.h.b16 %v29
  %v106 = vpack.c.b16 %v102, %v102
  %v107 = vpack.c.b16 %v103, %v103
  %v108 = vpack.c.b16 %v104, %v104
  %v109 = vpack.c.b16 %v105, %v105
  %v178 = vunpack.c.l.b16 %v30
  %v179 = vunpack.c.l.b16 %v31
  %v180 = vunpack.c.l.b16 %v32
  %v181 = vunpack.c.l.b16 %v33
  %v182 = vunpack.c.l.b16 %v34
  %v183 = vunpack.c.l.b16 %v35
  %v184 = vunpack.c.l.b16 %v36
  %v185 = vunpack.c.l.b16 %v37
  %v186 = vunpack.c.l.b16 %v38
  %v187 = vunpack.c.l.b16 %v39
  %v188 = vunpack.c.l.b16 %v40
  %v189 = vunpack.c.l.b16 %v41
  %v190 = vunpack.c.l.b16 %v42
  %v191 = vunpack.c.l.b16 %v43
  %v192 = vunpack.c.l.b16 %v44
  %v193 = vunpack.c.l.b16 %v45
  %v194 = vunpack.c.l.b16 %v46
  %v195 = vunpack.c.l.b16 %v47
  %v196 = vunpack.c.l.b16 %v48
  %v197 = vunpack.c.l.b16 %v49
  %v198 = vunpack.c.l.b16 %v50
  %v199 = vunpack.c.l.b16 %v51
  %v200 = vunpack.c.l.b16 %v52
  %v201 = vunpack.c.l.b16 %v53
  %v202 = vunpack.c.l.b16 %v54
  %v203 = vunpack.c.l.b16 %v55
  %v204 = vunpack.c.l.b16 %v56
  %v205 = vunpack.c.l.b16 %v57
  %v206 = vunpack.c.l.b16 %v58
  %v207 = vunpack.c.l.b16 %v59
  %v208 = vunpack.c.l.b16 %v60
  %v209 = vunpack.c.l.b16 %v61
  %v210 = vunpack.c.l.b16 %v62
  %v211 = vunpack.c.l.b16 %v63
  %v212 = vunpack.c.l.b16 %v64
  %v213 = vunpack.c.l.b16 %v65
  %v214 = vunpack.c.l.b16 %v66
  %v215 = vunpack.c.l.b16 %v67
  %v216 = vunpack.c.l.b16 %v68
  %v217 = vunpack.c.l.b16 %v69
  %v218 = vunpack.c.l.b16 %v70
  %v219 = vunpack.c.l.b16 %v71
  %v220 = vunpack.c.l.b16 %v72
  %v221 = vunpack.c.l.b16 %v73
  %v222 = vunpack.c.l.b16 %v74
  %v223 = vunpack.c.l.b16 %v75
  %v224 = vunpack.c.l.b16 %v76
  %v225 = vunpack.c.l.b16 %v77
  %v226 = vunpack.c.l.b16 %v78
  %v227 = vunpack.c.l.b16 %v79
  %v228 = vunpack.c.l.b16 %v80
  %v229 = vunpack.c.l.b16 %v81
  %v230 = vunpack.c.l.b16 %v82
  %v231 = vunpack.c.l.b16 %v83
  %v232 = vunpack.c.l.b16 %v84
  %v233 = vunpack.c.l.b16 %v85
  %v234 = vunpack.c.l.b16 %v86
  %v235 = vunpack.c.l.b16 %v87
  %v236 = vunpack.c.l.b16 %v88
  %v237 = vunpack.c.l.b16 %v89
  %v238 = vunpack.c.l.b16 %v90
  %v239 = vunpack.c.l.b16 %v91
  %v240 = vunpack.c.l.b16 %v92
  %v241 = vunpack.c.l.b16 %v93
  %v242 = vpack.c.b16 %v179, %v178
  %v243 = vpack.c.b16 %v181, %v180
  %v244 = vpack.c.b16 %v183, %v182
  %v245 = vpack.c.b16 %v185, %v184
  %v246 = vpack.c.b16 %v187, %v186
  %v247 = vpack.c.b16 %v189, %v188
  %v248 = vpack.c.b16 %v191, %v190
  %v249 = vpack.c.b16 %v193, %v192
  %v250 = vpack.c.b16 %v195, %v194
  %v251 = vpack.c.b16 %v197, %v196
  %v252 = vpack.c.b16 %v199, %v198
  %v253 = vpack.c.b16 %v201, %v200
  %v254 = vpack.c.b16 %v203, %v202
  %v255 = vpack.c.b16 %v205, %v204
  %v256 = vpack.c.b16 %v207, %v206
  %v257 = vpack.c.b16 %v209, %v208
  %v258 = vpack.c.b16 %v211, %v210
  %v259 = vpack.c.b16 %v213, %v212
  %v260 = vpack.c.b16 %v215, %v214
  %v261 = vpack.c.b16 %v217, %v216
  %v262 = vpack.c.b16 %v219, %v218
  %v263 = vpack.c.b16 %v221, %v220
  %v264 = vpack.c.b16 %v223, %v222
  %v265 = vpack.c.b16 %v225, %v224
  %v266 = vpack.c.b16 %v227, %v226
  %v267 = vpack.c.b16 %v229, %v228
  %v268 = vpack.c.b16 %v231, %v230
  %v269 = vpack.c.b16 %v233, %v232
  %v270 = vpack.c.b16 %v235, %v234
  %v271 = vpack.c.b16 %v237, %v236
  %v272 = vpack.c.b16 %v239, %v238
  %v273 = vpack.c.b16 %v241, %v240
  %306 = vmatprep.subr.bf16.mxu0 0
  %307 = vmatpush1.bf16.msra.mxu0 %v249
  %308 = vmatprep.subr.bf16.mxu0 0
  %309 = vmatpush1.bf16.msra.mxu0 %v248
  %310 = vmatprep.subr.bf16.mxu0 0
  %311 = vmatpush1.bf16.msra.mxu0 %v247
  %312 = vmatprep.subr.bf16.mxu0 0
  %313 = vmatpush1.bf16.msra.mxu0 %v246
  %314 = vmatprep.subr.bf16.mxu0 0
  %315 = vmatpush1.bf16.msra.mxu0 %v245
  %316 = vmatprep.subr.bf16.mxu0 0
  %317 = vmatpush1.bf16.msra.mxu0 %v244
  %318 = vmatprep.subr.bf16.mxu0 0
  %319 = vmatpush1.bf16.msra.mxu0 %v243
  %320 = vmatprep.subr.bf16.mxu0 0
  %321 = vmatpush1.bf16.msra.mxu0 %v242
  %322 = vmatprep.subr.bf16.mxu0 0
  %323 = vmatpush2.bf16.msra.mxu0 %v257
  %324 = vmatprep.subr.bf16.mxu0 0
  %325 = vmatpush2.bf16.msra.mxu0 %v256
  %326 = vmatprep.subr.bf16.mxu0 0
  %327 = vmatpush2.bf16.msra.mxu0 %v255
  %328 = vmatprep.subr.bf16.mxu0 0
  %329 = vmatpush2.bf16.msra.mxu0 %v254
  %330 = vmatprep.subr.bf16.mxu0 0
  %331 = vmatpush2.bf16.msra.mxu0 %v253
  %332 = vmatprep.subr.bf16.mxu0 0
  %333 = vmatpush2.bf16.msra.mxu0 %v252
  %334 = vmatprep.subr.bf16.mxu0 0
  %335 = vmatpush2.bf16.msra.mxu0 %v251
  %336 = vmatprep.subr.bf16.mxu0 0
  %337 = vmatpush2.bf16.msra.mxu0 %v250
  %338 = vmatprep.mubr.bf16.mxu0 %v107
  %339 = vmatmul.mubr.bf16.gmra.mxu0 %v106
  %v340 = vpop.f32.mrf.mxu0
  %v341 = vadd.f32 %v98, %v340
  %v342 = vpop.f32.mrf.mxu0
  %v343 = vpop.f32.mrf.mxu0
  %v344 = vpop.f32.mrf.mxu0
  %345 = vdwg.mxu0
  %346 = vmatprep.subr.bf16.mxu0 0
  %347 = vmatpush1.bf16.msra.mxu0 %v265
  %348 = vmatprep.subr.bf16.mxu0 0
  %349 = vmatpush1.bf16.msra.mxu0 %v264
  %350 = vmatprep.subr.bf16.mxu0 0
  %351 = vmatpush1.bf16.msra.mxu0 %v263
  %352 = vmatprep.subr.bf16.mxu0 0
  %353 = vmatpush1.bf16.msra.mxu0 %v262
  %354 = vmatprep.subr.bf16.mxu0 0
  %355 = vmatpush1.bf16.msra.mxu0 %v261
  %356 = vmatprep.subr.bf16.mxu0 0
  %357 = vmatpush1.bf16.msra.mxu0 %v260
  %358 = vmatprep.subr.bf16.mxu0 0
  %359 = vmatpush1.bf16.msra.mxu0 %v259
  %360 = vmatprep.subr.bf16.mxu0 0
  %361 = vmatpush1.bf16.msra.mxu0 %v258
  %362 = vmatprep.subr.bf16.mxu0 0
  %363 = vmatpush2.bf16.msra.mxu0 %v273
  %364 = vmatprep.subr.bf16.mxu0 0
  %365 = vmatpush2.bf16.msra.mxu0 %v272
  %366 = vmatprep.subr.bf16.mxu0 0
  %367 = vmatpush2.bf16.msra.mxu0 %v271
  %368 = vmatprep.subr.bf16.mxu0 0
  %369 = vmatpush2.bf16.msra.mxu0 %v270
  %370 = vmatprep.subr.bf16.mxu0 0
  %371 = vmatpush2.bf16.msra.mxu0 %v269
  %372 = vmatprep.subr.bf16.mxu0 0
  %373 = vmatpush2.bf16.msra.mxu0 %v268
  %374 = vmatprep.subr.bf16.mxu0 0
  %375 = vmatpush2.bf16.msra.mxu0 %v267
  %376 = vmatprep.subr.bf16.mxu0 0
  %377 = vmatpush2.bf16.msra.mxu0 %v266
  %378 = vmatprep.mubr.bf16.mxu0 %v109
  %379 = vmatmul.mubr.bf16.gmra.mxu0 %v108
  %v380 = vpop.f32.mrf.mxu0
  %v381 = vadd.f32 %v341, %v380
  %v382 = vpop.f32.mrf.mxu0
  %v383 = vpop.f32.mrf.mxu0
  %v384 = vpop.f32.mrf.mxu0
  %385 = vdwg.mxu0
  %v386 = vmax.f32 %v381, 0.0
  %v387 = vpack.c.bf16 %v386, %v386
  %v388 = vld [vmem:[%s3] sm:$0xff]
  %v389 = vld [vmem:[%s3 + $0x8] sm:$0xff]
  %v390 = vld [vmem:[%s3 + $0x10] sm:$0xff]
  %v391 = vld [vmem:[%s3 + $0x18] sm:$0xff]
  %s392 = scalar_lea.vmem %s0, 16
  %v393 = vld [vmem:[%s392] sm:$0xff]
  %v394 = vld [vmem:[%s392 + $0x8] sm:$0xff]
  %v397 = vunpack.c.l.b16 %v393
  %v398 = vunpack.c.h.b16 %v393
  %v399 = vunpack.c.l.b16 %v394
  %v400 = vunpack.c.h.b16 %v394
  %v401 = vpack.c.b16 %v397, %v397
  %v402 = vpack.c.b16 %v398, %v398
  %v403 = vpack.c.b16 %v399, %v399
  %v404 = vpack.c.b16 %v400, %v400
  %409 = vmatprep.subr.bf16.mxu0 0
  %410 = vmatpush1.bf16.msra.mxu0 %v249
  %411 = vmatprep.subr.bf16.mxu0 0
  %412 = vmatpush1.bf16.msra.mxu0 %v248
  %413 = vmatprep.subr.bf16.mxu0 0
  %414 = vmatpush1.bf16.msra.mxu0 %v247
  %415 = vmatprep.subr.bf16.mxu0 0
  %416 = vmatpush1.bf16.msra.mxu0 %v246
  %417 = vmatprep.subr.bf16.mxu0 0
  %418 = vmatpush1.bf16.msra.mxu0 %v245
  %419 = vmatprep.subr.bf16.mxu0 0
  %420 = vmatpush1.bf16.msra.mxu0 %v244
  %421 = vmatprep.subr.bf16.mxu0 0
  %422 = vmatpush1.bf16.msra.mxu0 %v243
  %423 = vmatprep.subr.bf16.mxu0 0
  %424 = vmatpush1.bf16.msra.mxu0 %v242
  %425 = vmatprep.subr.bf16.mxu0 0
  %426 = vmatpush2.bf16.msra.mxu0 %v257
  %427 = vmatprep.subr.bf16.mxu0 0
  %428 = vmatpush2.bf16.msra.mxu0 %v256
  %429 = vmatprep.subr.bf16.mxu0 0
  %430 = vmatpush2.bf16.msra.mxu0 %v255
  %431 = vmatprep.subr.bf16.mxu0 0
  %432 = vmatpush2.bf16.msra.mxu0 %v254
  %433 = vmatprep.subr.bf16.mxu0 0
  %434 = vmatpush2.bf16.msra.mxu0 %v253
  %435 = vmatprep.subr.bf16.mxu0 0
  %436 = vmatpush2.bf16.msra.mxu0 %v252
  %437 = vmatprep.subr.bf16.mxu0 0
  %438 = vmatpush2.bf16.msra.mxu0 %v251
  %439 = vmatprep.subr.bf16.mxu0 0
  %440 = vmatpush2.bf16.msra.mxu0 %v250
  %441 = vmatprep.mubr.bf16.mxu0 %v402
  %442 = vmatmul.mubr.bf16.gmra.mxu0 %v401
  %v443 = vpop.f32.mrf.mxu0
  %v444 = vadd.f32 %v98, %v443
  %v445 = vpop.f32.mrf.mxu0
  %v446 = vpop.f32.mrf.mxu0
  %v447 = vpop.f32.mrf.mxu0
  %448 = vdwg.mxu0
  %449 = vmatprep.subr.bf16.mxu0 0
  %450 = vmatpush1.bf16.msra.mxu0 %v265
  %451 = vmatprep.subr.bf16.mxu0 0
  %452 = vmatpush1.bf16.msra.mxu0 %v264
  %453 = vmatprep.subr.bf16.mxu0 0
  %454 = vmatpush1.bf16.msra.mxu0 %v263
  %455 = vmatprep.subr.bf16.mxu0 0
  %456 = vmatpush1.bf16.msra.mxu0 %v262
  %457 = vmatprep.subr.bf16.mxu0 0
  %458 = vmatpush1.bf16.msra.mxu0 %v261
  %459 = vmatprep.subr.bf16.mxu0 0
  %460 = vmatpush1.bf16.msra.mxu0 %v260
  %461 = vmatprep.subr.bf16.mxu0 0
  %462 = vmatpush1.bf16.msra.mxu0 %v259
  %463 = vmatprep.subr.bf16.mxu0 0
  %464 = vmatpush1.bf16.msra.mxu0 %v258
  %465 = vmatprep.subr.bf16.mxu0 0
  %466 = vmatpush2.bf16.msra.mxu0 %v273
  %467 = vmatprep.subr.bf16.mxu0 0
  %468 = vmatpush2.bf16.msra.mxu0 %v272
  %469 = vmatprep.subr.bf16.mxu0 0
  %470 = vmatpush2.bf16.msra.mxu0 %v271
  %471 = vmatprep.subr.bf16.mxu0 0
  %472 = vmatpush2.bf16.msra.mxu0 %v270
  %473 = vmatprep.subr.bf16.mxu0 0
  %474 = vmatpush2.bf16.msra.mxu0 %v269
  %475 = vmatprep.subr.bf16.mxu0 0
  %476 = vmatpush2.bf16.msra.mxu0 %v268
  %477 = vmatprep.subr.bf16.mxu0 0
  %478 = vmatpush2.bf16.msra.mxu0 %v267
  %479 = vmatprep.subr.bf16.mxu0 0
  %480 = vmatpush2.bf16.msra.mxu0 %v266
  %481 = vmatprep.mubr.bf16.mxu0 %v404
  %482 = vmatmul.mubr.bf16.gmra.mxu0 %v403
  %v483 = vpop.f32.mrf.mxu0
  %v484 = vadd.f32 %v444, %v483
  %v485 = vpop.f32.mrf.mxu0
  %v486 = vpop.f32.mrf.mxu0
  %v487 = vpop.f32.mrf.mxu0
  %488 = vdwg.mxu0
  %v489 = vmax.f32 %v484, 0.0
  %v490 = vpack.c.bf16 %v489, %v489
  %s491 = scalar_lea.vmem %s3, 32
  %v492 = vld [vmem:[%s491] sm:$0xff]
  %v493 = vld [vmem:[%s491 + $0x8] sm:$0xff]
  %v494 = vld [vmem:[%s491 + $0x10] sm:$0xff]
  %v495 = vld [vmem:[%s491 + $0x18] sm:$0xff]
  %v500 = vunpack.c.l.b16 %v492
  %v501 = vunpack.c.h.b16 %v492
  %v502 = vunpack.c.l.b16 %v493
  %v503 = vunpack.c.h.b16 %v493
  %v504 = vunpack.c.l.b16 %v494
  %v505 = vunpack.c.h.b16 %v494
  %v506 = vunpack.c.l.b16 %v495
  %v507 = vunpack.c.h.b16 %v495
  %v508 = vpack.c.b16 %v502, %v500
  %v509 = vpack.c.b16 %v503, %v501
  %v510 = vpack.c.b16 %v506, %v504
  %v511 = vpack.c.b16 %v507, %v505
  %vm516 = vcmask 261120
  %v518 = vsel %vm516, %v490, 0
  %520 = vmatprep.subr.bf16.mxu0 0
  %521 = vmatpush1.bf16.msra.mxu0 0
  %522 = vmatprep.subr.bf16.mxu0 0
  %523 = vmatpush1.bf16.msra.mxu0 0
  %524 = vmatprep.subr.bf16.mxu0 0
  %525 = vmatpush1.bf16.msra.mxu0 0
  %526 = vmatprep.subr.bf16.mxu0 0
  %527 = vmatpush1.bf16.msra.mxu0 0
  %528 = vmatprep.subr.bf16.mxu0 0
  %529 = vmatpush1.bf16.msra.mxu0 0
  %530 = vmatprep.subr.bf16.mxu0 0
  %531 = vmatpush1.bf16.msra.mxu0 0
  %532 = vmatprep.subr.bf16.mxu0 %v511
  %533 = vmatpush1.bf16.msra.mxu0 %v510
  %534 = vmatprep.subr.bf16.mxu0 %v509
  %535 = vmatpush1.bf16.msra.mxu0 %v508
  %536 = vmatprep.subr.bf16.mxu0 0
  %537 = vmatpush2.bf16.msra.mxu0 0
  %538 = vmatprep.subr.bf16.mxu0 0
  %539 = vmatpush2.bf16.msra.mxu0 0
  %540 = vmatprep.subr.bf16.mxu0 0
  %541 = vmatpush2.bf16.msra.mxu0 0
  %542 = vmatprep.subr.bf16.mxu0 0
  %543 = vmatpush2.bf16.msra.mxu0 0
  %544 = vmatprep.subr.bf16.mxu0 0
  %545 = vmatpush2.bf16.msra.mxu0 0
  %546 = vmatprep.subr.bf16.mxu0 0
  %547 = vmatpush2.bf16.msra.mxu0 0
  %548 = vmatprep.subr.bf16.mxu0 0
  %549 = vmatpush2.bf16.msra.mxu0 0
  %550 = vmatprep.subr.bf16.mxu0 0
  %551 = vmatpush2.bf16.msra.mxu0 0
  %552 = vmatprep.mubr.bf16.mxu0 0
  %553 = vmatmul.mubr.bf16.gmra.mxu0 %v518
  %v554 = vpop.f32.mrf.mxu0
  %v555 = vadd.f32 0.0, %v554
  %v556 = vpop.f32.mrf.mxu0
  %v557 = vadd.f32 0.0, %v556
  %v558 = vpop.f32.mrf.mxu0
  %v559 = vpop.f32.mrf.mxu0
  %560 = vdwg.mxu0
  %v565 = vunpack.c.l.b16 %v388
  %v566 = vunpack.c.h.b16 %v388
  %v567 = vunpack.c.l.b16 %v389
  %v568 = vunpack.c.h.b16 %v389
  %v569 = vunpack.c.l.b16 %v390
  %v570 = vunpack.c.h.b16 %v390
  %v571 = vunpack.c.l.b16 %v391
  %v572 = vunpack.c.h.b16 %v391
  %v573 = vpack.c.b16 %v567, %v565
  %v574 = vpack.c.b16 %v568, %v566
  %v575 = vpack.c.b16 %v571, %v569
  %v576 = vpack.c.b16 %v572, %v570
  %v582 = vsel %vm516, %v387, 0
  %584 = vmatprep.subr.bf16.mxu0 0
  %585 = vmatpush1.bf16.msra.mxu0 0
  %586 = vmatprep.subr.bf16.mxu0 0
  %587 = vmatpush1.bf16.msra.mxu0 0
  %588 = vmatprep.subr.bf16.mxu0 0
  %589 = vmatpush1.bf16.msra.mxu0 0
  %590 = vmatprep.subr.bf16.mxu0 0
  %591 = vmatpush1.bf16.msra.mxu0 0
  %592 = vmatprep.subr.bf16.mxu0 0
  %593 = vmatpush1.bf16.msra.mxu0 0
  %594 = vmatprep.subr.bf16.mxu0 0
  %595 = vmatpush1.bf16.msra.mxu0 0
  %596 = vmatprep.subr.bf16.mxu0 %v576
  %597 = vmatpush1.bf16.msra.mxu0 %v575
  %598 = vmatprep.subr.bf16.mxu0 %v574
  %599 = vmatpush1.bf16.msra.mxu0 %v573
  %600 = vmatprep.subr.bf16.mxu0 0
  %601 = vmatpush2.bf16.msra.mxu0 0
  %602 = vmatprep.subr.bf16.mxu0 0
  %603 = vmatpush2.bf16.msra.mxu0 0
  %604 = vmatprep.subr.bf16.mxu0 0
  %605 = vmatpush2.bf16.msra.mxu0 0
  %606 = vmatprep.subr.bf16.mxu0 0
  %607 = vmatpush2.bf16.msra.mxu0 0
  %608 = vmatprep.subr.bf16.mxu0 0
  %609 = vmatpush2.bf16.msra.mxu0 0
  %610 = vmatprep.subr.bf16.mxu0 0
  %611 = vmatpush2.bf16.msra.mxu0 0
  %612 = vmatprep.subr.bf16.mxu0 0
  %613 = vmatpush2.bf16.msra.mxu0 0
  %614 = vmatprep.subr.bf16.mxu0 0
  %615 = vmatpush2.bf16.msra.mxu0 0
  %616 = vmatprep.mubr.bf16.mxu0 0
  %617 = vmatmul.mubr.bf16.gmra.mxu0 %v582
  %v618 = vpop.f32.mrf.mxu0
  %v619 = vadd.f32 %v555, %v618
  %v620 = vpop.f32.mrf.mxu0
  %v621 = vadd.f32 %v557, %v620
  %v622 = vpop.f32.mrf.mxu0
  %v623 = vpop.f32.mrf.mxu0
  %624 = vdwg.mxu0
  %s625 = scalar_lea.vmem %s0, 32
  %v626 = vld [vmem:[%s625] sm:$0xff]
  %v627 = vld [vmem:[%s625 + $0x8] sm:$0xff]
  %v630 = vunpack.c.l.b16 %v626
  %v631 = vunpack.c.h.b16 %v626
  %v632 = vunpack.c.l.b16 %v627
  %v633 = vunpack.c.h.b16 %v627
  %v634 = vpack.c.b16 %v630, %v630
  %v635 = vpack.c.b16 %v631, %v631
  %v636 = vpack.c.b16 %v632, %v632
  %v637 = vpack.c.b16 %v633, %v633
  %642 = vmatprep.subr.bf16.mxu0 0
  %643 = vmatpush1.bf16.msra.mxu0 %v249
  %644 = vmatprep.subr.bf16.mxu0 0
  %645 = vmatpush1.bf16.msra.mxu0 %v248
  %646 = vmatprep.subr.bf16.mxu0 0
  %647 = vmatpush1.bf16.msra.mxu0 %v247
  %648 = vmatprep.subr.bf16.mxu0 0
  %649 = vmatpush1.bf16.msra.mxu0 %v246
  %650 = vmatprep.subr.bf16.mxu0 0
  %651 = vmatpush1.bf16.msra.mxu0 %v245
  %652 = vmatprep.subr.bf16.mxu0 0
  %653 = vmatpush1.bf16.msra.mxu0 %v244
  %654 = vmatprep.subr.bf16.mxu0 0
  %655 = vmatpush1.bf16.msra.mxu0 %v243
  %656 = vmatprep.subr.bf16.mxu0 0
  %657 = vmatpush1.bf16.msra.mxu0 %v242
  %658 = vmatprep.subr.bf16.mxu0 0
  %659 = vmatpush2.bf16.msra.mxu0 %v257
  %660 = vmatprep.subr.bf16.mxu0 0
  %661 = vmatpush2.bf16.msra.mxu0 %v256
  %662 = vmatprep.subr.bf16.mxu0 0
  %663 = vmatpush2.bf16.msra.mxu0 %v255
  %664 = vmatprep.subr.bf16.mxu0 0
  %665 = vmatpush2.bf16.msra.mxu0 %v254
  %666 = vmatprep.subr.bf16.mxu0 0
  %667 = vmatpush2.bf16.msra.mxu0 %v253
  %668 = vmatprep.subr.bf16.mxu0 0
  %669 = vmatpush2.bf16.msra.mxu0 %v252
  %670 = vmatprep.subr.bf16.mxu0 0
  %671 = vmatpush2.bf16.msra.mxu0 %v251
  %672 = vmatprep.subr.bf16.mxu0 0
  %673 = vmatpush2.bf16.msra.mxu0 %v250
  %674 = vmatprep.mubr.bf16.mxu0 %v635
  %675 = vmatmul.mubr.bf16.gmra.mxu0 %v634
  %v676 = vpop.f32.mrf.mxu0
  %v677 = vadd.f32 %v98, %v676
  %v678 = vpop.f32.mrf.mxu0
  %v679 = vpop.f32.mrf.mxu0
  %v680 = vpop.f32.mrf.mxu0
  %681 = vdwg.mxu0
  %682 = vmatprep.subr.bf16.mxu0 0
  %683 = vmatpush1.bf16.msra.mxu0 %v265
  %684 = vmatprep.subr.bf16.mxu0 0
  %685 = vmatpush1.bf16.msra.mxu0 %v264
  %686 = vmatprep.subr.bf16.mxu0 0
  %687 = vmatpush1.bf16.msra.mxu0 %v263
  %688 = vmatprep.subr.bf16.mxu0 0
  %689 = vmatpush1.bf16.msra.mxu0 %v262
  %690 = vmatprep.subr.bf16.mxu0 0
  %691 = vmatpush1.bf16.msra.mxu0 %v261
  %692 = vmatprep.subr.bf16.mxu0 0
  %693 = vmatpush1.bf16.msra.mxu0 %v260
  %694 = vmatprep.subr.bf16.mxu0 0
  %695 = vmatpush1.bf16.msra.mxu0 %v259
  %696 = vmatprep.subr.bf16.mxu0 0
  %697 = vmatpush1.bf16.msra.mxu0 %v258
  %698 = vmatprep.subr.bf16.mxu0 0
  %699 = vmatpush2.bf16.msra.mxu0 %v273
  %700 = vmatprep.subr.bf16.mxu0 0
  %701 = vmatpush2.bf16.msra.mxu0 %v272
  %702 = vmatprep.subr.bf16.mxu0 0
  %703 = vmatpush2.bf16.msra.mxu0 %v271
  %704 = vmatprep.subr.bf16.mxu0 0
  %705 = vmatpush2.bf16.msra.mxu0 %v270
  %706 = vmatprep.subr.bf16.mxu0 0
  %707 = vmatpush2.bf16.msra.mxu0 %v269
  %708 = vmatprep.subr.bf16.mxu0 0
  %709 = vmatpush2.bf16.msra.mxu0 %v268
  %710 = vmatprep.subr.bf16.mxu0 0
  %711 = vmatpush2.bf16.msra.mxu0 %v267
  %712 = vmatprep.subr.bf16.mxu0 0
  %713 = vmatpush2.bf16.msra.mxu0 %v266
  %714 = vmatprep.mubr.bf16.mxu0 %v637
  %715 = vmatmul.mubr.bf16.gmra.mxu0 %v636
  %v716 = vpop.f32.mrf.mxu0
  %v717 = vadd.f32 %v677, %v716
  %v718 = vpop.f32.mrf.mxu0
  %v719 = vpop.f32.mrf.mxu0
  %v720 = vpop.f32.mrf.mxu0
  %721 = vdwg.mxu0
  %v722 = vmax.f32 %v717, 0.0
  %v723 = vpack.c.bf16 %v722, %v722
  %s724 = scalar_lea.vmem %s3, 64
  %v725 = vld [vmem:[%s724] sm:$0xff]
  %v726 = vld [vmem:[%s724 + $0x8] sm:$0xff]
  %v727 = vld [vmem:[%s724 + $0x10] sm:$0xff]
  %v728 = vld [vmem:[%s724 + $0x18] sm:$0xff]
  %v733 = vunpack.c.l.b16 %v725
  %v734 = vunpack.c.h.b16 %v725
  %v735 = vunpack.c.l.b16 %v726
  %v736 = vunpack.c.h.b16 %v726
  %v737 = vunpack.c.l.b16 %v727
  %v738 = vunpack.c.h.b16 %v727
  %v739 = vunpack.c.l.b16 %v728
  %v740 = vunpack.c.h.b16 %v728
  %v741 = vpack.c.b16 %v735, %v733
  %v742 = vpack.c.b16 %v736, %v734
  %v743 = vpack.c.b16 %v739, %v737
  %v744 = vpack.c.b16 %v740, %v738
  %v750 = vsel %vm516, %v723, 0
  %752 = vmatprep.subr.bf16.mxu0 0
  %753 = vmatpush1.bf16.msra.mxu0 0
  %754 = vmatprep.subr.bf16.mxu0 0
  %755 = vmatpush1.bf16.msra.mxu0 0
  %756 = vmatprep.subr.bf16.mxu0 0
  %757 = vmatpush1.bf16.msra.mxu0 0
  %758 = vmatprep.subr.bf16.mxu0 0
  %759 = vmatpush1.bf16.msra.mxu0 0
  %760 = vmatprep.subr.bf16.mxu0 0
  %761 = vmatpush1.bf16.msra.mxu0 0
  %762 = vmatprep.subr.bf16.mxu0 0
  %763 = vmatpush1.bf16.msra.mxu0 0
  %764 = vmatprep.subr.bf16.mxu0 %v744
  %765 = vmatpush1.bf16.msra.mxu0 %v743
  %766 = vmatprep.subr.bf16.mxu0 %v742
  %767 = vmatpush1.bf16.msra.mxu0 %v741
  %768 = vmatprep.subr.bf16.mxu0 0
  %769 = vmatpush2.bf16.msra.mxu0 0
  %770 = vmatprep.subr.bf16.mxu0 0
  %771 = vmatpush2.bf16.msra.mxu0 0
  %772 = vmatprep.subr.bf16.mxu0 0
  %773 = vmatpush2.bf16.msra.mxu0 0
  %774 = vmatprep.subr.bf16.mxu0 0
  %775 = vmatpush2.bf16.msra.mxu0 0
  %776 = vmatprep.subr.bf16.mxu0 0
  %777 = vmatpush2.bf16.msra.mxu0 0
  %778 = vmatprep.subr.bf16.mxu0 0
  %779 = vmatpush2.bf16.msra.mxu0 0
  %780 = vmatprep.subr.bf16.mxu0 0
  %781 = vmatpush2.bf16.msra.mxu0 0
  %782 = vmatprep.subr.bf16.mxu0 0
  %783 = vmatpush2.bf16.msra.mxu0 0
  %784 = vmatprep.mubr.bf16.mxu0 0
  %785 = vmatmul.mubr.bf16.gmra.mxu0 %v750
  %v786 = vpop.f32.mrf.mxu0
  %v787 = vadd.f32 0.0, %v786
  %v788 = vpop.f32.mrf.mxu0
  %v789 = vadd.f32 0.0, %v788
  %v790 = vpop.f32.mrf.mxu0
  %v791 = vpop.f32.mrf.mxu0
  %792 = vdwg.mxu0
  %v793 = vadd.f32 %v619, %v787
  %v794 = vadd.f32 %v621, %v789
  %s795 = scalar_lea.vmem %s0, 48
  %v796 = vld [vmem:[%s795] sm:$0xff]
  %v797 = vld [vmem:[%s795 + $0x8] sm:$0xff]
  %v800 = vunpack.c.l.b16 %v796
  %v801 = vunpack.c.h.b16 %v796
  %v802 = vunpack.c.l.b16 %v797
  %v803 = vunpack.c.h.b16 %v797
  %v804 = vpack.c.b16 %v800, %v800
  %v805 = vpack.c.b16 %v801, %v801
  %v806 = vpack.c.b16 %v802, %v802
  %v807 = vpack.c.b16 %v803, %v803
  %812 = vmatprep.subr.bf16.mxu0 0
  %813 = vmatpush1.bf16.msra.mxu0 %v249
  %814 = vmatprep.subr.bf16.mxu0 0
  %815 = vmatpush1.bf16.msra.mxu0 %v248
  %816 = vmatprep.subr.bf16.mxu0 0
  %817 = vmatpush1.bf16.msra.mxu0 %v247
  %818 = vmatprep.subr.bf16.mxu0 0
  %819 = vmatpush1.bf16.msra.mxu0 %v246
  %820 = vmatprep.subr.bf16.mxu0 0
  %821 = vmatpush1.bf16.msra.mxu0 %v245
  %822 = vmatprep.subr.bf16.mxu0 0
  %823 = vmatpush1.bf16.msra.mxu0 %v244
  %824 = vmatprep.subr.bf16.mxu0 0
  %825 = vmatpush1.bf16.msra.mxu0 %v243
  %826 = vmatprep.subr.bf16.mxu0 0
  %827 = vmatpush1.bf16.msra.mxu0 %v242
  %828 = vmatprep.subr.bf16.mxu0 0
  %829 = vmatpush2.bf16.msra.mxu0 %v257
  %830 = vmatprep.subr.bf16.mxu0 0
  %831 = vmatpush2.bf16.msra.mxu0 %v256
  %832 = vmatprep.subr.bf16.mxu0 0
  %833 = vmatpush2.bf16.msra.mxu0 %v255
  %834 = vmatprep.subr.bf16.mxu0 0
  %835 = vmatpush2.bf16.msra.mxu0 %v254
  %836 = vmatprep.subr.bf16.mxu0 0
  %837 = vmatpush2.bf16.msra.mxu0 %v253
  %838 = vmatprep.subr.bf16.mxu0 0
  %839 = vmatpush2.bf16.msra.mxu0 %v252
  %840 = vmatprep.subr.bf16.mxu0 0
  %841 = vmatpush2.bf16.msra.mxu0 %v251
  %842 = vmatprep.subr.bf16.mxu0 0
  %843 = vmatpush2.bf16.msra.mxu0 %v250
  %844 = vmatprep.mubr.bf16.mxu0 %v805
  %845 = vmatmul.mubr.bf16.gmra.mxu0 %v804
  %v846 = vpop.f32.mrf.mxu0
  %v847 = vadd.f32 %v98, %v846
  %v848 = vpop.f32.mrf.mxu0
  %v849 = vpop.f32.mrf.mxu0
  %v850 = vpop.f32.mrf.mxu0
  %851 = vdwg.mxu0
  %852 = vmatprep.subr.bf16.mxu0 0
  %853 = vmatpush1.bf16.msra.mxu0 %v265
  %854 = vmatprep.subr.bf16.mxu0 0
  %855 = vmatpush1.bf16.msra.mxu0 %v264
  %856 = vmatprep.subr.bf16.mxu0 0
  %857 = vmatpush1.bf16.msra.mxu0 %v263
  %858 = vmatprep.subr.bf16.mxu0 0
  %859 = vmatpush1.bf16.msra.mxu0 %v262
  %860 = vmatprep.subr.bf16.mxu0 0
  %861 = vmatpush1.bf16.msra.mxu0 %v261
  %862 = vmatprep.subr.bf16.mxu0 0
  %863 = vmatpush1.bf16.msra.mxu0 %v260
  %864 = vmatprep.subr.bf16.mxu0 0
  %865 = vmatpush1.bf16.msra.mxu0 %v259
  %866 = vmatprep.subr.bf16.mxu0 0
  %867 = vmatpush1.bf16.msra.mxu0 %v258
  %868 = vmatprep.subr.bf16.mxu0 0
  %869 = vmatpush2.bf16.msra.mxu0 %v273
  %870 = vmatprep.subr.bf16.mxu0 0
  %871 = vmatpush2.bf16.msra.mxu0 %v272
  %872 = vmatprep.subr.bf16.mxu0 0
  %873 = vmatpush2.bf16.msra.mxu0 %v271
  %874 = vmatprep.subr.bf16.mxu0 0
  %875 = vmatpush2.bf16.msra.mxu0 %v270
  %876 = vmatprep.subr.bf16.mxu0 0
  %877 = vmatpush2.bf16.msra.mxu0 %v269
  %878 = vmatprep.subr.bf16.mxu0 0
  %879 = vmatpush2.bf16.msra.mxu0 %v268
  %880 = vmatprep.subr.bf16.mxu0 0
  %881 = vmatpush2.bf16.msra.mxu0 %v267
  %882 = vmatprep.subr.bf16.mxu0 0
  %883 = vmatpush2.bf16.msra.mxu0 %v266
  %884 = vmatprep.mubr.bf16.mxu0 %v807
  %885 = vmatmul.mubr.bf16.gmra.mxu0 %v806
  %v886 = vpop.f32.mrf.mxu0
  %v887 = vadd.f32 %v847, %v886
  %v888 = vpop.f32.mrf.mxu0
  %v889 = vpop.f32.mrf.mxu0
  %v890 = vpop.f32.mrf.mxu0
  %891 = vdwg.mxu0
  %v892 = vmax.f32 %v887, 0.0
  %v893 = vpack.c.bf16 %v892, %v892
  %s894 = scalar_lea.vmem %s3, 96
  %v895 = vld [vmem:[%s894] sm:$0xff]
  %v896 = vld [vmem:[%s894 + $0x8] sm:$0xff]
  %v897 = vld [vmem:[%s894 + $0x10] sm:$0xff]
  %v898 = vld [vmem:[%s894 + $0x18] sm:$0xff]
  %v903 = vunpack.c.l.b16 %v895
  %v904 = vunpack.c.h.b16 %v895
  %v905 = vunpack.c.l.b16 %v896
  %v906 = vunpack.c.h.b16 %v896
  %v907 = vunpack.c.l.b16 %v897
  %v908 = vunpack.c.h.b16 %v897
  %v909 = vunpack.c.l.b16 %v898
  %v910 = vunpack.c.h.b16 %v898
  %v911 = vpack.c.b16 %v905, %v903
  %v912 = vpack.c.b16 %v906, %v904
  %v913 = vpack.c.b16 %v909, %v907
  %v914 = vpack.c.b16 %v910, %v908
  %v920 = vsel %vm516, %v893, 0
  %922 = vmatprep.subr.bf16.mxu0 0
  %923 = vmatpush1.bf16.msra.mxu0 0
  %924 = vmatprep.subr.bf16.mxu0 0
  %925 = vmatpush1.bf16.msra.mxu0 0
  %926 = vmatprep.subr.bf16.mxu0 0
  %927 = vmatpush1.bf16.msra.mxu0 0
  %928 = vmatprep.subr.bf16.mxu0 0
  %929 = vmatpush1.bf16.msra.mxu0 0
  %930 = vmatprep.subr.bf16.mxu0 0
  %931 = vmatpush1.bf16.msra.mxu0 0
  %932 = vmatprep.subr.bf16.mxu0 0
  %933 = vmatpush1.bf16.msra.mxu0 0
  %934 = vmatprep.subr.bf16.mxu0 %v914
  %935 = vmatpush1.bf16.msra.mxu0 %v913
  %936 = vmatprep.subr.bf16.mxu0 %v912
  %937 = vmatpush1.bf16.msra.mxu0 %v911
  %938 = vmatprep.subr.bf16.mxu0 0
  %939 = vmatpush2.bf16.msra.mxu0 0
  %940 = vmatprep.subr.bf16.mxu0 0
  %941 = vmatpush2.bf16.msra.mxu0 0
  %942 = vmatprep.subr.bf16.mxu0 0
  %943 = vmatpush2.bf16.msra.mxu0 0
  %944 = vmatprep.subr.bf16.mxu0 0
  %945 = vmatpush2.bf16.msra.mxu0 0
  %946 = vmatprep.subr.bf16.mxu0 0
  %947 = vmatpush2.bf16.msra.mxu0 0
  %948 = vmatprep.subr.bf16.mxu0 0
  %949 = vmatpush2.bf16.msra.mxu0 0
  %950 = vmatprep.subr.bf16.mxu0 0
  %951 = vmatpush2.bf16.msra.mxu0 0
  %952 = vmatprep.subr.bf16.mxu0 0
  %953 = vmatpush2.bf16.msra.mxu0 0
  %954 = vmatprep.mubr.bf16.mxu0 0
  %955 = vmatmul.mubr.bf16.gmra.mxu0 %v920
  %v956 = vpop.f32.mrf.mxu0
  %v957 = vadd.f32 0.0, %v956
  %v958 = vpop.f32.mrf.mxu0
  %v959 = vadd.f32 0.0, %v958
  %v960 = vpop.f32.mrf.mxu0
  %v961 = vpop.f32.mrf.mxu0
  %962 = vdwg.mxu0
  %v963 = vadd.f32 %v793, %v957
  %v964 = vadd.f32 %v794, %v959
  %s965 = scalar_lea.vmem %s0, 64
  %v966 = vld [vmem:[%s965] sm:$0xff]
  %v967 = vld [vmem:[%s965 + $0x8] sm:$0xff]
  %v970 = vunpack.c.l.b16 %v966
  %v971 = vunpack.c.h.b16 %v966
  %v972 = vunpack.c.l.b16 %v967
  %v973 = vunpack.c.h.b16 %v967
  %v974 = vpack.c.b16 %v970, %v970
  %v975 = vpack.c.b16 %v971, %v971
  %v976 = vpack.c.b16 %v972, %v972
  %v977 = vpack.c.b16 %v973, %v973
  %982 = vmatprep.subr.bf16.mxu0 0
  %983 = vmatpush1.bf16.msra.mxu0 %v249
  %984 = vmatprep.subr.bf16.mxu0 0
  %985 = vmatpush1.bf16.msra.mxu0 %v248
  %986 = vmatprep.subr.bf16.mxu0 0
  %987 = vmatpush1.bf16.msra.mxu0 %v247
  %988 = vmatprep.subr.bf16.mxu0 0
  %989 = vmatpush1.bf16.msra.mxu0 %v246
  %990 = vmatprep.subr.bf16.mxu0 0
  %991 = vmatpush1.bf16.msra.mxu0 %v245
  %992 = vmatprep.subr.bf16.mxu0 0
  %993 = vmatpush1.bf16.msra.mxu0 %v244
  %994 = vmatprep.subr.bf16.mxu0 0
  %995 = vmatpush1.bf16.msra.mxu0 %v243
  %996 = vmatprep.subr.bf16.mxu0 0
  %997 = vmatpush1.bf16.msra.mxu0 %v242
  %998 = vmatprep.subr.bf16.mxu0 0
  %999 = vmatpush2.bf16.msra.mxu0 %v257
  %1000 = vmatprep.subr.bf16.mxu0 0
  %1001 = vmatpush2.bf16.msra.mxu0 %v256
  %1002 = vmatprep.subr.bf16.mxu0 0
  %1003 = vmatpush2.bf16.msra.mxu0 %v255
  %1004 = vmatprep.subr.bf16.mxu0 0
  %1005 = vmatpush2.bf16.msra.mxu0 %v254
  %1006 = vmatprep.subr.bf16.mxu0 0
  %1007 = vmatpush2.bf16.msra.mxu0 %v253
  %1008 = vmatprep.subr.bf16.mxu0 0
  %1009 = vmatpush2.bf16.msra.mxu0 %v252
  %1010 = vmatprep.subr.bf16.mxu0 0
  %1011 = vmatpush2.bf16.msra.mxu0 %v251
  %1012 = vmatprep.subr.bf16.mxu0 0
  %1013 = vmatpush2.bf16.msra.mxu0 %v250
  %1014 = vmatprep.mubr.bf16.mxu0 %v975
  %1015 = vmatmul.mubr.bf16.gmra.mxu0 %v974
  %v1016 = vpop.f32.mrf.mxu0
  %v1017 = vadd.f32 %v98, %v1016
  %v1018 = vpop.f32.mrf.mxu0
  %v1019 = vpop.f32.mrf.mxu0
  %v1020 = vpop.f32.mrf.mxu0
  %1021 = vdwg.mxu0
  %1022 = vmatprep.subr.bf16.mxu0 0
  %1023 = vmatpush1.bf16.msra.mxu0 %v265
  %1024 = vmatprep.subr.bf16.mxu0 0
  %1025 = vmatpush1.bf16.msra.mxu0 %v264
  %1026 = vmatprep.subr.bf16.mxu0 0
  %1027 = vmatpush1.bf16.msra.mxu0 %v263
  %1028 = vmatprep.subr.bf16.mxu0 0
  %1029 = vmatpush1.bf16.msra.mxu0 %v262
  %1030 = vmatprep.subr.bf16.mxu0 0
  %1031 = vmatpush1.bf16.msra.mxu0 %v261
  %1032 = vmatprep.subr.bf16.mxu0 0
  %1033 = vmatpush1.bf16.msra.mxu0 %v260
  %1034 = vmatprep.subr.bf16.mxu0 0
  %1035 = vmatpush1.bf16.msra.mxu0 %v259
  %1036 = vmatprep.subr.bf16.mxu0 0
  %1037 = vmatpush1.bf16.msra.mxu0 %v258
  %1038 = vmatprep.subr.bf16.mxu0 0
  %1039 = vmatpush2.bf16.msra.mxu0 %v273
  %1040 = vmatprep.subr.bf16.mxu0 0
  %1041 = vmatpush2.bf16.msra.mxu0 %v272
  %1042 = vmatprep.subr.bf16.mxu0 0
  %1043 = vmatpush2.bf16.msra.mxu0 %v271
  %1044 = vmatprep.subr.bf16.mxu0 0
  %1045 = vmatpush2.bf16.msra.mxu0 %v270
  %1046 = vmatprep.subr.bf16.mxu0 0
  %1047 = vmatpush2.bf16.msra.mxu0 %v269
  %1048 = vmatprep.subr.bf16.mxu0 0
  %1049 = vmatpush2.bf16.msra.mxu0 %v268
  %1050 = vmatprep.subr.bf16.mxu0 0
  %1051 = vmatpush2.bf16.msra.mxu0 %v267
  %1052 = vmatprep.subr.bf16.mxu0 0
  %1053 = vmatpush2.bf16.msra.mxu0 %v266
  %1054 = vmatprep.mubr.bf16.mxu0 %v977
  %1055 = vmatmul.mubr.bf16.gmra.mxu0 %v976
  %v1056 = vpop.f32.mrf.mxu0
  %v1057 = vadd.f32 %v1017, %v1056
  %v1058 = vpop.f32.mrf.mxu0
  %v1059 = vpop.f32.mrf.mxu0
  %v1060 = vpop.f32.mrf.mxu0
  %1061 = vdwg.mxu0
  %v1062 = vmax.f32 %v1057, 0.0
  %v1063 = vpack.c.bf16 %v1062, %v1062
  %s1064 = scalar_lea.vmem %s3, 128
  %v1065 = vld [vmem:[%s1064] sm:$0xff]
  %v1066 = vld [vmem:[%s1064 + $0x8] sm:$0xff]
  %v1067 = vld [vmem:[%s1064 + $0x10] sm:$0xff]
  %v1068 = vld [vmem:[%s1064 + $0x18] sm:$0xff]
  %v1073 = vunpack.c.l.b16 %v1065
  %v1074 = vunpack.c.h.b16 %v1065
  %v1075 = vunpack.c.l.b16 %v1066
  %v1076 = vunpack.c.h.b16 %v1066
  %v1077 = vunpack.c.l.b16 %v1067
  %v1078 = vunpack.c.h.b16 %v1067
  %v1079 = vunpack.c.l.b16 %v1068
  %v1080 = vunpack.c.h.b16 %v1068
  %v1081 = vpack.c.b16 %v1075, %v1073
  %v1082 = vpack.c.b16 %v1076, %v1074
  %v1083 = vpack.c.b16 %v1079, %v1077
  %v1084 = vpack.c.b16 %v1080, %v1078
  %v1090 = vsel %vm516, %v1063, 0
  %1092 = vmatprep.subr.bf16.mxu0 0
  %1093 = vmatpush1.bf16.msra.mxu0 0
  %1094 = vmatprep.subr.bf16.mxu0 0
  %1095 = vmatpush1.bf16.msra.mxu0 0
  %1096 = vmatprep.subr.bf16.mxu0 0
  %1097 = vmatpush1.bf16.msra.mxu0 0
  %1098 = vmatprep.subr.bf16.mxu0 0
  %1099 = vmatpush1.bf16.msra.mxu0 0
  %1100 = vmatprep.subr.bf16.mxu0 0
  %1101 = vmatpush1.bf16.msra.mxu0 0
  %1102 = vmatprep.subr.bf16.mxu0 0
  %1103 = vmatpush1.bf16.msra.mxu0 0
  %1104 = vmatprep.subr.bf16.mxu0 %v1084
  %1105 = vmatpush1.bf16.msra.mxu0 %v1083
  %1106 = vmatprep.subr.bf16.mxu0 %v1082
  %1107 = vmatpush1.bf16.msra.mxu0 %v1081
  %1108 = vmatprep.subr.bf16.mxu0 0
  %1109 = vmatpush2.bf16.msra.mxu0 0
  %1110 = vmatprep.subr.bf16.mxu0 0
  %1111 = vmatpush2.bf16.msra.mxu0 0
  %1112 = vmatprep.subr.bf16.mxu0 0
  %1113 = vmatpush2.bf16.msra.mxu0 0
  %1114 = vmatprep.subr.bf16.mxu0 0
  %1115 = vmatpush2.bf16.msra.mxu0 0
  %1116 = vmatprep.subr.bf16.mxu0 0
  %1117 = vmatpush2.bf16.msra.mxu0 0
  %1118 = vmatprep.subr.bf16.mxu0 0
  %1119 = vmatpush2.bf16.msra.mxu0 0
  %1120 = vmatprep.subr.bf16.mxu0 0
  %1121 = vmatpush2.bf16.msra.mxu0 0
  %1122 = vmatprep.subr.bf16.mxu0 0
  %1123 = vmatpush2.bf16.msra.mxu0 0
  %1124 = vmatprep.mubr.bf16.mxu0 0
  %1125 = vmatmul.mubr.bf16.gmra.mxu0 %v1090
  %v1126 = vpop.f32.mrf.mxu0
  %v1127 = vadd.f32 0.0, %v1126
  %v1128 = vpop.f32.mrf.mxu0
  %v1129 = vadd.f32 0.0, %v1128
  %v1130 = vpop.f32.mrf.mxu0
  %v1131 = vpop.f32.mrf.mxu0
  %1132 = vdwg.mxu0
  %v1133 = vadd.f32 %v963, %v1127
  %v1134 = vadd.f32 %v964, %v1129
  %s1135 = scalar_lea.vmem %s0, 80
  %v1136 = vld [vmem:[%s1135] sm:$0xff]
  %v1137 = vld [vmem:[%s1135 + $0x8] sm:$0xff]
  %v1140 = vunpack.c.l.b16 %v1136
  %v1141 = vunpack.c.h.b16 %v1136
  %v1142 = vunpack.c.l.b16 %v1137
  %v1143 = vunpack.c.h.b16 %v1137
  %v1144 = vpack.c.b16 %v1140, %v1140
  %v1145 = vpack.c.b16 %v1141, %v1141
  %v1146 = vpack.c.b16 %v1142, %v1142
  %v1147 = vpack.c.b16 %v1143, %v1143
  %1152 = vmatprep.subr.bf16.mxu0 0
  %1153 = vmatpush1.bf16.msra.mxu0 %v249
  %1154 = vmatprep.subr.bf16.mxu0 0
  %1155 = vmatpush1.bf16.msra.mxu0 %v248
  %1156 = vmatprep.subr.bf16.mxu0 0
  %1157 = vmatpush1.bf16.msra.mxu0 %v247
  %1158 = vmatprep.subr.bf16.mxu0 0
  %1159 = vmatpush1.bf16.msra.mxu0 %v246
  %1160 = vmatprep.subr.bf16.mxu0 0
  %1161 = vmatpush1.bf16.msra.mxu0 %v245
  %1162 = vmatprep.subr.bf16.mxu0 0
  %1163 = vmatpush1.bf16.msra.mxu0 %v244
  %1164 = vmatprep.subr.bf16.mxu0 0
  %1165 = vmatpush1.bf16.msra.mxu0 %v243
  %1166 = vmatprep.subr.bf16.mxu0 0
  %1167 = vmatpush1.bf16.msra.mxu0 %v242
  %1168 = vmatprep.subr.bf16.mxu0 0
  %1169 = vmatpush2.bf16.msra.mxu0 %v257
  %1170 = vmatprep.subr.bf16.mxu0 0
  %1171 = vmatpush2.bf16.msra.mxu0 %v256
  %1172 = vmatprep.subr.bf16.mxu0 0
  %1173 = vmatpush2.bf16.msra.mxu0 %v255
  %1174 = vmatprep.subr.bf16.mxu0 0
  %1175 = vmatpush2.bf16.msra.mxu0 %v254
  %1176 = vmatprep.subr.bf16.mxu0 0
  %1177 = vmatpush2.bf16.msra.mxu0 %v253
  %1178 = vmatprep.subr.bf16.mxu0 0
  %1179 = vmatpush2.bf16.msra.mxu0 %v252
  %1180 = vmatprep.subr.bf16.mxu0 0
  %1181 = vmatpush2.bf16.msra.mxu0 %v251
  %1182 = vmatprep.subr.bf16.mxu0 0
  %1183 = vmatpush2.bf16.msra.mxu0 %v250
  %1184 = vmatprep.mubr.bf16.mxu0 %v1145
  %1185 = vmatmul.mubr.bf16.gmra.mxu0 %v1144
  %v1186 = vpop.f32.mrf.mxu0
  %v1187 = vadd.f32 %v98, %v1186
  %v1188 = vpop.f32.mrf.mxu0
  %v1189 = vpop.f32.mrf.mxu0
  %v1190 = vpop.f32.mrf.mxu0
  %1191 = vdwg.mxu0
  %1192 = vmatprep.subr.bf16.mxu0 0
  %1193 = vmatpush1.bf16.msra.mxu0 %v265
  %1194 = vmatprep.subr.bf16.mxu0 0
  %1195 = vmatpush1.bf16.msra.mxu0 %v264
  %1196 = vmatprep.subr.bf16.mxu0 0
  %1197 = vmatpush1.bf16.msra.mxu0 %v263
  %1198 = vmatprep.subr.bf16.mxu0 0
  %1199 = vmatpush1.bf16.msra.mxu0 %v262
  %1200 = vmatprep.subr.bf16.mxu0 0
  %1201 = vmatpush1.bf16.msra.mxu0 %v261
  %1202 = vmatprep.subr.bf16.mxu0 0
  %1203 = vmatpush1.bf16.msra.mxu0 %v260
  %1204 = vmatprep.subr.bf16.mxu0 0
  %1205 = vmatpush1.bf16.msra.mxu0 %v259
  %1206 = vmatprep.subr.bf16.mxu0 0
  %1207 = vmatpush1.bf16.msra.mxu0 %v258
  %1208 = vmatprep.subr.bf16.mxu0 0
  %1209 = vmatpush2.bf16.msra.mxu0 %v273
  %1210 = vmatprep.subr.bf16.mxu0 0
  %1211 = vmatpush2.bf16.msra.mxu0 %v272
  %1212 = vmatprep.subr.bf16.mxu0 0
  %1213 = vmatpush2.bf16.msra.mxu0 %v271
  %1214 = vmatprep.subr.bf16.mxu0 0
  %1215 = vmatpush2.bf16.msra.mxu0 %v270
  %1216 = vmatprep.subr.bf16.mxu0 0
  %1217 = vmatpush2.bf16.msra.mxu0 %v269
  %1218 = vmatprep.subr.bf16.mxu0 0
  %1219 = vmatpush2.bf16.msra.mxu0 %v268
  %1220 = vmatprep.subr.bf16.mxu0 0
  %1221 = vmatpush2.bf16.msra.mxu0 %v267
  %1222 = vmatprep.subr.bf16.mxu0 0
  %1223 = vmatpush2.bf16.msra.mxu0 %v266
  %1224 = vmatprep.mubr.bf16.mxu0 %v1147
  %1225 = vmatmul.mubr.bf16.gmra.mxu0 %v1146
  %v1226 = vpop.f32.mrf.mxu0
  %v1227 = vadd.f32 %v1187, %v1226
  %v1228 = vpop.f32.mrf.mxu0
  %v1229 = vpop.f32.mrf.mxu0
  %v1230 = vpop.f32.mrf.mxu0
  %1231 = vdwg.mxu0
  %v1232 = vmax.f32 %v1227, 0.0
  %v1233 = vpack.c.bf16 %v1232, %v1232
  %s1234 = scalar_lea.vmem %s3, 160
  %v1235 = vld [vmem:[%s1234] sm:$0xff]
  %v1236 = vld [vmem:[%s1234 + $0x8] sm:$0xff]
  %v1237 = vld [vmem:[%s1234 + $0x10] sm:$0xff]
  %v1238 = vld [vmem:[%s1234 + $0x18] sm:$0xff]
  %v1243 = vunpack.c.l.b16 %v1235
  %v1244 = vunpack.c.h.b16 %v1235
  %v1245 = vunpack.c.l.b16 %v1236
  %v1246 = vunpack.c.h.b16 %v1236
  %v1247 = vunpack.c.l.b16 %v1237
  %v1248 = vunpack.c.h.b16 %v1237
  %v1249 = vunpack.c.l.b16 %v1238
  %v1250 = vunpack.c.h.b16 %v1238
  %v1251 = vpack.c.b16 %v1245, %v1243
  %v1252 = vpack.c.b16 %v1246, %v1244
  %v1253 = vpack.c.b16 %v1249, %v1247
  %v1254 = vpack.c.b16 %v1250, %v1248
  %v1260 = vsel %vm516, %v1233, 0
  %1262 = vmatprep.subr.bf16.mxu0 0
  %1263 = vmatpush1.bf16.msra.mxu0 0
  %1264 = vmatprep.subr.bf16.mxu0 0
  %1265 = vmatpush1.bf16.msra.mxu0 0
  %1266 = vmatprep.subr.bf16.mxu0 0
  %1267 = vmatpush1.bf16.msra.mxu0 0
  %1268 = vmatprep.subr.bf16.mxu0 0
  %1269 = vmatpush1.bf16.msra.mxu0 0
  %1270 = vmatprep.subr.bf16.mxu0 0
  %1271 = vmatpush1.bf16.msra.mxu0 0
  %1272 = vmatprep.subr.bf16.mxu0 0
  %1273 = vmatpush1.bf16.msra.mxu0 0
  %1274 = vmatprep.subr.bf16.mxu0 %v1254
  %1275 = vmatpush1.bf16.msra.mxu0 %v1253
  %1276 = vmatprep.subr.bf16.mxu0 %v1252
  %1277 = vmatpush1.bf16.msra.mxu0 %v1251
  %1278 = vmatprep.subr.bf16.mxu0 0
  %1279 = vmatpush2.bf16.msra.mxu0 0
  %1280 = vmatprep.subr.bf16.mxu0 0
  %1281 = vmatpush2.bf16.msra.mxu0 0
  %1282 = vmatprep.subr.bf16.mxu0 0
  %1283 = vmatpush2.bf16.msra.mxu0 0
  %1284 = vmatprep.subr.bf16.mxu0 0
  %1285 = vmatpush2.bf16.msra.mxu0 0
  %1286 = vmatprep.subr.bf16.mxu0 0
  %1287 = vmatpush2.bf16.msra.mxu0 0
  %1288 = vmatprep.subr.bf16.mxu0 0
  %1289 = vmatpush2.bf16.msra.mxu0 0
  %1290 = vmatprep.subr.bf16.mxu0 0
  %1291 = vmatpush2.bf16.msra.mxu0 0
  %1292 = vmatprep.subr.bf16.mxu0 0
  %1293 = vmatpush2.bf16.msra.mxu0 0
  %1294 = vmatprep.mubr.bf16.mxu0 0
  %1295 = vmatmul.mubr.bf16.gmra.mxu0 %v1260
  %v1296 = vpop.f32.mrf.mxu0
  %v1297 = vadd.f32 0.0, %v1296
  %v1298 = vpop.f32.mrf.mxu0
  %v1299 = vadd.f32 0.0, %v1298
  %v1300 = vpop.f32.mrf.mxu0
  %v1301 = vpop.f32.mrf.mxu0
  %1302 = vdwg.mxu0
  %v1303 = vadd.f32 %v1133, %v1297
  %v1304 = vadd.f32 %v1134, %v1299
  %s1305 = scalar_lea.vmem %s0, 96
  %v1306 = vld [vmem:[%s1305] sm:$0xff]
  %v1307 = vld [vmem:[%s1305 + $0x8] sm:$0xff]
  %v1310 = vunpack.c.l.b16 %v1306
  %v1311 = vunpack.c.h.b16 %v1306
  %v1312 = vunpack.c.l.b16 %v1307
  %v1313 = vunpack.c.h.b16 %v1307
  %v1314 = vpack.c.b16 %v1310, %v1310
  %v1315 = vpack.c.b16 %v1311, %v1311
  %v1316 = vpack.c.b16 %v1312, %v1312
  %v1317 = vpack.c.b16 %v1313, %v1313
  %1322 = vmatprep.subr.bf16.mxu0 0
  %1323 = vmatpush1.bf16.msra.mxu0 %v249
  %1324 = vmatprep.subr.bf16.mxu0 0
  %1325 = vmatpush1.bf16.msra.mxu0 %v248
  %1326 = vmatprep.subr.bf16.mxu0 0
  %1327 = vmatpush1.bf16.msra.mxu0 %v247
  %1328 = vmatprep.subr.bf16.mxu0 0
  %1329 = vmatpush1.bf16.msra.mxu0 %v246
  %1330 = vmatprep.subr.bf16.mxu0 0
  %1331 = vmatpush1.bf16.msra.mxu0 %v245
  %1332 = vmatprep.subr.bf16.mxu0 0
  %1333 = vmatpush1.bf16.msra.mxu0 %v244
  %1334 = vmatprep.subr.bf16.mxu0 0
  %1335 = vmatpush1.bf16.msra.mxu0 %v243
  %1336 = vmatprep.subr.bf16.mxu0 0
  %1337 = vmatpush1.bf16.msra.mxu0 %v242
  %1338 = vmatprep.subr.bf16.mxu0 0
  %1339 = vmatpush2.bf16.msra.mxu0 %v257
  %1340 = vmatprep.subr.bf16.mxu0 0
  %1341 = vmatpush2.bf16.msra.mxu0 %v256
  %1342 = vmatprep.subr.bf16.mxu0 0
  %1343 = vmatpush2.bf16.msra.mxu0 %v255
  %1344 = vmatprep.subr.bf16.mxu0 0
  %1345 = vmatpush2.bf16.msra.mxu0 %v254
  %1346 = vmatprep.subr.bf16.mxu0 0
  %1347 = vmatpush2.bf16.msra.mxu0 %v253
  %1348 = vmatprep.subr.bf16.mxu0 0
  %1349 = vmatpush2.bf16.msra.mxu0 %v252
  %1350 = vmatprep.subr.bf16.mxu0 0
  %1351 = vmatpush2.bf16.msra.mxu0 %v251
  %1352 = vmatprep.subr.bf16.mxu0 0
  %1353 = vmatpush2.bf16.msra.mxu0 %v250
  %1354 = vmatprep.mubr.bf16.mxu0 %v1315
  %1355 = vmatmul.mubr.bf16.gmra.mxu0 %v1314
  %v1356 = vpop.f32.mrf.mxu0
  %v1357 = vadd.f32 %v98, %v1356
  %v1358 = vpop.f32.mrf.mxu0
  %v1359 = vpop.f32.mrf.mxu0
  %v1360 = vpop.f32.mrf.mxu0
  %1361 = vdwg.mxu0
  %1362 = vmatprep.subr.bf16.mxu0 0
  %1363 = vmatpush1.bf16.msra.mxu0 %v265
  %1364 = vmatprep.subr.bf16.mxu0 0
  %1365 = vmatpush1.bf16.msra.mxu0 %v264
  %1366 = vmatprep.subr.bf16.mxu0 0
  %1367 = vmatpush1.bf16.msra.mxu0 %v263
  %1368 = vmatprep.subr.bf16.mxu0 0
  %1369 = vmatpush1.bf16.msra.mxu0 %v262
  %1370 = vmatprep.subr.bf16.mxu0 0
  %1371 = vmatpush1.bf16.msra.mxu0 %v261
  %1372 = vmatprep.subr.bf16.mxu0 0
  %1373 = vmatpush1.bf16.msra.mxu0 %v260
  %1374 = vmatprep.subr.bf16.mxu0 0
  %1375 = vmatpush1.bf16.msra.mxu0 %v259
  %1376 = vmatprep.subr.bf16.mxu0 0
  %1377 = vmatpush1.bf16.msra.mxu0 %v258
  %1378 = vmatprep.subr.bf16.mxu0 0
  %1379 = vmatpush2.bf16.msra.mxu0 %v273
  %1380 = vmatprep.subr.bf16.mxu0 0
  %1381 = vmatpush2.bf16.msra.mxu0 %v272
  %1382 = vmatprep.subr.bf16.mxu0 0
  %1383 = vmatpush2.bf16.msra.mxu0 %v271
  %1384 = vmatprep.subr.bf16.mxu0 0
  %1385 = vmatpush2.bf16.msra.mxu0 %v270
  %1386 = vmatprep.subr.bf16.mxu0 0
  %1387 = vmatpush2.bf16.msra.mxu0 %v269
  %1388 = vmatprep.subr.bf16.mxu0 0
  %1389 = vmatpush2.bf16.msra.mxu0 %v268
  %1390 = vmatprep.subr.bf16.mxu0 0
  %1391 = vmatpush2.bf16.msra.mxu0 %v267
  %1392 = vmatprep.subr.bf16.mxu0 0
  %1393 = vmatpush2.bf16.msra.mxu0 %v266
  %1394 = vmatprep.mubr.bf16.mxu0 %v1317
  %1395 = vmatmul.mubr.bf16.gmra.mxu0 %v1316
  %v1396 = vpop.f32.mrf.mxu0
  %v1397 = vadd.f32 %v1357, %v1396
  %v1398 = vpop.f32.mrf.mxu0
  %v1399 = vpop.f32.mrf.mxu0
  %v1400 = vpop.f32.mrf.mxu0
  %1401 = vdwg.mxu0
  %v1402 = vmax.f32 %v1397, 0.0
  %v1403 = vpack.c.bf16 %v1402, %v1402
  %s1404 = scalar_lea.vmem %s3, 192
  %v1405 = vld [vmem:[%s1404] sm:$0xff]
  %v1406 = vld [vmem:[%s1404 + $0x8] sm:$0xff]
  %v1407 = vld [vmem:[%s1404 + $0x10] sm:$0xff]
  %v1408 = vld [vmem:[%s1404 + $0x18] sm:$0xff]
  %v1413 = vunpack.c.l.b16 %v1405
  %v1414 = vunpack.c.h.b16 %v1405
  %v1415 = vunpack.c.l.b16 %v1406
  %v1416 = vunpack.c.h.b16 %v1406
  %v1417 = vunpack.c.l.b16 %v1407
  %v1418 = vunpack.c.h.b16 %v1407
  %v1419 = vunpack.c.l.b16 %v1408
  %v1420 = vunpack.c.h.b16 %v1408
  %v1421 = vpack.c.b16 %v1415, %v1413
  %v1422 = vpack.c.b16 %v1416, %v1414
  %v1423 = vpack.c.b16 %v1419, %v1417
  %v1424 = vpack.c.b16 %v1420, %v1418
  %v1430 = vsel %vm516, %v1403, 0
  %1432 = vmatprep.subr.bf16.mxu0 0
  %1433 = vmatpush1.bf16.msra.mxu0 0
  %1434 = vmatprep.subr.bf16.mxu0 0
  %1435 = vmatpush1.bf16.msra.mxu0 0
  %1436 = vmatprep.subr.bf16.mxu0 0
  %1437 = vmatpush1.bf16.msra.mxu0 0
  %1438 = vmatprep.subr.bf16.mxu0 0
  %1439 = vmatpush1.bf16.msra.mxu0 0
  %1440 = vmatprep.subr.bf16.mxu0 0
  %1441 = vmatpush1.bf16.msra.mxu0 0
  %1442 = vmatprep.subr.bf16.mxu0 0
  %1443 = vmatpush1.bf16.msra.mxu0 0
  %1444 = vmatprep.subr.bf16.mxu0 %v1424
  %1445 = vmatpush1.bf16.msra.mxu0 %v1423
  %1446 = vmatprep.subr.bf16.mxu0 %v1422
  %1447 = vmatpush1.bf16.msra.mxu0 %v1421
  %1448 = vmatprep.subr.bf16.mxu0 0
  %1449 = vmatpush2.bf16.msra.mxu0 0
  %1450 = vmatprep.subr.bf16.mxu0 0
  %1451 = vmatpush2.bf16.msra.mxu0 0
  %1452 = vmatprep.subr.bf16.mxu0 0
  %1453 = vmatpush2.bf16.msra.mxu0 0
  %1454 = vmatprep.subr.bf16.mxu0 0
  %1455 = vmatpush2.bf16.msra.mxu0 0
  %1456 = vmatprep.subr.bf16.mxu0 0
  %1457 = vmatpush2.bf16.msra.mxu0 0
  %1458 = vmatprep.subr.bf16.mxu0 0
  %1459 = vmatpush2.bf16.msra.mxu0 0
  %1460 = vmatprep.subr.bf16.mxu0 0
  %1461 = vmatpush2.bf16.msra.mxu0 0
  %1462 = vmatprep.subr.bf16.mxu0 0
  %1463 = vmatpush2.bf16.msra.mxu0 0
  %1464 = vmatprep.mubr.bf16.mxu0 0
  %1465 = vmatmul.mubr.bf16.gmra.mxu0 %v1430
  %v1466 = vpop.f32.mrf.mxu0
  %v1467 = vadd.f32 0.0, %v1466
  %v1468 = vpop.f32.mrf.mxu0
  %v1469 = vadd.f32 0.0, %v1468
  %v1470 = vpop.f32.mrf.mxu0
  %v1471 = vpop.f32.mrf.mxu0
  %1472 = vdwg.mxu0
  %v1473 = vadd.f32 %v1303, %v1467
  %v1474 = vadd.f32 %v1304, %v1469
  %s1475 = scalar_lea.vmem %s0, 112
  %v1476 = vld [vmem:[%s1475] sm:$0xff]
  %v1477 = vld [vmem:[%s1475 + $0x8] sm:$0xff]
  %v1480 = vunpack.c.l.b16 %v1476
  %v1481 = vunpack.c.h.b16 %v1476
  %v1482 = vunpack.c.l.b16 %v1477
  %v1483 = vunpack.c.h.b16 %v1477
  %v1484 = vpack.c.b16 %v1480, %v1480
  %v1485 = vpack.c.b16 %v1481, %v1481
  %v1486 = vpack.c.b16 %v1482, %v1482
  %v1487 = vpack.c.b16 %v1483, %v1483
  %1492 = vmatprep.subr.bf16.mxu0 0
  %1493 = vmatpush1.bf16.msra.mxu0 %v249
  %1494 = vmatprep.subr.bf16.mxu0 0
  %1495 = vmatpush1.bf16.msra.mxu0 %v248
  %1496 = vmatprep.subr.bf16.mxu0 0
  %1497 = vmatpush1.bf16.msra.mxu0 %v247
  %1498 = vmatprep.subr.bf16.mxu0 0
  %1499 = vmatpush1.bf16.msra.mxu0 %v246
  %1500 = vmatprep.subr.bf16.mxu0 0
  %1501 = vmatpush1.bf16.msra.mxu0 %v245
  %1502 = vmatprep.subr.bf16.mxu0 0
  %1503 = vmatpush1.bf16.msra.mxu0 %v244
  %1504 = vmatprep.subr.bf16.mxu0 0
  %1505 = vmatpush1.bf16.msra.mxu0 %v243
  %1506 = vmatprep.subr.bf16.mxu0 0
  %1507 = vmatpush1.bf16.msra.mxu0 %v242
  %1508 = vmatprep.subr.bf16.mxu0 0
  %1509 = vmatpush2.bf16.msra.mxu0 %v257
  %1510 = vmatprep.subr.bf16.mxu0 0
  %1511 = vmatpush2.bf16.msra.mxu0 %v256
  %1512 = vmatprep.subr.bf16.mxu0 0
  %1513 = vmatpush2.bf16.msra.mxu0 %v255
  %1514 = vmatprep.subr.bf16.mxu0 0
  %1515 = vmatpush2.bf16.msra.mxu0 %v254
  %1516 = vmatprep.subr.bf16.mxu0 0
  %1517 = vmatpush2.bf16.msra.mxu0 %v253
  %1518 = vmatprep.subr.bf16.mxu0 0
  %1519 = vmatpush2.bf16.msra.mxu0 %v252
  %1520 = vmatprep.subr.bf16.mxu0 0
  %1521 = vmatpush2.bf16.msra.mxu0 %v251
  %1522 = vmatprep.subr.bf16.mxu0 0
  %1523 = vmatpush2.bf16.msra.mxu0 %v250
  %1524 = vmatprep.mubr.bf16.mxu0 %v1485
  %1525 = vmatmul.mubr.bf16.gmra.mxu0 %v1484
  %v1526 = vpop.f32.mrf.mxu0
  %v1527 = vadd.f32 %v98, %v1526
  %v1528 = vpop.f32.mrf.mxu0
  %v1529 = vpop.f32.mrf.mxu0
  %v1530 = vpop.f32.mrf.mxu0
  %1531 = vdwg.mxu0
  %1532 = vmatprep.subr.bf16.mxu0 0
  %1533 = vmatpush1.bf16.msra.mxu0 %v265
  %1534 = vmatprep.subr.bf16.mxu0 0
  %1535 = vmatpush1.bf16.msra.mxu0 %v264
  %1536 = vmatprep.subr.bf16.mxu0 0
  %1537 = vmatpush1.bf16.msra.mxu0 %v263
  %1538 = vmatprep.subr.bf16.mxu0 0
  %1539 = vmatpush1.bf16.msra.mxu0 %v262
  %1540 = vmatprep.subr.bf16.mxu0 0
  %1541 = vmatpush1.bf16.msra.mxu0 %v261
  %1542 = vmatprep.subr.bf16.mxu0 0
  %1543 = vmatpush1.bf16.msra.mxu0 %v260
  %1544 = vmatprep.subr.bf16.mxu0 0
  %1545 = vmatpush1.bf16.msra.mxu0 %v259
  %1546 = vmatprep.subr.bf16.mxu0 0
  %1547 = vmatpush1.bf16.msra.mxu0 %v258
  %1548 = vmatprep.subr.bf16.mxu0 0
  %1549 = vmatpush2.bf16.msra.mxu0 %v273
  %1550 = vmatprep.subr.bf16.mxu0 0
  %1551 = vmatpush2.bf16.msra.mxu0 %v272
  %1552 = vmatprep.subr.bf16.mxu0 0
  %1553 = vmatpush2.bf16.msra.mxu0 %v271
  %1554 = vmatprep.subr.bf16.mxu0 0
  %1555 = vmatpush2.bf16.msra.mxu0 %v270
  %1556 = vmatprep.subr.bf16.mxu0 0
  %1557 = vmatpush2.bf16.msra.mxu0 %v269
  %1558 = vmatprep.subr.bf16.mxu0 0
  %1559 = vmatpush2.bf16.msra.mxu0 %v268
  %1560 = vmatprep.subr.bf16.mxu0 0
  %1561 = vmatpush2.bf16.msra.mxu0 %v267
  %1562 = vmatprep.subr.bf16.mxu0 0
  %1563 = vmatpush2.bf16.msra.mxu0 %v266
  %1564 = vmatprep.mubr.bf16.mxu0 %v1487
  %1565 = vmatmul.mubr.bf16.gmra.mxu0 %v1486
  %v1566 = vpop.f32.mrf.mxu0
  %v1567 = vadd.f32 %v1527, %v1566
  %v1568 = vpop.f32.mrf.mxu0
  %v1569 = vpop.f32.mrf.mxu0
  %v1570 = vpop.f32.mrf.mxu0
  %1571 = vdwg.mxu0
  %v1572 = vmax.f32 %v1567, 0.0
  %v1573 = vpack.c.bf16 %v1572, %v1572
  %s1574 = scalar_lea.vmem %s3, 224
  %v1575 = vld [vmem:[%s1574] sm:$0xff]
  %v1576 = vld [vmem:[%s1574 + $0x8] sm:$0xff]
  %v1577 = vld [vmem:[%s1574 + $0x10] sm:$0xff]
  %v1578 = vld [vmem:[%s1574 + $0x18] sm:$0xff]
  %v1583 = vunpack.c.l.b16 %v1575
  %v1584 = vunpack.c.h.b16 %v1575
  %v1585 = vunpack.c.l.b16 %v1576
  %v1586 = vunpack.c.h.b16 %v1576
  %v1587 = vunpack.c.l.b16 %v1577
  %v1588 = vunpack.c.h.b16 %v1577
  %v1589 = vunpack.c.l.b16 %v1578
  %v1590 = vunpack.c.h.b16 %v1578
  %v1591 = vpack.c.b16 %v1585, %v1583
  %v1592 = vpack.c.b16 %v1586, %v1584
  %v1593 = vpack.c.b16 %v1589, %v1587
  %v1594 = vpack.c.b16 %v1590, %v1588
  %v1600 = vsel %vm516, %v1573, 0
  %1602 = vmatprep.subr.bf16.mxu0 0
  %1603 = vmatpush1.bf16.msra.mxu0 0
  %1604 = vmatprep.subr.bf16.mxu0 0
  %1605 = vmatpush1.bf16.msra.mxu0 0
  %1606 = vmatprep.subr.bf16.mxu0 0
  %1607 = vmatpush1.bf16.msra.mxu0 0
  %1608 = vmatprep.subr.bf16.mxu0 0
  %1609 = vmatpush1.bf16.msra.mxu0 0
  %1610 = vmatprep.subr.bf16.mxu0 0
  %1611 = vmatpush1.bf16.msra.mxu0 0
  %1612 = vmatprep.subr.bf16.mxu0 0
  %1613 = vmatpush1.bf16.msra.mxu0 0
  %1614 = vmatprep.subr.bf16.mxu0 %v1594
  %1615 = vmatpush1.bf16.msra.mxu0 %v1593
  %1616 = vmatprep.subr.bf16.mxu0 %v1592
  %1617 = vmatpush1.bf16.msra.mxu0 %v1591
  %1618 = vmatprep.subr.bf16.mxu0 0
  %1619 = vmatpush2.bf16.msra.mxu0 0
  %1620 = vmatprep.subr.bf16.mxu0 0
  %1621 = vmatpush2.bf16.msra.mxu0 0
  %1622 = vmatprep.subr.bf16.mxu0 0
  %1623 = vmatpush2.bf16.msra.mxu0 0
  %1624 = vmatprep.subr.bf16.mxu0 0
  %1625 = vmatpush2.bf16.msra.mxu0 0
  %1626 = vmatprep.subr.bf16.mxu0 0
  %1627 = vmatpush2.bf16.msra.mxu0 0
  %1628 = vmatprep.subr.bf16.mxu0 0
  %1629 = vmatpush2.bf16.msra.mxu0 0
  %1630 = vmatprep.subr.bf16.mxu0 0
  %1631 = vmatpush2.bf16.msra.mxu0 0
  %1632 = vmatprep.subr.bf16.mxu0 0
  %1633 = vmatpush2.bf16.msra.mxu0 0
  %1634 = vmatprep.mubr.bf16.mxu0 0
  %1635 = vmatmul.mubr.bf16.gmra.mxu0 %v1600
  %v1636 = vpop.f32.mrf.mxu0
  %v1637 = vadd.f32 0.0, %v1636
  %v1638 = vpop.f32.mrf.mxu0
  %v1639 = vadd.f32 0.0, %v1638
  %v1640 = vpop.f32.mrf.mxu0
  %v1641 = vpop.f32.mrf.mxu0
  %1642 = vdwg.mxu0
  %v1643 = vadd.f32 %v1473, %v1637
  %v1644 = vadd.f32 %v1474, %v1639
  %s1645 = scalar_lea.vmem %s0, 128
  %v1646 = vld [vmem:[%s1645] sm:$0xff]
  %v1647 = vld [vmem:[%s1645 + $0x8] sm:$0xff]
  %v1650 = vunpack.c.l.b16 %v1646
  %v1651 = vunpack.c.h.b16 %v1646
  %v1652 = vunpack.c.l.b16 %v1647
  %v1653 = vunpack.c.h.b16 %v1647
  %v1654 = vpack.c.b16 %v1650, %v1650
  %v1655 = vpack.c.b16 %v1651, %v1651
  %v1656 = vpack.c.b16 %v1652, %v1652
  %v1657 = vpack.c.b16 %v1653, %v1653
  %1662 = vmatprep.subr.bf16.mxu0 0
  %1663 = vmatpush1.bf16.msra.mxu0 %v249
  %1664 = vmatprep.subr.bf16.mxu0 0
  %1665 = vmatpush1.bf16.msra.mxu0 %v248
  %1666 = vmatprep.subr.bf16.mxu0 0
  %1667 = vmatpush1.bf16.msra.mxu0 %v247
  %1668 = vmatprep.subr.bf16.mxu0 0
  %1669 = vmatpush1.bf16.msra.mxu0 %v246
  %1670 = vmatprep.subr.bf16.mxu0 0
  %1671 = vmatpush1.bf16.msra.mxu0 %v245
  %1672 = vmatprep.subr.bf16.mxu0 0
  %1673 = vmatpush1.bf16.msra.mxu0 %v244
  %1674 = vmatprep.subr.bf16.mxu0 0
  %1675 = vmatpush1.bf16.msra.mxu0 %v243
  %1676 = vmatprep.subr.bf16.mxu0 0
  %1677 = vmatpush1.bf16.msra.mxu0 %v242
  %1678 = vmatprep.subr.bf16.mxu0 0
  %1679 = vmatpush2.bf16.msra.mxu0 %v257
  %1680 = vmatprep.subr.bf16.mxu0 0
  %1681 = vmatpush2.bf16.msra.mxu0 %v256
  %1682 = vmatprep.subr.bf16.mxu0 0
  %1683 = vmatpush2.bf16.msra.mxu0 %v255
  %1684 = vmatprep.subr.bf16.mxu0 0
  %1685 = vmatpush2.bf16.msra.mxu0 %v254
  %1686 = vmatprep.subr.bf16.mxu0 0
  %1687 = vmatpush2.bf16.msra.mxu0 %v253
  %1688 = vmatprep.subr.bf16.mxu0 0
  %1689 = vmatpush2.bf16.msra.mxu0 %v252
  %1690 = vmatprep.subr.bf16.mxu0 0
  %1691 = vmatpush2.bf16.msra.mxu0 %v251
  %1692 = vmatprep.subr.bf16.mxu0 0
  %1693 = vmatpush2.bf16.msra.mxu0 %v250
  %1694 = vmatprep.mubr.bf16.mxu0 %v1655
  %1695 = vmatmul.mubr.bf16.gmra.mxu0 %v1654
  %v1696 = vpop.f32.mrf.mxu0
  %v1697 = vadd.f32 %v98, %v1696
  %v1698 = vpop.f32.mrf.mxu0
  %v1699 = vpop.f32.mrf.mxu0
  %v1700 = vpop.f32.mrf.mxu0
  %1701 = vdwg.mxu0
  %1702 = vmatprep.subr.bf16.mxu0 0
  %1703 = vmatpush1.bf16.msra.mxu0 %v265
  %1704 = vmatprep.subr.bf16.mxu0 0
  %1705 = vmatpush1.bf16.msra.mxu0 %v264
  %1706 = vmatprep.subr.bf16.mxu0 0
  %1707 = vmatpush1.bf16.msra.mxu0 %v263
  %1708 = vmatprep.subr.bf16.mxu0 0
  %1709 = vmatpush1.bf16.msra.mxu0 %v262
  %1710 = vmatprep.subr.bf16.mxu0 0
  %1711 = vmatpush1.bf16.msra.mxu0 %v261
  %1712 = vmatprep.subr.bf16.mxu0 0
  %1713 = vmatpush1.bf16.msra.mxu0 %v260
  %1714 = vmatprep.subr.bf16.mxu0 0
  %1715 = vmatpush1.bf16.msra.mxu0 %v259
  %1716 = vmatprep.subr.bf16.mxu0 0
  %1717 = vmatpush1.bf16.msra.mxu0 %v258
  %1718 = vmatprep.subr.bf16.mxu0 0
  %1719 = vmatpush2.bf16.msra.mxu0 %v273
  %1720 = vmatprep.subr.bf16.mxu0 0
  %1721 = vmatpush2.bf16.msra.mxu0 %v272
  %1722 = vmatprep.subr.bf16.mxu0 0
  %1723 = vmatpush2.bf16.msra.mxu0 %v271
  %1724 = vmatprep.subr.bf16.mxu0 0
  %1725 = vmatpush2.bf16.msra.mxu0 %v270
  %1726 = vmatprep.subr.bf16.mxu0 0
  %1727 = vmatpush2.bf16.msra.mxu0 %v269
  %1728 = vmatprep.subr.bf16.mxu0 0
  %1729 = vmatpush2.bf16.msra.mxu0 %v268
  %1730 = vmatprep.subr.bf16.mxu0 0
  %1731 = vmatpush2.bf16.msra.mxu0 %v267
  %1732 = vmatprep.subr.bf16.mxu0 0
  %1733 = vmatpush2.bf16.msra.mxu0 %v266
  %1734 = vmatprep.mubr.bf16.mxu0 %v1657
  %1735 = vmatmul.mubr.bf16.gmra.mxu0 %v1656
  %v1736 = vpop.f32.mrf.mxu0
  %v1737 = vadd.f32 %v1697, %v1736
  %v1738 = vpop.f32.mrf.mxu0
  %v1739 = vpop.f32.mrf.mxu0
  %v1740 = vpop.f32.mrf.mxu0
  %1741 = vdwg.mxu0
  %v1742 = vmax.f32 %v1737, 0.0
  %v1743 = vpack.c.bf16 %v1742, %v1742
  %s1744 = scalar_lea.vmem %s3, 256
  %v1745 = vld [vmem:[%s1744] sm:$0xff]
  %v1746 = vld [vmem:[%s1744 + $0x8] sm:$0xff]
  %v1747 = vld [vmem:[%s1744 + $0x10] sm:$0xff]
  %v1748 = vld [vmem:[%s1744 + $0x18] sm:$0xff]
  %v1753 = vunpack.c.l.b16 %v1745
  %v1754 = vunpack.c.h.b16 %v1745
  %v1755 = vunpack.c.l.b16 %v1746
  %v1756 = vunpack.c.h.b16 %v1746
  %v1757 = vunpack.c.l.b16 %v1747
  %v1758 = vunpack.c.h.b16 %v1747
  %v1759 = vunpack.c.l.b16 %v1748
  %v1760 = vunpack.c.h.b16 %v1748
  %v1761 = vpack.c.b16 %v1755, %v1753
  %v1762 = vpack.c.b16 %v1756, %v1754
  %v1763 = vpack.c.b16 %v1759, %v1757
  %v1764 = vpack.c.b16 %v1760, %v1758
  %v1770 = vsel %vm516, %v1743, 0
  %1772 = vmatprep.subr.bf16.mxu0 0
  %1773 = vmatpush1.bf16.msra.mxu0 0
  %1774 = vmatprep.subr.bf16.mxu0 0
  %1775 = vmatpush1.bf16.msra.mxu0 0
  %1776 = vmatprep.subr.bf16.mxu0 0
  %1777 = vmatpush1.bf16.msra.mxu0 0
  %1778 = vmatprep.subr.bf16.mxu0 0
  %1779 = vmatpush1.bf16.msra.mxu0 0
  %1780 = vmatprep.subr.bf16.mxu0 0
  %1781 = vmatpush1.bf16.msra.mxu0 0
  %1782 = vmatprep.subr.bf16.mxu0 0
  %1783 = vmatpush1.bf16.msra.mxu0 0
  %1784 = vmatprep.subr.bf16.mxu0 %v1764
  %1785 = vmatpush1.bf16.msra.mxu0 %v1763
  %1786 = vmatprep.subr.bf16.mxu0 %v1762
  %1787 = vmatpush1.bf16.msra.mxu0 %v1761
  %1788 = vmatprep.subr.bf16.mxu0 0
  %1789 = vmatpush2.bf16.msra.mxu0 0
  %1790 = vmatprep.subr.bf16.mxu0 0
  %1791 = vmatpush2.bf16.msra.mxu0 0
  %1792 = vmatprep.subr.bf16.mxu0 0
  %1793 = vmatpush2.bf16.msra.mxu0 0
  %1794 = vmatprep.subr.bf16.mxu0 0
  %1795 = vmatpush2.bf16.msra.mxu0 0
  %1796 = vmatprep.subr.bf16.mxu0 0
  %1797 = vmatpush2.bf16.msra.mxu0 0
  %1798 = vmatprep.subr.bf16.mxu0 0
  %1799 = vmatpush2.bf16.msra.mxu0 0
  %1800 = vmatprep.subr.bf16.mxu0 0
  %1801 = vmatpush2.bf16.msra.mxu0 0
  %1802 = vmatprep.subr.bf16.mxu0 0
  %1803 = vmatpush2.bf16.msra.mxu0 0
  %1804 = vmatprep.mubr.bf16.mxu0 0
  %1805 = vmatmul.mubr.bf16.gmra.mxu0 %v1770
  %v1806 = vpop.f32.mrf.mxu0
  %v1807 = vadd.f32 0.0, %v1806
  %v1808 = vpop.f32.mrf.mxu0
  %v1809 = vadd.f32 0.0, %v1808
  %v1810 = vpop.f32.mrf.mxu0
  %v1811 = vpop.f32.mrf.mxu0
  %1812 = vdwg.mxu0
  %v1813 = vadd.f32 %v1643, %v1807
  %v1814 = vadd.f32 %v1644, %v1809
  %s1815 = scalar_lea.vmem %s0, 144
  %v1816 = vld [vmem:[%s1815] sm:$0xff]
  %v1817 = vld [vmem:[%s1815 + $0x8] sm:$0xff]
  %v1820 = vunpack.c.l.b16 %v1816
  %v1821 = vunpack.c.h.b16 %v1816
  %v1822 = vunpack.c.l.b16 %v1817
  %v1823 = vunpack.c.h.b16 %v1817
  %v1824 = vpack.c.b16 %v1820, %v1820
  %v1825 = vpack.c.b16 %v1821, %v1821
  %v1826 = vpack.c.b16 %v1822, %v1822
  %v1827 = vpack.c.b16 %v1823, %v1823
  %1832 = vmatprep.subr.bf16.mxu0 0
  %1833 = vmatpush1.bf16.msra.mxu0 %v249
  %1834 = vmatprep.subr.bf16.mxu0 0
  %1835 = vmatpush1.bf16.msra.mxu0 %v248
  %1836 = vmatprep.subr.bf16.mxu0 0
  %1837 = vmatpush1.bf16.msra.mxu0 %v247
  %1838 = vmatprep.subr.bf16.mxu0 0
  %1839 = vmatpush1.bf16.msra.mxu0 %v246
  %1840 = vmatprep.subr.bf16.mxu0 0
  %1841 = vmatpush1.bf16.msra.mxu0 %v245
  %1842 = vmatprep.subr.bf16.mxu0 0
  %1843 = vmatpush1.bf16.msra.mxu0 %v244
  %1844 = vmatprep.subr.bf16.mxu0 0
  %1845 = vmatpush1.bf16.msra.mxu0 %v243
  %1846 = vmatprep.subr.bf16.mxu0 0
  %1847 = vmatpush1.bf16.msra.mxu0 %v242
  %1848 = vmatprep.subr.bf16.mxu0 0
  %1849 = vmatpush2.bf16.msra.mxu0 %v257
  %1850 = vmatprep.subr.bf16.mxu0 0
  %1851 = vmatpush2.bf16.msra.mxu0 %v256
  %1852 = vmatprep.subr.bf16.mxu0 0
  %1853 = vmatpush2.bf16.msra.mxu0 %v255
  %1854 = vmatprep.subr.bf16.mxu0 0
  %1855 = vmatpush2.bf16.msra.mxu0 %v254
  %1856 = vmatprep.subr.bf16.mxu0 0
  %1857 = vmatpush2.bf16.msra.mxu0 %v253
  %1858 = vmatprep.subr.bf16.mxu0 0
  %1859 = vmatpush2.bf16.msra.mxu0 %v252
  %1860 = vmatprep.subr.bf16.mxu0 0
  %1861 = vmatpush2.bf16.msra.mxu0 %v251
  %1862 = vmatprep.subr.bf16.mxu0 0
  %1863 = vmatpush2.bf16.msra.mxu0 %v250
  %1864 = vmatprep.mubr.bf16.mxu0 %v1825
  %1865 = vmatmul.mubr.bf16.gmra.mxu0 %v1824
  %v1866 = vpop.f32.mrf.mxu0
  %v1867 = vadd.f32 %v98, %v1866
  %v1868 = vpop.f32.mrf.mxu0
  %v1869 = vpop.f32.mrf.mxu0
  %v1870 = vpop.f32.mrf.mxu0
  %1871 = vdwg.mxu0
  %1872 = vmatprep.subr.bf16.mxu0 0
  %1873 = vmatpush1.bf16.msra.mxu0 %v265
  %1874 = vmatprep.subr.bf16.mxu0 0
  %1875 = vmatpush1.bf16.msra.mxu0 %v264
  %1876 = vmatprep.subr.bf16.mxu0 0
  %1877 = vmatpush1.bf16.msra.mxu0 %v263
  %1878 = vmatprep.subr.bf16.mxu0 0
  %1879 = vmatpush1.bf16.msra.mxu0 %v262
  %1880 = vmatprep.subr.bf16.mxu0 0
  %1881 = vmatpush1.bf16.msra.mxu0 %v261
  %1882 = vmatprep.subr.bf16.mxu0 0
  %1883 = vmatpush1.bf16.msra.mxu0 %v260
  %1884 = vmatprep.subr.bf16.mxu0 0
  %1885 = vmatpush1.bf16.msra.mxu0 %v259
  %1886 = vmatprep.subr.bf16.mxu0 0
  %1887 = vmatpush1.bf16.msra.mxu0 %v258
  %1888 = vmatprep.subr.bf16.mxu0 0
  %1889 = vmatpush2.bf16.msra.mxu0 %v273
  %1890 = vmatprep.subr.bf16.mxu0 0
  %1891 = vmatpush2.bf16.msra.mxu0 %v272
  %1892 = vmatprep.subr.bf16.mxu0 0
  %1893 = vmatpush2.bf16.msra.mxu0 %v271
  %1894 = vmatprep.subr.bf16.mxu0 0
  %1895 = vmatpush2.bf16.msra.mxu0 %v270
  %1896 = vmatprep.subr.bf16.mxu0 0
  %1897 = vmatpush2.bf16.msra.mxu0 %v269
  %1898 = vmatprep.subr.bf16.mxu0 0
  %1899 = vmatpush2.bf16.msra.mxu0 %v268
  %1900 = vmatprep.subr.bf16.mxu0 0
  %1901 = vmatpush2.bf16.msra.mxu0 %v267
  %1902 = vmatprep.subr.bf16.mxu0 0
  %1903 = vmatpush2.bf16.msra.mxu0 %v266
  %1904 = vmatprep.mubr.bf16.mxu0 %v1827
  %1905 = vmatmul.mubr.bf16.gmra.mxu0 %v1826
  %v1906 = vpop.f32.mrf.mxu0
  %v1907 = vadd.f32 %v1867, %v1906
  %v1908 = vpop.f32.mrf.mxu0
  %v1909 = vpop.f32.mrf.mxu0
  %v1910 = vpop.f32.mrf.mxu0
  %1911 = vdwg.mxu0
  %v1912 = vmax.f32 %v1907, 0.0
  %v1913 = vpack.c.bf16 %v1912, %v1912
  %s1914 = scalar_lea.vmem %s3, 288
  %v1915 = vld [vmem:[%s1914] sm:$0xff]
  %v1916 = vld [vmem:[%s1914 + $0x8] sm:$0xff]
  %v1917 = vld [vmem:[%s1914 + $0x10] sm:$0xff]
  %v1918 = vld [vmem:[%s1914 + $0x18] sm:$0xff]
  %v1923 = vunpack.c.l.b16 %v1915
  %v1924 = vunpack.c.h.b16 %v1915
  %v1925 = vunpack.c.l.b16 %v1916
  %v1926 = vunpack.c.h.b16 %v1916
  %v1927 = vunpack.c.l.b16 %v1917
  %v1928 = vunpack.c.h.b16 %v1917
  %v1929 = vunpack.c.l.b16 %v1918
  %v1930 = vunpack.c.h.b16 %v1918
  %v1931 = vpack.c.b16 %v1925, %v1923
  %v1932 = vpack.c.b16 %v1926, %v1924
  %v1933 = vpack.c.b16 %v1929, %v1927
  %v1934 = vpack.c.b16 %v1930, %v1928
  %v1940 = vsel %vm516, %v1913, 0
  %1942 = vmatprep.subr.bf16.mxu0 0
  %1943 = vmatpush1.bf16.msra.mxu0 0
  %1944 = vmatprep.subr.bf16.mxu0 0
  %1945 = vmatpush1.bf16.msra.mxu0 0
  %1946 = vmatprep.subr.bf16.mxu0 0
  %1947 = vmatpush1.bf16.msra.mxu0 0
  %1948 = vmatprep.subr.bf16.mxu0 0
  %1949 = vmatpush1.bf16.msra.mxu0 0
  %1950 = vmatprep.subr.bf16.mxu0 0
  %1951 = vmatpush1.bf16.msra.mxu0 0
  %1952 = vmatprep.subr.bf16.mxu0 0
  %1953 = vmatpush1.bf16.msra.mxu0 0
  %1954 = vmatprep.subr.bf16.mxu0 %v1934
  %1955 = vmatpush1.bf16.msra.mxu0 %v1933
  %1956 = vmatprep.subr.bf16.mxu0 %v1932
  %1957 = vmatpush1.bf16.msra.mxu0 %v1931
  %1958 = vmatprep.subr.bf16.mxu0 0
  %1959 = vmatpush2.bf16.msra.mxu0 0
  %1960 = vmatprep.subr.bf16.mxu0 0
  %1961 = vmatpush2.bf16.msra.mxu0 0
  %1962 = vmatprep.subr.bf16.mxu0 0
  %1963 = vmatpush2.bf16.msra.mxu0 0
  %1964 = vmatprep.subr.bf16.mxu0 0
  %1965 = vmatpush2.bf16.msra.mxu0 0
  %1966 = vmatprep.subr.bf16.mxu0 0
  %1967 = vmatpush2.bf16.msra.mxu0 0
  %1968 = vmatprep.subr.bf16.mxu0 0
  %1969 = vmatpush2.bf16.msra.mxu0 0
  %1970 = vmatprep.subr.bf16.mxu0 0
  %1971 = vmatpush2.bf16.msra.mxu0 0
  %1972 = vmatprep.subr.bf16.mxu0 0
  %1973 = vmatpush2.bf16.msra.mxu0 0
  %1974 = vmatprep.mubr.bf16.mxu0 0
  %1975 = vmatmul.mubr.bf16.gmra.mxu0 %v1940
  %v1976 = vpop.f32.mrf.mxu0
  %v1977 = vadd.f32 0.0, %v1976
  %v1978 = vpop.f32.mrf.mxu0
  %v1979 = vadd.f32 0.0, %v1978
  %v1980 = vpop.f32.mrf.mxu0
  %v1981 = vpop.f32.mrf.mxu0
  %1982 = vdwg.mxu0
  %v1983 = vadd.f32 %v1813, %v1977
  %v1984 = vadd.f32 %v1814, %v1979
  %s1985 = scalar_lea.vmem %s0, 160
  %v1986 = vld [vmem:[%s1985] sm:$0xff]
  %v1987 = vld [vmem:[%s1985 + $0x8] sm:$0xff]
  %v1990 = vunpack.c.l.b16 %v1986
  %v1991 = vunpack.c.h.b16 %v1986
  %v1992 = vunpack.c.l.b16 %v1987
  %v1993 = vunpack.c.h.b16 %v1987
  %v1994 = vpack.c.b16 %v1990, %v1990
  %v1995 = vpack.c.b16 %v1991, %v1991
  %v1996 = vpack.c.b16 %v1992, %v1992
  %v1997 = vpack.c.b16 %v1993, %v1993
  %2002 = vmatprep.subr.bf16.mxu0 0
  %2003 = vmatpush1.bf16.msra.mxu0 %v249
  %2004 = vmatprep.subr.bf16.mxu0 0
  %2005 = vmatpush1.bf16.msra.mxu0 %v248
  %2006 = vmatprep.subr.bf16.mxu0 0
  %2007 = vmatpush1.bf16.msra.mxu0 %v247
  %2008 = vmatprep.subr.bf16.mxu0 0
  %2009 = vmatpush1.bf16.msra.mxu0 %v246
  %2010 = vmatprep.subr.bf16.mxu0 0
  %2011 = vmatpush1.bf16.msra.mxu0 %v245
  %2012 = vmatprep.subr.bf16.mxu0 0
  %2013 = vmatpush1.bf16.msra.mxu0 %v244
  %2014 = vmatprep.subr.bf16.mxu0 0
  %2015 = vmatpush1.bf16.msra.mxu0 %v243
  %2016 = vmatprep.subr.bf16.mxu0 0
  %2017 = vmatpush1.bf16.msra.mxu0 %v242
  %2018 = vmatprep.subr.bf16.mxu0 0
  %2019 = vmatpush2.bf16.msra.mxu0 %v257
  %2020 = vmatprep.subr.bf16.mxu0 0
  %2021 = vmatpush2.bf16.msra.mxu0 %v256
  %2022 = vmatprep.subr.bf16.mxu0 0
  %2023 = vmatpush2.bf16.msra.mxu0 %v255
  %2024 = vmatprep.subr.bf16.mxu0 0
  %2025 = vmatpush2.bf16.msra.mxu0 %v254
  %2026 = vmatprep.subr.bf16.mxu0 0
  %2027 = vmatpush2.bf16.msra.mxu0 %v253
  %2028 = vmatprep.subr.bf16.mxu0 0
  %2029 = vmatpush2.bf16.msra.mxu0 %v252
  %2030 = vmatprep.subr.bf16.mxu0 0
  %2031 = vmatpush2.bf16.msra.mxu0 %v251
  %2032 = vmatprep.subr.bf16.mxu0 0
  %2033 = vmatpush2.bf16.msra.mxu0 %v250
  %2034 = vmatprep.mubr.bf16.mxu0 %v1995
  %2035 = vmatmul.mubr.bf16.gmra.mxu0 %v1994
  %v2036 = vpop.f32.mrf.mxu0
  %v2037 = vadd.f32 %v98, %v2036
  %v2038 = vpop.f32.mrf.mxu0
  %v2039 = vpop.f32.mrf.mxu0
  %v2040 = vpop.f32.mrf.mxu0
  %2041 = vdwg.mxu0
  %2042 = vmatprep.subr.bf16.mxu0 0
  %2043 = vmatpush1.bf16.msra.mxu0 %v265
  %2044 = vmatprep.subr.bf16.mxu0 0
  %2045 = vmatpush1.bf16.msra.mxu0 %v264
  %2046 = vmatprep.subr.bf16.mxu0 0
  %2047 = vmatpush1.bf16.msra.mxu0 %v263
  %2048 = vmatprep.subr.bf16.mxu0 0
  %2049 = vmatpush1.bf16.msra.mxu0 %v262
  %2050 = vmatprep.subr.bf16.mxu0 0
  %2051 = vmatpush1.bf16.msra.mxu0 %v261
  %2052 = vmatprep.subr.bf16.mxu0 0
  %2053 = vmatpush1.bf16.msra.mxu0 %v260
  %2054 = vmatprep.subr.bf16.mxu0 0
  %2055 = vmatpush1.bf16.msra.mxu0 %v259
  %2056 = vmatprep.subr.bf16.mxu0 0
  %2057 = vmatpush1.bf16.msra.mxu0 %v258
  %2058 = vmatprep.subr.bf16.mxu0 0
  %2059 = vmatpush2.bf16.msra.mxu0 %v273
  %2060 = vmatprep.subr.bf16.mxu0 0
  %2061 = vmatpush2.bf16.msra.mxu0 %v272
  %2062 = vmatprep.subr.bf16.mxu0 0
  %2063 = vmatpush2.bf16.msra.mxu0 %v271
  %2064 = vmatprep.subr.bf16.mxu0 0
  %2065 = vmatpush2.bf16.msra.mxu0 %v270
  %2066 = vmatprep.subr.bf16.mxu0 0
  %2067 = vmatpush2.bf16.msra.mxu0 %v269
  %2068 = vmatprep.subr.bf16.mxu0 0
  %2069 = vmatpush2.bf16.msra.mxu0 %v268
  %2070 = vmatprep.subr.bf16.mxu0 0
  %2071 = vmatpush2.bf16.msra.mxu0 %v267
  %2072 = vmatprep.subr.bf16.mxu0 0
  %2073 = vmatpush2.bf16.msra.mxu0 %v266
  %2074 = vmatprep.mubr.bf16.mxu0 %v1997
  %2075 = vmatmul.mubr.bf16.gmra.mxu0 %v1996
  %v2076 = vpop.f32.mrf.mxu0
  %v2077 = vadd.f32 %v2037, %v2076
  %v2078 = vpop.f32.mrf.mxu0
  %v2079 = vpop.f32.mrf.mxu0
  %v2080 = vpop.f32.mrf.mxu0
  %2081 = vdwg.mxu0
  %v2082 = vmax.f32 %v2077, 0.0
  %v2083 = vpack.c.bf16 %v2082, %v2082
  %s2084 = scalar_lea.vmem %s3, 320
  %v2085 = vld [vmem:[%s2084] sm:$0xff]
  %v2086 = vld [vmem:[%s2084 + $0x8] sm:$0xff]
  %v2087 = vld [vmem:[%s2084 + $0x10] sm:$0xff]
  %v2088 = vld [vmem:[%s2084 + $0x18] sm:$0xff]
  %v2093 = vunpack.c.l.b16 %v2085
  %v2094 = vunpack.c.h.b16 %v2085
  %v2095 = vunpack.c.l.b16 %v2086
  %v2096 = vunpack.c.h.b16 %v2086
  %v2097 = vunpack.c.l.b16 %v2087
  %v2098 = vunpack.c.h.b16 %v2087
  %v2099 = vunpack.c.l.b16 %v2088
  %v2100 = vunpack.c.h.b16 %v2088
  %v2101 = vpack.c.b16 %v2095, %v2093
  %v2102 = vpack.c.b16 %v2096, %v2094
  %v2103 = vpack.c.b16 %v2099, %v2097
  %v2104 = vpack.c.b16 %v2100, %v2098
  %v2110 = vsel %vm516, %v2083, 0
  %2112 = vmatprep.subr.bf16.mxu0 0
  %2113 = vmatpush1.bf16.msra.mxu0 0
  %2114 = vmatprep.subr.bf16.mxu0 0
  %2115 = vmatpush1.bf16.msra.mxu0 0
  %2116 = vmatprep.subr.bf16.mxu0 0
  %2117 = vmatpush1.bf16.msra.mxu0 0
  %2118 = vmatprep.subr.bf16.mxu0 0
  %2119 = vmatpush1.bf16.msra.mxu0 0
  %2120 = vmatprep.subr.bf16.mxu0 0
  %2121 = vmatpush1.bf16.msra.mxu0 0
  %2122 = vmatprep.subr.bf16.mxu0 0
  %2123 = vmatpush1.bf16.msra.mxu0 0
  %2124 = vmatprep.subr.bf16.mxu0 %v2104
  %2125 = vmatpush1.bf16.msra.mxu0 %v2103
  %2126 = vmatprep.subr.bf16.mxu0 %v2102
  %2127 = vmatpush1.bf16.msra.mxu0 %v2101
  %2128 = vmatprep.subr.bf16.mxu0 0
  %2129 = vmatpush2.bf16.msra.mxu0 0
  %2130 = vmatprep.subr.bf16.mxu0 0
  %2131 = vmatpush2.bf16.msra.mxu0 0
  %2132 = vmatprep.subr.bf16.mxu0 0
  %2133 = vmatpush2.bf16.msra.mxu0 0
  %2134 = vmatprep.subr.bf16.mxu0 0
  %2135 = vmatpush2.bf16.msra.mxu0 0
  %2136 = vmatprep.subr.bf16.mxu0 0
  %2137 = vmatpush2.bf16.msra.mxu0 0
  %2138 = vmatprep.subr.bf16.mxu0 0
  %2139 = vmatpush2.bf16.msra.mxu0 0
  %2140 = vmatprep.subr.bf16.mxu0 0
  %2141 = vmatpush2.bf16.msra.mxu0 0
  %2142 = vmatprep.subr.bf16.mxu0 0
  %2143 = vmatpush2.bf16.msra.mxu0 0
  %2144 = vmatprep.mubr.bf16.mxu0 0
  %2145 = vmatmul.mubr.bf16.gmra.mxu0 %v2110
  %v2146 = vpop.f32.mrf.mxu0
  %v2147 = vadd.f32 0.0, %v2146
  %v2148 = vpop.f32.mrf.mxu0
  %v2149 = vadd.f32 0.0, %v2148
  %v2150 = vpop.f32.mrf.mxu0
  %v2151 = vpop.f32.mrf.mxu0
  %2152 = vdwg.mxu0
  %v2153 = vadd.f32 %v1983, %v2147
  %v2154 = vadd.f32 %v1984, %v2149
  %s2155 = scalar_lea.vmem %s0, 176
  %v2156 = vld [vmem:[%s2155] sm:$0xff]
  %v2157 = vld [vmem:[%s2155 + $0x8] sm:$0xff]
  %v2160 = vunpack.c.l.b16 %v2156
  %v2161 = vunpack.c.h.b16 %v2156
  %v2162 = vunpack.c.l.b16 %v2157
  %v2163 = vunpack.c.h.b16 %v2157
  %v2164 = vpack.c.b16 %v2160, %v2160
  %v2165 = vpack.c.b16 %v2161, %v2161
  %v2166 = vpack.c.b16 %v2162, %v2162
  %v2167 = vpack.c.b16 %v2163, %v2163
  %2172 = vmatprep.subr.bf16.mxu0 0
  %2173 = vmatpush1.bf16.msra.mxu0 %v249
  %2174 = vmatprep.subr.bf16.mxu0 0
  %2175 = vmatpush1.bf16.msra.mxu0 %v248
  %2176 = vmatprep.subr.bf16.mxu0 0
  %2177 = vmatpush1.bf16.msra.mxu0 %v247
  %2178 = vmatprep.subr.bf16.mxu0 0
  %2179 = vmatpush1.bf16.msra.mxu0 %v246
  %2180 = vmatprep.subr.bf16.mxu0 0
  %2181 = vmatpush1.bf16.msra.mxu0 %v245
  %2182 = vmatprep.subr.bf16.mxu0 0
  %2183 = vmatpush1.bf16.msra.mxu0 %v244
  %2184 = vmatprep.subr.bf16.mxu0 0
  %2185 = vmatpush1.bf16.msra.mxu0 %v243
  %2186 = vmatprep.subr.bf16.mxu0 0
  %2187 = vmatpush1.bf16.msra.mxu0 %v242
  %2188 = vmatprep.subr.bf16.mxu0 0
  %2189 = vmatpush2.bf16.msra.mxu0 %v257
  %2190 = vmatprep.subr.bf16.mxu0 0
  %2191 = vmatpush2.bf16.msra.mxu0 %v256
  %2192 = vmatprep.subr.bf16.mxu0 0
  %2193 = vmatpush2.bf16.msra.mxu0 %v255
  %2194 = vmatprep.subr.bf16.mxu0 0
  %2195 = vmatpush2.bf16.msra.mxu0 %v254
  %2196 = vmatprep.subr.bf16.mxu0 0
  %2197 = vmatpush2.bf16.msra.mxu0 %v253
  %2198 = vmatprep.subr.bf16.mxu0 0
  %2199 = vmatpush2.bf16.msra.mxu0 %v252
  %2200 = vmatprep.subr.bf16.mxu0 0
  %2201 = vmatpush2.bf16.msra.mxu0 %v251
  %2202 = vmatprep.subr.bf16.mxu0 0
  %2203 = vmatpush2.bf16.msra.mxu0 %v250
  %2204 = vmatprep.mubr.bf16.mxu0 %v2165
  %2205 = vmatmul.mubr.bf16.gmra.mxu0 %v2164
  %v2206 = vpop.f32.mrf.mxu0
  %v2207 = vadd.f32 %v98, %v2206
  %v2208 = vpop.f32.mrf.mxu0
  %v2209 = vpop.f32.mrf.mxu0
  %v2210 = vpop.f32.mrf.mxu0
  %2211 = vdwg.mxu0
  %2212 = vmatprep.subr.bf16.mxu0 0
  %2213 = vmatpush1.bf16.msra.mxu0 %v265
  %2214 = vmatprep.subr.bf16.mxu0 0
  %2215 = vmatpush1.bf16.msra.mxu0 %v264
  %2216 = vmatprep.subr.bf16.mxu0 0
  %2217 = vmatpush1.bf16.msra.mxu0 %v263
  %2218 = vmatprep.subr.bf16.mxu0 0
  %2219 = vmatpush1.bf16.msra.mxu0 %v262
  %2220 = vmatprep.subr.bf16.mxu0 0
  %2221 = vmatpush1.bf16.msra.mxu0 %v261
  %2222 = vmatprep.subr.bf16.mxu0 0
  %2223 = vmatpush1.bf16.msra.mxu0 %v260
  %2224 = vmatprep.subr.bf16.mxu0 0
  %2225 = vmatpush1.bf16.msra.mxu0 %v259
  %2226 = vmatprep.subr.bf16.mxu0 0
  %2227 = vmatpush1.bf16.msra.mxu0 %v258
  %2228 = vmatprep.subr.bf16.mxu0 0
  %2229 = vmatpush2.bf16.msra.mxu0 %v273
  %2230 = vmatprep.subr.bf16.mxu0 0
  %2231 = vmatpush2.bf16.msra.mxu0 %v272
  %2232 = vmatprep.subr.bf16.mxu0 0
  %2233 = vmatpush2.bf16.msra.mxu0 %v271
  %2234 = vmatprep.subr.bf16.mxu0 0
  %2235 = vmatpush2.bf16.msra.mxu0 %v270
  %2236 = vmatprep.subr.bf16.mxu0 0
  %2237 = vmatpush2.bf16.msra.mxu0 %v269
  %2238 = vmatprep.subr.bf16.mxu0 0
  %2239 = vmatpush2.bf16.msra.mxu0 %v268
  %2240 = vmatprep.subr.bf16.mxu0 0
  %2241 = vmatpush2.bf16.msra.mxu0 %v267
  %2242 = vmatprep.subr.bf16.mxu0 0
  %2243 = vmatpush2.bf16.msra.mxu0 %v266
  %2244 = vmatprep.mubr.bf16.mxu0 %v2167
  %2245 = vmatmul.mubr.bf16.gmra.mxu0 %v2166
  %v2246 = vpop.f32.mrf.mxu0
  %v2247 = vadd.f32 %v2207, %v2246
  %v2248 = vpop.f32.mrf.mxu0
  %v2249 = vpop.f32.mrf.mxu0
  %v2250 = vpop.f32.mrf.mxu0
  %2251 = vdwg.mxu0
  %v2252 = vmax.f32 %v2247, 0.0
  %v2253 = vpack.c.bf16 %v2252, %v2252
  %s2254 = scalar_lea.vmem %s3, 352
  %v2255 = vld [vmem:[%s2254] sm:$0xff]
  %v2256 = vld [vmem:[%s2254 + $0x8] sm:$0xff]
  %v2257 = vld [vmem:[%s2254 + $0x10] sm:$0xff]
  %v2258 = vld [vmem:[%s2254 + $0x18] sm:$0xff]
  %v2263 = vunpack.c.l.b16 %v2255
  %v2264 = vunpack.c.h.b16 %v2255
  %v2265 = vunpack.c.l.b16 %v2256
  %v2266 = vunpack.c.h.b16 %v2256
  %v2267 = vunpack.c.l.b16 %v2257
  %v2268 = vunpack.c.h.b16 %v2257
  %v2269 = vunpack.c.l.b16 %v2258
  %v2270 = vunpack.c.h.b16 %v2258
  %v2271 = vpack.c.b16 %v2265, %v2263
  %v2272 = vpack.c.b16 %v2266, %v2264
  %v2273 = vpack.c.b16 %v2269, %v2267
  %v2274 = vpack.c.b16 %v2270, %v2268
  %v2280 = vsel %vm516, %v2253, 0
  %2282 = vmatprep.subr.bf16.mxu0 0
  %2283 = vmatpush1.bf16.msra.mxu0 0
  %2284 = vmatprep.subr.bf16.mxu0 0
  %2285 = vmatpush1.bf16.msra.mxu0 0
  %2286 = vmatprep.subr.bf16.mxu0 0
  %2287 = vmatpush1.bf16.msra.mxu0 0
  %2288 = vmatprep.subr.bf16.mxu0 0
  %2289 = vmatpush1.bf16.msra.mxu0 0
  %2290 = vmatprep.subr.bf16.mxu0 0
  %2291 = vmatpush1.bf16.msra.mxu0 0
  %2292 = vmatprep.subr.bf16.mxu0 0
  %2293 = vmatpush1.bf16.msra.mxu0 0
  %2294 = vmatprep.subr.bf16.mxu0 %v2274
  %2295 = vmatpush1.bf16.msra.mxu0 %v2273
  %2296 = vmatprep.subr.bf16.mxu0 %v2272
  %2297 = vmatpush1.bf16.msra.mxu0 %v2271
  %2298 = vmatprep.subr.bf16.mxu0 0
  %2299 = vmatpush2.bf16.msra.mxu0 0
  %2300 = vmatprep.subr.bf16.mxu0 0
  %2301 = vmatpush2.bf16.msra.mxu0 0
  %2302 = vmatprep.subr.bf16.mxu0 0
  %2303 = vmatpush2.bf16.msra.mxu0 0
  %2304 = vmatprep.subr.bf16.mxu0 0
  %2305 = vmatpush2.bf16.msra.mxu0 0
  %2306 = vmatprep.subr.bf16.mxu0 0
  %2307 = vmatpush2.bf16.msra.mxu0 0
  %2308 = vmatprep.subr.bf16.mxu0 0
  %2309 = vmatpush2.bf16.msra.mxu0 0
  %2310 = vmatprep.subr.bf16.mxu0 0
  %2311 = vmatpush2.bf16.msra.mxu0 0
  %2312 = vmatprep.subr.bf16.mxu0 0
  %2313 = vmatpush2.bf16.msra.mxu0 0
  %2314 = vmatprep.mubr.bf16.mxu0 0
  %2315 = vmatmul.mubr.bf16.gmra.mxu0 %v2280
  %v2316 = vpop.f32.mrf.mxu0
  %v2317 = vadd.f32 0.0, %v2316
  %v2318 = vpop.f32.mrf.mxu0
  %v2319 = vadd.f32 0.0, %v2318
  %v2320 = vpop.f32.mrf.mxu0
  %v2321 = vpop.f32.mrf.mxu0
  %2322 = vdwg.mxu0
  %v2323 = vadd.f32 %v2153, %v2317
  %v2324 = vadd.f32 %v2154, %v2319
  %s2325 = scalar_lea.vmem %s0, 192
  %v2326 = vld [vmem:[%s2325] sm:$0xff]
  %v2327 = vld [vmem:[%s2325 + $0x8] sm:$0xff]
  %v2330 = vunpack.c.l.b16 %v2326
  %v2331 = vunpack.c.h.b16 %v2326
  %v2332 = vunpack.c.l.b16 %v2327
  %v2333 = vunpack.c.h.b16 %v2327
  %v2334 = vpack.c.b16 %v2330, %v2330
  %v2335 = vpack.c.b16 %v2331, %v2331
  %v2336 = vpack.c.b16 %v2332, %v2332
  %v2337 = vpack.c.b16 %v2333, %v2333
  %2342 = vmatprep.subr.bf16.mxu0 0
  %2343 = vmatpush1.bf16.msra.mxu0 %v249
  %2344 = vmatprep.subr.bf16.mxu0 0
  %2345 = vmatpush1.bf16.msra.mxu0 %v248
  %2346 = vmatprep.subr.bf16.mxu0 0
  %2347 = vmatpush1.bf16.msra.mxu0 %v247
  %2348 = vmatprep.subr.bf16.mxu0 0
  %2349 = vmatpush1.bf16.msra.mxu0 %v246
  %2350 = vmatprep.subr.bf16.mxu0 0
  %2351 = vmatpush1.bf16.msra.mxu0 %v245
  %2352 = vmatprep.subr.bf16.mxu0 0
  %2353 = vmatpush1.bf16.msra.mxu0 %v244
  %2354 = vmatprep.subr.bf16.mxu0 0
  %2355 = vmatpush1.bf16.msra.mxu0 %v243
  %2356 = vmatprep.subr.bf16.mxu0 0
  %2357 = vmatpush1.bf16.msra.mxu0 %v242
  %2358 = vmatprep.subr.bf16.mxu0 0
  %2359 = vmatpush2.bf16.msra.mxu0 %v257
  %2360 = vmatprep.subr.bf16.mxu0 0
  %2361 = vmatpush2.bf16.msra.mxu0 %v256
  %2362 = vmatprep.subr.bf16.mxu0 0
  %2363 = vmatpush2.bf16.msra.mxu0 %v255
  %2364 = vmatprep.subr.bf16.mxu0 0
  %2365 = vmatpush2.bf16.msra.mxu0 %v254
  %2366 = vmatprep.subr.bf16.mxu0 0
  %2367 = vmatpush2.bf16.msra.mxu0 %v253
  %2368 = vmatprep.subr.bf16.mxu0 0
  %2369 = vmatpush2.bf16.msra.mxu0 %v252
  %2370 = vmatprep.subr.bf16.mxu0 0
  %2371 = vmatpush2.bf16.msra.mxu0 %v251
  %2372 = vmatprep.subr.bf16.mxu0 0
  %2373 = vmatpush2.bf16.msra.mxu0 %v250
  %2374 = vmatprep.mubr.bf16.mxu0 %v2335
  %2375 = vmatmul.mubr.bf16.gmra.mxu0 %v2334
  %v2376 = vpop.f32.mrf.mxu0
  %v2377 = vadd.f32 %v98, %v2376
  %v2378 = vpop.f32.mrf.mxu0
  %v2379 = vpop.f32.mrf.mxu0
  %v2380 = vpop.f32.mrf.mxu0
  %2381 = vdwg.mxu0
  %2382 = vmatprep.subr.bf16.mxu0 0
  %2383 = vmatpush1.bf16.msra.mxu0 %v265
  %2384 = vmatprep.subr.bf16.mxu0 0
  %2385 = vmatpush1.bf16.msra.mxu0 %v264
  %2386 = vmatprep.subr.bf16.mxu0 0
  %2387 = vmatpush1.bf16.msra.mxu0 %v263
  %2388 = vmatprep.subr.bf16.mxu0 0
  %2389 = vmatpush1.bf16.msra.mxu0 %v262
  %2390 = vmatprep.subr.bf16.mxu0 0
  %2391 = vmatpush1.bf16.msra.mxu0 %v261
  %2392 = vmatprep.subr.bf16.mxu0 0
  %2393 = vmatpush1.bf16.msra.mxu0 %v260
  %2394 = vmatprep.subr.bf16.mxu0 0
  %2395 = vmatpush1.bf16.msra.mxu0 %v259
  %2396 = vmatprep.subr.bf16.mxu0 0
  %2397 = vmatpush1.bf16.msra.mxu0 %v258
  %2398 = vmatprep.subr.bf16.mxu0 0
  %2399 = vmatpush2.bf16.msra.mxu0 %v273
  %2400 = vmatprep.subr.bf16.mxu0 0
  %2401 = vmatpush2.bf16.msra.mxu0 %v272
  %2402 = vmatprep.subr.bf16.mxu0 0
  %2403 = vmatpush2.bf16.msra.mxu0 %v271
  %2404 = vmatprep.subr.bf16.mxu0 0
  %2405 = vmatpush2.bf16.msra.mxu0 %v270
  %2406 = vmatprep.subr.bf16.mxu0 0
  %2407 = vmatpush2.bf16.msra.mxu0 %v269
  %2408 = vmatprep.subr.bf16.mxu0 0
  %2409 = vmatpush2.bf16.msra.mxu0 %v268
  %2410 = vmatprep.subr.bf16.mxu0 0
  %2411 = vmatpush2.bf16.msra.mxu0 %v267
  %2412 = vmatprep.subr.bf16.mxu0 0
  %2413 = vmatpush2.bf16.msra.mxu0 %v266
  %2414 = vmatprep.mubr.bf16.mxu0 %v2337
  %2415 = vmatmul.mubr.bf16.gmra.mxu0 %v2336
  %v2416 = vpop.f32.mrf.mxu0
  %v2417 = vadd.f32 %v2377, %v2416
  %v2418 = vpop.f32.mrf.mxu0
  %v2419 = vpop.f32.mrf.mxu0
  %v2420 = vpop.f32.mrf.mxu0
  %2421 = vdwg.mxu0
  %v2422 = vmax.f32 %v2417, 0.0
  %v2423 = vpack.c.bf16 %v2422, %v2422
  %s2424 = scalar_lea.vmem %s3, 384
  %v2425 = vld [vmem:[%s2424] sm:$0xff]
  %v2426 = vld [vmem:[%s2424 + $0x8] sm:$0xff]
  %v2427 = vld [vmem:[%s2424 + $0x10] sm:$0xff]
  %v2428 = vld [vmem:[%s2424 + $0x18] sm:$0xff]
  %v2433 = vunpack.c.l.b16 %v2425
  %v2434 = vunpack.c.h.b16 %v2425
  %v2435 = vunpack.c.l.b16 %v2426
  %v2436 = vunpack.c.h.b16 %v2426
  %v2437 = vunpack.c.l.b16 %v2427
  %v2438 = vunpack.c.h.b16 %v2427
  %v2439 = vunpack.c.l.b16 %v2428
  %v2440 = vunpack.c.h.b16 %v2428
  %v2441 = vpack.c.b16 %v2435, %v2433
  %v2442 = vpack.c.b16 %v2436, %v2434
  %v2443 = vpack.c.b16 %v2439, %v2437
  %v2444 = vpack.c.b16 %v2440, %v2438
  %v2450 = vsel %vm516, %v2423, 0
  %2452 = vmatprep.subr.bf16.mxu0 0
  %2453 = vmatpush1.bf16.msra.mxu0 0
  %2454 = vmatprep.subr.bf16.mxu0 0
  %2455 = vmatpush1.bf16.msra.mxu0 0
  %2456 = vmatprep.subr.bf16.mxu0 0
  %2457 = vmatpush1.bf16.msra.mxu0 0
  %2458 = vmatprep.subr.bf16.mxu0 0
  %2459 = vmatpush1.bf16.msra.mxu0 0
  %2460 = vmatprep.subr.bf16.mxu0 0
  %2461 = vmatpush1.bf16.msra.mxu0 0
  %2462 = vmatprep.subr.bf16.mxu0 0
  %2463 = vmatpush1.bf16.msra.mxu0 0
  %2464 = vmatprep.subr.bf16.mxu0 %v2444
  %2465 = vmatpush1.bf16.msra.mxu0 %v2443
  %2466 = vmatprep.subr.bf16.mxu0 %v2442
  %2467 = vmatpush1.bf16.msra.mxu0 %v2441
  %2468 = vmatprep.subr.bf16.mxu0 0
  %2469 = vmatpush2.bf16.msra.mxu0 0
  %2470 = vmatprep.subr.bf16.mxu0 0
  %2471 = vmatpush2.bf16.msra.mxu0 0
  %2472 = vmatprep.subr.bf16.mxu0 0
  %2473 = vmatpush2.bf16.msra.mxu0 0
  %2474 = vmatprep.subr.bf16.mxu0 0
  %2475 = vmatpush2.bf16.msra.mxu0 0
  %2476 = vmatprep.subr.bf16.mxu0 0
  %2477 = vmatpush2.bf16.msra.mxu0 0
  %2478 = vmatprep.subr.bf16.mxu0 0
  %2479 = vmatpush2.bf16.msra.mxu0 0
  %2480 = vmatprep.subr.bf16.mxu0 0
  %2481 = vmatpush2.bf16.msra.mxu0 0
  %2482 = vmatprep.subr.bf16.mxu0 0
  %2483 = vmatpush2.bf16.msra.mxu0 0
  %2484 = vmatprep.mubr.bf16.mxu0 0
  %2485 = vmatmul.mubr.bf16.gmra.mxu0 %v2450
  %v2486 = vpop.f32.mrf.mxu0
  %v2487 = vadd.f32 0.0, %v2486
  %v2488 = vpop.f32.mrf.mxu0
  %v2489 = vadd.f32 0.0, %v2488
  %v2490 = vpop.f32.mrf.mxu0
  %v2491 = vpop.f32.mrf.mxu0
  %2492 = vdwg.mxu0
  %v2493 = vadd.f32 %v2323, %v2487
  %v2494 = vadd.f32 %v2324, %v2489
  %s2495 = scalar_lea.vmem %s0, 208
  %v2496 = vld [vmem:[%s2495] sm:$0xff]
  %v2497 = vld [vmem:[%s2495 + $0x8] sm:$0xff]
  %v2500 = vunpack.c.l.b16 %v2496
  %v2501 = vunpack.c.h.b16 %v2496
  %v2502 = vunpack.c.l.b16 %v2497
  %v2503 = vunpack.c.h.b16 %v2497
  %v2504 = vpack.c.b16 %v2500, %v2500
  %v2505 = vpack.c.b16 %v2501, %v2501
  %v2506 = vpack.c.b16 %v2502, %v2502
  %v2507 = vpack.c.b16 %v2503, %v2503
  %2512 = vmatprep.subr.bf16.mxu0 0
  %2513 = vmatpush1.bf16.msra.mxu0 %v249
  %2514 = vmatprep.subr.bf16.mxu0 0
  %2515 = vmatpush1.bf16.msra.mxu0 %v248
  %2516 = vmatprep.subr.bf16.mxu0 0
  %2517 = vmatpush1.bf16.msra.mxu0 %v247
  %2518 = vmatprep.subr.bf16.mxu0 0
  %2519 = vmatpush1.bf16.msra.mxu0 %v246
  %2520 = vmatprep.subr.bf16.mxu0 0
  %2521 = vmatpush1.bf16.msra.mxu0 %v245
  %2522 = vmatprep.subr.bf16.mxu0 0
  %2523 = vmatpush1.bf16.msra.mxu0 %v244
  %2524 = vmatprep.subr.bf16.mxu0 0
  %2525 = vmatpush1.bf16.msra.mxu0 %v243
  %2526 = vmatprep.subr.bf16.mxu0 0
  %2527 = vmatpush1.bf16.msra.mxu0 %v242
  %2528 = vmatprep.subr.bf16.mxu0 0
  %2529 = vmatpush2.bf16.msra.mxu0 %v257
  %2530 = vmatprep.subr.bf16.mxu0 0
  %2531 = vmatpush2.bf16.msra.mxu0 %v256
  %2532 = vmatprep.subr.bf16.mxu0 0
  %2533 = vmatpush2.bf16.msra.mxu0 %v255
  %2534 = vmatprep.subr.bf16.mxu0 0
  %2535 = vmatpush2.bf16.msra.mxu0 %v254
  %2536 = vmatprep.subr.bf16.mxu0 0
  %2537 = vmatpush2.bf16.msra.mxu0 %v253
  %2538 = vmatprep.subr.bf16.mxu0 0
  %2539 = vmatpush2.bf16.msra.mxu0 %v252
  %2540 = vmatprep.subr.bf16.mxu0 0
  %2541 = vmatpush2.bf16.msra.mxu0 %v251
  %2542 = vmatprep.subr.bf16.mxu0 0
  %2543 = vmatpush2.bf16.msra.mxu0 %v250
  %2544 = vmatprep.mubr.bf16.mxu0 %v2505
  %2545 = vmatmul.mubr.bf16.gmra.mxu0 %v2504
  %v2546 = vpop.f32.mrf.mxu0
  %v2547 = vadd.f32 %v98, %v2546
  %v2548 = vpop.f32.mrf.mxu0
  %v2549 = vpop.f32.mrf.mxu0
  %v2550 = vpop.f32.mrf.mxu0
  %2551 = vdwg.mxu0
  %2552 = vmatprep.subr.bf16.mxu0 0
  %2553 = vmatpush1.bf16.msra.mxu0 %v265
  %2554 = vmatprep.subr.bf16.mxu0 0
  %2555 = vmatpush1.bf16.msra.mxu0 %v264
  %2556 = vmatprep.subr.bf16.mxu0 0
  %2557 = vmatpush1.bf16.msra.mxu0 %v263
  %2558 = vmatprep.subr.bf16.mxu0 0
  %2559 = vmatpush1.bf16.msra.mxu0 %v262
  %2560 = vmatprep.subr.bf16.mxu0 0
  %2561 = vmatpush1.bf16.msra.mxu0 %v261
  %2562 = vmatprep.subr.bf16.mxu0 0
  %2563 = vmatpush1.bf16.msra.mxu0 %v260
  %2564 = vmatprep.subr.bf16.mxu0 0
  %2565 = vmatpush1.bf16.msra.mxu0 %v259
  %2566 = vmatprep.subr.bf16.mxu0 0
  %2567 = vmatpush1.bf16.msra.mxu0 %v258
  %2568 = vmatprep.subr.bf16.mxu0 0
  %2569 = vmatpush2.bf16.msra.mxu0 %v273
  %2570 = vmatprep.subr.bf16.mxu0 0
  %2571 = vmatpush2.bf16.msra.mxu0 %v272
  %2572 = vmatprep.subr.bf16.mxu0 0
  %2573 = vmatpush2.bf16.msra.mxu0 %v271
  %2574 = vmatprep.subr.bf16.mxu0 0
  %2575 = vmatpush2.bf16.msra.mxu0 %v270
  %2576 = vmatprep.subr.bf16.mxu0 0
  %2577 = vmatpush2.bf16.msra.mxu0 %v269
  %2578 = vmatprep.subr.bf16.mxu0 0
  %2579 = vmatpush2.bf16.msra.mxu0 %v268
  %2580 = vmatprep.subr.bf16.mxu0 0
  %2581 = vmatpush2.bf16.msra.mxu0 %v267
  %2582 = vmatprep.subr.bf16.mxu0 0
  %2583 = vmatpush2.bf16.msra.mxu0 %v266
  %2584 = vmatprep.mubr.bf16.mxu0 %v2507
  %2585 = vmatmul.mubr.bf16.gmra.mxu0 %v2506
  %v2586 = vpop.f32.mrf.mxu0
  %v2587 = vadd.f32 %v2547, %v2586
  %v2588 = vpop.f32.mrf.mxu0
  %v2589 = vpop.f32.mrf.mxu0
  %v2590 = vpop.f32.mrf.mxu0
  %2591 = vdwg.mxu0
  %v2592 = vmax.f32 %v2587, 0.0
  %v2593 = vpack.c.bf16 %v2592, %v2592
  %s2594 = scalar_lea.vmem %s3, 416
  %v2595 = vld [vmem:[%s2594] sm:$0xff]
  %v2596 = vld [vmem:[%s2594 + $0x8] sm:$0xff]
  %v2597 = vld [vmem:[%s2594 + $0x10] sm:$0xff]
  %v2598 = vld [vmem:[%s2594 + $0x18] sm:$0xff]
  %v2603 = vunpack.c.l.b16 %v2595
  %v2604 = vunpack.c.h.b16 %v2595
  %v2605 = vunpack.c.l.b16 %v2596
  %v2606 = vunpack.c.h.b16 %v2596
  %v2607 = vunpack.c.l.b16 %v2597
  %v2608 = vunpack.c.h.b16 %v2597
  %v2609 = vunpack.c.l.b16 %v2598
  %v2610 = vunpack.c.h.b16 %v2598
  %v2611 = vpack.c.b16 %v2605, %v2603
  %v2612 = vpack.c.b16 %v2606, %v2604
  %v2613 = vpack.c.b16 %v2609, %v2607
  %v2614 = vpack.c.b16 %v2610, %v2608
  %v2620 = vsel %vm516, %v2593, 0
  %2622 = vmatprep.subr.bf16.mxu0 0
  %2623 = vmatpush1.bf16.msra.mxu0 0
  %2624 = vmatprep.subr.bf16.mxu0 0
  %2625 = vmatpush1.bf16.msra.mxu0 0
  %2626 = vmatprep.subr.bf16.mxu0 0
  %2627 = vmatpush1.bf16.msra.mxu0 0
  %2628 = vmatprep.subr.bf16.mxu0 0
  %2629 = vmatpush1.bf16.msra.mxu0 0
  %2630 = vmatprep.subr.bf16.mxu0 0
  %2631 = vmatpush1.bf16.msra.mxu0 0
  %2632 = vmatprep.subr.bf16.mxu0 0
  %2633 = vmatpush1.bf16.msra.mxu0 0
  %2634 = vmatprep.subr.bf16.mxu0 %v2614
  %2635 = vmatpush1.bf16.msra.mxu0 %v2613
  %2636 = vmatprep.subr.bf16.mxu0 %v2612
  %2637 = vmatpush1.bf16.msra.mxu0 %v2611
  %2638 = vmatprep.subr.bf16.mxu0 0
  %2639 = vmatpush2.bf16.msra.mxu0 0
  %2640 = vmatprep.subr.bf16.mxu0 0
  %2641 = vmatpush2.bf16.msra.mxu0 0
  %2642 = vmatprep.subr.bf16.mxu0 0
  %2643 = vmatpush2.bf16.msra.mxu0 0
  %2644 = vmatprep.subr.bf16.mxu0 0
  %2645 = vmatpush2.bf16.msra.mxu0 0
  %2646 = vmatprep.subr.bf16.mxu0 0
  %2647 = vmatpush2.bf16.msra.mxu0 0
  %2648 = vmatprep.subr.bf16.mxu0 0
  %2649 = vmatpush2.bf16.msra.mxu0 0
  %2650 = vmatprep.subr.bf16.mxu0 0
  %2651 = vmatpush2.bf16.msra.mxu0 0
  %2652 = vmatprep.subr.bf16.mxu0 0
  %2653 = vmatpush2.bf16.msra.mxu0 0
  %2654 = vmatprep.mubr.bf16.mxu0 0
  %2655 = vmatmul.mubr.bf16.gmra.mxu0 %v2620
  %v2656 = vpop.f32.mrf.mxu0
  %v2657 = vadd.f32 0.0, %v2656
  %v2658 = vpop.f32.mrf.mxu0
  %v2659 = vadd.f32 0.0, %v2658
  %v2660 = vpop.f32.mrf.mxu0
  %v2661 = vpop.f32.mrf.mxu0
  %2662 = vdwg.mxu0
  %v2663 = vadd.f32 %v2493, %v2657
  %v2664 = vadd.f32 %v2494, %v2659
  %s2665 = scalar_lea.vmem %s0, 224
  %v2666 = vld [vmem:[%s2665] sm:$0xff]
  %v2667 = vld [vmem:[%s2665 + $0x8] sm:$0xff]
  %v2670 = vunpack.c.l.b16 %v2666
  %v2671 = vunpack.c.h.b16 %v2666
  %v2672 = vunpack.c.l.b16 %v2667
  %v2673 = vunpack.c.h.b16 %v2667
  %v2674 = vpack.c.b16 %v2670, %v2670
  %v2675 = vpack.c.b16 %v2671, %v2671
  %v2676 = vpack.c.b16 %v2672, %v2672
  %v2677 = vpack.c.b16 %v2673, %v2673
  %2682 = vmatprep.subr.bf16.mxu0 0
  %2683 = vmatpush1.bf16.msra.mxu0 %v249
  %2684 = vmatprep.subr.bf16.mxu0 0
  %2685 = vmatpush1.bf16.msra.mxu0 %v248
  %2686 = vmatprep.subr.bf16.mxu0 0
  %2687 = vmatpush1.bf16.msra.mxu0 %v247
  %2688 = vmatprep.subr.bf16.mxu0 0
  %2689 = vmatpush1.bf16.msra.mxu0 %v246
  %2690 = vmatprep.subr.bf16.mxu0 0
  %2691 = vmatpush1.bf16.msra.mxu0 %v245
  %2692 = vmatprep.subr.bf16.mxu0 0
  %2693 = vmatpush1.bf16.msra.mxu0 %v244
  %2694 = vmatprep.subr.bf16.mxu0 0
  %2695 = vmatpush1.bf16.msra.mxu0 %v243
  %2696 = vmatprep.subr.bf16.mxu0 0
  %2697 = vmatpush1.bf16.msra.mxu0 %v242
  %2698 = vmatprep.subr.bf16.mxu0 0
  %2699 = vmatpush2.bf16.msra.mxu0 %v257
  %2700 = vmatprep.subr.bf16.mxu0 0
  %2701 = vmatpush2.bf16.msra.mxu0 %v256
  %2702 = vmatprep.subr.bf16.mxu0 0
  %2703 = vmatpush2.bf16.msra.mxu0 %v255
  %2704 = vmatprep.subr.bf16.mxu0 0
  %2705 = vmatpush2.bf16.msra.mxu0 %v254
  %2706 = vmatprep.subr.bf16.mxu0 0
  %2707 = vmatpush2.bf16.msra.mxu0 %v253
  %2708 = vmatprep.subr.bf16.mxu0 0
  %2709 = vmatpush2.bf16.msra.mxu0 %v252
  %2710 = vmatprep.subr.bf16.mxu0 0
  %2711 = vmatpush2.bf16.msra.mxu0 %v251
  %2712 = vmatprep.subr.bf16.mxu0 0
  %2713 = vmatpush2.bf16.msra.mxu0 %v250
  %2714 = vmatprep.mubr.bf16.mxu0 %v2675
  %2715 = vmatmul.mubr.bf16.gmra.mxu0 %v2674
  %v2716 = vpop.f32.mrf.mxu0
  %v2717 = vadd.f32 %v98, %v2716
  %v2718 = vpop.f32.mrf.mxu0
  %v2719 = vpop.f32.mrf.mxu0
  %v2720 = vpop.f32.mrf.mxu0
  %2721 = vdwg.mxu0
  %2722 = vmatprep.subr.bf16.mxu0 0
  %2723 = vmatpush1.bf16.msra.mxu0 %v265
  %2724 = vmatprep.subr.bf16.mxu0 0
  %2725 = vmatpush1.bf16.msra.mxu0 %v264
  %2726 = vmatprep.subr.bf16.mxu0 0
  %2727 = vmatpush1.bf16.msra.mxu0 %v263
  %2728 = vmatprep.subr.bf16.mxu0 0
  %2729 = vmatpush1.bf16.msra.mxu0 %v262
  %2730 = vmatprep.subr.bf16.mxu0 0
  %2731 = vmatpush1.bf16.msra.mxu0 %v261
  %2732 = vmatprep.subr.bf16.mxu0 0
  %2733 = vmatpush1.bf16.msra.mxu0 %v260
  %2734 = vmatprep.subr.bf16.mxu0 0
  %2735 = vmatpush1.bf16.msra.mxu0 %v259
  %2736 = vmatprep.subr.bf16.mxu0 0
  %2737 = vmatpush1.bf16.msra.mxu0 %v258
  %2738 = vmatprep.subr.bf16.mxu0 0
  %2739 = vmatpush2.bf16.msra.mxu0 %v273
  %2740 = vmatprep.subr.bf16.mxu0 0
  %2741 = vmatpush2.bf16.msra.mxu0 %v272
  %2742 = vmatprep.subr.bf16.mxu0 0
  %2743 = vmatpush2.bf16.msra.mxu0 %v271
  %2744 = vmatprep.subr.bf16.mxu0 0
  %2745 = vmatpush2.bf16.msra.mxu0 %v270
  %2746 = vmatprep.subr.bf16.mxu0 0
  %2747 = vmatpush2.bf16.msra.mxu0 %v269
  %2748 = vmatprep.subr.bf16.mxu0 0
  %2749 = vmatpush2.bf16.msra.mxu0 %v268
  %2750 = vmatprep.subr.bf16.mxu0 0
  %2751 = vmatpush2.bf16.msra.mxu0 %v267
  %2752 = vmatprep.subr.bf16.mxu0 0
  %2753 = vmatpush2.bf16.msra.mxu0 %v266
  %2754 = vmatprep.mubr.bf16.mxu0 %v2677
  %2755 = vmatmul.mubr.bf16.gmra.mxu0 %v2676
  %v2756 = vpop.f32.mrf.mxu0
  %v2757 = vadd.f32 %v2717, %v2756
  %v2758 = vpop.f32.mrf.mxu0
  %v2759 = vpop.f32.mrf.mxu0
  %v2760 = vpop.f32.mrf.mxu0
  %2761 = vdwg.mxu0
  %v2762 = vmax.f32 %v2757, 0.0
  %v2763 = vpack.c.bf16 %v2762, %v2762
  %s2764 = scalar_lea.vmem %s3, 448
  %v2765 = vld [vmem:[%s2764] sm:$0xff]
  %v2766 = vld [vmem:[%s2764 + $0x8] sm:$0xff]
  %v2767 = vld [vmem:[%s2764 + $0x10] sm:$0xff]
  %v2768 = vld [vmem:[%s2764 + $0x18] sm:$0xff]
  %v2773 = vunpack.c.l.b16 %v2765
  %v2774 = vunpack.c.h.b16 %v2765
  %v2775 = vunpack.c.l.b16 %v2766
  %v2776 = vunpack.c.h.b16 %v2766
  %v2777 = vunpack.c.l.b16 %v2767
  %v2778 = vunpack.c.h.b16 %v2767
  %v2779 = vunpack.c.l.b16 %v2768
  %v2780 = vunpack.c.h.b16 %v2768
  %v2781 = vpack.c.b16 %v2775, %v2773
  %v2782 = vpack.c.b16 %v2776, %v2774
  %v2783 = vpack.c.b16 %v2779, %v2777
  %v2784 = vpack.c.b16 %v2780, %v2778
  %v2790 = vsel %vm516, %v2763, 0
  %2792 = vmatprep.subr.bf16.mxu0 0
  %2793 = vmatpush1.bf16.msra.mxu0 0
  %2794 = vmatprep.subr.bf16.mxu0 0
  %2795 = vmatpush1.bf16.msra.mxu0 0
  %2796 = vmatprep.subr.bf16.mxu0 0
  %2797 = vmatpush1.bf16.msra.mxu0 0
  %2798 = vmatprep.subr.bf16.mxu0 0
  %2799 = vmatpush1.bf16.msra.mxu0 0
  %2800 = vmatprep.subr.bf16.mxu0 0
  %2801 = vmatpush1.bf16.msra.mxu0 0
  %2802 = vmatprep.subr.bf16.mxu0 0
  %2803 = vmatpush1.bf16.msra.mxu0 0
  %2804 = vmatprep.subr.bf16.mxu0 %v2784
  %2805 = vmatpush1.bf16.msra.mxu0 %v2783
  %2806 = vmatprep.subr.bf16.mxu0 %v2782
  %2807 = vmatpush1.bf16.msra.mxu0 %v2781
  %2808 = vmatprep.subr.bf16.mxu0 0
  %2809 = vmatpush2.bf16.msra.mxu0 0
  %2810 = vmatprep.subr.bf16.mxu0 0
  %2811 = vmatpush2.bf16.msra.mxu0 0
  %2812 = vmatprep.subr.bf16.mxu0 0
  %2813 = vmatpush2.bf16.msra.mxu0 0
  %2814 = vmatprep.subr.bf16.mxu0 0
  %2815 = vmatpush2.bf16.msra.mxu0 0
  %2816 = vmatprep.subr.bf16.mxu0 0
  %2817 = vmatpush2.bf16.msra.mxu0 0
  %2818 = vmatprep.subr.bf16.mxu0 0
  %2819 = vmatpush2.bf16.msra.mxu0 0
  %2820 = vmatprep.subr.bf16.mxu0 0
  %2821 = vmatpush2.bf16.msra.mxu0 0
  %2822 = vmatprep.subr.bf16.mxu0 0
  %2823 = vmatpush2.bf16.msra.mxu0 0
  %2824 = vmatprep.mubr.bf16.mxu0 0
  %2825 = vmatmul.mubr.bf16.gmra.mxu0 %v2790
  %v2826 = vpop.f32.mrf.mxu0
  %v2827 = vadd.f32 0.0, %v2826
  %v2828 = vpop.f32.mrf.mxu0
  %v2829 = vadd.f32 0.0, %v2828
  %v2830 = vpop.f32.mrf.mxu0
  %v2831 = vpop.f32.mrf.mxu0
  %2832 = vdwg.mxu0
  %v2833 = vadd.f32 %v2663, %v2827
  %v2834 = vadd.f32 %v2664, %v2829
  %s2835 = scalar_lea.vmem %s0, 240
  %v2836 = vld [vmem:[%s2835] sm:$0xff]
  %v2837 = vld [vmem:[%s2835 + $0x8] sm:$0xff]
  %v2840 = vunpack.c.l.b16 %v2836
  %v2841 = vunpack.c.h.b16 %v2836
  %v2842 = vunpack.c.l.b16 %v2837
  %v2843 = vunpack.c.h.b16 %v2837
  %v2844 = vpack.c.b16 %v2840, %v2840
  %v2845 = vpack.c.b16 %v2841, %v2841
  %v2846 = vpack.c.b16 %v2842, %v2842
  %v2847 = vpack.c.b16 %v2843, %v2843
  %2852 = vmatprep.subr.bf16.mxu0 0
  %2853 = vmatpush1.bf16.msra.mxu0 %v249
  %2854 = vmatprep.subr.bf16.mxu0 0
  %2855 = vmatpush1.bf16.msra.mxu0 %v248
  %2856 = vmatprep.subr.bf16.mxu0 0
  %2857 = vmatpush1.bf16.msra.mxu0 %v247
  %2858 = vmatprep.subr.bf16.mxu0 0
  %2859 = vmatpush1.bf16.msra.mxu0 %v246
  %2860 = vmatprep.subr.bf16.mxu0 0
  %2861 = vmatpush1.bf16.msra.mxu0 %v245
  %2862 = vmatprep.subr.bf16.mxu0 0
  %2863 = vmatpush1.bf16.msra.mxu0 %v244
  %2864 = vmatprep.subr.bf16.mxu0 0
  %2865 = vmatpush1.bf16.msra.mxu0 %v243
  %2866 = vmatprep.subr.bf16.mxu0 0
  %2867 = vmatpush1.bf16.msra.mxu0 %v242
  %2868 = vmatprep.subr.bf16.mxu0 0
  %2869 = vmatpush2.bf16.msra.mxu0 %v257
  %2870 = vmatprep.subr.bf16.mxu0 0
  %2871 = vmatpush2.bf16.msra.mxu0 %v256
  %2872 = vmatprep.subr.bf16.mxu0 0
  %2873 = vmatpush2.bf16.msra.mxu0 %v255
  %2874 = vmatprep.subr.bf16.mxu0 0
  %2875 = vmatpush2.bf16.msra.mxu0 %v254
  %2876 = vmatprep.subr.bf16.mxu0 0
  %2877 = vmatpush2.bf16.msra.mxu0 %v253
  %2878 = vmatprep.subr.bf16.mxu0 0
  %2879 = vmatpush2.bf16.msra.mxu0 %v252
  %2880 = vmatprep.subr.bf16.mxu0 0
  %2881 = vmatpush2.bf16.msra.mxu0 %v251
  %2882 = vmatprep.subr.bf16.mxu0 0
  %2883 = vmatpush2.bf16.msra.mxu0 %v250
  %2884 = vmatprep.mubr.bf16.mxu0 %v2845
  %2885 = vmatmul.mubr.bf16.gmra.mxu0 %v2844
  %v2886 = vpop.f32.mrf.mxu0
  %v2887 = vadd.f32 %v98, %v2886
  %v2888 = vpop.f32.mrf.mxu0
  %v2889 = vpop.f32.mrf.mxu0
  %v2890 = vpop.f32.mrf.mxu0
  %2891 = vdwg.mxu0
  %2892 = vmatprep.subr.bf16.mxu0 0
  %2893 = vmatpush1.bf16.msra.mxu0 %v265
  %2894 = vmatprep.subr.bf16.mxu0 0
  %2895 = vmatpush1.bf16.msra.mxu0 %v264
  %2896 = vmatprep.subr.bf16.mxu0 0
  %2897 = vmatpush1.bf16.msra.mxu0 %v263
  %2898 = vmatprep.subr.bf16.mxu0 0
  %2899 = vmatpush1.bf16.msra.mxu0 %v262
  %2900 = vmatprep.subr.bf16.mxu0 0
  %2901 = vmatpush1.bf16.msra.mxu0 %v261
  %2902 = vmatprep.subr.bf16.mxu0 0
  %2903 = vmatpush1.bf16.msra.mxu0 %v260
  %2904 = vmatprep.subr.bf16.mxu0 0
  %2905 = vmatpush1.bf16.msra.mxu0 %v259
  %2906 = vmatprep.subr.bf16.mxu0 0
  %2907 = vmatpush1.bf16.msra.mxu0 %v258
  %2908 = vmatprep.subr.bf16.mxu0 0
  %2909 = vmatpush2.bf16.msra.mxu0 %v273
  %2910 = vmatprep.subr.bf16.mxu0 0
  %2911 = vmatpush2.bf16.msra.mxu0 %v272
  %2912 = vmatprep.subr.bf16.mxu0 0
  %2913 = vmatpush2.bf16.msra.mxu0 %v271
  %2914 = vmatprep.subr.bf16.mxu0 0
  %2915 = vmatpush2.bf16.msra.mxu0 %v270
  %2916 = vmatprep.subr.bf16.mxu0 0
  %2917 = vmatpush2.bf16.msra.mxu0 %v269
  %2918 = vmatprep.subr.bf16.mxu0 0
  %2919 = vmatpush2.bf16.msra.mxu0 %v268
  %2920 = vmatprep.subr.bf16.mxu0 0
  %2921 = vmatpush2.bf16.msra.mxu0 %v267
  %2922 = vmatprep.subr.bf16.mxu0 0
  %2923 = vmatpush2.bf16.msra.mxu0 %v266
  %2924 = vmatprep.mubr.bf16.mxu0 %v2847
  %2925 = vmatmul.mubr.bf16.gmra.mxu0 %v2846
  %v2926 = vpop.f32.mrf.mxu0
  %v2927 = vadd.f32 %v2887, %v2926
  %v2928 = vpop.f32.mrf.mxu0
  %v2929 = vpop.f32.mrf.mxu0
  %v2930 = vpop.f32.mrf.mxu0
  %2931 = vdwg.mxu0
  %v2932 = vmax.f32 %v2927, 0.0
  %v2933 = vpack.c.bf16 %v2932, %v2932
  %s2934 = scalar_lea.vmem %s3, 480
  %v2935 = vld [vmem:[%s2934] sm:$0xff]
  %v2936 = vld [vmem:[%s2934 + $0x8] sm:$0xff]
  %v2937 = vld [vmem:[%s2934 + $0x10] sm:$0xff]
  %v2938 = vld [vmem:[%s2934 + $0x18] sm:$0xff]
  %v2943 = vunpack.c.l.b16 %v2935
  %v2944 = vunpack.c.h.b16 %v2935
  %v2945 = vunpack.c.l.b16 %v2936
  %v2946 = vunpack.c.h.b16 %v2936
  %v2947 = vunpack.c.l.b16 %v2937
  %v2948 = vunpack.c.h.b16 %v2937
  %v2949 = vunpack.c.l.b16 %v2938
  %v2950 = vunpack.c.h.b16 %v2938
  %v2951 = vpack.c.b16 %v2945, %v2943
  %v2952 = vpack.c.b16 %v2946, %v2944
  %v2953 = vpack.c.b16 %v2949, %v2947
  %v2954 = vpack.c.b16 %v2950, %v2948
  %v2960 = vsel %vm516, %v2933, 0
  %2962 = vmatprep.subr.bf16.mxu0 0
  %2963 = vmatpush1.bf16.msra.mxu0 0
  %2964 = vmatprep.subr.bf16.mxu0 0
  %2965 = vmatpush1.bf16.msra.mxu0 0
  %2966 = vmatprep.subr.bf16.mxu0 0
  %2967 = vmatpush1.bf16.msra.mxu0 0
  %2968 = vmatprep.subr.bf16.mxu0 0
  %2969 = vmatpush1.bf16.msra.mxu0 0
  %2970 = vmatprep.subr.bf16.mxu0 0
  %2971 = vmatpush1.bf16.msra.mxu0 0
  %2972 = vmatprep.subr.bf16.mxu0 0
  %2973 = vmatpush1.bf16.msra.mxu0 0
  %2974 = vmatprep.subr.bf16.mxu0 %v2954
  %2975 = vmatpush1.bf16.msra.mxu0 %v2953
  %2976 = vmatprep.subr.bf16.mxu0 %v2952
  %2977 = vmatpush1.bf16.msra.mxu0 %v2951
  %2978 = vmatprep.subr.bf16.mxu0 0
  %2979 = vmatpush2.bf16.msra.mxu0 0
  %2980 = vmatprep.subr.bf16.mxu0 0
  %2981 = vmatpush2.bf16.msra.mxu0 0
  %2982 = vmatprep.subr.bf16.mxu0 0
  %2983 = vmatpush2.bf16.msra.mxu0 0
  %2984 = vmatprep.subr.bf16.mxu0 0
  %2985 = vmatpush2.bf16.msra.mxu0 0
  %2986 = vmatprep.subr.bf16.mxu0 0
  %2987 = vmatpush2.bf16.msra.mxu0 0
  %2988 = vmatprep.subr.bf16.mxu0 0
  %2989 = vmatpush2.bf16.msra.mxu0 0
  %2990 = vmatprep.subr.bf16.mxu0 0
  %2991 = vmatpush2.bf16.msra.mxu0 0
  %2992 = vmatprep.subr.bf16.mxu0 0
  %2993 = vmatpush2.bf16.msra.mxu0 0
  %2994 = vmatprep.mubr.bf16.mxu0 0
  %2995 = vmatmul.mubr.bf16.gmra.mxu0 %v2960
  %v2996 = vpop.f32.mrf.mxu0
  %v2997 = vadd.f32 0.0, %v2996
  %v2998 = vpop.f32.mrf.mxu0
  %v2999 = vadd.f32 0.0, %v2998
  %v3000 = vpop.f32.mrf.mxu0
  %v3001 = vpop.f32.mrf.mxu0
  %3002 = vdwg.mxu0
  %v3003 = vadd.f32 %v2833, %v2997
  %v3004 = vadd.f32 %v2834, %v2999
  %v3005 = vld [vmem:[%s4] sm:$0x3]
  %v3007 = vlaneseq
  %v3008 = vshrl.u32 %v3007, 7
  %v3009 = vsub.s32 0, %v3008
  %v3010 = vrot.slane %v3005, %v3009
  %v3011 = vlaneseq
  %v3012 = vshrl.u32 %v3011, 7
  %v3013 = vsub.s32 1, %v3012
  %v3014 = vrot.slane %v3005, %v3013
  %v3017 = vadd.f32 %v3003, %v3010
  %v3018 = vadd.f32 %v3004, %v3014
  %v3019 = vmax.f32 %v3017, 0.0
  %v3020 = vmax.f32 %v3018, 0.0
  %v3021 = vpack.c.bf16 %v3019, %v3019
  %v3022 = vpack.c.bf16 %v3020, %v3020
  %v3023 = vld [vmem:[%s5] sm:$0xf]
  %v3024 = vld [vmem:[%s5 + $0x4] sm:$0xf]
  %v3025 = vld [vmem:[%s5 + $0x8] sm:$0xf]
  %v3026 = vld [vmem:[%s5 + $0xc] sm:$0xf]
  %v3027 = vld [vmem:[%s5 + $0x10] sm:$0xf]
  %v3028 = vld [vmem:[%s5 + $0x14] sm:$0xf]
  %v3029 = vld [vmem:[%s5 + $0x18] sm:$0xf]
  %v3030 = vld [vmem:[%s5 + $0x1c] sm:$0xf]
  %v3031 = vld [vmem:[%s5 + $0x20] sm:$0xf]
  %v3032 = vld [vmem:[%s5 + $0x24] sm:$0xf]
  %v3033 = vld [vmem:[%s5 + $0x28] sm:$0xf]
  %v3034 = vld [vmem:[%s5 + $0x2c] sm:$0xf]
  %v3035 = vld [vmem:[%s5 + $0x30] sm:$0xf]
  %v3036 = vld [vmem:[%s5 + $0x34] sm:$0xf]
  %v3037 = vld [vmem:[%s5 + $0x38] sm:$0xf]
  %v3038 = vld [vmem:[%s5 + $0x3c] sm:$0xf]
  %v3039 = vld [vmem:[%s5 + $0x40] sm:$0xf]
  %v3040 = vld [vmem:[%s5 + $0x44] sm:$0xf]
  %v3041 = vld [vmem:[%s5 + $0x48] sm:$0xf]
  %v3042 = vld [vmem:[%s5 + $0x4c] sm:$0xf]
  %v3043 = vld [vmem:[%s5 + $0x50] sm:$0xf]
  %v3044 = vld [vmem:[%s5 + $0x54] sm:$0xf]
  %v3045 = vld [vmem:[%s5 + $0x58] sm:$0xf]
  %v3046 = vld [vmem:[%s5 + $0x5c] sm:$0xf]
  %v3047 = vld [vmem:[%s5 + $0x60] sm:$0xf]
  %v3048 = vld [vmem:[%s5 + $0x64] sm:$0xf]
  %v3049 = vld [vmem:[%s5 + $0x68] sm:$0xf]
  %v3050 = vld [vmem:[%s5 + $0x6c] sm:$0xf]
  %v3051 = vld [vmem:[%s5 + $0x70] sm:$0xf]
  %v3052 = vld [vmem:[%s5 + $0x74] sm:$0xf]
  %v3053 = vld [vmem:[%s5 + $0x78] sm:$0xf]
  %v3054 = vld [vmem:[%s5 + $0x7c] sm:$0xf]
  %v3055 = vld [vmem:[%s6] sm:$0x1]
  %v3057 = vlaneseq
  %v3058 = vshrl.u32 %v3057, 7
  %v3059 = vsub.s32 0, %v3058
  %v3060 = vrot.slane %v3055, %v3059
  %v3094 = vunpack.c.l.b16 %v3023
  %v3095 = vunpack.c.l.b16 %v3024
  %v3096 = vunpack.c.l.b16 %v3025
  %v3097 = vunpack.c.l.b16 %v3026
  %v3098 = vunpack.c.l.b16 %v3027
  %v3099 = vunpack.c.l.b16 %v3028
  %v3100 = vunpack.c.l.b16 %v3029
  %v3101 = vunpack.c.l.b16 %v3030
  %v3102 = vunpack.c.l.b16 %v3031
  %v3103 = vunpack.c.l.b16 %v3032
  %v3104 = vunpack.c.l.b16 %v3033
  %v3105 = vunpack.c.l.b16 %v3034
  %v3106 = vunpack.c.l.b16 %v3035
  %v3107 = vunpack.c.l.b16 %v3036
  %v3108 = vunpack.c.l.b16 %v3037
  %v3109 = vunpack.c.l.b16 %v3038
  %v3110 = vunpack.c.l.b16 %v3039
  %v3111 = vunpack.c.l.b16 %v3040
  %v3112 = vunpack.c.l.b16 %v3041
  %v3113 = vunpack.c.l.b16 %v3042
  %v3114 = vunpack.c.l.b16 %v3043
  %v3115 = vunpack.c.l.b16 %v3044
  %v3116 = vunpack.c.l.b16 %v3045
  %v3117 = vunpack.c.l.b16 %v3046
  %v3118 = vunpack.c.l.b16 %v3047
  %v3119 = vunpack.c.l.b16 %v3048
  %v3120 = vunpack.c.l.b16 %v3049
  %v3121 = vunpack.c.l.b16 %v3050
  %v3122 = vunpack.c.l.b16 %v3051
  %v3123 = vunpack.c.l.b16 %v3052
  %v3124 = vunpack.c.l.b16 %v3053
  %v3125 = vunpack.c.l.b16 %v3054
  %v3126 = vpack.c.b16 %v3095, %v3094
  %v3127 = vpack.c.b16 %v3097, %v3096
  %v3128 = vpack.c.b16 %v3099, %v3098
  %v3129 = vpack.c.b16 %v3101, %v3100
  %v3130 = vpack.c.b16 %v3103, %v3102
  %v3131 = vpack.c.b16 %v3105, %v3104
  %v3132 = vpack.c.b16 %v3107, %v3106
  %v3133 = vpack.c.b16 %v3109, %v3108
  %v3134 = vpack.c.b16 %v3111, %v3110
  %v3135 = vpack.c.b16 %v3113, %v3112
  %v3136 = vpack.c.b16 %v3115, %v3114
  %v3137 = vpack.c.b16 %v3117, %v3116
  %v3138 = vpack.c.b16 %v3119, %v3118
  %v3139 = vpack.c.b16 %v3121, %v3120
  %v3140 = vpack.c.b16 %v3123, %v3122
  %v3141 = vpack.c.b16 %v3125, %v3124
  %3158 = vmatprep.subr.bf16.mxu0 0
  %3159 = vmatpush1.bf16.msra.mxu0 %v3133
  %3160 = vmatprep.subr.bf16.mxu0 0
  %3161 = vmatpush1.bf16.msra.mxu0 %v3132
  %3162 = vmatprep.subr.bf16.mxu0 0
  %3163 = vmatpush1.bf16.msra.mxu0 %v3131
  %3164 = vmatprep.subr.bf16.mxu0 0
  %3165 = vmatpush1.bf16.msra.mxu0 %v3130
  %3166 = vmatprep.subr.bf16.mxu0 0
  %3167 = vmatpush1.bf16.msra.mxu0 %v3129
  %3168 = vmatprep.subr.bf16.mxu0 0
  %3169 = vmatpush1.bf16.msra.mxu0 %v3128
  %3170 = vmatprep.subr.bf16.mxu0 0
  %3171 = vmatpush1.bf16.msra.mxu0 %v3127
  %3172 = vmatprep.subr.bf16.mxu0 0
  %3173 = vmatpush1.bf16.msra.mxu0 %v3126
  %3174 = vmatprep.subr.bf16.mxu0 0
  %3175 = vmatpush2.bf16.msra.mxu0 %v3141
  %3176 = vmatprep.subr.bf16.mxu0 0
  %3177 = vmatpush2.bf16.msra.mxu0 %v3140
  %3178 = vmatprep.subr.bf16.mxu0 0
  %3179 = vmatpush2.bf16.msra.mxu0 %v3139
  %3180 = vmatprep.subr.bf16.mxu0 0
  %3181 = vmatpush2.bf16.msra.mxu0 %v3138
  %3182 = vmatprep.subr.bf16.mxu0 0
  %3183 = vmatpush2.bf16.msra.mxu0 %v3137
  %3184 = vmatprep.subr.bf16.mxu0 0
  %3185 = vmatpush2.bf16.msra.mxu0 %v3136
  %3186 = vmatprep.subr.bf16.mxu0 0
  %3187 = vmatpush2.bf16.msra.mxu0 %v3135
  %3188 = vmatprep.subr.bf16.mxu0 0
  %3189 = vmatpush2.bf16.msra.mxu0 %v3134
  %3190 = vmatprep.mubr.bf16.mxu0 %v3022
  %3191 = vmatmul.mubr.bf16.gmra.mxu0 %v3021
  %v3192 = vpop.f32.mrf.mxu0
  %v3193 = vadd.f32 %v3060, %v3192
  %v3194 = vpop.f32.mrf.mxu0
  %v3195 = vpop.f32.mrf.mxu0
  %v3196 = vpop.f32.mrf.mxu0
  %3197 = vdwg.mxu0
  %3198 = vst [vmem:[%s7] sm:$0xff] %v3193
  // Predicated region
  $region30: #{cnn_forward.7} parent=0 // pred_check
    _
  $region31: #{cnn_forward.7} parent=0 // pred_check_branch
    %3200 = sbr.rel (0) target = $region33
  $region32: #{cnn_forward.7} parent=0 // pred_region
    _
  $region33: #{cnn_forward.7} parent=0 // pred_fallthru
    _
  // Predicated region
  $region34: #{cnn_forward.7} parent=0 // pred_check
    _
  $region35: #{cnn_forward.7} parent=0 // pred_check_branch
    %3202 = sbr.rel (0) target = $region37
  $region36: #{cnn_forward.7} parent=0 // pred_region
    _
  $region37: #{cnn_forward.7} parent=0 // pred_fallthru
    _

</llo_original>
